<compile_context>
chip_gen: v7x
topology: tpu7x:2x2x1
jax: 0.10.0
libtpu: 0.0.40
codegen_flags: <defaults>
</compile_context>

<pallas_src>
import jax
import jax.numpy as jnp
from jax.experimental import pallas as pl
from jax.experimental.pallas import tpu as pltpu

D_MODEL = 768
D_FF = 1024
N_LAYERS = 3
LN_EPS = 1e-5


def _layernorm(z, gamma, beta):
    # nn.LayerNorm(768): biased variance over the last dim, eps inside rsqrt.
    mean = jnp.mean(z, axis=-1, keepdims=True)
    var = jnp.mean((z - mean) ** 2, axis=-1, keepdims=True)
    return (z - mean) * jax.lax.rsqrt(var + LN_EPS) * gamma + beta


# ---------------------------------------------------------------------------
# Pallas kernels
# ---------------------------------------------------------------------------
def attn_add_ln_kernel(x_ref, xp_ref, g_ref, b_ref, o_ref):
    """Effective MultiHeadAttention: out = LN(x + perm(x)), perm precomputed."""
    o_ref[...] = _layernorm(x_ref[...] + xp_ref[...], g_ref[...], b_ref[...])


def attn_ffn_kernel(x_ref, xp_ref, g2_ref, b2_ref,
                    w1_ref, bias1_ref, w2_ref, bias2_ref,
                    g3_ref, b3_ref, o_ref):
    """Fused [attn2 add+LN] + [FFN + residual + LN] for one decoder layer.

    Matmuls run in bf16 on the MXU with f32 accumulation; LayerNorm, residual
    and bias adds stay in f32.
    """
    z = _layernorm(x_ref[...] + xp_ref[...], g2_ref[...], b2_ref[...])
    h = jnp.dot(z.astype(jnp.bfloat16), w1_ref[...],
                preferred_element_type=jnp.float32) + bias1_ref[...]
    h = jnp.maximum(h, 0.0)
    y = jnp.dot(h.astype(jnp.bfloat16), w2_ref[...],
                preferred_element_type=jnp.float32) + bias2_ref[...]
    o_ref[...] = _layernorm(z + y, g3_ref[...], b3_ref[...])


# ---------------------------------------------------------------------------
# pallas_call wrappers (row-tiled grid, VMEM-resident weights)
# ---------------------------------------------------------------------------
def _row_tile(rows):
    for tm in (512, 256, 128, 64, 32, 16, 8):
        if rows % tm == 0:
            return tm
    return rows  # not 8-divisible: single full-array block (always legal)


_COMPILER_PARAMS = pltpu.CompilerParams(
    dimension_semantics=("parallel",),   # lets v7x shard row blocks over 2 TCs
    vmem_limit_bytes=32 << 20,           # safe on v5e/v6e/v7x (<= physical/2)
)


def attn_add_ln(x2d, xp2d, gamma, beta):
    rows, d = x2d.shape
    tm = _row_tile(rows)
    row = lambda i: (i, 0)
    rep = lambda i: (0, 0)
    return pl.pallas_call(
        attn_add_ln_kernel,
        out_shape=jax.ShapeDtypeStruct((rows, d), jnp.float32),
        grid=(rows // tm,),
        in_specs=[
            pl.BlockSpec((tm, d), row),
            pl.BlockSpec((tm, d), row),
            pl.BlockSpec((1, d), rep),
            pl.BlockSpec((1, d), rep),
        ],
        out_specs=pl.BlockSpec((tm, d), row),
        compiler_params=_COMPILER_PARAMS,
    )(x2d, xp2d, gamma.reshape(1, d), beta.reshape(1, d))


def attn_ffn(x2d, xp2d, attn_p, ffn_p):
    rows, d = x2d.shape
    tm = _row_tile(rows)
    row = lambda i: (i, 0)
    rep = lambda i: (0, 0)
    cost = pl.CostEstimate(
        flops=2 * rows * (d * D_FF + D_FF * d),
        transcendentals=0,
        bytes_accessed=3 * rows * d * 4 + 2 * (d * D_FF + D_FF * d)
        + 4 * (D_FF + 5 * d),
    )
    return pl.pallas_call(
        attn_ffn_kernel,
        out_shape=jax.ShapeDtypeStruct((rows, d), jnp.float32),
        grid=(rows // tm,),
        in_specs=[
            pl.BlockSpec((tm, d), row),        # x
            pl.BlockSpec((tm, d), row),        # perm(x)
            pl.BlockSpec((1, d), rep),         # attn2 LN gamma
            pl.BlockSpec((1, d), rep),         # attn2 LN beta
            pl.BlockSpec((d, D_FF), rep),      # w1 (bf16), VMEM-resident
            pl.BlockSpec((1, D_FF), rep),      # b1
            pl.BlockSpec((D_FF, d), rep),      # w2 (bf16), VMEM-resident
            pl.BlockSpec((1, d), rep),         # b2
            pl.BlockSpec((1, d), rep),         # ffn LN gamma
            pl.BlockSpec((1, d), rep),         # ffn LN beta
        ],
        out_specs=pl.BlockSpec((tm, d), row),
        compiler_params=_COMPILER_PARAMS,
        cost_estimate=cost,
    )(
        x2d, xp2d,
        attn_p["ln_g"].reshape(1, d), attn_p["ln_b"].reshape(1, d),
        ffn_p["w1"], ffn_p["b1"].reshape(1, D_FF),
        ffn_p["w2"], ffn_p["b2"].reshape(1, d),
        ffn_p["ln_g"].reshape(1, d), ffn_p["ln_b"].reshape(1, d),
    )


# ---------------------------------------------------------------------------
# Module forward (effective semantics of the reference PyTorch Decoder)
# ---------------------------------------------------------------------------
def _perm(x):
    # Effective residual branch of MultiHeadAttention:
    #   x.transpose(1, 2).reshape(B, S, D)  — a pure per-batch permutation.
    b, s, d = x.shape
    return jnp.transpose(x, (0, 2, 1)).reshape(b, s, d)


def decoder_block(x, layer):
    b, s, d = x.shape
    rows = b * s
    # attention_block1 (effective): LN(x + perm(x))
    y1 = attn_add_ln(
        x.reshape(rows, d), _perm(x).reshape(rows, d),
        layer["attn1"]["ln_g"], layer["attn1"]["ln_b"],
    ).reshape(b, s, d)
    # attention_block2 + feed_forward fused into one kernel
    y3 = attn_ffn(
        y1.reshape(rows, d), _perm(y1).reshape(rows, d),
        layer["attn2"], layer["ffn"],
    ).reshape(b, s, d)
    return y3


@jax.jit
def decoder_forward(params, x_tokens):
    # get_attention_mask(x) feeds only the dead attention branch -> elided.
    _, s = x_tokens.shape
    pos = jnp.arange(s)
    x = params["token_emb"][x_tokens] + params["pos_emb"][pos][None, :, :]
    for layer in params["layers"]:
        x = decoder_block(x, layer)
    return x


def _reference_forward(params, x_tokens):
    """Pure-jnp reference of the effective forward (f32 everywhere)."""
    _, s = x_tokens.shape
    pos = jnp.arange(s)
    x = params["token_emb"][x_tokens] + params["pos_emb"][pos][None, :, :]
    for layer in params["layers"]:
        for name in ("attn1", "attn2"):
            x = _layernorm(x + _perm(x), layer[name]["ln_g"], layer[name]["ln_b"])
        f = layer["ffn"]
        h = jnp.maximum(x @ f["w1"].astype(jnp.float32) + f["b1"], 0.0)
        y = h @ f["w2"].astype(jnp.float32) + f["b2"]
        x = _layernorm(x + y, f["ln_g"], f["ln_b"])
    return x


# ---------------------------------------------------------------------------
# Deterministic parameter init (synthetic weights, shapes from __init__)
# ---------------------------------------------------------------------------
def init_params(key, vocab_len, seq_max_len):
    keys = jax.random.split(key, 2 + N_LAYERS)
    params = {
        "token_emb": jax.random.normal(keys[0], (vocab_len, D_MODEL), jnp.float32),
        "pos_emb": jax.random.normal(keys[1], (seq_max_len, D_MODEL), jnp.float32),
        "layers": [],
    }
    for li in range(N_LAYERS):
        lk = jax.random.split(keys[2 + li], 4)
        # Q/K/V Linear(768, 768) weights are dead code in the reference forward
        # and therefore not materialized here.
        layer = {
            "attn1": {"ln_g": jnp.ones((D_MODEL,), jnp.float32),
                      "ln_b": jnp.zeros((D_MODEL,), jnp.float32)},
            "attn2": {"ln_g": jnp.ones((D_MODEL,), jnp.float32),
                      "ln_b": jnp.zeros((D_MODEL,), jnp.float32)},
            "ffn": {
                # stored in bf16: fed straight to the MXU inside the kernel
                "w1": (0.02 * jax.random.normal(lk[0], (D_MODEL, D_FF), jnp.float32)
                       ).astype(jnp.bfloat16),
                "b1": 0.02 * jax.random.normal(lk[1], (D_FF,), jnp.float32),
                "w2": (0.02 * jax.random.normal(lk[2], (D_FF, D_MODEL), jnp.float32)
                       ).astype(jnp.bfloat16),
                "b2": 0.02 * jax.random.normal(lk[3], (D_MODEL,), jnp.float32),
                "ln_g": jnp.ones((D_MODEL,), jnp.float32),
                "ln_b": jnp.zeros((D_MODEL,), jnp.float32),
            },
        }
        params["layers"].append(layer)
    return params


if __name__ == "__main__":
    key = jax.random.PRNGKey(0)
    pkey, xkey = jax.random.split(key)

    vocab_len, seq_max_len = 100, 32   # small synthetic vocab / max position
    B, S = 2, 8                        # small batch / sequence

    params = init_params(pkey, vocab_len, seq_max_len)
    x_tokens = jax.random.randint(xkey, (B, S), 0, vocab_len, dtype=jnp.int32)

    out = jax.block_until_ready(decoder_forward(params, x_tokens))
    assert out.shape == (B, S, D_MODEL) and out.dtype == jnp.float32
    assert bool(jnp.all(jnp.isfinite(out)))

    # Numerical sanity check vs the pure-jnp effective forward; differences come
    # only from the bf16 MXU matmuls inside the fused FFN kernel.
    ref = jax.block_until_ready(_reference_forward(params, x_tokens))
    max_err = float(jnp.max(jnp.abs(out - ref)))
    assert max_err < 0.25, f"mismatch vs reference: {max_err}"

    print("KERNEL_OK")
</pallas_src>

<mosaic_0001>
module attributes {stable_mosaic.version = 11 : i64} {
  func.func @attn_add_ln_kernel(%arg0: i32, %arg1: memref<16x768xf32, #tpu.memory_space<vmem>>, %arg2: memref<16x768xf32, #tpu.memory_space<vmem>>, %arg3: memref<1x768xf32, #tpu.memory_space<vmem>>, %arg4: memref<1x768xf32, #tpu.memory_space<vmem>>, %arg5: memref<16x768xf32, #tpu.memory_space<vmem>>) attributes {dimension_semantics = [#tpu.dimension_semantics<parallel>], iteration_bounds = array<i64: 1>, scalar_prefetch = 0 : i64, scratch_operands = 0 : i64, tpu.core_type = #tpu.core_type<tc>, window_params = [{transform_indices = @transform_0, window_bounds = array<i64: 16, 768>}, {transform_indices = @transform_1, window_bounds = array<i64: 16, 768>}, {pipeline_mode = #tpu.pipeline_mode<synchronous>, transform_indices = @transform_2, window_bounds = array<i64: 1, 768>}, {pipeline_mode = #tpu.pipeline_mode<synchronous>, transform_indices = @transform_3, window_bounds = array<i64: 1, 768>}, {transform_indices = @transform_4, window_bounds = array<i64: 16, 768>}]} {
    %c0 = arith.constant 0 : index
    %c0_0 = arith.constant 0 : index
    %0 = vector.load %arg1[%c0, %c0_0] : memref<16x768xf32, #tpu.memory_space<vmem>>, vector<16x768xf32>
    %c0_1 = arith.constant 0 : index
    %c0_2 = arith.constant 0 : index
    %1 = vector.load %arg2[%c0_1, %c0_2] : memref<16x768xf32, #tpu.memory_space<vmem>>, vector<16x768xf32>
    %2 = arith.addf %0, %1 : vector<16x768xf32>
    %c0_3 = arith.constant 0 : index
    %c0_4 = arith.constant 0 : index
    %3 = vector.load %arg3[%c0_3, %c0_4] : memref<1x768xf32, #tpu.memory_space<vmem>>, vector<1x768xf32>
    %c0_5 = arith.constant 0 : index
    %c0_6 = arith.constant 0 : index
    %4 = vector.load %arg4[%c0_5, %c0_6] : memref<1x768xf32, #tpu.memory_space<vmem>>, vector<1x768xf32>
    %cst = arith.constant dense<0.000000e+00> : vector<16xf32>
    %5 = vector.multi_reduction <add>, %2, %cst [1] : vector<16x768xf32> to vector<16xf32>
    %6 = vector.shape_cast %5 : vector<16xf32> to vector<16x1xf32>
    %cst_7 = arith.constant 7.680000e+02 : f32
    %7 = vector.broadcast %cst_7 : f32 to vector<16x1xf32>
    %8 = arith.divf %6, %7 : vector<16x1xf32>
    %9 = vector.broadcast %8 : vector<16x1xf32> to vector<16x768xf32>
    %10 = arith.subf %2, %9 : vector<16x768xf32>
    %11 = arith.mulf %10, %10 : vector<16x768xf32>
    %cst_8 = arith.constant dense<0.000000e+00> : vector<16xf32>
    %12 = vector.multi_reduction <add>, %11, %cst_8 [1] : vector<16x768xf32> to vector<16xf32>
    %13 = vector.shape_cast %12 : vector<16xf32> to vector<16x1xf32>
    %cst_9 = arith.constant 7.680000e+02 : f32
    %14 = vector.broadcast %cst_9 : f32 to vector<16x1xf32>
    %15 = arith.divf %13, %14 : vector<16x1xf32>
    %16 = vector.broadcast %8 : vector<16x1xf32> to vector<16x768xf32>
    %17 = arith.subf %2, %16 : vector<16x768xf32>
    %cst_10 = arith.constant 9.99999974E-6 : f32
    %18 = vector.broadcast %cst_10 : f32 to vector<16x1xf32>
    %19 = arith.addf %15, %18 : vector<16x1xf32>
    %20 = math.rsqrt %19 : vector<16x1xf32>
    %21 = vector.broadcast %20 : vector<16x1xf32> to vector<16x768xf32>
    %22 = arith.mulf %17, %21 : vector<16x768xf32>
    %23 = vector.broadcast %3 : vector<1x768xf32> to vector<16x768xf32>
    %24 = arith.mulf %22, %23 : vector<16x768xf32>
    %25 = vector.broadcast %4 : vector<1x768xf32> to vector<16x768xf32>
    %26 = arith.addf %24, %25 : vector<16x768xf32>
    %c0_11 = arith.constant 0 : index
    %c0_12 = arith.constant 0 : index
    %27 = vector.load %arg5[%c0_11, %c0_12] : memref<16x768xf32, #tpu.memory_space<vmem>>, vector<16x768xf32>
    tpu.vector_store %arg5[%c0_11, %c0_12], %26 {strides = array<i32>} : memref<16x768xf32, #tpu.memory_space<vmem>>, vector<16x768xf32>,
    return
  }
  func.func @transform_0(%arg0: i32) -> (i32, i32) {
    %c0_i32 = arith.constant 0 : i32
    %c0_i32_0 = arith.constant 0 : i32
    return %arg0, %c0_i32 : i32, i32
  }
  func.func @transform_1(%arg0: i32) -> (i32, i32) {
    %c0_i32 = arith.constant 0 : i32
    %c0_i32_0 = arith.constant 0 : i32
    return %arg0, %c0_i32 : i32, i32
  }
  func.func @transform_2(%arg0: i32) -> (i32, i32) {
    %c0_i32 = arith.constant 0 : i32
    %c0_i32_0 = arith.constant 0 : i32
    %c0_i32_1 = arith.constant 0 : i32
    return %c0_i32, %c0_i32_0 : i32, i32
  }
  func.func @transform_3(%arg0: i32) -> (i32, i32) {
    %c0_i32 = arith.constant 0 : i32
    %c0_i32_0 = arith.constant 0 : i32
    %c0_i32_1 = arith.constant 0 : i32
    return %c0_i32, %c0_i32_0 : i32, i32
  }
  func.func @transform_4(%arg0: i32) -> (i32, i32) {
    %c0_i32 = arith.constant 0 : i32
    %c0_i32_0 = arith.constant 0 : i32
    return %arg0, %c0_i32 : i32, i32
  }
}

module attributes {stable_mosaic.version = 11 : i64} {
  func.func @attn_ffn_kernel(%arg0: i32, %arg1: memref<16x768xf32, #tpu.memory_space<vmem>>, %arg2: memref<16x768xf32, #tpu.memory_space<vmem>>, %arg3: memref<1x768xf32, #tpu.memory_space<vmem>>, %arg4: memref<1x768xf32, #tpu.memory_space<vmem>>, %arg5: memref<768x1024xbf16, #tpu.memory_space<vmem>>, %arg6: memref<1x1024xf32, #tpu.memory_space<vmem>>, %arg7: memref<1024x768xbf16, #tpu.memory_space<vmem>>, %arg8: memref<1x768xf32, #tpu.memory_space<vmem>>, %arg9: memref<1x768xf32, #tpu.memory_space<vmem>>, %arg10: memref<1x768xf32, #tpu.memory_space<vmem>>, %arg11: memref<16x768xf32, #tpu.memory_space<vmem>>) attributes {dimension_semantics = [#tpu.dimension_semantics<parallel>], iteration_bounds = array<i64: 1>, scalar_prefetch = 0 : i64, scratch_operands = 0 : i64, tpu.core_type = #tpu.core_type<tc>, window_params = [{transform_indices = @transform_0, window_bounds = array<i64: 16, 768>}, {transform_indices = @transform_1, window_bounds = array<i64: 16, 768>}, {pipeline_mode = #tpu.pipeline_mode<synchronous>, transform_indices = @transform_2, window_bounds = array<i64: 1, 768>}, {pipeline_mode = #tpu.pipeline_mode<synchronous>, transform_indices = @transform_3, window_bounds = array<i64: 1, 768>}, {pipeline_mode = #tpu.pipeline_mode<synchronous>, transform_indices = @transform_4, window_bounds = array<i64: 768, 1024>}, {pipeline_mode = #tpu.pipeline_mode<synchronous>, transform_indices = @transform_5, window_bounds = array<i64: 1, 1024>}, {pipeline_mode = #tpu.pipeline_mode<synchronous>, transform_indices = @transform_6, window_bounds = array<i64: 1024, 768>}, {pipeline_mode = #tpu.pipeline_mode<synchronous>, transform_indices = @transform_7, window_bounds = array<i64: 1, 768>}, {pipeline_mode = #tpu.pipeline_mode<synchronous>, transform_indices = @transform_8, window_bounds = array<i64: 1, 768>}, {pipeline_mode = #tpu.pipeline_mode<synchronous>, transform_indices = @transform_9, window_bounds = array<i64: 1, 768>}, {transform_indices = @transform_10, window_bounds = array<i64: 16, 768>}]} {
    %c0 = arith.constant 0 : index
    %c0_0 = arith.constant 0 : index
    %0 = vector.load %arg1[%c0, %c0_0] : memref<16x768xf32, #tpu.memory_space<vmem>>, vector<16x768xf32>
    %c0_1 = arith.constant 0 : index
    %c0_2 = arith.constant 0 : index
    %1 = vector.load %arg2[%c0_1, %c0_2] : memref<16x768xf32, #tpu.memory_space<vmem>>, vector<16x768xf32>
    %2 = arith.addf %0, %1 : vector<16x768xf32>
    %c0_3 = arith.constant 0 : index
    %c0_4 = arith.constant 0 : index
    %3 = vector.load %arg3[%c0_3, %c0_4] : memref<1x768xf32, #tpu.memory_space<vmem>>, vector<1x768xf32>
    %c0_5 = arith.constant 0 : index
    %c0_6 = arith.constant 0 : index
    %4 = vector.load %arg4[%c0_5, %c0_6] : memref<1x768xf32, #tpu.memory_space<vmem>>, vector<1x768xf32>
    %cst = arith.constant dense<0.000000e+00> : vector<16xf32>
    %5 = vector.multi_reduction <add>, %2, %cst [1] : vector<16x768xf32> to vector<16xf32>
    %6 = vector.shape_cast %5 : vector<16xf32> to vector<16x1xf32>
    %cst_7 = arith.constant 7.680000e+02 : f32
    %7 = vector.broadcast %cst_7 : f32 to vector<16x1xf32>
    %8 = arith.divf %6, %7 : vector<16x1xf32>
    %9 = vector.broadcast %8 : vector<16x1xf32> to vector<16x768xf32>
    %10 = arith.subf %2, %9 : vector<16x768xf32>
    %11 = arith.mulf %10, %10 : vector<16x768xf32>
    %cst_8 = arith.constant dense<0.000000e+00> : vector<16xf32>
    %12 = vector.multi_reduction <add>, %11, %cst_8 [1] : vector<16x768xf32> to vector<16xf32>
    %13 = vector.shape_cast %12 : vector<16xf32> to vector<16x1xf32>
    %cst_9 = arith.constant 7.680000e+02 : f32
    %14 = vector.broadcast %cst_9 : f32 to vector<16x1xf32>
    %15 = arith.divf %13, %14 : vector<16x1xf32>
    %16 = vector.broadcast %8 : vector<16x1xf32> to vector<16x768xf32>
    %17 = arith.subf %2, %16 : vector<16x768xf32>
    %cst_10 = arith.constant 9.99999974E-6 : f32
    %18 = vector.broadcast %cst_10 : f32 to vector<16x1xf32>
    %19 = arith.addf %15, %18 : vector<16x1xf32>
    %20 = math.rsqrt %19 : vector<16x1xf32>
    %21 = vector.broadcast %20 : vector<16x1xf32> to vector<16x768xf32>
    %22 = arith.mulf %17, %21 : vector<16x768xf32>
    %23 = vector.broadcast %3 : vector<1x768xf32> to vector<16x768xf32>
    %24 = arith.mulf %22, %23 : vector<16x768xf32>
    %25 = vector.broadcast %4 : vector<1x768xf32> to vector<16x768xf32>
    %26 = arith.addf %24, %25 : vector<16x768xf32>
    %27 = arith.truncf %26 : vector<16x768xf32> to vector<16x768xbf16>
    %c0_11 = arith.constant 0 : index
    %c0_12 = arith.constant 0 : index
    %28 = vector.load %arg5[%c0_11, %c0_12] : memref<768x1024xbf16, #tpu.memory_space<vmem>>, vector<768x1024xbf16>
    %cst_13 = arith.constant dense<0.000000e+00> : vector<16x1024xf32>
    %29 = tpu.matmul %27, %28, %cst_13 {dimension_numbers = #tpu.dot_dimension_numbers<[1], [0], [0], [1], [0, 0, 1, 1], [], []>} : vector<16x768xbf16>, vector<768x1024xbf16>, vector<16x1024xf32> -> vector<16x1024xf32>
    %c0_14 = arith.constant 0 : index
    %c0_15 = arith.constant 0 : index
    %30 = vector.load %arg6[%c0_14, %c0_15] : memref<1x1024xf32, #tpu.memory_space<vmem>>, vector<1x1024xf32>
    %31 = vector.broadcast %30 : vector<1x1024xf32> to vector<16x1024xf32>
    %32 = arith.addf %29, %31 : vector<16x1024xf32>
    %cst_16 = arith.constant 0.000000e+00 : f32
    %33 = vector.broadcast %cst_16 : f32 to vector<16x1024xf32>
    %34 = arith.maximumf %32, %33 : vector<16x1024xf32>
    %35 = arith.truncf %34 : vector<16x1024xf32> to vector<16x1024xbf16>
    %c0_17 = arith.constant 0 : index
    %c0_18 = arith.constant 0 : index
    %36 = vector.load %arg7[%c0_17, %c0_18] : memref<1024x768xbf16, #tpu.memory_space<vmem>>, vector<1024x768xbf16>
    %cst_19 = arith.constant dense<0.000000e+00> : vector<16x768xf32>
    %37 = tpu.matmul %35, %36, %cst_19 {dimension_numbers = #tpu.dot_dimension_numbers<[1], [0], [0], [1], [0, 0, 1, 1], [], []>} : vector<16x1024xbf16>, vector<1024x768xbf16>, vector<16x768xf32> -> vector<16x768xf32>
    %c0_20 = arith.constant 0 : index
    %c0_21 = arith.constant 0 : index
    %38 = vector.load %arg8[%c0_20, %c0_21] : memref<1x768xf32, #tpu.memory_space<vmem>>, vector<1x768xf32>
    %39 = vector.broadcast %38 : vector<1x768xf32> to vector<16x768xf32>
    %40 = arith.addf %37, %39 : vector<16x768xf32>
    %41 = arith.addf %26, %40 : vector<16x768xf32>
    %c0_22 = arith.constant 0 : index
    %c0_23 = arith.constant 0 : index
    %42 = vector.load %arg9[%c0_22, %c0_23] : memref<1x768xf32, #tpu.memory_space<vmem>>, vector<1x768xf32>
    %c0_24 = arith.constant 0 : index
    %c0_25 = arith.constant 0 : index
    %43 = vector.load %arg10[%c0_24, %c0_25] : memref<1x768xf32, #tpu.memory_space<vmem>>, vector<1x768xf32>
    %cst_26 = arith.constant dense<0.000000e+00> : vector<16xf32>
    %44 = vector.multi_reduction <add>, %41, %cst_26 [1] : vector<16x768xf32> to vector<16xf32>
    %45 = vector.shape_cast %44 : vector<16xf32> to vector<16x1xf32>
    %cst_27 = arith.constant 7.680000e+02 : f32
    %46 = vector.broadcast %cst_27 : f32 to vector<16x1xf32>
    %47 = arith.divf %45, %46 : vector<16x1xf32>
    %48 = vector.broadcast %47 : vector<16x1xf32> to vector<16x768xf32>
    %49 = arith.subf %41, %48 : vector<16x768xf32>
    %50 = arith.mulf %49, %49 : vector<16x768xf32>
    %cst_28 = arith.constant dense<0.000000e+00> : vector<16xf32>
    %51 = vector.multi_reduction <add>, %50, %cst_28 [1] : vector<16x768xf32> to vector<16xf32>
    %52 = vector.shape_cast %51 : vector<16xf32> to vector<16x1xf32>
    %cst_29 = arith.constant 7.680000e+02 : f32
    %53 = vector.broadcast %cst_29 : f32 to vector<16x1xf32>
    %54 = arith.divf %52, %53 : vector<16x1xf32>
    %55 = vector.broadcast %47 : vector<16x1xf32> to vector<16x768xf32>
    %56 = arith.subf %41, %55 : vector<16x768xf32>
    %cst_30 = arith.constant 9.99999974E-6 : f32
    %57 = vector.broadcast %cst_30 : f32 to vector<16x1xf32>
    %58 = arith.addf %54, %57 : vector<16x1xf32>
    %59 = math.rsqrt %58 : vector<16x1xf32>
    %60 = vector.broadcast %59 : vector<16x1xf32> to vector<16x768xf32>
    %61 = arith.mulf %56, %60 : vector<16x768xf32>
    %62 = vector.broadcast %42 : vector<1x768xf32> to vector<16x768xf32>
    %63 = arith.mulf %61, %62 : vector<16x768xf32>
    %64 = vector.broadcast %43 : vector<1x768xf32> to vector<16x768xf32>
    %65 = arith.addf %63, %64 : vector<16x768xf32>
    %c0_31 = arith.constant 0 : index
    %c0_32 = arith.constant 0 : index
    %66 = vector.load %arg11[%c0_31, %c0_32] : memref<16x768xf32, #tpu.memory_space<vmem>>, vector<16x768xf32>
    tpu.vector_store %arg11[%c0_31, %c0_32], %65 {strides = array<i32>} : memref<16x768xf32, #tpu.memory_space<vmem>>, vector<16x768xf32>,
    return
  }
  func.func @transform_0(%arg0: i32) -> (i32, i32) {
    %c0_i32 = arith.constant 0 : i32
    %c0_i32_0 = arith.constant 0 : i32
    return %arg0, %c0_i32 : i32, i32
  }
  func.func @transform_1(%arg0: i32) -> (i32, i32) {
    %c0_i32 = arith.constant 0 : i32
    %c0_i32_0 = arith.constant 0 : i32
    return %arg0, %c0_i32 : i32, i32
  }
  func.func @transform_2(%arg0: i32) -> (i32, i32) {
    %c0_i32 = arith.constant 0 : i32
    %c0_i32_0 = arith.constant 0 : i32
    %c0_i32_1 = arith.constant 0 : i32
    return %c0_i32, %c0_i32_0 : i32, i32
  }
  func.func @transform_3(%arg0: i32) -> (i32, i32) {
    %c0_i32 = arith.constant 0 : i32
    %c0_i32_0 = arith.constant 0 : i32
    %c0_i32_1 = arith.constant 0 : i32
    return %c0_i32, %c0_i32_0 : i32, i32
  }
  func.func @transform_4(%arg0: i32) -> (i32, i32) {
    %c0_i32 = arith.constant 0 : i32
    %c0_i32_0 = arith.constant 0 : i32
    %c0_i32_1 = arith.constant 0 : i32
    return %c0_i32, %c0_i32_0 : i32, i32
  }
  func.func @transform_5(%arg0: i32) -> (i32, i32) {
    %c0_i32 = arith.constant 0 : i32
    %c0_i32_0 = arith.constant 0 : i32
    %c0_i32_1 = arith.constant 0 : i32
    return %c0_i32, %c0_i32_0 : i32, i32
  }
  func.func @transform_6(%arg0: i32) -> (i32, i32) {
    %c0_i32 = arith.constant 0 : i32
    %c0_i32_0 = arith.constant 0 : i32
    %c0_i32_1 = arith.constant 0 : i32
    return %c0_i32, %c0_i32_0 : i32, i32
  }
  func.func @transform_7(%arg0: i32) -> (i32, i32) {
    %c0_i32 = arith.constant 0 : i32
    %c0_i32_0 = arith.constant 0 : i32
    %c0_i32_1 = arith.constant 0 : i32
    return %c0_i32, %c0_i32_0 : i32, i32
  }
  func.func @transform_8(%arg0: i32) -> (i32, i32) {
    %c0_i32 = arith.constant 0 : i32
    %c0_i32_0 = arith.constant 0 : i32
    %c0_i32_1 = arith.constant 0 : i32
    return %c0_i32, %c0_i32_0 : i32, i32
  }
  func.func @transform_9(%arg0: i32) -> (i32, i32) {
    %c0_i32 = arith.constant 0 : i32
    %c0_i32_0 = arith.constant 0 : i32
    %c0_i32_1 = arith.constant 0 : i32
    return %c0_i32, %c0_i32_0 : i32, i32
  }
  func.func @transform_10(%arg0: i32) -> (i32, i32) {
    %c0_i32 = arith.constant 0 : i32
    %c0_i32_0 = arith.constant 0 : i32
    return %arg0, %c0_i32 : i32, i32
  }
}

module attributes {stable_mosaic.version = 11 : i64} {
  func.func @attn_ffn_kernel(%arg0: i32, %arg1: memref<16x768xf32, #tpu.memory_space<vmem>>, %arg2: memref<16x768xf32, #tpu.memory_space<vmem>>, %arg3: memref<1x768xf32, #tpu.memory_space<vmem>>, %arg4: memref<1x768xf32, #tpu.memory_space<vmem>>, %arg5: memref<768x1024xbf16, #tpu.memory_space<vmem>>, %arg6: memref<1x1024xf32, #tpu.memory_space<vmem>>, %arg7: memref<1024x768xbf16, #tpu.memory_space<vmem>>, %arg8: memref<1x768xf32, #tpu.memory_space<vmem>>, %arg9: memref<1x768xf32, #tpu.memory_space<vmem>>, %arg10: memref<1x768xf32, #tpu.memory_space<vmem>>, %arg11: memref<16x768xf32, #tpu.memory_space<vmem>>) attributes {dimension_semantics = [#tpu.dimension_semantics<parallel>], iteration_bounds = array<i64: 1>, scalar_prefetch = 0 : i64, scratch_operands = 0 : i64, tpu.core_type = #tpu.core_type<tc>, window_params = [{transform_indices = @transform_0, window_bounds = array<i64: 16, 768>}, {transform_indices = @transform_1, window_bounds = array<i64: 16, 768>}, {pipeline_mode = #tpu.pipeline_mode<synchronous>, transform_indices = @transform_2, window_bounds = array<i64: 1, 768>}, {pipeline_mode = #tpu.pipeline_mode<synchronous>, transform_indices = @transform_3, window_bounds = array<i64: 1, 768>}, {pipeline_mode = #tpu.pipeline_mode<synchronous>, transform_indices = @transform_4, window_bounds = array<i64: 768, 1024>}, {pipeline_mode = #tpu.pipeline_mode<synchronous>, transform_indices = @transform_5, window_bounds = array<i64: 1, 1024>}, {pipeline_mode = #tpu.pipeline_mode<synchronous>, transform_indices = @transform_6, window_bounds = array<i64: 1024, 768>}, {pipeline_mode = #tpu.pipeline_mode<synchronous>, transform_indices = @transform_7, window_bounds = array<i64: 1, 768>}, {pipeline_mode = #tpu.pipeline_mode<synchronous>, transform_indices = @transform_8, window_bounds = array<i64: 1, 768>}, {pipeline_mode = #tpu.pipeline_mode<synchronous>, transform_indices = @transform_9, window_bounds = array<i64: 1, 768>}, {transform_indices = @transform_10, window_bounds = array<i64: 16, 768>}]} {
    %c0 = arith.constant 0 : index
    %c0_0 = arith.constant 0 : index
    %0 = vector.load %arg1[%c0, %c0_0] : memref<16x768xf32, #tpu.memory_space<vmem>>, vector<16x768xf32>
    %c0_1 = arith.constant 0 : index
    %c0_2 = arith.constant 0 : index
    %1 = vector.load %arg2[%c0_1, %c0_2] : memref<16x768xf32, #tpu.memory_space<vmem>>, vector<16x768xf32>
    %2 = arith.addf %0, %1 : vector<16x768xf32>
    %c0_3 = arith.constant 0 : index
    %c0_4 = arith.constant 0 : index
    %3 = vector.load %arg3[%c0_3, %c0_4] : memref<1x768xf32, #tpu.memory_space<vmem>>, vector<1x768xf32>
    %c0_5 = arith.constant 0 : index
    %c0_6 = arith.constant 0 : index
    %4 = vector.load %arg4[%c0_5, %c0_6] : memref<1x768xf32, #tpu.memory_space<vmem>>, vector<1x768xf32>
    %cst = arith.constant dense<0.000000e+00> : vector<16xf32>
    %5 = vector.multi_reduction <add>, %2, %cst [1] : vector<16x768xf32> to vector<16xf32>
    %6 = vector.shape_cast %5 : vector<16xf32> to vector<16x1xf32>
    %cst_7 = arith.constant 7.680000e+02 : f32
    %7 = vector.broadcast %cst_7 : f32 to vector<16x1xf32>
    %8 = arith.divf %6, %7 : vector<16x1xf32>
    %9 = vector.broadcast %8 : vector<16x1xf32> to vector<16x768xf32>
    %10 = arith.subf %2, %9 : vector<16x768xf32>
    %11 = arith.mulf %10, %10 : vector<16x768xf32>
    %cst_8 = arith.constant dense<0.000000e+00> : vector<16xf32>
    %12 = vector.multi_reduction <add>, %11, %cst_8 [1] : vector<16x768xf32> to vector<16xf32>
    %13 = vector.shape_cast %12 : vector<16xf32> to vector<16x1xf32>
    %cst_9 = arith.constant 7.680000e+02 : f32
    %14 = vector.broadcast %cst_9 : f32 to vector<16x1xf32>
    %15 = arith.divf %13, %14 : vector<16x1xf32>
    %16 = vector.broadcast %8 : vector<16x1xf32> to vector<16x768xf32>
    %17 = arith.subf %2, %16 : vector<16x768xf32>
    %cst_10 = arith.constant 9.99999974E-6 : f32
    %18 = vector.broadcast %cst_10 : f32 to vector<16x1xf32>
    %19 = arith.addf %15, %18 : vector<16x1xf32>
    %20 = math.rsqrt %19 : vector<16x1xf32>
    %21 = vector.broadcast %20 : vector<16x1xf32> to vector<16x768xf32>
    %22 = arith.mulf %17, %21 : vector<16x768xf32>
    %23 = vector.broadcast %3 : vector<1x768xf32> to vector<16x768xf32>
    %24 = arith.mulf %22, %23 : vector<16x768xf32>
    %25 = vector.broadcast %4 : vector<1x768xf32> to vector<16x768xf32>
    %26 = arith.addf %24, %25 : vector<16x768xf32>
    %27 = arith.truncf %26 : vector<16x768xf32> to vector<16x768xbf16>
    %c0_11 = arith.constant 0 : index
    %c0_12 = arith.constant 0 : index
    %28 = vector.load %arg5[%c0_11, %c0_12] : memref<768x1024xbf16, #tpu.memory_space<vmem>>, vector<768x1024xbf16>
    %cst_13 = arith.constant dense<0.000000e+00> : vector<16x1024xf32>
    %29 = tpu.matmul %27, %28, %cst_13 {dimension_numbers = #tpu.dot_dimension_numbers<[1], [0], [0], [1], [0, 0, 1, 1], [], []>} : vector<16x768xbf16>, vector<768x1024xbf16>, vector<16x1024xf32> -> vector<16x1024xf32>
    %c0_14 = arith.constant 0 : index
    %c0_15 = arith.constant 0 : index
    %30 = vector.load %arg6[%c0_14, %c0_15] : memref<1x1024xf32, #tpu.memory_space<vmem>>, vector<1x1024xf32>
    %31 = vector.broadcast %30 : vector<1x1024xf32> to vector<16x1024xf32>
    %32 = arith.addf %29, %31 : vector<16x1024xf32>
    %cst_16 = arith.constant 0.000000e+00 : f32
    %33 = vector.broadcast %cst_16 : f32 to vector<16x1024xf32>
    %34 = arith.maximumf %32, %33 : vector<16x1024xf32>
    %35 = arith.truncf %34 : vector<16x1024xf32> to vector<16x1024xbf16>
    %c0_17 = arith.constant 0 : index
    %c0_18 = arith.constant 0 : index
    %36 = vector.load %arg7[%c0_17, %c0_18] : memref<1024x768xbf16, #tpu.memory_space<vmem>>, vector<1024x768xbf16>
    %cst_19 = arith.constant dense<0.000000e+00> : vector<16x768xf32>
    %37 = tpu.matmul %35, %36, %cst_19 {dimension_numbers = #tpu.dot_dimension_numbers<[1], [0], [0], [1], [0, 0, 1, 1], [], []>} : vector<16x1024xbf16>, vector<1024x768xbf16>, vector<16x768xf32> -> vector<16x768xf32>
    %c0_20 = arith.constant 0 : index
    %c0_21 = arith.constant 0 : index
    %38 = vector.load %arg8[%c0_20, %c0_21] : memref<1x768xf32, #tpu.memory_space<vmem>>, vector<1x768xf32>
    %39 = vector.broadcast %38 : vector<1x768xf32> to vector<16x768xf32>
    %40 = arith.addf %37, %39 : vector<16x768xf32>
    %41 = arith.addf %26, %40 : vector<16x768xf32>
    %c0_22 = arith.constant 0 : index
    %c0_23 = arith.constant 0 : index
    %42 = vector.load %arg9[%c0_22, %c0_23] : memref<1x768xf32, #tpu.memory_space<vmem>>, vector<1x768xf32>
    %c0_24 = arith.constant 0 : index
    %c0_25 = arith.constant 0 : index
    %43 = vector.load %arg10[%c0_24, %c0_25] : memref<1x768xf32, #tpu.memory_space<vmem>>, vector<1x768xf32>
    %cst_26 = arith.constant dense<0.000000e+00> : vector<16xf32>
    %44 = vector.multi_reduction <add>, %41, %cst_26 [1] : vector<16x768xf32> to vector<16xf32>
    %45 = vector.shape_cast %44 : vector<16xf32> to vector<16x1xf32>
    %cst_27 = arith.constant 7.680000e+02 : f32
    %46 = vector.broadcast %cst_27 : f32 to vector<16x1xf32>
    %47 = arith.divf %45, %46 : vector<16x1xf32>
    %48 = vector.broadcast %47 : vector<16x1xf32> to vector<16x768xf32>
    %49 = arith.subf %41, %48 : vector<16x768xf32>
    %50 = arith.mulf %49, %49 : vector<16x768xf32>
    %cst_28 = arith.constant dense<0.000000e+00> : vector<16xf32>
    %51 = vector.multi_reduction <add>, %50, %cst_28 [1] : vector<16x768xf32> to vector<16xf32>
    %52 = vector.shape_cast %51 : vector<16xf32> to vector<16x1xf32>
    %cst_29 = arith.constant 7.680000e+02 : f32
    %53 = vector.broadcast %cst_29 : f32 to vector<16x1xf32>
    %54 = arith.divf %52, %53 : vector<16x1xf32>
    %55 = vector.broadcast %47 : vector<16x1xf32> to vector<16x768xf32>
    %56 = arith.subf %41, %55 : vector<16x768xf32>
    %cst_30 = arith.constant 9.99999974E-6 : f32
    %57 = vector.broadcast %cst_30 : f32 to vector<16x1xf32>
    %58 = arith.addf %54, %57 : vector<16x1xf32>
    %59 = math.rsqrt %58 : vector<16x1xf32>
    %60 = vector.broadcast %59 : vector<16x1xf32> to vector<16x768xf32>
    %61 = arith.mulf %56, %60 : vector<16x768xf32>
    %62 = vector.broadcast %42 : vector<1x768xf32> to vector<16x768xf32>
    %63 = arith.mulf %61, %62 : vector<16x768xf32>
    %64 = vector.broadcast %43 : vector<1x768xf32> to vector<16x768xf32>
    %65 = arith.addf %63, %64 : vector<16x768xf32>
    %c0_31 = arith.constant 0 : index
    %c0_32 = arith.constant 0 : index
    %66 = vector.load %arg11[%c0_31, %c0_32] : memref<16x768xf32, #tpu.memory_space<vmem>>, vector<16x768xf32>
    tpu.vector_store %arg11[%c0_31, %c0_32], %65 {strides = array<i32>} : memref<16x768xf32, #tpu.memory_space<vmem>>, vector<16x768xf32>,
    return
  }
  func.func @transform_0(%arg0: i32) -> (i32, i32) {
    %c0_i32 = arith.constant 0 : i32
    %c0_i32_0 = arith.constant 0 : i32
    return %arg0, %c0_i32 : i32, i32
  }
  func.func @transform_1(%arg0: i32) -> (i32, i32) {
    %c0_i32 = arith.constant 0 : i32
    %c0_i32_0 = arith.constant 0 : i32
    return %arg0, %c0_i32 : i32, i32
  }
  func.func @transform_2(%arg0: i32) -> (i32, i32) {
    %c0_i32 = arith.constant 0 : i32
    %c0_i32_0 = arith.constant 0 : i32
    %c0_i32_1 = arith.constant 0 : i32
    return %c0_i32, %c0_i32_0 : i32, i32
  }
  func.func @transform_3(%arg0: i32) -> (i32, i32) {
    %c0_i32 = arith.constant 0 : i32
    %c0_i32_0 = arith.constant 0 : i32
    %c0_i32_1 = arith.constant 0 : i32
    return %c0_i32, %c0_i32_0 : i32, i32
  }
  func.func @transform_4(%arg0: i32) -> (i32, i32) {
    %c0_i32 = arith.constant 0 : i32
    %c0_i32_0 = arith.constant 0 : i32
    %c0_i32_1 = arith.constant 0 : i32
    return %c0_i32, %c0_i32_0 : i32, i32
  }
  func.func @transform_5(%arg0: i32) -> (i32, i32) {
    %c0_i32 = arith.constant 0 : i32
    %c0_i32_0 = arith.constant 0 : i32
    %c0_i32_1 = arith.constant 0 : i32
    return %c0_i32, %c0_i32_0 : i32, i32
  }
  func.func @transform_6(%arg0: i32) -> (i32, i32) {
    %c0_i32 = arith.constant 0 : i32
    %c0_i32_0 = arith.constant 0 : i32
    %c0_i32_1 = arith.constant 0 : i32
    return %c0_i32, %c0_i32_0 : i32, i32
  }
  func.func @transform_7(%arg0: i32) -> (i32, i32) {
    %c0_i32 = arith.constant 0 : i32
    %c0_i32_0 = arith.constant 0 : i32
    %c0_i32_1 = arith.constant 0 : i32
    return %c0_i32, %c0_i32_0 : i32, i32
  }
  func.func @transform_8(%arg0: i32) -> (i32, i32) {
    %c0_i32 = arith.constant 0 : i32
    %c0_i32_0 = arith.constant 0 : i32
    %c0_i32_1 = arith.constant 0 : i32
    return %c0_i32, %c0_i32_0 : i32, i32
  }
  func.func @transform_9(%arg0: i32) -> (i32, i32) {
    %c0_i32 = arith.constant 0 : i32
    %c0_i32_0 = arith.constant 0 : i32
    %c0_i32_1 = arith.constant 0 : i32
    return %c0_i32, %c0_i32_0 : i32, i32
  }
  func.func @transform_10(%arg0: i32) -> (i32, i32) {
    %c0_i32 = arith.constant 0 : i32
    %c0_i32_0 = arith.constant 0 : i32
    return %arg0, %c0_i32 : i32, i32
  }
}

</mosaic_0001>

<llo_original>
// kernel: decoder_forward.6
$region0: #{decoder_forward.6}
  #allocation0 [shape = 'u32[]', space=smem, size = 0x4, offset = 0x4, fixed_abs, tag = 'smem constant byte address 0x4 - core index']
  #allocation1 [shape = 'u32[144,128]{1,0:T(1,128)}', space=vmem, size = 0x12000, scoped, tag = 'internal scratch']
  %s0 = inlined_call_operand.vmem [shape: f32[16,768], index: 0, kind: input, shape index: {}]
  %s1 = inlined_call_operand.vmem [shape: f32[16,768], index: 1, kind: input, shape index: {}]
  %s2 = inlined_call_operand.vmem [shape: f32[1,768], index: 2, kind: input, shape index: {}]
  %s3 = inlined_call_operand.vmem [shape: f32[1,768], index: 3, kind: input, shape index: {}]
  %s4 = inlined_call_operand.vmem [shape: f32[16,768], index: 4, kind: output, shape index: {}]
  %s5 = sld [smem:[#allocation0]]
  $region26: #{decoder_forward.6} parent=0
    _
  %s7 = ssub.s32 1, %s5
  %s8 = scalar_select 0, %s7, %s5
  // Predicated region
  $region2: #{decoder_forward.6} parent=0 // pred_check
    _
  $region3: #{decoder_forward.6} parent=0 // pred_check_branch
    %10 = sbr.rel (0) target = $region5
  $region4: #{decoder_forward.6} parent=0 // pred_region
    _
  $region5: #{decoder_forward.6} parent=0 // pred_fallthru
    _
  // Predicated region
  $region6: #{decoder_forward.6} parent=0 // pred_check
    _
  $region7: #{decoder_forward.6} parent=0 // pred_check_branch
    %12 = sbr.rel (0) target = $region9
  $region8: #{decoder_forward.6} parent=0 // pred_region
    _
  $region9: #{decoder_forward.6} parent=0 // pred_fallthru
    _
  // Predicated region
  $region10: #{decoder_forward.6} parent=0 // pred_check
    _
  $region11: #{decoder_forward.6} parent=0 // pred_check_branch
    %14 = sbr.rel (0) target = $region13
  $region12: #{decoder_forward.6} parent=0 // pred_region
    _
  $region13: #{decoder_forward.6} parent=0 // pred_fallthru
    _
  // Predicated region
  $region14: #{decoder_forward.6} parent=0 // pred_check
    _
  $region15: #{decoder_forward.6} parent=0 // pred_check_branch
    %16 = sbr.rel (0) target = $region17
  $region16: #{decoder_forward.6} parent=0 // pred_region
    _
  $region17: #{decoder_forward.6} parent=0 // pred_fallthru
    _
  %v17 = vld [vmem:[%s0] sm:$0xff]
  %v18 = vld [vmem:[%s0 + $0x8] sm:$0xff]
  %v19 = vld [vmem:[%s0 + $0x10] sm:$0xff]
  %v20 = vld [vmem:[%s0 + $0x18] sm:$0xff]
  %v21 = vld [vmem:[%s0 + $0x20] sm:$0xff]
  %v22 = vld [vmem:[%s0 + $0x28] sm:$0xff]
  %v23 = vld [vmem:[%s0 + $0x30] sm:$0xff]
  %v24 = vld [vmem:[%s0 + $0x38] sm:$0xff]
  %v25 = vld [vmem:[%s0 + $0x40] sm:$0xff]
  %v26 = vld [vmem:[%s0 + $0x48] sm:$0xff]
  %v27 = vld [vmem:[%s0 + $0x50] sm:$0xff]
  %v28 = vld [vmem:[%s0 + $0x58] sm:$0xff]
  %v29 = vld [vmem:[%s1] sm:$0xff]
  %v30 = vld [vmem:[%s1 + $0x8] sm:$0xff]
  %v31 = vld [vmem:[%s1 + $0x10] sm:$0xff]
  %v32 = vld [vmem:[%s1 + $0x18] sm:$0xff]
  %v33 = vld [vmem:[%s1 + $0x20] sm:$0xff]
  %v34 = vld [vmem:[%s1 + $0x28] sm:$0xff]
  %v35 = vld [vmem:[%s1 + $0x30] sm:$0xff]
  %v36 = vld [vmem:[%s1 + $0x38] sm:$0xff]
  %v37 = vld [vmem:[%s1 + $0x40] sm:$0xff]
  %v38 = vld [vmem:[%s1 + $0x48] sm:$0xff]
  %v39 = vld [vmem:[%s1 + $0x50] sm:$0xff]
  %v40 = vld [vmem:[%s1 + $0x58] sm:$0xff]
  %v41 = vadd.f32 %v17, %v29
  %v42 = vadd.f32 %v18, %v30
  %v43 = vadd.f32 %v19, %v31
  %v44 = vadd.f32 %v20, %v32
  %v45 = vadd.f32 %v21, %v33
  %v46 = vadd.f32 %v22, %v34
  %v47 = vadd.f32 %v23, %v35
  %v48 = vadd.f32 %v24, %v36
  %v49 = vadd.f32 %v25, %v37
  %v50 = vadd.f32 %v26, %v38
  %v51 = vadd.f32 %v27, %v39
  %v52 = vadd.f32 %v28, %v40
  %v53 = vld [vmem:[%s2] sm:$0x3f]
  %v54 = vld [vmem:[%s3] sm:$0x3f]
  %v55 = vadd.f32 %v41, %v42
  %v56 = vadd.f32 %v55, %v43
  %v57 = vadd.f32 %v56, %v44
  %v58 = vadd.f32 %v57, %v45
  %v59 = vadd.f32 %v58, %v46
  %60 = vadd.xlane.f32.xlu0 %v59
  %v61 = vpop.xlane.xlu0 %60
  %v62 = vadd.f32 %v47, %v48
  %v63 = vadd.f32 %v62, %v49
  %v64 = vadd.f32 %v63, %v50
  %v65 = vadd.f32 %v64, %v51
  %v66 = vadd.f32 %v65, %v52
  %67 = vadd.xlane.f32.xlu0 %v66
  %v68 = vpop.xlane.xlu0 %67
  %v69 = vrcp.pop 768.0
  %v70 = vmul.f32 %v61, %v69
  %v71 = vmul.f32 %v68, %v69
  %v72 = vsub.f32 %v41, %v70
  %v73 = vsub.f32 %v42, %v70
  %v74 = vsub.f32 %v43, %v70
  %v75 = vsub.f32 %v44, %v70
  %v76 = vsub.f32 %v45, %v70
  %v77 = vsub.f32 %v46, %v70
  %v78 = vsub.f32 %v47, %v71
  %v79 = vsub.f32 %v48, %v71
  %v80 = vsub.f32 %v49, %v71
  %v81 = vsub.f32 %v50, %v71
  %v82 = vsub.f32 %v51, %v71
  %v83 = vsub.f32 %v52, %v71
  %v84 = vmul.f32 %v72, %v72
  %v85 = vmul.f32 %v73, %v73
  %v86 = vmul.f32 %v74, %v74
  %v87 = vmul.f32 %v75, %v75
  %v88 = vmul.f32 %v76, %v76
  %v89 = vmul.f32 %v77, %v77
  %v90 = vmul.f32 %v78, %v78
  %v91 = vmul.f32 %v79, %v79
  %v92 = vmul.f32 %v80, %v80
  %v93 = vmul.f32 %v81, %v81
  %v94 = vmul.f32 %v82, %v82
  %v95 = vmul.f32 %v83, %v83
  %v96 = vadd.f32 %v84, %v85
  %v97 = vadd.f32 %v96, %v86
  %v98 = vadd.f32 %v97, %v87
  %v99 = vadd.f32 %v98, %v88
  %v100 = vadd.f32 %v99, %v89
  %101 = vadd.xlane.f32.xlu0 %v100
  %v102 = vpop.xlane.xlu0 %101
  %v103 = vadd.f32 %v90, %v91
  %v104 = vadd.f32 %v103, %v92
  %v105 = vadd.f32 %v104, %v93
  %v106 = vadd.f32 %v105, %v94
  %v107 = vadd.f32 %v106, %v95
  %108 = vadd.xlane.f32.xlu0 %v107
  %v109 = vpop.xlane.xlu0 %108
  %v110 = vmul.f32 %v102, %v69
  %v111 = vmul.f32 %v109, %v69
  %v112 = vadd.f32 %v110, 1e-05
  %v113 = vadd.f32 %v111, 1e-05
  %v114 = vrsqrt.pop %v112
  %v115 = vrsqrt.pop %v113
  %v116 = vmul.f32 %v72, %v114
  %v117 = vmul.f32 %v73, %v114
  %v118 = vmul.f32 %v74, %v114
  %v119 = vmul.f32 %v75, %v114
  %v120 = vmul.f32 %v76, %v114
  %v121 = vmul.f32 %v77, %v114
  %v122 = vmul.f32 %v78, %v115
  %v123 = vmul.f32 %v79, %v115
  %v124 = vmul.f32 %v80, %v115
  %v125 = vmul.f32 %v81, %v115
  %v126 = vmul.f32 %v82, %v115
  %v127 = vmul.f32 %v83, %v115
  %v129 = vlaneseq
  %v130 = vshrl.u32 %v129, 7
  %v131 = vsub.s32 0, %v130
  %v132 = vrot.slane %v53, %v131
  %v133 = vlaneseq
  %v134 = vshrl.u32 %v133, 7
  %v135 = vsub.s32 1, %v134
  %v136 = vrot.slane %v53, %v135
  %v137 = vlaneseq
  %v138 = vshrl.u32 %v137, 7
  %v139 = vsub.s32 2, %v138
  %v140 = vrot.slane %v53, %v139
  %v141 = vlaneseq
  %v142 = vshrl.u32 %v141, 7
  %v143 = vsub.s32 3, %v142
  %v144 = vrot.slane %v53, %v143
  %v145 = vlaneseq
  %v146 = vshrl.u32 %v145, 7
  %v147 = vsub.s32 4, %v146
  %v148 = vrot.slane %v53, %v147
  %v149 = vlaneseq
  %v150 = vshrl.u32 %v149, 7
  %v151 = vsub.s32 5, %v150
  %v152 = vrot.slane %v53, %v151
  %v159 = vmul.f32 %v116, %v132
  %v160 = vmul.f32 %v117, %v136
  %v161 = vmul.f32 %v118, %v140
  %v162 = vmul.f32 %v119, %v144
  %v163 = vmul.f32 %v120, %v148
  %v164 = vmul.f32 %v121, %v152
  %v165 = vmul.f32 %v122, %v132
  %v166 = vmul.f32 %v123, %v136
  %v167 = vmul.f32 %v124, %v140
  %v168 = vmul.f32 %v125, %v144
  %v169 = vmul.f32 %v126, %v148
  %v170 = vmul.f32 %v127, %v152
  %v172 = vlaneseq
  %v173 = vshrl.u32 %v172, 7
  %v174 = vsub.s32 0, %v173
  %v175 = vrot.slane %v54, %v174
  %v176 = vlaneseq
  %v177 = vshrl.u32 %v176, 7
  %v178 = vsub.s32 1, %v177
  %v179 = vrot.slane %v54, %v178
  %v180 = vlaneseq
  %v181 = vshrl.u32 %v180, 7
  %v182 = vsub.s32 2, %v181
  %v183 = vrot.slane %v54, %v182
  %v184 = vlaneseq
  %v185 = vshrl.u32 %v184, 7
  %v186 = vsub.s32 3, %v185
  %v187 = vrot.slane %v54, %v186
  %v188 = vlaneseq
  %v189 = vshrl.u32 %v188, 7
  %v190 = vsub.s32 4, %v189
  %v191 = vrot.slane %v54, %v190
  %v192 = vlaneseq
  %v193 = vshrl.u32 %v192, 7
  %v194 = vsub.s32 5, %v193
  %v195 = vrot.slane %v54, %v194
  %v202 = vadd.f32 %v159, %v175
  %v203 = vadd.f32 %v160, %v179
  %v204 = vadd.f32 %v161, %v183
  %v205 = vadd.f32 %v162, %v187
  %v206 = vadd.f32 %v163, %v191
  %v207 = vadd.f32 %v164, %v195
  %v208 = vadd.f32 %v165, %v175
  %v209 = vadd.f32 %v166, %v179
  %v210 = vadd.f32 %v167, %v183
  %v211 = vadd.f32 %v168, %v187
  %v212 = vadd.f32 %v169, %v191
  %v213 = vadd.f32 %v170, %v195
  %214 = vst [vmem:[%s4] sm:$0xff] %v202
  %215 = vst [vmem:[%s4 + $0x8] sm:$0xff] %v203
  %216 = vst [vmem:[%s4 + $0x10] sm:$0xff] %v204
  %217 = vst [vmem:[%s4 + $0x18] sm:$0xff] %v205
  %218 = vst [vmem:[%s4 + $0x20] sm:$0xff] %v206
  %219 = vst [vmem:[%s4 + $0x28] sm:$0xff] %v207
  %220 = vst [vmem:[%s4 + $0x30] sm:$0xff] %v208
  %221 = vst [vmem:[%s4 + $0x38] sm:$0xff] %v209
  %222 = vst [vmem:[%s4 + $0x40] sm:$0xff] %v210
  %223 = vst [vmem:[%s4 + $0x48] sm:$0xff] %v211
  %224 = vst [vmem:[%s4 + $0x50] sm:$0xff] %v212
  %225 = vst [vmem:[%s4 + $0x58] sm:$0xff] %v213
  // Predicated region
  $region18: #{decoder_forward.6} parent=0 // pred_check
    _
  $region19: #{decoder_forward.6} parent=0 // pred_check_branch
    %227 = sbr.rel (0) target = $region21
  $region20: #{decoder_forward.6} parent=0 // pred_region
    _
  $region21: #{decoder_forward.6} parent=0 // pred_fallthru
    _
  // Predicated region
  $region22: #{decoder_forward.6} parent=0 // pred_check
    _
  $region23: #{decoder_forward.6} parent=0 // pred_check_branch
    %229 = sbr.rel (0) target = $region25
  $region24: #{decoder_forward.6} parent=0 // pred_region
    _
  $region25: #{decoder_forward.6} parent=0 // pred_fallthru
    _

// kernel: decoder_forward.7
$region0: #{decoder_forward.7}
  #allocation0 [shape = 'u32[]', space=smem, size = 0x4, offset = 0x4, fixed_abs, tag = 'smem constant byte address 0x4 - core index']
  #allocation1 [shape = 'u32[144,128]{1,0:T(1,128)}', space=vmem, size = 0x12000, scoped, tag = 'internal scratch']
  %s0 = inlined_call_operand.vmem [shape: f32[16,768], index: 0, kind: input, shape index: {}]
  %s1 = inlined_call_operand.vmem [shape: f32[16,768], index: 1, kind: input, shape index: {}]
  %s2 = inlined_call_operand.vmem [shape: f32[1,768], index: 2, kind: input, shape index: {}]
  %s3 = inlined_call_operand.vmem [shape: f32[1,768], index: 3, kind: input, shape index: {}]
  %s4 = inlined_call_operand.vmem [shape: bf16[768,1024], index: 4, kind: input, shape index: {}]
  %s5 = inlined_call_operand.vmem [shape: f32[1,1024], index: 5, kind: input, shape index: {}]
  %s6 = inlined_call_operand.vmem [shape: bf16[1024,768], index: 6, kind: input, shape index: {}]
  %s7 = inlined_call_operand.vmem [shape: f32[1,768], index: 7, kind: input, shape index: {}]
  %s8 = inlined_call_operand.vmem [shape: f32[1,768], index: 8, kind: input, shape index: {}]
  %s9 = inlined_call_operand.vmem [shape: f32[1,768], index: 9, kind: input, shape index: {}]
  %s10 = inlined_call_operand.vmem [shape: f32[16,768], index: 10, kind: output, shape index: {}]
  %s11 = sld [smem:[#allocation0]]
  $region50: #{decoder_forward.7} parent=0
    _
  %s13 = ssub.s32 1, %s11
  %s14 = scalar_select 0, %s13, %s11
  // Predicated region
  $region2: #{decoder_forward.7} parent=0 // pred_check
    _
  $region3: #{decoder_forward.7} parent=0 // pred_check_branch
    %16 = sbr.rel (0) target = $region5
  $region4: #{decoder_forward.7} parent=0 // pred_region
    _
  $region5: #{decoder_forward.7} parent=0 // pred_fallthru
    _
  // Predicated region
  $region6: #{decoder_forward.7} parent=0 // pred_check
    _
  $region7: #{decoder_forward.7} parent=0 // pred_check_branch
    %18 = sbr.rel (0) target = $region9
  $region8: #{decoder_forward.7} parent=0 // pred_region
    _
  $region9: #{decoder_forward.7} parent=0 // pred_fallthru
    _
  // Predicated region
  $region10: #{decoder_forward.7} parent=0 // pred_check
    _
  $region11: #{decoder_forward.7} parent=0 // pred_check_branch
    %20 = sbr.rel (0) target = $region13
  $region12: #{decoder_forward.7} parent=0 // pred_region
    _
  $region13: #{decoder_forward.7} parent=0 // pred_fallthru
    _
  // Predicated region
  $region14: #{decoder_forward.7} parent=0 // pred_check
    _
  $region15: #{decoder_forward.7} parent=0 // pred_check_branch
    %22 = sbr.rel (0) target = $region17
  $region16: #{decoder_forward.7} parent=0 // pred_region
    _
  $region17: #{decoder_forward.7} parent=0 // pred_fallthru
    _
  // Predicated region
  $region18: #{decoder_forward.7} parent=0 // pred_check
    _
  $region19: #{decoder_forward.7} parent=0 // pred_check_branch
    %24 = sbr.rel (0) target = $region21
  $region20: #{decoder_forward.7} parent=0 // pred_region
    _
  $region21: #{decoder_forward.7} parent=0 // pred_fallthru
    _
  // Predicated region
  $region22: #{decoder_forward.7} parent=0 // pred_check
    _
  $region23: #{decoder_forward.7} parent=0 // pred_check_branch
    %26 = sbr.rel (0) target = $region25
  $region24: #{decoder_forward.7} parent=0 // pred_region
    _
  $region25: #{decoder_forward.7} parent=0 // pred_fallthru
    _
  // Predicated region
  $region26: #{decoder_forward.7} parent=0 // pred_check
    _
  $region27: #{decoder_forward.7} parent=0 // pred_check_branch
    %28 = sbr.rel (0) target = $region29
  $region28: #{decoder_forward.7} parent=0 // pred_region
    _
  $region29: #{decoder_forward.7} parent=0 // pred_fallthru
    _
  // Predicated region
  $region30: #{decoder_forward.7} parent=0 // pred_check
    _
  $region31: #{decoder_forward.7} parent=0 // pred_check_branch
    %30 = sbr.rel (0) target = $region33
  $region32: #{decoder_forward.7} parent=0 // pred_region
    _
  $region33: #{decoder_forward.7} parent=0 // pred_fallthru
    _
  // Predicated region
  $region34: #{decoder_forward.7} parent=0 // pred_check
    _
  $region35: #{decoder_forward.7} parent=0 // pred_check_branch
    %32 = sbr.rel (0) target = $region37
  $region36: #{decoder_forward.7} parent=0 // pred_region
    _
  $region37: #{decoder_forward.7} parent=0 // pred_fallthru
    _
  // Predicated region
  $region38: #{decoder_forward.7} parent=0 // pred_check
    _
  $region39: #{decoder_forward.7} parent=0 // pred_check_branch
    %34 = sbr.rel (0) target = $region41
  $region40: #{decoder_forward.7} parent=0 // pred_region
    _
  $region41: #{decoder_forward.7} parent=0 // pred_fallthru
    _
  %v35 = vld [vmem:[%s0] sm:$0xff]
  %v36 = vld [vmem:[%s0 + $0x8] sm:$0xff]
  %v37 = vld [vmem:[%s0 + $0x10] sm:$0xff]
  %v38 = vld [vmem:[%s0 + $0x18] sm:$0xff]
  %v39 = vld [vmem:[%s0 + $0x20] sm:$0xff]
  %v40 = vld [vmem:[%s0 + $0x28] sm:$0xff]
  %v41 = vld [vmem:[%s0 + $0x30] sm:$0xff]
  %v42 = vld [vmem:[%s0 + $0x38] sm:$0xff]
  %v43 = vld [vmem:[%s0 + $0x40] sm:$0xff]
  %v44 = vld [vmem:[%s0 + $0x48] sm:$0xff]
  %v45 = vld [vmem:[%s0 + $0x50] sm:$0xff]
  %v46 = vld [vmem:[%s0 + $0x58] sm:$0xff]
  %v47 = vld [vmem:[%s1] sm:$0xff]
  %v48 = vld [vmem:[%s1 + $0x8] sm:$0xff]
  %v49 = vld [vmem:[%s1 + $0x10] sm:$0xff]
  %v50 = vld [vmem:[%s1 + $0x18] sm:$0xff]
  %v51 = vld [vmem:[%s1 + $0x20] sm:$0xff]
  %v52 = vld [vmem:[%s1 + $0x28] sm:$0xff]
  %v53 = vld [vmem:[%s1 + $0x30] sm:$0xff]
  %v54 = vld [vmem:[%s1 + $0x38] sm:$0xff]
  %v55 = vld [vmem:[%s1 + $0x40] sm:$0xff]
  %v56 = vld [vmem:[%s1 + $0x48] sm:$0xff]
  %v57 = vld [vmem:[%s1 + $0x50] sm:$0xff]
  %v58 = vld [vmem:[%s1 + $0x58] sm:$0xff]
  %v59 = vadd.f32 %v35, %v47
  %v60 = vadd.f32 %v36, %v48
  %v61 = vadd.f32 %v37, %v49
  %v62 = vadd.f32 %v38, %v50
  %v63 = vadd.f32 %v39, %v51
  %v64 = vadd.f32 %v40, %v52
  %v65 = vadd.f32 %v41, %v53
  %v66 = vadd.f32 %v42, %v54
  %v67 = vadd.f32 %v43, %v55
  %v68 = vadd.f32 %v44, %v56
  %v69 = vadd.f32 %v45, %v57
  %v70 = vadd.f32 %v46, %v58
  %v71 = vld [vmem:[%s2] sm:$0x3f]
  %v72 = vld [vmem:[%s3] sm:$0x3f]
  %v73 = vadd.f32 %v59, %v60
  %v74 = vadd.f32 %v73, %v61
  %v75 = vadd.f32 %v74, %v62
  %v76 = vadd.f32 %v75, %v63
  %v77 = vadd.f32 %v76, %v64
  %78 = vadd.xlane.f32.xlu0 %v77
  %v79 = vpop.xlane.xlu0 %78
  %v80 = vadd.f32 %v65, %v66
  %v81 = vadd.f32 %v80, %v67
  %v82 = vadd.f32 %v81, %v68
  %v83 = vadd.f32 %v82, %v69
  %v84 = vadd.f32 %v83, %v70
  %85 = vadd.xlane.f32.xlu0 %v84
  %v86 = vpop.xlane.xlu0 %85
  %v87 = vrcp.pop 768.0
  %v88 = vmul.f32 %v79, %v87
  %v89 = vmul.f32 %v86, %v87
  %v90 = vsub.f32 %v59, %v88
  %v91 = vsub.f32 %v60, %v88
  %v92 = vsub.f32 %v61, %v88
  %v93 = vsub.f32 %v62, %v88
  %v94 = vsub.f32 %v63, %v88
  %v95 = vsub.f32 %v64, %v88
  %v96 = vsub.f32 %v65, %v89
  %v97 = vsub.f32 %v66, %v89
  %v98 = vsub.f32 %v67, %v89
  %v99 = vsub.f32 %v68, %v89
  %v100 = vsub.f32 %v69, %v89
  %v101 = vsub.f32 %v70, %v89
  %v102 = vmul.f32 %v90, %v90
  %v103 = vmul.f32 %v91, %v91
  %v104 = vmul.f32 %v92, %v92
  %v105 = vmul.f32 %v93, %v93
  %v106 = vmul.f32 %v94, %v94
  %v107 = vmul.f32 %v95, %v95
  %v108 = vmul.f32 %v96, %v96
  %v109 = vmul.f32 %v97, %v97
  %v110 = vmul.f32 %v98, %v98
  %v111 = vmul.f32 %v99, %v99
  %v112 = vmul.f32 %v100, %v100
  %v113 = vmul.f32 %v101, %v101
  %v114 = vadd.f32 %v102, %v103
  %v115 = vadd.f32 %v114, %v104
  %v116 = vadd.f32 %v115, %v105
  %v117 = vadd.f32 %v116, %v106
  %v118 = vadd.f32 %v117, %v107
  %119 = vadd.xlane.f32.xlu0 %v118
  %v120 = vpop.xlane.xlu0 %119
  %v121 = vadd.f32 %v108, %v109
  %v122 = vadd.f32 %v121, %v110
  %v123 = vadd.f32 %v122, %v111
  %v124 = vadd.f32 %v123, %v112
  %v125 = vadd.f32 %v124, %v113
  %126 = vadd.xlane.f32.xlu0 %v125
  %v127 = vpop.xlane.xlu0 %126
  %v128 = vmul.f32 %v120, %v87
  %v129 = vmul.f32 %v127, %v87
  %v130 = vadd.f32 %v128, 1e-05
  %v131 = vadd.f32 %v129, 1e-05
  %v132 = vrsqrt.pop %v130
  %v133 = vrsqrt.pop %v131
  %v134 = vmul.f32 %v90, %v132
  %v135 = vmul.f32 %v91, %v132
  %v136 = vmul.f32 %v92, %v132
  %v137 = vmul.f32 %v93, %v132
  %v138 = vmul.f32 %v94, %v132
  %v139 = vmul.f32 %v95, %v132
  %v140 = vmul.f32 %v96, %v133
  %v141 = vmul.f32 %v97, %v133
  %v142 = vmul.f32 %v98, %v133
  %v143 = vmul.f32 %v99, %v133
  %v144 = vmul.f32 %v100, %v133
  %v145 = vmul.f32 %v101, %v133
  %v147 = vlaneseq
  %v148 = vshrl.u32 %v147, 7
  %v149 = vsub.s32 0, %v148
  %v150 = vrot.slane %v71, %v149
  %v151 = vlaneseq
  %v152 = vshrl.u32 %v151, 7
  %v153 = vsub.s32 1, %v152
  %v154 = vrot.slane %v71, %v153
  %v155 = vlaneseq
  %v156 = vshrl.u32 %v155, 7
  %v157 = vsub.s32 2, %v156
  %v158 = vrot.slane %v71, %v157
  %v159 = vlaneseq
  %v160 = vshrl.u32 %v159, 7
  %v161 = vsub.s32 3, %v160
  %v162 = vrot.slane %v71, %v161
  %v163 = vlaneseq
  %v164 = vshrl.u32 %v163, 7
  %v165 = vsub.s32 4, %v164
  %v166 = vrot.slane %v71, %v165
  %v167 = vlaneseq
  %v168 = vshrl.u32 %v167, 7
  %v169 = vsub.s32 5, %v168
  %v170 = vrot.slane %v71, %v169
  %v177 = vmul.f32 %v134, %v150
  %v178 = vmul.f32 %v135, %v154
  %v179 = vmul.f32 %v136, %v158
  %v180 = vmul.f32 %v137, %v162
  %v181 = vmul.f32 %v138, %v166
  %v182 = vmul.f32 %v139, %v170
  %v183 = vmul.f32 %v140, %v150
  %v184 = vmul.f32 %v141, %v154
  %v185 = vmul.f32 %v142, %v158
  %v186 = vmul.f32 %v143, %v162
  %v187 = vmul.f32 %v144, %v166
  %v188 = vmul.f32 %v145, %v170
  %v190 = vlaneseq
  %v191 = vshrl.u32 %v190, 7
  %v192 = vsub.s32 0, %v191
  %v193 = vrot.slane %v72, %v192
  %v194 = vlaneseq
  %v195 = vshrl.u32 %v194, 7
  %v196 = vsub.s32 1, %v195
  %v197 = vrot.slane %v72, %v196
  %v198 = vlaneseq
  %v199 = vshrl.u32 %v198, 7
  %v200 = vsub.s32 2, %v199
  %v201 = vrot.slane %v72, %v200
  %v202 = vlaneseq
  %v203 = vshrl.u32 %v202, 7
  %v204 = vsub.s32 3, %v203
  %v205 = vrot.slane %v72, %v204
  %v206 = vlaneseq
  %v207 = vshrl.u32 %v206, 7
  %v208 = vsub.s32 4, %v207
  %v209 = vrot.slane %v72, %v208
  %v210 = vlaneseq
  %v211 = vshrl.u32 %v210, 7
  %v212 = vsub.s32 5, %v211
  %v213 = vrot.slane %v72, %v212
  %v220 = vadd.f32 %v177, %v193
  %v221 = vadd.f32 %v178, %v197
  %v222 = vadd.f32 %v179, %v201
  %v223 = vadd.f32 %v180, %v205
  %v224 = vadd.f32 %v181, %v209
  %v225 = vadd.f32 %v182, %v213
  %v226 = vadd.f32 %v183, %v193
  %v227 = vadd.f32 %v184, %v197
  %v228 = vadd.f32 %v185, %v201
  %v229 = vadd.f32 %v186, %v205
  %v230 = vadd.f32 %v187, %v209
  %v231 = vadd.f32 %v188, %v213
  %v232 = vpack.c.bf16 %v226, %v220
  %v233 = vpack.c.bf16 %v227, %v221
  %v234 = vpack.c.bf16 %v228, %v222
  %v235 = vpack.c.bf16 %v229, %v223
  %v236 = vpack.c.bf16 %v230, %v224
  %v237 = vpack.c.bf16 %v231, %v225
  %v238 = vld [vmem:[%s4] sm:$0xff]
  %v239 = vld [vmem:[%s4 + $0x8] sm:$0xff]
  %v240 = vld [vmem:[%s4 + $0x10] sm:$0xff]
  %v241 = vld [vmem:[%s4 + $0x18] sm:$0xff]
  %v242 = vld [vmem:[%s4 + $0x20] sm:$0xff]
  %v243 = vld [vmem:[%s4 + $0x28] sm:$0xff]
  %v244 = vld [vmem:[%s4 + $0x30] sm:$0xff]
  %v245 = vld [vmem:[%s4 + $0x38] sm:$0xff]
  %v246 = vld [vmem:[%s4 + $0x40] sm:$0xff]
  %v247 = vld [vmem:[%s4 + $0x48] sm:$0xff]
  %v248 = vld [vmem:[%s4 + $0x50] sm:$0xff]
  %v249 = vld [vmem:[%s4 + $0x58] sm:$0xff]
  %v250 = vld [vmem:[%s4 + $0x60] sm:$0xff]
  %v251 = vld [vmem:[%s4 + $0x68] sm:$0xff]
  %v252 = vld [vmem:[%s4 + $0x70] sm:$0xff]
  %v253 = vld [vmem:[%s4 + $0x78] sm:$0xff]
  %v254 = vld [vmem:[%s4 + $0x80] sm:$0xff]
  %v255 = vld [vmem:[%s4 + $0x88] sm:$0xff]
  %v256 = vld [vmem:[%s4 + $0x90] sm:$0xff]
  %v257 = vld [vmem:[%s4 + $0x98] sm:$0xff]
  %v258 = vld [vmem:[%s4 + $0xa0] sm:$0xff]
  %v259 = vld [vmem:[%s4 + $0xa8] sm:$0xff]
  %v260 = vld [vmem:[%s4 + $0xb0] sm:$0xff]
  %v261 = vld [vmem:[%s4 + $0xb8] sm:$0xff]
  %v262 = vld [vmem:[%s4 + $0xc0] sm:$0xff]
  %v263 = vld [vmem:[%s4 + $0xc8] sm:$0xff]
  %v264 = vld [vmem:[%s4 + $0xd0] sm:$0xff]
  %v265 = vld [vmem:[%s4 + $0xd8] sm:$0xff]
  %v266 = vld [vmem:[%s4 + $0xe0] sm:$0xff]
  %v267 = vld [vmem:[%s4 + $0xe8] sm:$0xff]
  %v268 = vld [vmem:[%s4 + $0xf0] sm:$0xff]
  %v269 = vld [vmem:[%s4 + $0xf8] sm:$0xff]
  %v270 = vld [vmem:[%s4 + $0x100] sm:$0xff]
  %v271 = vld [vmem:[%s4 + $0x108] sm:$0xff]
  %v272 = vld [vmem:[%s4 + $0x110] sm:$0xff]
  %v273 = vld [vmem:[%s4 + $0x118] sm:$0xff]
  %v274 = vld [vmem:[%s4 + $0x120] sm:$0xff]
  %v275 = vld [vmem:[%s4 + $0x128] sm:$0xff]
  %v276 = vld [vmem:[%s4 + $0x130] sm:$0xff]
  %v277 = vld [vmem:[%s4 + $0x138] sm:$0xff]
  %v278 = vld [vmem:[%s4 + $0x140] sm:$0xff]
  %v279 = vld [vmem:[%s4 + $0x148] sm:$0xff]
  %v280 = vld [vmem:[%s4 + $0x150] sm:$0xff]
  %v281 = vld [vmem:[%s4 + $0x158] sm:$0xff]
  %v282 = vld [vmem:[%s4 + $0x160] sm:$0xff]
  %v283 = vld [vmem:[%s4 + $0x168] sm:$0xff]
  %v284 = vld [vmem:[%s4 + $0x170] sm:$0xff]
  %v285 = vld [vmem:[%s4 + $0x178] sm:$0xff]
  %v286 = vld [vmem:[%s4 + $0x180] sm:$0xff]
  %v287 = vld [vmem:[%s4 + $0x188] sm:$0xff]
  %v288 = vld [vmem:[%s4 + $0x190] sm:$0xff]
  %v289 = vld [vmem:[%s4 + $0x198] sm:$0xff]
  %v290 = vld [vmem:[%s4 + $0x1a0] sm:$0xff]
  %v291 = vld [vmem:[%s4 + $0x1a8] sm:$0xff]
  %v292 = vld [vmem:[%s4 + $0x1b0] sm:$0xff]
  %v293 = vld [vmem:[%s4 + $0x1b8] sm:$0xff]
  %v294 = vld [vmem:[%s4 + $0x1c0] sm:$0xff]
  %v295 = vld [vmem:[%s4 + $0x1c8] sm:$0xff]
  %v296 = vld [vmem:[%s4 + $0x1d0] sm:$0xff]
  %v297 = vld [vmem:[%s4 + $0x1d8] sm:$0xff]
  %v298 = vld [vmem:[%s4 + $0x1e0] sm:$0xff]
  %v299 = vld [vmem:[%s4 + $0x1e8] sm:$0xff]
  %v300 = vld [vmem:[%s4 + $0x1f0] sm:$0xff]
  %v301 = vld [vmem:[%s4 + $0x1f8] sm:$0xff]
  %v302 = vld [vmem:[%s4 + $0x200] sm:$0xff]
  %v303 = vld [vmem:[%s4 + $0x208] sm:$0xff]
  %v304 = vld [vmem:[%s4 + $0x210] sm:$0xff]
  %v305 = vld [vmem:[%s4 + $0x218] sm:$0xff]
  %v306 = vld [vmem:[%s4 + $0x220] sm:$0xff]
  %v307 = vld [vmem:[%s4 + $0x228] sm:$0xff]
  %v308 = vld [vmem:[%s4 + $0x230] sm:$0xff]
  %v309 = vld [vmem:[%s4 + $0x238] sm:$0xff]
  %v310 = vld [vmem:[%s4 + $0x240] sm:$0xff]
  %v311 = vld [vmem:[%s4 + $0x248] sm:$0xff]
  %v312 = vld [vmem:[%s4 + $0x250] sm:$0xff]
  %v313 = vld [vmem:[%s4 + $0x258] sm:$0xff]
  %v314 = vld [vmem:[%s4 + $0x260] sm:$0xff]
  %v315 = vld [vmem:[%s4 + $0x268] sm:$0xff]
  %v316 = vld [vmem:[%s4 + $0x270] sm:$0xff]
  %v317 = vld [vmem:[%s4 + $0x278] sm:$0xff]
  %v318 = vld [vmem:[%s4 + $0x280] sm:$0xff]
  %v319 = vld [vmem:[%s4 + $0x288] sm:$0xff]
  %v320 = vld [vmem:[%s4 + $0x290] sm:$0xff]
  %v321 = vld [vmem:[%s4 + $0x298] sm:$0xff]
  %v322 = vld [vmem:[%s4 + $0x2a0] sm:$0xff]
  %v323 = vld [vmem:[%s4 + $0x2a8] sm:$0xff]
  %v324 = vld [vmem:[%s4 + $0x2b0] sm:$0xff]
  %v325 = vld [vmem:[%s4 + $0x2b8] sm:$0xff]
  %v326 = vld [vmem:[%s4 + $0x2c0] sm:$0xff]
  %v327 = vld [vmem:[%s4 + $0x2c8] sm:$0xff]
  %v328 = vld [vmem:[%s4 + $0x2d0] sm:$0xff]
  %v329 = vld [vmem:[%s4 + $0x2d8] sm:$0xff]
  %v330 = vld [vmem:[%s4 + $0x2e0] sm:$0xff]
  %v331 = vld [vmem:[%s4 + $0x2e8] sm:$0xff]
  %v332 = vld [vmem:[%s4 + $0x2f0] sm:$0xff]
  %v333 = vld [vmem:[%s4 + $0x2f8] sm:$0xff]
  %v334 = vld [vmem:[%s4 + $0x300] sm:$0xff]
  %v335 = vld [vmem:[%s4 + $0x308] sm:$0xff]
  %v336 = vld [vmem:[%s4 + $0x310] sm:$0xff]
  %v337 = vld [vmem:[%s4 + $0x318] sm:$0xff]
  %v338 = vld [vmem:[%s4 + $0x320] sm:$0xff]
  %v339 = vld [vmem:[%s4 + $0x328] sm:$0xff]
  %v340 = vld [vmem:[%s4 + $0x330] sm:$0xff]
  %v341 = vld [vmem:[%s4 + $0x338] sm:$0xff]
  %v342 = vld [vmem:[%s4 + $0x340] sm:$0xff]
  %v343 = vld [vmem:[%s4 + $0x348] sm:$0xff]
  %v344 = vld [vmem:[%s4 + $0x350] sm:$0xff]
  %v345 = vld [vmem:[%s4 + $0x358] sm:$0xff]
  %v346 = vld [vmem:[%s4 + $0x360] sm:$0xff]
  %v347 = vld [vmem:[%s4 + $0x368] sm:$0xff]
  %v348 = vld [vmem:[%s4 + $0x370] sm:$0xff]
  %v349 = vld [vmem:[%s4 + $0x378] sm:$0xff]
  %v350 = vld [vmem:[%s4 + $0x380] sm:$0xff]
  %v351 = vld [vmem:[%s4 + $0x388] sm:$0xff]
  %v352 = vld [vmem:[%s4 + $0x390] sm:$0xff]
  %v353 = vld [vmem:[%s4 + $0x398] sm:$0xff]
  %v354 = vld [vmem:[%s4 + $0x3a0] sm:$0xff]
  %v355 = vld [vmem:[%s4 + $0x3a8] sm:$0xff]
  %v356 = vld [vmem:[%s4 + $0x3b0] sm:$0xff]
  %v357 = vld [vmem:[%s4 + $0x3b8] sm:$0xff]
  %v358 = vld [vmem:[%s4 + $0x3c0] sm:$0xff]
  %v359 = vld [vmem:[%s4 + $0x3c8] sm:$0xff]
  %v360 = vld [vmem:[%s4 + $0x3d0] sm:$0xff]
  %v361 = vld [vmem:[%s4 + $0x3d8] sm:$0xff]
  %v362 = vld [vmem:[%s4 + $0x3e0] sm:$0xff]
  %v363 = vld [vmem:[%s4 + $0x3e8] sm:$0xff]
  %v364 = vld [vmem:[%s4 + $0x3f0] sm:$0xff]
  %v365 = vld [vmem:[%s4 + $0x3f8] sm:$0xff]
  %v366 = vld [vmem:[%s4 + $0x400] sm:$0xff]
  %v367 = vld [vmem:[%s4 + $0x408] sm:$0xff]
  %v368 = vld [vmem:[%s4 + $0x410] sm:$0xff]
  %v369 = vld [vmem:[%s4 + $0x418] sm:$0xff]
  %v370 = vld [vmem:[%s4 + $0x420] sm:$0xff]
  %v371 = vld [vmem:[%s4 + $0x428] sm:$0xff]
  %v372 = vld [vmem:[%s4 + $0x430] sm:$0xff]
  %v373 = vld [vmem:[%s4 + $0x438] sm:$0xff]
  %v374 = vld [vmem:[%s4 + $0x440] sm:$0xff]
  %v375 = vld [vmem:[%s4 + $0x448] sm:$0xff]
  %v376 = vld [vmem:[%s4 + $0x450] sm:$0xff]
  %v377 = vld [vmem:[%s4 + $0x458] sm:$0xff]
  %v378 = vld [vmem:[%s4 + $0x460] sm:$0xff]
  %v379 = vld [vmem:[%s4 + $0x468] sm:$0xff]
  %v380 = vld [vmem:[%s4 + $0x470] sm:$0xff]
  %v381 = vld [vmem:[%s4 + $0x478] sm:$0xff]
  %v382 = vld [vmem:[%s4 + $0x480] sm:$0xff]
  %v383 = vld [vmem:[%s4 + $0x488] sm:$0xff]
  %v384 = vld [vmem:[%s4 + $0x490] sm:$0xff]
  %v385 = vld [vmem:[%s4 + $0x498] sm:$0xff]
  %v386 = vld [vmem:[%s4 + $0x4a0] sm:$0xff]
  %v387 = vld [vmem:[%s4 + $0x4a8] sm:$0xff]
  %v388 = vld [vmem:[%s4 + $0x4b0] sm:$0xff]
  %v389 = vld [vmem:[%s4 + $0x4b8] sm:$0xff]
  %v390 = vld [vmem:[%s4 + $0x4c0] sm:$0xff]
  %v391 = vld [vmem:[%s4 + $0x4c8] sm:$0xff]
  %v392 = vld [vmem:[%s4 + $0x4d0] sm:$0xff]
  %v393 = vld [vmem:[%s4 + $0x4d8] sm:$0xff]
  %v394 = vld [vmem:[%s4 + $0x4e0] sm:$0xff]
  %v395 = vld [vmem:[%s4 + $0x4e8] sm:$0xff]
  %v396 = vld [vmem:[%s4 + $0x4f0] sm:$0xff]
  %v397 = vld [vmem:[%s4 + $0x4f8] sm:$0xff]
  %v398 = vld [vmem:[%s4 + $0x500] sm:$0xff]
  %v399 = vld [vmem:[%s4 + $0x508] sm:$0xff]
  %v400 = vld [vmem:[%s4 + $0x510] sm:$0xff]
  %v401 = vld [vmem:[%s4 + $0x518] sm:$0xff]
  %v402 = vld [vmem:[%s4 + $0x520] sm:$0xff]
  %v403 = vld [vmem:[%s4 + $0x528] sm:$0xff]
  %v404 = vld [vmem:[%s4 + $0x530] sm:$0xff]
  %v405 = vld [vmem:[%s4 + $0x538] sm:$0xff]
  %v406 = vld [vmem:[%s4 + $0x540] sm:$0xff]
  %v407 = vld [vmem:[%s4 + $0x548] sm:$0xff]
  %v408 = vld [vmem:[%s4 + $0x550] sm:$0xff]
  %v409 = vld [vmem:[%s4 + $0x558] sm:$0xff]
  %v410 = vld [vmem:[%s4 + $0x560] sm:$0xff]
  %v411 = vld [vmem:[%s4 + $0x568] sm:$0xff]
  %v412 = vld [vmem:[%s4 + $0x570] sm:$0xff]
  %v413 = vld [vmem:[%s4 + $0x578] sm:$0xff]
  %v414 = vld [vmem:[%s4 + $0x580] sm:$0xff]
  %v415 = vld [vmem:[%s4 + $0x588] sm:$0xff]
  %v416 = vld [vmem:[%s4 + $0x590] sm:$0xff]
  %v417 = vld [vmem:[%s4 + $0x598] sm:$0xff]
  %v418 = vld [vmem:[%s4 + $0x5a0] sm:$0xff]
  %v419 = vld [vmem:[%s4 + $0x5a8] sm:$0xff]
  %v420 = vld [vmem:[%s4 + $0x5b0] sm:$0xff]
  %v421 = vld [vmem:[%s4 + $0x5b8] sm:$0xff]
  %v422 = vld [vmem:[%s4 + $0x5c0] sm:$0xff]
  %v423 = vld [vmem:[%s4 + $0x5c8] sm:$0xff]
  %v424 = vld [vmem:[%s4 + $0x5d0] sm:$0xff]
  %v425 = vld [vmem:[%s4 + $0x5d8] sm:$0xff]
  %v426 = vld [vmem:[%s4 + $0x5e0] sm:$0xff]
  %v427 = vld [vmem:[%s4 + $0x5e8] sm:$0xff]
  %v428 = vld [vmem:[%s4 + $0x5f0] sm:$0xff]
  %v429 = vld [vmem:[%s4 + $0x5f8] sm:$0xff]
  %v430 = vld [vmem:[%s4 + $0x600] sm:$0xff]
  %v431 = vld [vmem:[%s4 + $0x608] sm:$0xff]
  %v432 = vld [vmem:[%s4 + $0x610] sm:$0xff]
  %v433 = vld [vmem:[%s4 + $0x618] sm:$0xff]
  %v434 = vld [vmem:[%s4 + $0x620] sm:$0xff]
  %v435 = vld [vmem:[%s4 + $0x628] sm:$0xff]
  %v436 = vld [vmem:[%s4 + $0x630] sm:$0xff]
  %v437 = vld [vmem:[%s4 + $0x638] sm:$0xff]
  %v438 = vld [vmem:[%s4 + $0x640] sm:$0xff]
  %v439 = vld [vmem:[%s4 + $0x648] sm:$0xff]
  %v440 = vld [vmem:[%s4 + $0x650] sm:$0xff]
  %v441 = vld [vmem:[%s4 + $0x658] sm:$0xff]
  %v442 = vld [vmem:[%s4 + $0x660] sm:$0xff]
  %v443 = vld [vmem:[%s4 + $0x668] sm:$0xff]
  %v444 = vld [vmem:[%s4 + $0x670] sm:$0xff]
  %v445 = vld [vmem:[%s4 + $0x678] sm:$0xff]
  %v446 = vld [vmem:[%s4 + $0x680] sm:$0xff]
  %v447 = vld [vmem:[%s4 + $0x688] sm:$0xff]
  %v448 = vld [vmem:[%s4 + $0x690] sm:$0xff]
  %v449 = vld [vmem:[%s4 + $0x698] sm:$0xff]
  %v450 = vld [vmem:[%s4 + $0x6a0] sm:$0xff]
  %v451 = vld [vmem:[%s4 + $0x6a8] sm:$0xff]
  %v452 = vld [vmem:[%s4 + $0x6b0] sm:$0xff]
  %v453 = vld [vmem:[%s4 + $0x6b8] sm:$0xff]
  %v454 = vld [vmem:[%s4 + $0x6c0] sm:$0xff]
  %v455 = vld [vmem:[%s4 + $0x6c8] sm:$0xff]
  %v456 = vld [vmem:[%s4 + $0x6d0] sm:$0xff]
  %v457 = vld [vmem:[%s4 + $0x6d8] sm:$0xff]
  %v458 = vld [vmem:[%s4 + $0x6e0] sm:$0xff]
  %v459 = vld [vmem:[%s4 + $0x6e8] sm:$0xff]
  %v460 = vld [vmem:[%s4 + $0x6f0] sm:$0xff]
  %v461 = vld [vmem:[%s4 + $0x6f8] sm:$0xff]
  %v462 = vld [vmem:[%s4 + $0x700] sm:$0xff]
  %v463 = vld [vmem:[%s4 + $0x708] sm:$0xff]
  %v464 = vld [vmem:[%s4 + $0x710] sm:$0xff]
  %v465 = vld [vmem:[%s4 + $0x718] sm:$0xff]
  %v466 = vld [vmem:[%s4 + $0x720] sm:$0xff]
  %v467 = vld [vmem:[%s4 + $0x728] sm:$0xff]
  %v468 = vld [vmem:[%s4 + $0x730] sm:$0xff]
  %v469 = vld [vmem:[%s4 + $0x738] sm:$0xff]
  %v470 = vld [vmem:[%s4 + $0x740] sm:$0xff]
  %v471 = vld [vmem:[%s4 + $0x748] sm:$0xff]
  %v472 = vld [vmem:[%s4 + $0x750] sm:$0xff]
  %v473 = vld [vmem:[%s4 + $0x758] sm:$0xff]
  %v474 = vld [vmem:[%s4 + $0x760] sm:$0xff]
  %v475 = vld [vmem:[%s4 + $0x768] sm:$0xff]
  %v476 = vld [vmem:[%s4 + $0x770] sm:$0xff]
  %v477 = vld [vmem:[%s4 + $0x778] sm:$0xff]
  %v478 = vld [vmem:[%s4 + $0x780] sm:$0xff]
  %v479 = vld [vmem:[%s4 + $0x788] sm:$0xff]
  %v480 = vld [vmem:[%s4 + $0x790] sm:$0xff]
  %v481 = vld [vmem:[%s4 + $0x798] sm:$0xff]
  %v482 = vld [vmem:[%s4 + $0x7a0] sm:$0xff]
  %v483 = vld [vmem:[%s4 + $0x7a8] sm:$0xff]
  %v484 = vld [vmem:[%s4 + $0x7b0] sm:$0xff]
  %v485 = vld [vmem:[%s4 + $0x7b8] sm:$0xff]
  %v486 = vld [vmem:[%s4 + $0x7c0] sm:$0xff]
  %v487 = vld [vmem:[%s4 + $0x7c8] sm:$0xff]
  %v488 = vld [vmem:[%s4 + $0x7d0] sm:$0xff]
  %v489 = vld [vmem:[%s4 + $0x7d8] sm:$0xff]
  %v490 = vld [vmem:[%s4 + $0x7e0] sm:$0xff]
  %v491 = vld [vmem:[%s4 + $0x7e8] sm:$0xff]
  %v492 = vld [vmem:[%s4 + $0x7f0] sm:$0xff]
  %v493 = vld [vmem:[%s4 + $0x7f8] sm:$0xff]
  %v494 = vld [vmem:[%s4 + $0x800] sm:$0xff]
  %v495 = vld [vmem:[%s4 + $0x808] sm:$0xff]
  %v496 = vld [vmem:[%s4 + $0x810] sm:$0xff]
  %v497 = vld [vmem:[%s4 + $0x818] sm:$0xff]
  %v498 = vld [vmem:[%s4 + $0x820] sm:$0xff]
  %v499 = vld [vmem:[%s4 + $0x828] sm:$0xff]
  %v500 = vld [vmem:[%s4 + $0x830] sm:$0xff]
  %v501 = vld [vmem:[%s4 + $0x838] sm:$0xff]
  %v502 = vld [vmem:[%s4 + $0x840] sm:$0xff]
  %v503 = vld [vmem:[%s4 + $0x848] sm:$0xff]
  %v504 = vld [vmem:[%s4 + $0x850] sm:$0xff]
  %v505 = vld [vmem:[%s4 + $0x858] sm:$0xff]
  %v506 = vld [vmem:[%s4 + $0x860] sm:$0xff]
  %v507 = vld [vmem:[%s4 + $0x868] sm:$0xff]
  %v508 = vld [vmem:[%s4 + $0x870] sm:$0xff]
  %v509 = vld [vmem:[%s4 + $0x878] sm:$0xff]
  %v510 = vld [vmem:[%s4 + $0x880] sm:$0xff]
  %v511 = vld [vmem:[%s4 + $0x888] sm:$0xff]
  %v512 = vld [vmem:[%s4 + $0x890] sm:$0xff]
  %v513 = vld [vmem:[%s4 + $0x898] sm:$0xff]
  %v514 = vld [vmem:[%s4 + $0x8a0] sm:$0xff]
  %v515 = vld [vmem:[%s4 + $0x8a8] sm:$0xff]
  %v516 = vld [vmem:[%s4 + $0x8b0] sm:$0xff]
  %v517 = vld [vmem:[%s4 + $0x8b8] sm:$0xff]
  %v518 = vld [vmem:[%s4 + $0x8c0] sm:$0xff]
  %v519 = vld [vmem:[%s4 + $0x8c8] sm:$0xff]
  %v520 = vld [vmem:[%s4 + $0x8d0] sm:$0xff]
  %v521 = vld [vmem:[%s4 + $0x8d8] sm:$0xff]
  %v522 = vld [vmem:[%s4 + $0x8e0] sm:$0xff]
  %v523 = vld [vmem:[%s4 + $0x8e8] sm:$0xff]
  %v524 = vld [vmem:[%s4 + $0x8f0] sm:$0xff]
  %v525 = vld [vmem:[%s4 + $0x8f8] sm:$0xff]
  %v526 = vld [vmem:[%s4 + $0x900] sm:$0xff]
  %v527 = vld [vmem:[%s4 + $0x908] sm:$0xff]
  %v528 = vld [vmem:[%s4 + $0x910] sm:$0xff]
  %v529 = vld [vmem:[%s4 + $0x918] sm:$0xff]
  %v530 = vld [vmem:[%s4 + $0x920] sm:$0xff]
  %v531 = vld [vmem:[%s4 + $0x928] sm:$0xff]
  %v532 = vld [vmem:[%s4 + $0x930] sm:$0xff]
  %v533 = vld [vmem:[%s4 + $0x938] sm:$0xff]
  %v534 = vld [vmem:[%s4 + $0x940] sm:$0xff]
  %v535 = vld [vmem:[%s4 + $0x948] sm:$0xff]
  %v536 = vld [vmem:[%s4 + $0x950] sm:$0xff]
  %v537 = vld [vmem:[%s4 + $0x958] sm:$0xff]
  %v538 = vld [vmem:[%s4 + $0x960] sm:$0xff]
  %v539 = vld [vmem:[%s4 + $0x968] sm:$0xff]
  %v540 = vld [vmem:[%s4 + $0x970] sm:$0xff]
  %v541 = vld [vmem:[%s4 + $0x978] sm:$0xff]
  %v542 = vld [vmem:[%s4 + $0x980] sm:$0xff]
  %v543 = vld [vmem:[%s4 + $0x988] sm:$0xff]
  %v544 = vld [vmem:[%s4 + $0x990] sm:$0xff]
  %v545 = vld [vmem:[%s4 + $0x998] sm:$0xff]
  %v546 = vld [vmem:[%s4 + $0x9a0] sm:$0xff]
  %v547 = vld [vmem:[%s4 + $0x9a8] sm:$0xff]
  %v548 = vld [vmem:[%s4 + $0x9b0] sm:$0xff]
  %v549 = vld [vmem:[%s4 + $0x9b8] sm:$0xff]
  %v550 = vld [vmem:[%s4 + $0x9c0] sm:$0xff]
  %v551 = vld [vmem:[%s4 + $0x9c8] sm:$0xff]
  %v552 = vld [vmem:[%s4 + $0x9d0] sm:$0xff]
  %v553 = vld [vmem:[%s4 + $0x9d8] sm:$0xff]
  %v554 = vld [vmem:[%s4 + $0x9e0] sm:$0xff]
  %v555 = vld [vmem:[%s4 + $0x9e8] sm:$0xff]
  %v556 = vld [vmem:[%s4 + $0x9f0] sm:$0xff]
  %v557 = vld [vmem:[%s4 + $0x9f8] sm:$0xff]
  %v558 = vld [vmem:[%s4 + $0xa00] sm:$0xff]
  %v559 = vld [vmem:[%s4 + $0xa08] sm:$0xff]
  %v560 = vld [vmem:[%s4 + $0xa10] sm:$0xff]
  %v561 = vld [vmem:[%s4 + $0xa18] sm:$0xff]
  %v562 = vld [vmem:[%s4 + $0xa20] sm:$0xff]
  %v563 = vld [vmem:[%s4 + $0xa28] sm:$0xff]
  %v564 = vld [vmem:[%s4 + $0xa30] sm:$0xff]
  %v565 = vld [vmem:[%s4 + $0xa38] sm:$0xff]
  %v566 = vld [vmem:[%s4 + $0xa40] sm:$0xff]
  %v567 = vld [vmem:[%s4 + $0xa48] sm:$0xff]
  %v568 = vld [vmem:[%s4 + $0xa50] sm:$0xff]
  %v569 = vld [vmem:[%s4 + $0xa58] sm:$0xff]
  %v570 = vld [vmem:[%s4 + $0xa60] sm:$0xff]
  %v571 = vld [vmem:[%s4 + $0xa68] sm:$0xff]
  %v572 = vld [vmem:[%s4 + $0xa70] sm:$0xff]
  %v573 = vld [vmem:[%s4 + $0xa78] sm:$0xff]
  %v574 = vld [vmem:[%s4 + $0xa80] sm:$0xff]
  %v575 = vld [vmem:[%s4 + $0xa88] sm:$0xff]
  %v576 = vld [vmem:[%s4 + $0xa90] sm:$0xff]
  %v577 = vld [vmem:[%s4 + $0xa98] sm:$0xff]
  %v578 = vld [vmem:[%s4 + $0xaa0] sm:$0xff]
  %v579 = vld [vmem:[%s4 + $0xaa8] sm:$0xff]
  %v580 = vld [vmem:[%s4 + $0xab0] sm:$0xff]
  %v581 = vld [vmem:[%s4 + $0xab8] sm:$0xff]
  %v582 = vld [vmem:[%s4 + $0xac0] sm:$0xff]
  %v583 = vld [vmem:[%s4 + $0xac8] sm:$0xff]
  %v584 = vld [vmem:[%s4 + $0xad0] sm:$0xff]
  %v585 = vld [vmem:[%s4 + $0xad8] sm:$0xff]
  %v586 = vld [vmem:[%s4 + $0xae0] sm:$0xff]
  %v587 = vld [vmem:[%s4 + $0xae8] sm:$0xff]
  %v588 = vld [vmem:[%s4 + $0xaf0] sm:$0xff]
  %v589 = vld [vmem:[%s4 + $0xaf8] sm:$0xff]
  %v590 = vld [vmem:[%s4 + $0xb00] sm:$0xff]
  %v591 = vld [vmem:[%s4 + $0xb08] sm:$0xff]
  %v592 = vld [vmem:[%s4 + $0xb10] sm:$0xff]
  %v593 = vld [vmem:[%s4 + $0xb18] sm:$0xff]
  %v594 = vld [vmem:[%s4 + $0xb20] sm:$0xff]
  %v595 = vld [vmem:[%s4 + $0xb28] sm:$0xff]
  %v596 = vld [vmem:[%s4 + $0xb30] sm:$0xff]
  %v597 = vld [vmem:[%s4 + $0xb38] sm:$0xff]
  %v598 = vld [vmem:[%s4 + $0xb40] sm:$0xff]
  %v599 = vld [vmem:[%s4 + $0xb48] sm:$0xff]
  %v600 = vld [vmem:[%s4 + $0xb50] sm:$0xff]
  %v601 = vld [vmem:[%s4 + $0xb58] sm:$0xff]
  %v602 = vld [vmem:[%s4 + $0xb60] sm:$0xff]
  %v603 = vld [vmem:[%s4 + $0xb68] sm:$0xff]
  %v604 = vld [vmem:[%s4 + $0xb70] sm:$0xff]
  %v605 = vld [vmem:[%s4 + $0xb78] sm:$0xff]
  %v606 = vld [vmem:[%s4 + $0xb80] sm:$0xff]
  %v607 = vld [vmem:[%s4 + $0xb88] sm:$0xff]
  %v608 = vld [vmem:[%s4 + $0xb90] sm:$0xff]
  %v609 = vld [vmem:[%s4 + $0xb98] sm:$0xff]
  %v610 = vld [vmem:[%s4 + $0xba0] sm:$0xff]
  %v611 = vld [vmem:[%s4 + $0xba8] sm:$0xff]
  %v612 = vld [vmem:[%s4 + $0xbb0] sm:$0xff]
  %v613 = vld [vmem:[%s4 + $0xbb8] sm:$0xff]
  %v614 = vld [vmem:[%s4 + $0xbc0] sm:$0xff]
  %v615 = vld [vmem:[%s4 + $0xbc8] sm:$0xff]
  %v616 = vld [vmem:[%s4 + $0xbd0] sm:$0xff]
  %v617 = vld [vmem:[%s4 + $0xbd8] sm:$0xff]
  %v618 = vld [vmem:[%s4 + $0xbe0] sm:$0xff]
  %v619 = vld [vmem:[%s4 + $0xbe8] sm:$0xff]
  %v620 = vld [vmem:[%s4 + $0xbf0] sm:$0xff]
  %v621 = vld [vmem:[%s4 + $0xbf8] sm:$0xff]
  %v622 = vld [vmem:[%s5] sm:$0xff]
  %v624 = vlaneseq
  %v625 = vshrl.u32 %v624, 7
  %v626 = vsub.s32 0, %v625
  %v627 = vrot.slane %v622, %v626
  %v628 = vlaneseq
  %v629 = vshrl.u32 %v628, 7
  %v630 = vsub.s32 1, %v629
  %v631 = vrot.slane %v622, %v630
  %v632 = vlaneseq
  %v633 = vshrl.u32 %v632, 7
  %v634 = vsub.s32 2, %v633
  %v635 = vrot.slane %v622, %v634
  %v636 = vlaneseq
  %v637 = vshrl.u32 %v636, 7
  %v638 = vsub.s32 3, %v637
  %v639 = vrot.slane %v622, %v638
  %v640 = vlaneseq
  %v641 = vshrl.u32 %v640, 7
  %v642 = vsub.s32 4, %v641
  %v643 = vrot.slane %v622, %v642
  %v644 = vlaneseq
  %v645 = vshrl.u32 %v644, 7
  %v646 = vsub.s32 5, %v645
  %v647 = vrot.slane %v622, %v646
  %v648 = vlaneseq
  %v649 = vshrl.u32 %v648, 7
  %v650 = vsub.s32 6, %v649
  %v651 = vrot.slane %v622, %v650
  %v652 = vlaneseq
  %v653 = vshrl.u32 %v652, 7
  %v654 = vsub.s32 7, %v653
  %v655 = vrot.slane %v622, %v654
  %v1048 = vunpack.c.l.b16 %v238
  %v1049 = vunpack.c.h.b16 %v238
  %v1050 = vunpack.c.l.b16 %v239
  %v1051 = vunpack.c.h.b16 %v239
  %v1052 = vunpack.c.l.b16 %v240
  %v1053 = vunpack.c.h.b16 %v240
  %v1054 = vunpack.c.l.b16 %v241
  %v1055 = vunpack.c.h.b16 %v241
  %v1056 = vunpack.c.l.b16 %v242
  %v1057 = vunpack.c.h.b16 %v242
  %v1058 = vunpack.c.l.b16 %v243
  %v1059 = vunpack.c.h.b16 %v243
  %v1060 = vunpack.c.l.b16 %v244
  %v1061 = vunpack.c.h.b16 %v244
  %v1062 = vunpack.c.l.b16 %v245
  %v1063 = vunpack.c.h.b16 %v245
  %v1064 = vunpack.c.l.b16 %v246
  %v1065 = vunpack.c.h.b16 %v246
  %v1066 = vunpack.c.l.b16 %v247
  %v1067 = vunpack.c.h.b16 %v247
  %v1068 = vunpack.c.l.b16 %v248
  %v1069 = vunpack.c.h.b16 %v248
  %v1070 = vunpack.c.l.b16 %v249
  %v1071 = vunpack.c.h.b16 %v249
  %v1072 = vunpack.c.l.b16 %v250
  %v1073 = vunpack.c.h.b16 %v250
  %v1074 = vunpack.c.l.b16 %v251
  %v1075 = vunpack.c.h.b16 %v251
  %v1076 = vunpack.c.l.b16 %v252
  %v1077 = vunpack.c.h.b16 %v252
  %v1078 = vunpack.c.l.b16 %v253
  %v1079 = vunpack.c.h.b16 %v253
  %v1080 = vunpack.c.l.b16 %v254
  %v1081 = vunpack.c.h.b16 %v254
  %v1082 = vunpack.c.l.b16 %v255
  %v1083 = vunpack.c.h.b16 %v255
  %v1084 = vunpack.c.l.b16 %v256
  %v1085 = vunpack.c.h.b16 %v256
  %v1086 = vunpack.c.l.b16 %v257
  %v1087 = vunpack.c.h.b16 %v257
  %v1088 = vunpack.c.l.b16 %v258
  %v1089 = vunpack.c.h.b16 %v258
  %v1090 = vunpack.c.l.b16 %v259
  %v1091 = vunpack.c.h.b16 %v259
  %v1092 = vunpack.c.l.b16 %v260
  %v1093 = vunpack.c.h.b16 %v260
  %v1094 = vunpack.c.l.b16 %v261
  %v1095 = vunpack.c.h.b16 %v261
  %v1096 = vunpack.c.l.b16 %v262
  %v1097 = vunpack.c.h.b16 %v262
  %v1098 = vunpack.c.l.b16 %v263
  %v1099 = vunpack.c.h.b16 %v263
  %v1100 = vunpack.c.l.b16 %v264
  %v1101 = vunpack.c.h.b16 %v264
  %v1102 = vunpack.c.l.b16 %v265
  %v1103 = vunpack.c.h.b16 %v265
  %v1104 = vunpack.c.l.b16 %v266
  %v1105 = vunpack.c.h.b16 %v266
  %v1106 = vunpack.c.l.b16 %v267
  %v1107 = vunpack.c.h.b16 %v267
  %v1108 = vunpack.c.l.b16 %v268
  %v1109 = vunpack.c.h.b16 %v268
  %v1110 = vunpack.c.l.b16 %v269
  %v1111 = vunpack.c.h.b16 %v269
  %v1112 = vunpack.c.l.b16 %v270
  %v1113 = vunpack.c.h.b16 %v270
  %v1114 = vunpack.c.l.b16 %v271
  %v1115 = vunpack.c.h.b16 %v271
  %v1116 = vunpack.c.l.b16 %v272
  %v1117 = vunpack.c.h.b16 %v272
  %v1118 = vunpack.c.l.b16 %v273
  %v1119 = vunpack.c.h.b16 %v273
  %v1120 = vunpack.c.l.b16 %v274
  %v1121 = vunpack.c.h.b16 %v274
  %v1122 = vunpack.c.l.b16 %v275
  %v1123 = vunpack.c.h.b16 %v275
  %v1124 = vunpack.c.l.b16 %v276
  %v1125 = vunpack.c.h.b16 %v276
  %v1126 = vunpack.c.l.b16 %v277
  %v1127 = vunpack.c.h.b16 %v277
  %v1128 = vunpack.c.l.b16 %v278
  %v1129 = vunpack.c.h.b16 %v278
  %v1130 = vunpack.c.l.b16 %v279
  %v1131 = vunpack.c.h.b16 %v279
  %v1132 = vunpack.c.l.b16 %v280
  %v1133 = vunpack.c.h.b16 %v280
  %v1134 = vunpack.c.l.b16 %v281
  %v1135 = vunpack.c.h.b16 %v281
  %v1136 = vunpack.c.l.b16 %v282
  %v1137 = vunpack.c.h.b16 %v282
  %v1138 = vunpack.c.l.b16 %v283
  %v1139 = vunpack.c.h.b16 %v283
  %v1140 = vunpack.c.l.b16 %v284
  %v1141 = vunpack.c.h.b16 %v284
  %v1142 = vunpack.c.l.b16 %v285
  %v1143 = vunpack.c.h.b16 %v285
  %v1144 = vunpack.c.l.b16 %v286
  %v1145 = vunpack.c.h.b16 %v286
  %v1146 = vunpack.c.l.b16 %v287
  %v1147 = vunpack.c.h.b16 %v287
  %v1148 = vunpack.c.l.b16 %v288
  %v1149 = vunpack.c.h.b16 %v288
  %v1150 = vunpack.c.l.b16 %v289
  %v1151 = vunpack.c.h.b16 %v289
  %v1152 = vunpack.c.l.b16 %v290
  %v1153 = vunpack.c.h.b16 %v290
  %v1154 = vunpack.c.l.b16 %v291
  %v1155 = vunpack.c.h.b16 %v291
  %v1156 = vunpack.c.l.b16 %v292
  %v1157 = vunpack.c.h.b16 %v292
  %v1158 = vunpack.c.l.b16 %v293
  %v1159 = vunpack.c.h.b16 %v293
  %v1160 = vunpack.c.l.b16 %v294
  %v1161 = vunpack.c.h.b16 %v294
  %v1162 = vunpack.c.l.b16 %v295
  %v1163 = vunpack.c.h.b16 %v295
  %v1164 = vunpack.c.l.b16 %v296
  %v1165 = vunpack.c.h.b16 %v296
  %v1166 = vunpack.c.l.b16 %v297
  %v1167 = vunpack.c.h.b16 %v297
  %v1168 = vunpack.c.l.b16 %v298
  %v1169 = vunpack.c.h.b16 %v298
  %v1170 = vunpack.c.l.b16 %v299
  %v1171 = vunpack.c.h.b16 %v299
  %v1172 = vunpack.c.l.b16 %v300
  %v1173 = vunpack.c.h.b16 %v300
  %v1174 = vunpack.c.l.b16 %v301
  %v1175 = vunpack.c.h.b16 %v301
  %v1176 = vunpack.c.l.b16 %v302
  %v1177 = vunpack.c.h.b16 %v302
  %v1178 = vunpack.c.l.b16 %v303
  %v1179 = vunpack.c.h.b16 %v303
  %v1180 = vunpack.c.l.b16 %v304
  %v1181 = vunpack.c.h.b16 %v304
  %v1182 = vunpack.c.l.b16 %v305
  %v1183 = vunpack.c.h.b16 %v305
  %v1184 = vunpack.c.l.b16 %v306
  %v1185 = vunpack.c.h.b16 %v306
  %v1186 = vunpack.c.l.b16 %v307
  %v1187 = vunpack.c.h.b16 %v307
  %v1188 = vunpack.c.l.b16 %v308
  %v1189 = vunpack.c.h.b16 %v308
  %v1190 = vunpack.c.l.b16 %v309
  %v1191 = vunpack.c.h.b16 %v309
  %v1192 = vunpack.c.l.b16 %v310
  %v1193 = vunpack.c.h.b16 %v310
  %v1194 = vunpack.c.l.b16 %v311
  %v1195 = vunpack.c.h.b16 %v311
  %v1196 = vunpack.c.l.b16 %v312
  %v1197 = vunpack.c.h.b16 %v312
  %v1198 = vunpack.c.l.b16 %v313
  %v1199 = vunpack.c.h.b16 %v313
  %v1200 = vunpack.c.l.b16 %v314
  %v1201 = vunpack.c.h.b16 %v314
  %v1202 = vunpack.c.l.b16 %v315
  %v1203 = vunpack.c.h.b16 %v315
  %v1204 = vunpack.c.l.b16 %v316
  %v1205 = vunpack.c.h.b16 %v316
  %v1206 = vunpack.c.l.b16 %v317
  %v1207 = vunpack.c.h.b16 %v317
  %v1208 = vunpack.c.l.b16 %v318
  %v1209 = vunpack.c.h.b16 %v318
  %v1210 = vunpack.c.l.b16 %v319
  %v1211 = vunpack.c.h.b16 %v319
  %v1212 = vunpack.c.l.b16 %v320
  %v1213 = vunpack.c.h.b16 %v320
  %v1214 = vunpack.c.l.b16 %v321
  %v1215 = vunpack.c.h.b16 %v321
  %v1216 = vunpack.c.l.b16 %v322
  %v1217 = vunpack.c.h.b16 %v322
  %v1218 = vunpack.c.l.b16 %v323
  %v1219 = vunpack.c.h.b16 %v323
  %v1220 = vunpack.c.l.b16 %v324
  %v1221 = vunpack.c.h.b16 %v324
  %v1222 = vunpack.c.l.b16 %v325
  %v1223 = vunpack.c.h.b16 %v325
  %v1224 = vunpack.c.l.b16 %v326
  %v1225 = vunpack.c.h.b16 %v326
  %v1226 = vunpack.c.l.b16 %v327
  %v1227 = vunpack.c.h.b16 %v327
  %v1228 = vunpack.c.l.b16 %v328
  %v1229 = vunpack.c.h.b16 %v328
  %v1230 = vunpack.c.l.b16 %v329
  %v1231 = vunpack.c.h.b16 %v329
  %v1232 = vunpack.c.l.b16 %v330
  %v1233 = vunpack.c.h.b16 %v330
  %v1234 = vunpack.c.l.b16 %v331
  %v1235 = vunpack.c.h.b16 %v331
  %v1236 = vunpack.c.l.b16 %v332
  %v1237 = vunpack.c.h.b16 %v332
  %v1238 = vunpack.c.l.b16 %v333
  %v1239 = vunpack.c.h.b16 %v333
  %v1240 = vunpack.c.l.b16 %v334
  %v1241 = vunpack.c.h.b16 %v334
  %v1242 = vunpack.c.l.b16 %v335
  %v1243 = vunpack.c.h.b16 %v335
  %v1244 = vunpack.c.l.b16 %v336
  %v1245 = vunpack.c.h.b16 %v336
  %v1246 = vunpack.c.l.b16 %v337
  %v1247 = vunpack.c.h.b16 %v337
  %v1248 = vunpack.c.l.b16 %v338
  %v1249 = vunpack.c.h.b16 %v338
  %v1250 = vunpack.c.l.b16 %v339
  %v1251 = vunpack.c.h.b16 %v339
  %v1252 = vunpack.c.l.b16 %v340
  %v1253 = vunpack.c.h.b16 %v340
  %v1254 = vunpack.c.l.b16 %v341
  %v1255 = vunpack.c.h.b16 %v341
  %v1256 = vunpack.c.l.b16 %v342
  %v1257 = vunpack.c.h.b16 %v342
  %v1258 = vunpack.c.l.b16 %v343
  %v1259 = vunpack.c.h.b16 %v343
  %v1260 = vunpack.c.l.b16 %v344
  %v1261 = vunpack.c.h.b16 %v344
  %v1262 = vunpack.c.l.b16 %v345
  %v1263 = vunpack.c.h.b16 %v345
  %v1264 = vunpack.c.l.b16 %v346
  %v1265 = vunpack.c.h.b16 %v346
  %v1266 = vunpack.c.l.b16 %v347
  %v1267 = vunpack.c.h.b16 %v347
  %v1268 = vunpack.c.l.b16 %v348
  %v1269 = vunpack.c.h.b16 %v348
  %v1270 = vunpack.c.l.b16 %v349
  %v1271 = vunpack.c.h.b16 %v349
  %v1272 = vunpack.c.l.b16 %v350
  %v1273 = vunpack.c.h.b16 %v350
  %v1274 = vunpack.c.l.b16 %v351
  %v1275 = vunpack.c.h.b16 %v351
  %v1276 = vunpack.c.l.b16 %v352
  %v1277 = vunpack.c.h.b16 %v352
  %v1278 = vunpack.c.l.b16 %v353
  %v1279 = vunpack.c.h.b16 %v353
  %v1280 = vunpack.c.l.b16 %v354
  %v1281 = vunpack.c.h.b16 %v354
  %v1282 = vunpack.c.l.b16 %v355
  %v1283 = vunpack.c.h.b16 %v355
  %v1284 = vunpack.c.l.b16 %v356
  %v1285 = vunpack.c.h.b16 %v356
  %v1286 = vunpack.c.l.b16 %v357
  %v1287 = vunpack.c.h.b16 %v357
  %v1288 = vunpack.c.l.b16 %v358
  %v1289 = vunpack.c.h.b16 %v358
  %v1290 = vunpack.c.l.b16 %v359
  %v1291 = vunpack.c.h.b16 %v359
  %v1292 = vunpack.c.l.b16 %v360
  %v1293 = vunpack.c.h.b16 %v360
  %v1294 = vunpack.c.l.b16 %v361
  %v1295 = vunpack.c.h.b16 %v361
  %v1296 = vunpack.c.l.b16 %v362
  %v1297 = vunpack.c.h.b16 %v362
  %v1298 = vunpack.c.l.b16 %v363
  %v1299 = vunpack.c.h.b16 %v363
  %v1300 = vunpack.c.l.b16 %v364
  %v1301 = vunpack.c.h.b16 %v364
  %v1302 = vunpack.c.l.b16 %v365
  %v1303 = vunpack.c.h.b16 %v365
  %v1304 = vunpack.c.l.b16 %v366
  %v1305 = vunpack.c.h.b16 %v366
  %v1306 = vunpack.c.l.b16 %v367
  %v1307 = vunpack.c.h.b16 %v367
  %v1308 = vunpack.c.l.b16 %v368
  %v1309 = vunpack.c.h.b16 %v368
  %v1310 = vunpack.c.l.b16 %v369
  %v1311 = vunpack.c.h.b16 %v369
  %v1312 = vunpack.c.l.b16 %v370
  %v1313 = vunpack.c.h.b16 %v370
  %v1314 = vunpack.c.l.b16 %v371
  %v1315 = vunpack.c.h.b16 %v371
  %v1316 = vunpack.c.l.b16 %v372
  %v1317 = vunpack.c.h.b16 %v372
  %v1318 = vunpack.c.l.b16 %v373
  %v1319 = vunpack.c.h.b16 %v373
  %v1320 = vunpack.c.l.b16 %v374
  %v1321 = vunpack.c.h.b16 %v374
  %v1322 = vunpack.c.l.b16 %v375
  %v1323 = vunpack.c.h.b16 %v375
  %v1324 = vunpack.c.l.b16 %v376
  %v1325 = vunpack.c.h.b16 %v376
  %v1326 = vunpack.c.l.b16 %v377
  %v1327 = vunpack.c.h.b16 %v377
  %v1328 = vunpack.c.l.b16 %v378
  %v1329 = vunpack.c.h.b16 %v378
  %v1330 = vunpack.c.l.b16 %v379
  %v1331 = vunpack.c.h.b16 %v379
  %v1332 = vunpack.c.l.b16 %v380
  %v1333 = vunpack.c.h.b16 %v380
  %v1334 = vunpack.c.l.b16 %v381
  %v1335 = vunpack.c.h.b16 %v381
  %v1336 = vunpack.c.l.b16 %v382
  %v1337 = vunpack.c.h.b16 %v382
  %v1338 = vunpack.c.l.b16 %v383
  %v1339 = vunpack.c.h.b16 %v383
  %v1340 = vunpack.c.l.b16 %v384
  %v1341 = vunpack.c.h.b16 %v384
  %v1342 = vunpack.c.l.b16 %v385
  %v1343 = vunpack.c.h.b16 %v385
  %v1344 = vunpack.c.l.b16 %v386
  %v1345 = vunpack.c.h.b16 %v386
  %v1346 = vunpack.c.l.b16 %v387
  %v1347 = vunpack.c.h.b16 %v387
  %v1348 = vunpack.c.l.b16 %v388
  %v1349 = vunpack.c.h.b16 %v388
  %v1350 = vunpack.c.l.b16 %v389
  %v1351 = vunpack.c.h.b16 %v389
  %v1352 = vunpack.c.l.b16 %v390
  %v1353 = vunpack.c.h.b16 %v390
  %v1354 = vunpack.c.l.b16 %v391
  %v1355 = vunpack.c.h.b16 %v391
  %v1356 = vunpack.c.l.b16 %v392
  %v1357 = vunpack.c.h.b16 %v392
  %v1358 = vunpack.c.l.b16 %v393
  %v1359 = vunpack.c.h.b16 %v393
  %v1360 = vunpack.c.l.b16 %v394
  %v1361 = vunpack.c.h.b16 %v394
  %v1362 = vunpack.c.l.b16 %v395
  %v1363 = vunpack.c.h.b16 %v395
  %v1364 = vunpack.c.l.b16 %v396
  %v1365 = vunpack.c.h.b16 %v396
  %v1366 = vunpack.c.l.b16 %v397
  %v1367 = vunpack.c.h.b16 %v397
  %v1368 = vunpack.c.l.b16 %v398
  %v1369 = vunpack.c.h.b16 %v398
  %v1370 = vunpack.c.l.b16 %v399
  %v1371 = vunpack.c.h.b16 %v399
  %v1372 = vunpack.c.l.b16 %v400
  %v1373 = vunpack.c.h.b16 %v400
  %v1374 = vunpack.c.l.b16 %v401
  %v1375 = vunpack.c.h.b16 %v401
  %v1376 = vunpack.c.l.b16 %v402
  %v1377 = vunpack.c.h.b16 %v402
  %v1378 = vunpack.c.l.b16 %v403
  %v1379 = vunpack.c.h.b16 %v403
  %v1380 = vunpack.c.l.b16 %v404
  %v1381 = vunpack.c.h.b16 %v404
  %v1382 = vunpack.c.l.b16 %v405
  %v1383 = vunpack.c.h.b16 %v405
  %v1384 = vunpack.c.l.b16 %v406
  %v1385 = vunpack.c.h.b16 %v406
  %v1386 = vunpack.c.l.b16 %v407
  %v1387 = vunpack.c.h.b16 %v407
  %v1388 = vunpack.c.l.b16 %v408
  %v1389 = vunpack.c.h.b16 %v408
  %v1390 = vunpack.c.l.b16 %v409
  %v1391 = vunpack.c.h.b16 %v409
  %v1392 = vunpack.c.l.b16 %v410
  %v1393 = vunpack.c.h.b16 %v410
  %v1394 = vunpack.c.l.b16 %v411
  %v1395 = vunpack.c.h.b16 %v411
  %v1396 = vunpack.c.l.b16 %v412
  %v1397 = vunpack.c.h.b16 %v412
  %v1398 = vunpack.c.l.b16 %v413
  %v1399 = vunpack.c.h.b16 %v413
  %v1400 = vunpack.c.l.b16 %v414
  %v1401 = vunpack.c.h.b16 %v414
  %v1402 = vunpack.c.l.b16 %v415
  %v1403 = vunpack.c.h.b16 %v415
  %v1404 = vunpack.c.l.b16 %v416
  %v1405 = vunpack.c.h.b16 %v416
  %v1406 = vunpack.c.l.b16 %v417
  %v1407 = vunpack.c.h.b16 %v417
  %v1408 = vunpack.c.l.b16 %v418
  %v1409 = vunpack.c.h.b16 %v418
  %v1410 = vunpack.c.l.b16 %v419
  %v1411 = vunpack.c.h.b16 %v419
  %v1412 = vunpack.c.l.b16 %v420
  %v1413 = vunpack.c.h.b16 %v420
  %v1414 = vunpack.c.l.b16 %v421
  %v1415 = vunpack.c.h.b16 %v421
  %v1416 = vunpack.c.l.b16 %v422
  %v1417 = vunpack.c.h.b16 %v422
  %v1418 = vunpack.c.l.b16 %v423
  %v1419 = vunpack.c.h.b16 %v423
  %v1420 = vunpack.c.l.b16 %v424
  %v1421 = vunpack.c.h.b16 %v424
  %v1422 = vunpack.c.l.b16 %v425
  %v1423 = vunpack.c.h.b16 %v425
  %v1424 = vunpack.c.l.b16 %v426
  %v1425 = vunpack.c.h.b16 %v426
  %v1426 = vunpack.c.l.b16 %v427
  %v1427 = vunpack.c.h.b16 %v427
  %v1428 = vunpack.c.l.b16 %v428
  %v1429 = vunpack.c.h.b16 %v428
  %v1430 = vunpack.c.l.b16 %v429
  %v1431 = vunpack.c.h.b16 %v429
  %v1432 = vunpack.c.l.b16 %v430
  %v1433 = vunpack.c.h.b16 %v430
  %v1434 = vunpack.c.l.b16 %v431
  %v1435 = vunpack.c.h.b16 %v431
  %v1436 = vunpack.c.l.b16 %v432
  %v1437 = vunpack.c.h.b16 %v432
  %v1438 = vunpack.c.l.b16 %v433
  %v1439 = vunpack.c.h.b16 %v433
  %v1440 = vunpack.c.l.b16 %v434
  %v1441 = vunpack.c.h.b16 %v434
  %v1442 = vunpack.c.l.b16 %v435
  %v1443 = vunpack.c.h.b16 %v435
  %v1444 = vunpack.c.l.b16 %v436
  %v1445 = vunpack.c.h.b16 %v436
  %v1446 = vunpack.c.l.b16 %v437
  %v1447 = vunpack.c.h.b16 %v437
  %v1448 = vunpack.c.l.b16 %v438
  %v1449 = vunpack.c.h.b16 %v438
  %v1450 = vunpack.c.l.b16 %v439
  %v1451 = vunpack.c.h.b16 %v439
  %v1452 = vunpack.c.l.b16 %v440
  %v1453 = vunpack.c.h.b16 %v440
  %v1454 = vunpack.c.l.b16 %v441
  %v1455 = vunpack.c.h.b16 %v441
  %v1456 = vunpack.c.l.b16 %v442
  %v1457 = vunpack.c.h.b16 %v442
  %v1458 = vunpack.c.l.b16 %v443
  %v1459 = vunpack.c.h.b16 %v443
  %v1460 = vunpack.c.l.b16 %v444
  %v1461 = vunpack.c.h.b16 %v444
  %v1462 = vunpack.c.l.b16 %v445
  %v1463 = vunpack.c.h.b16 %v445
  %v1464 = vunpack.c.l.b16 %v446
  %v1465 = vunpack.c.h.b16 %v446
  %v1466 = vunpack.c.l.b16 %v447
  %v1467 = vunpack.c.h.b16 %v447
  %v1468 = vunpack.c.l.b16 %v448
  %v1469 = vunpack.c.h.b16 %v448
  %v1470 = vunpack.c.l.b16 %v449
  %v1471 = vunpack.c.h.b16 %v449
  %v1472 = vunpack.c.l.b16 %v450
  %v1473 = vunpack.c.h.b16 %v450
  %v1474 = vunpack.c.l.b16 %v451
  %v1475 = vunpack.c.h.b16 %v451
  %v1476 = vunpack.c.l.b16 %v452
  %v1477 = vunpack.c.h.b16 %v452
  %v1478 = vunpack.c.l.b16 %v453
  %v1479 = vunpack.c.h.b16 %v453
  %v1480 = vunpack.c.l.b16 %v454
  %v1481 = vunpack.c.h.b16 %v454
  %v1482 = vunpack.c.l.b16 %v455
  %v1483 = vunpack.c.h.b16 %v455
  %v1484 = vunpack.c.l.b16 %v456
  %v1485 = vunpack.c.h.b16 %v456
  %v1486 = vunpack.c.l.b16 %v457
  %v1487 = vunpack.c.h.b16 %v457
  %v1488 = vunpack.c.l.b16 %v458
  %v1489 = vunpack.c.h.b16 %v458
  %v1490 = vunpack.c.l.b16 %v459
  %v1491 = vunpack.c.h.b16 %v459
  %v1492 = vunpack.c.l.b16 %v460
  %v1493 = vunpack.c.h.b16 %v460
  %v1494 = vunpack.c.l.b16 %v461
  %v1495 = vunpack.c.h.b16 %v461
  %v1496 = vunpack.c.l.b16 %v462
  %v1497 = vunpack.c.h.b16 %v462
  %v1498 = vunpack.c.l.b16 %v463
  %v1499 = vunpack.c.h.b16 %v463
  %v1500 = vunpack.c.l.b16 %v464
  %v1501 = vunpack.c.h.b16 %v464
  %v1502 = vunpack.c.l.b16 %v465
  %v1503 = vunpack.c.h.b16 %v465
  %v1504 = vunpack.c.l.b16 %v466
  %v1505 = vunpack.c.h.b16 %v466
  %v1506 = vunpack.c.l.b16 %v467
  %v1507 = vunpack.c.h.b16 %v467
  %v1508 = vunpack.c.l.b16 %v468
  %v1509 = vunpack.c.h.b16 %v468
  %v1510 = vunpack.c.l.b16 %v469
  %v1511 = vunpack.c.h.b16 %v469
  %v1512 = vunpack.c.l.b16 %v470
  %v1513 = vunpack.c.h.b16 %v470
  %v1514 = vunpack.c.l.b16 %v471
  %v1515 = vunpack.c.h.b16 %v471
  %v1516 = vunpack.c.l.b16 %v472
  %v1517 = vunpack.c.h.b16 %v472
  %v1518 = vunpack.c.l.b16 %v473
  %v1519 = vunpack.c.h.b16 %v473
  %v1520 = vunpack.c.l.b16 %v474
  %v1521 = vunpack.c.h.b16 %v474
  %v1522 = vunpack.c.l.b16 %v475
  %v1523 = vunpack.c.h.b16 %v475
  %v1524 = vunpack.c.l.b16 %v476
  %v1525 = vunpack.c.h.b16 %v476
  %v1526 = vunpack.c.l.b16 %v477
  %v1527 = vunpack.c.h.b16 %v477
  %v1528 = vunpack.c.l.b16 %v478
  %v1529 = vunpack.c.h.b16 %v478
  %v1530 = vunpack.c.l.b16 %v479
  %v1531 = vunpack.c.h.b16 %v479
  %v1532 = vunpack.c.l.b16 %v480
  %v1533 = vunpack.c.h.b16 %v480
  %v1534 = vunpack.c.l.b16 %v481
  %v1535 = vunpack.c.h.b16 %v481
  %v1536 = vunpack.c.l.b16 %v482
  %v1537 = vunpack.c.h.b16 %v482
  %v1538 = vunpack.c.l.b16 %v483
  %v1539 = vunpack.c.h.b16 %v483
  %v1540 = vunpack.c.l.b16 %v484
  %v1541 = vunpack.c.h.b16 %v484
  %v1542 = vunpack.c.l.b16 %v485
  %v1543 = vunpack.c.h.b16 %v485
  %v1544 = vunpack.c.l.b16 %v486
  %v1545 = vunpack.c.h.b16 %v486
  %v1546 = vunpack.c.l.b16 %v487
  %v1547 = vunpack.c.h.b16 %v487
  %v1548 = vunpack.c.l.b16 %v488
  %v1549 = vunpack.c.h.b16 %v488
  %v1550 = vunpack.c.l.b16 %v489
  %v1551 = vunpack.c.h.b16 %v489
  %v1552 = vunpack.c.l.b16 %v490
  %v1553 = vunpack.c.h.b16 %v490
  %v1554 = vunpack.c.l.b16 %v491
  %v1555 = vunpack.c.h.b16 %v491
  %v1556 = vunpack.c.l.b16 %v492
  %v1557 = vunpack.c.h.b16 %v492
  %v1558 = vunpack.c.l.b16 %v493
  %v1559 = vunpack.c.h.b16 %v493
  %v1560 = vunpack.c.l.b16 %v494
  %v1561 = vunpack.c.h.b16 %v494
  %v1562 = vunpack.c.l.b16 %v495
  %v1563 = vunpack.c.h.b16 %v495
  %v1564 = vunpack.c.l.b16 %v496
  %v1565 = vunpack.c.h.b16 %v496
  %v1566 = vunpack.c.l.b16 %v497
  %v1567 = vunpack.c.h.b16 %v497
  %v1568 = vunpack.c.l.b16 %v498
  %v1569 = vunpack.c.h.b16 %v498
  %v1570 = vunpack.c.l.b16 %v499
  %v1571 = vunpack.c.h.b16 %v499
  %v1572 = vunpack.c.l.b16 %v500
  %v1573 = vunpack.c.h.b16 %v500
  %v1574 = vunpack.c.l.b16 %v501
  %v1575 = vunpack.c.h.b16 %v501
  %v1576 = vunpack.c.l.b16 %v502
  %v1577 = vunpack.c.h.b16 %v502
  %v1578 = vunpack.c.l.b16 %v503
  %v1579 = vunpack.c.h.b16 %v503
  %v1580 = vunpack.c.l.b16 %v504
  %v1581 = vunpack.c.h.b16 %v504
  %v1582 = vunpack.c.l.b16 %v505
  %v1583 = vunpack.c.h.b16 %v505
  %v1584 = vunpack.c.l.b16 %v506
  %v1585 = vunpack.c.h.b16 %v506
  %v1586 = vunpack.c.l.b16 %v507
  %v1587 = vunpack.c.h.b16 %v507
  %v1588 = vunpack.c.l.b16 %v508
  %v1589 = vunpack.c.h.b16 %v508
  %v1590 = vunpack.c.l.b16 %v509
  %v1591 = vunpack.c.h.b16 %v509
  %v1592 = vunpack.c.l.b16 %v510
  %v1593 = vunpack.c.h.b16 %v510
  %v1594 = vunpack.c.l.b16 %v511
  %v1595 = vunpack.c.h.b16 %v511
  %v1596 = vunpack.c.l.b16 %v512
  %v1597 = vunpack.c.h.b16 %v512
  %v1598 = vunpack.c.l.b16 %v513
  %v1599 = vunpack.c.h.b16 %v513
  %v1600 = vunpack.c.l.b16 %v514
  %v1601 = vunpack.c.h.b16 %v514
  %v1602 = vunpack.c.l.b16 %v515
  %v1603 = vunpack.c.h.b16 %v515
  %v1604 = vunpack.c.l.b16 %v516
  %v1605 = vunpack.c.h.b16 %v516
  %v1606 = vunpack.c.l.b16 %v517
  %v1607 = vunpack.c.h.b16 %v517
  %v1608 = vunpack.c.l.b16 %v518
  %v1609 = vunpack.c.h.b16 %v518
  %v1610 = vunpack.c.l.b16 %v519
  %v1611 = vunpack.c.h.b16 %v519
  %v1612 = vunpack.c.l.b16 %v520
  %v1613 = vunpack.c.h.b16 %v520
  %v1614 = vunpack.c.l.b16 %v521
  %v1615 = vunpack.c.h.b16 %v521
  %v1616 = vunpack.c.l.b16 %v522
  %v1617 = vunpack.c.h.b16 %v522
  %v1618 = vunpack.c.l.b16 %v523
  %v1619 = vunpack.c.h.b16 %v523
  %v1620 = vunpack.c.l.b16 %v524
  %v1621 = vunpack.c.h.b16 %v524
  %v1622 = vunpack.c.l.b16 %v525
  %v1623 = vunpack.c.h.b16 %v525
  %v1624 = vunpack.c.l.b16 %v526
  %v1625 = vunpack.c.h.b16 %v526
  %v1626 = vunpack.c.l.b16 %v527
  %v1627 = vunpack.c.h.b16 %v527
  %v1628 = vunpack.c.l.b16 %v528
  %v1629 = vunpack.c.h.b16 %v528
  %v1630 = vunpack.c.l.b16 %v529
  %v1631 = vunpack.c.h.b16 %v529
  %v1632 = vunpack.c.l.b16 %v530
  %v1633 = vunpack.c.h.b16 %v530
  %v1634 = vunpack.c.l.b16 %v531
  %v1635 = vunpack.c.h.b16 %v531
  %v1636 = vunpack.c.l.b16 %v532
  %v1637 = vunpack.c.h.b16 %v532
  %v1638 = vunpack.c.l.b16 %v533
  %v1639 = vunpack.c.h.b16 %v533
  %v1640 = vunpack.c.l.b16 %v534
  %v1641 = vunpack.c.h.b16 %v534
  %v1642 = vunpack.c.l.b16 %v535
  %v1643 = vunpack.c.h.b16 %v535
  %v1644 = vunpack.c.l.b16 %v536
  %v1645 = vunpack.c.h.b16 %v536
  %v1646 = vunpack.c.l.b16 %v537
  %v1647 = vunpack.c.h.b16 %v537
  %v1648 = vunpack.c.l.b16 %v538
  %v1649 = vunpack.c.h.b16 %v538
  %v1650 = vunpack.c.l.b16 %v539
  %v1651 = vunpack.c.h.b16 %v539
  %v1652 = vunpack.c.l.b16 %v540
  %v1653 = vunpack.c.h.b16 %v540
  %v1654 = vunpack.c.l.b16 %v541
  %v1655 = vunpack.c.h.b16 %v541
  %v1656 = vunpack.c.l.b16 %v542
  %v1657 = vunpack.c.h.b16 %v542
  %v1658 = vunpack.c.l.b16 %v543
  %v1659 = vunpack.c.h.b16 %v543
  %v1660 = vunpack.c.l.b16 %v544
  %v1661 = vunpack.c.h.b16 %v544
  %v1662 = vunpack.c.l.b16 %v545
  %v1663 = vunpack.c.h.b16 %v545
  %v1664 = vunpack.c.l.b16 %v546
  %v1665 = vunpack.c.h.b16 %v546
  %v1666 = vunpack.c.l.b16 %v547
  %v1667 = vunpack.c.h.b16 %v547
  %v1668 = vunpack.c.l.b16 %v548
  %v1669 = vunpack.c.h.b16 %v548
  %v1670 = vunpack.c.l.b16 %v549
  %v1671 = vunpack.c.h.b16 %v549
  %v1672 = vunpack.c.l.b16 %v550
  %v1673 = vunpack.c.h.b16 %v550
  %v1674 = vunpack.c.l.b16 %v551
  %v1675 = vunpack.c.h.b16 %v551
  %v1676 = vunpack.c.l.b16 %v552
  %v1677 = vunpack.c.h.b16 %v552
  %v1678 = vunpack.c.l.b16 %v553
  %v1679 = vunpack.c.h.b16 %v553
  %v1680 = vunpack.c.l.b16 %v554
  %v1681 = vunpack.c.h.b16 %v554
  %v1682 = vunpack.c.l.b16 %v555
  %v1683 = vunpack.c.h.b16 %v555
  %v1684 = vunpack.c.l.b16 %v556
  %v1685 = vunpack.c.h.b16 %v556
  %v1686 = vunpack.c.l.b16 %v557
  %v1687 = vunpack.c.h.b16 %v557
  %v1688 = vunpack.c.l.b16 %v558
  %v1689 = vunpack.c.h.b16 %v558
  %v1690 = vunpack.c.l.b16 %v559
  %v1691 = vunpack.c.h.b16 %v559
  %v1692 = vunpack.c.l.b16 %v560
  %v1693 = vunpack.c.h.b16 %v560
  %v1694 = vunpack.c.l.b16 %v561
  %v1695 = vunpack.c.h.b16 %v561
  %v1696 = vunpack.c.l.b16 %v562
  %v1697 = vunpack.c.h.b16 %v562
  %v1698 = vunpack.c.l.b16 %v563
  %v1699 = vunpack.c.h.b16 %v563
  %v1700 = vunpack.c.l.b16 %v564
  %v1701 = vunpack.c.h.b16 %v564
  %v1702 = vunpack.c.l.b16 %v565
  %v1703 = vunpack.c.h.b16 %v565
  %v1704 = vunpack.c.l.b16 %v566
  %v1705 = vunpack.c.h.b16 %v566
  %v1706 = vunpack.c.l.b16 %v567
  %v1707 = vunpack.c.h.b16 %v567
  %v1708 = vunpack.c.l.b16 %v568
  %v1709 = vunpack.c.h.b16 %v568
  %v1710 = vunpack.c.l.b16 %v569
  %v1711 = vunpack.c.h.b16 %v569
  %v1712 = vunpack.c.l.b16 %v570
  %v1713 = vunpack.c.h.b16 %v570
  %v1714 = vunpack.c.l.b16 %v571
  %v1715 = vunpack.c.h.b16 %v571
  %v1716 = vunpack.c.l.b16 %v572
  %v1717 = vunpack.c.h.b16 %v572
  %v1718 = vunpack.c.l.b16 %v573
  %v1719 = vunpack.c.h.b16 %v573
  %v1720 = vunpack.c.l.b16 %v574
  %v1721 = vunpack.c.h.b16 %v574
  %v1722 = vunpack.c.l.b16 %v575
  %v1723 = vunpack.c.h.b16 %v575
  %v1724 = vunpack.c.l.b16 %v576
  %v1725 = vunpack.c.h.b16 %v576
  %v1726 = vunpack.c.l.b16 %v577
  %v1727 = vunpack.c.h.b16 %v577
  %v1728 = vunpack.c.l.b16 %v578
  %v1729 = vunpack.c.h.b16 %v578
  %v1730 = vunpack.c.l.b16 %v579
  %v1731 = vunpack.c.h.b16 %v579
  %v1732 = vunpack.c.l.b16 %v580
  %v1733 = vunpack.c.h.b16 %v580
  %v1734 = vunpack.c.l.b16 %v581
  %v1735 = vunpack.c.h.b16 %v581
  %v1736 = vunpack.c.l.b16 %v582
  %v1737 = vunpack.c.h.b16 %v582
  %v1738 = vunpack.c.l.b16 %v583
  %v1739 = vunpack.c.h.b16 %v583
  %v1740 = vunpack.c.l.b16 %v584
  %v1741 = vunpack.c.h.b16 %v584
  %v1742 = vunpack.c.l.b16 %v585
  %v1743 = vunpack.c.h.b16 %v585
  %v1744 = vunpack.c.l.b16 %v586
  %v1745 = vunpack.c.h.b16 %v586
  %v1746 = vunpack.c.l.b16 %v587
  %v1747 = vunpack.c.h.b16 %v587
  %v1748 = vunpack.c.l.b16 %v588
  %v1749 = vunpack.c.h.b16 %v588
  %v1750 = vunpack.c.l.b16 %v589
  %v1751 = vunpack.c.h.b16 %v589
  %v1752 = vunpack.c.l.b16 %v590
  %v1753 = vunpack.c.h.b16 %v590
  %v1754 = vunpack.c.l.b16 %v591
  %v1755 = vunpack.c.h.b16 %v591
  %v1756 = vunpack.c.l.b16 %v592
  %v1757 = vunpack.c.h.b16 %v592
  %v1758 = vunpack.c.l.b16 %v593
  %v1759 = vunpack.c.h.b16 %v593
  %v1760 = vunpack.c.l.b16 %v594
  %v1761 = vunpack.c.h.b16 %v594
  %v1762 = vunpack.c.l.b16 %v595
  %v1763 = vunpack.c.h.b16 %v595
  %v1764 = vunpack.c.l.b16 %v596
  %v1765 = vunpack.c.h.b16 %v596
  %v1766 = vunpack.c.l.b16 %v597
  %v1767 = vunpack.c.h.b16 %v597
  %v1768 = vunpack.c.l.b16 %v598
  %v1769 = vunpack.c.h.b16 %v598
  %v1770 = vunpack.c.l.b16 %v599
  %v1771 = vunpack.c.h.b16 %v599
  %v1772 = vunpack.c.l.b16 %v600
  %v1773 = vunpack.c.h.b16 %v600
  %v1774 = vunpack.c.l.b16 %v601
  %v1775 = vunpack.c.h.b16 %v601
  %v1776 = vunpack.c.l.b16 %v602
  %v1777 = vunpack.c.h.b16 %v602
  %v1778 = vunpack.c.l.b16 %v603
  %v1779 = vunpack.c.h.b16 %v603
  %v1780 = vunpack.c.l.b16 %v604
  %v1781 = vunpack.c.h.b16 %v604
  %v1782 = vunpack.c.l.b16 %v605
  %v1783 = vunpack.c.h.b16 %v605
  %v1784 = vunpack.c.l.b16 %v606
  %v1785 = vunpack.c.h.b16 %v606
  %v1786 = vunpack.c.l.b16 %v607
  %v1787 = vunpack.c.h.b16 %v607
  %v1788 = vunpack.c.l.b16 %v608
  %v1789 = vunpack.c.h.b16 %v608
  %v1790 = vunpack.c.l.b16 %v609
  %v1791 = vunpack.c.h.b16 %v609
  %v1792 = vunpack.c.l.b16 %v610
  %v1793 = vunpack.c.h.b16 %v610
  %v1794 = vunpack.c.l.b16 %v611
  %v1795 = vunpack.c.h.b16 %v611
  %v1796 = vunpack.c.l.b16 %v612
  %v1797 = vunpack.c.h.b16 %v612
  %v1798 = vunpack.c.l.b16 %v613
  %v1799 = vunpack.c.h.b16 %v613
  %v1800 = vunpack.c.l.b16 %v614
  %v1801 = vunpack.c.h.b16 %v614
  %v1802 = vunpack.c.l.b16 %v615
  %v1803 = vunpack.c.h.b16 %v615
  %v1804 = vunpack.c.l.b16 %v616
  %v1805 = vunpack.c.h.b16 %v616
  %v1806 = vunpack.c.l.b16 %v617
  %v1807 = vunpack.c.h.b16 %v617
  %v1808 = vunpack.c.l.b16 %v618
  %v1809 = vunpack.c.h.b16 %v618
  %v1810 = vunpack.c.l.b16 %v619
  %v1811 = vunpack.c.h.b16 %v619
  %v1812 = vunpack.c.l.b16 %v620
  %v1813 = vunpack.c.h.b16 %v620
  %v1814 = vunpack.c.l.b16 %v621
  %v1815 = vunpack.c.h.b16 %v621
  %v1816 = vpack.c.b16 %v1056, %v1048
  %v1817 = vpack.c.b16 %v1057, %v1049
  %v1818 = vpack.c.b16 %v1058, %v1050
  %v1819 = vpack.c.b16 %v1059, %v1051
  %v1820 = vpack.c.b16 %v1060, %v1052
  %v1821 = vpack.c.b16 %v1061, %v1053
  %v1822 = vpack.c.b16 %v1062, %v1054
  %v1823 = vpack.c.b16 %v1063, %v1055
  %v1824 = vpack.c.b16 %v1072, %v1064
  %v1825 = vpack.c.b16 %v1073, %v1065
  %v1826 = vpack.c.b16 %v1074, %v1066
  %v1827 = vpack.c.b16 %v1075, %v1067
  %v1828 = vpack.c.b16 %v1076, %v1068
  %v1829 = vpack.c.b16 %v1077, %v1069
  %v1830 = vpack.c.b16 %v1078, %v1070
  %v1831 = vpack.c.b16 %v1079, %v1071
  %v1832 = vpack.c.b16 %v1088, %v1080
  %v1833 = vpack.c.b16 %v1089, %v1081
  %v1834 = vpack.c.b16 %v1090, %v1082
  %v1835 = vpack.c.b16 %v1091, %v1083
  %v1836 = vpack.c.b16 %v1092, %v1084
  %v1837 = vpack.c.b16 %v1093, %v1085
  %v1838 = vpack.c.b16 %v1094, %v1086
  %v1839 = vpack.c.b16 %v1095, %v1087
  %v1840 = vpack.c.b16 %v1104, %v1096
  %v1841 = vpack.c.b16 %v1105, %v1097
  %v1842 = vpack.c.b16 %v1106, %v1098
  %v1843 = vpack.c.b16 %v1107, %v1099
  %v1844 = vpack.c.b16 %v1108, %v1100
  %v1845 = vpack.c.b16 %v1109, %v1101
  %v1846 = vpack.c.b16 %v1110, %v1102
  %v1847 = vpack.c.b16 %v1111, %v1103
  %v1848 = vpack.c.b16 %v1120, %v1112
  %v1849 = vpack.c.b16 %v1121, %v1113
  %v1850 = vpack.c.b16 %v1122, %v1114
  %v1851 = vpack.c.b16 %v1123, %v1115
  %v1852 = vpack.c.b16 %v1124, %v1116
  %v1853 = vpack.c.b16 %v1125, %v1117
  %v1854 = vpack.c.b16 %v1126, %v1118
  %v1855 = vpack.c.b16 %v1127, %v1119
  %v1856 = vpack.c.b16 %v1136, %v1128
  %v1857 = vpack.c.b16 %v1137, %v1129
  %v1858 = vpack.c.b16 %v1138, %v1130
  %v1859 = vpack.c.b16 %v1139, %v1131
  %v1860 = vpack.c.b16 %v1140, %v1132
  %v1861 = vpack.c.b16 %v1141, %v1133
  %v1862 = vpack.c.b16 %v1142, %v1134
  %v1863 = vpack.c.b16 %v1143, %v1135
  %v1864 = vpack.c.b16 %v1152, %v1144
  %v1865 = vpack.c.b16 %v1153, %v1145
  %v1866 = vpack.c.b16 %v1154, %v1146
  %v1867 = vpack.c.b16 %v1155, %v1147
  %v1868 = vpack.c.b16 %v1156, %v1148
  %v1869 = vpack.c.b16 %v1157, %v1149
  %v1870 = vpack.c.b16 %v1158, %v1150
  %v1871 = vpack.c.b16 %v1159, %v1151
  %v1872 = vpack.c.b16 %v1168, %v1160
  %v1873 = vpack.c.b16 %v1169, %v1161
  %v1874 = vpack.c.b16 %v1170, %v1162
  %v1875 = vpack.c.b16 %v1171, %v1163
  %v1876 = vpack.c.b16 %v1172, %v1164
  %v1877 = vpack.c.b16 %v1173, %v1165
  %v1878 = vpack.c.b16 %v1174, %v1166
  %v1879 = vpack.c.b16 %v1175, %v1167
  %v1880 = vpack.c.b16 %v1184, %v1176
  %v1881 = vpack.c.b16 %v1185, %v1177
  %v1882 = vpack.c.b16 %v1186, %v1178
  %v1883 = vpack.c.b16 %v1187, %v1179
  %v1884 = vpack.c.b16 %v1188, %v1180
  %v1885 = vpack.c.b16 %v1189, %v1181
  %v1886 = vpack.c.b16 %v1190, %v1182
  %v1887 = vpack.c.b16 %v1191, %v1183
  %v1888 = vpack.c.b16 %v1200, %v1192
  %v1889 = vpack.c.b16 %v1201, %v1193
  %v1890 = vpack.c.b16 %v1202, %v1194
  %v1891 = vpack.c.b16 %v1203, %v1195
  %v1892 = vpack.c.b16 %v1204, %v1196
  %v1893 = vpack.c.b16 %v1205, %v1197
  %v1894 = vpack.c.b16 %v1206, %v1198
  %v1895 = vpack.c.b16 %v1207, %v1199
  %v1896 = vpack.c.b16 %v1216, %v1208
  %v1897 = vpack.c.b16 %v1217, %v1209
  %v1898 = vpack.c.b16 %v1218, %v1210
  %v1899 = vpack.c.b16 %v1219, %v1211
  %v1900 = vpack.c.b16 %v1220, %v1212
  %v1901 = vpack.c.b16 %v1221, %v1213
  %v1902 = vpack.c.b16 %v1222, %v1214
  %v1903 = vpack.c.b16 %v1223, %v1215
  %v1904 = vpack.c.b16 %v1232, %v1224
  %v1905 = vpack.c.b16 %v1233, %v1225
  %v1906 = vpack.c.b16 %v1234, %v1226
  %v1907 = vpack.c.b16 %v1235, %v1227
  %v1908 = vpack.c.b16 %v1236, %v1228
  %v1909 = vpack.c.b16 %v1237, %v1229
  %v1910 = vpack.c.b16 %v1238, %v1230
  %v1911 = vpack.c.b16 %v1239, %v1231
  %v1912 = vpack.c.b16 %v1248, %v1240
  %v1913 = vpack.c.b16 %v1249, %v1241
  %v1914 = vpack.c.b16 %v1250, %v1242
  %v1915 = vpack.c.b16 %v1251, %v1243
  %v1916 = vpack.c.b16 %v1252, %v1244
  %v1917 = vpack.c.b16 %v1253, %v1245
  %v1918 = vpack.c.b16 %v1254, %v1246
  %v1919 = vpack.c.b16 %v1255, %v1247
  %v1920 = vpack.c.b16 %v1264, %v1256
  %v1921 = vpack.c.b16 %v1265, %v1257
  %v1922 = vpack.c.b16 %v1266, %v1258
  %v1923 = vpack.c.b16 %v1267, %v1259
  %v1924 = vpack.c.b16 %v1268, %v1260
  %v1925 = vpack.c.b16 %v1269, %v1261
  %v1926 = vpack.c.b16 %v1270, %v1262
  %v1927 = vpack.c.b16 %v1271, %v1263
  %v1928 = vpack.c.b16 %v1280, %v1272
  %v1929 = vpack.c.b16 %v1281, %v1273
  %v1930 = vpack.c.b16 %v1282, %v1274
  %v1931 = vpack.c.b16 %v1283, %v1275
  %v1932 = vpack.c.b16 %v1284, %v1276
  %v1933 = vpack.c.b16 %v1285, %v1277
  %v1934 = vpack.c.b16 %v1286, %v1278
  %v1935 = vpack.c.b16 %v1287, %v1279
  %v1936 = vpack.c.b16 %v1296, %v1288
  %v1937 = vpack.c.b16 %v1297, %v1289
  %v1938 = vpack.c.b16 %v1298, %v1290
  %v1939 = vpack.c.b16 %v1299, %v1291
  %v1940 = vpack.c.b16 %v1300, %v1292
  %v1941 = vpack.c.b16 %v1301, %v1293
  %v1942 = vpack.c.b16 %v1302, %v1294
  %v1943 = vpack.c.b16 %v1303, %v1295
  %v1944 = vpack.c.b16 %v1312, %v1304
  %v1945 = vpack.c.b16 %v1313, %v1305
  %v1946 = vpack.c.b16 %v1314, %v1306
  %v1947 = vpack.c.b16 %v1315, %v1307
  %v1948 = vpack.c.b16 %v1316, %v1308
  %v1949 = vpack.c.b16 %v1317, %v1309
  %v1950 = vpack.c.b16 %v1318, %v1310
  %v1951 = vpack.c.b16 %v1319, %v1311
  %v1952 = vpack.c.b16 %v1328, %v1320
  %v1953 = vpack.c.b16 %v1329, %v1321
  %v1954 = vpack.c.b16 %v1330, %v1322
  %v1955 = vpack.c.b16 %v1331, %v1323
  %v1956 = vpack.c.b16 %v1332, %v1324
  %v1957 = vpack.c.b16 %v1333, %v1325
  %v1958 = vpack.c.b16 %v1334, %v1326
  %v1959 = vpack.c.b16 %v1335, %v1327
  %v1960 = vpack.c.b16 %v1344, %v1336
  %v1961 = vpack.c.b16 %v1345, %v1337
  %v1962 = vpack.c.b16 %v1346, %v1338
  %v1963 = vpack.c.b16 %v1347, %v1339
  %v1964 = vpack.c.b16 %v1348, %v1340
  %v1965 = vpack.c.b16 %v1349, %v1341
  %v1966 = vpack.c.b16 %v1350, %v1342
  %v1967 = vpack.c.b16 %v1351, %v1343
  %v1968 = vpack.c.b16 %v1360, %v1352
  %v1969 = vpack.c.b16 %v1361, %v1353
  %v1970 = vpack.c.b16 %v1362, %v1354
  %v1971 = vpack.c.b16 %v1363, %v1355
  %v1972 = vpack.c.b16 %v1364, %v1356
  %v1973 = vpack.c.b16 %v1365, %v1357
  %v1974 = vpack.c.b16 %v1366, %v1358
  %v1975 = vpack.c.b16 %v1367, %v1359
  %v1976 = vpack.c.b16 %v1376, %v1368
  %v1977 = vpack.c.b16 %v1377, %v1369
  %v1978 = vpack.c.b16 %v1378, %v1370
  %v1979 = vpack.c.b16 %v1379, %v1371
  %v1980 = vpack.c.b16 %v1380, %v1372
  %v1981 = vpack.c.b16 %v1381, %v1373
  %v1982 = vpack.c.b16 %v1382, %v1374
  %v1983 = vpack.c.b16 %v1383, %v1375
  %v1984 = vpack.c.b16 %v1392, %v1384
  %v1985 = vpack.c.b16 %v1393, %v1385
  %v1986 = vpack.c.b16 %v1394, %v1386
  %v1987 = vpack.c.b16 %v1395, %v1387
  %v1988 = vpack.c.b16 %v1396, %v1388
  %v1989 = vpack.c.b16 %v1397, %v1389
  %v1990 = vpack.c.b16 %v1398, %v1390
  %v1991 = vpack.c.b16 %v1399, %v1391
  %v1992 = vpack.c.b16 %v1408, %v1400
  %v1993 = vpack.c.b16 %v1409, %v1401
  %v1994 = vpack.c.b16 %v1410, %v1402
  %v1995 = vpack.c.b16 %v1411, %v1403
  %v1996 = vpack.c.b16 %v1412, %v1404
  %v1997 = vpack.c.b16 %v1413, %v1405
  %v1998 = vpack.c.b16 %v1414, %v1406
  %v1999 = vpack.c.b16 %v1415, %v1407
  %v2000 = vpack.c.b16 %v1424, %v1416
  %v2001 = vpack.c.b16 %v1425, %v1417
  %v2002 = vpack.c.b16 %v1426, %v1418
  %v2003 = vpack.c.b16 %v1427, %v1419
  %v2004 = vpack.c.b16 %v1428, %v1420
  %v2005 = vpack.c.b16 %v1429, %v1421
  %v2006 = vpack.c.b16 %v1430, %v1422
  %v2007 = vpack.c.b16 %v1431, %v1423
  %v2008 = vpack.c.b16 %v1440, %v1432
  %v2009 = vpack.c.b16 %v1441, %v1433
  %v2010 = vpack.c.b16 %v1442, %v1434
  %v2011 = vpack.c.b16 %v1443, %v1435
  %v2012 = vpack.c.b16 %v1444, %v1436
  %v2013 = vpack.c.b16 %v1445, %v1437
  %v2014 = vpack.c.b16 %v1446, %v1438
  %v2015 = vpack.c.b16 %v1447, %v1439
  %v2016 = vpack.c.b16 %v1456, %v1448
  %v2017 = vpack.c.b16 %v1457, %v1449
  %v2018 = vpack.c.b16 %v1458, %v1450
  %v2019 = vpack.c.b16 %v1459, %v1451
  %v2020 = vpack.c.b16 %v1460, %v1452
  %v2021 = vpack.c.b16 %v1461, %v1453
  %v2022 = vpack.c.b16 %v1462, %v1454
  %v2023 = vpack.c.b16 %v1463, %v1455
  %v2024 = vpack.c.b16 %v1472, %v1464
  %v2025 = vpack.c.b16 %v1473, %v1465
  %v2026 = vpack.c.b16 %v1474, %v1466
  %v2027 = vpack.c.b16 %v1475, %v1467
  %v2028 = vpack.c.b16 %v1476, %v1468
  %v2029 = vpack.c.b16 %v1477, %v1469
  %v2030 = vpack.c.b16 %v1478, %v1470
  %v2031 = vpack.c.b16 %v1479, %v1471
  %v2032 = vpack.c.b16 %v1488, %v1480
  %v2033 = vpack.c.b16 %v1489, %v1481
  %v2034 = vpack.c.b16 %v1490, %v1482
  %v2035 = vpack.c.b16 %v1491, %v1483
  %v2036 = vpack.c.b16 %v1492, %v1484
  %v2037 = vpack.c.b16 %v1493, %v1485
  %v2038 = vpack.c.b16 %v1494, %v1486
  %v2039 = vpack.c.b16 %v1495, %v1487
  %v2040 = vpack.c.b16 %v1504, %v1496
  %v2041 = vpack.c.b16 %v1505, %v1497
  %v2042 = vpack.c.b16 %v1506, %v1498
  %v2043 = vpack.c.b16 %v1507, %v1499
  %v2044 = vpack.c.b16 %v1508, %v1500
  %v2045 = vpack.c.b16 %v1509, %v1501
  %v2046 = vpack.c.b16 %v1510, %v1502
  %v2047 = vpack.c.b16 %v1511, %v1503
  %v2048 = vpack.c.b16 %v1520, %v1512
  %v2049 = vpack.c.b16 %v1521, %v1513
  %v2050 = vpack.c.b16 %v1522, %v1514
  %v2051 = vpack.c.b16 %v1523, %v1515
  %v2052 = vpack.c.b16 %v1524, %v1516
  %v2053 = vpack.c.b16 %v1525, %v1517
  %v2054 = vpack.c.b16 %v1526, %v1518
  %v2055 = vpack.c.b16 %v1527, %v1519
  %v2056 = vpack.c.b16 %v1536, %v1528
  %v2057 = vpack.c.b16 %v1537, %v1529
  %v2058 = vpack.c.b16 %v1538, %v1530
  %v2059 = vpack.c.b16 %v1539, %v1531
  %v2060 = vpack.c.b16 %v1540, %v1532
  %v2061 = vpack.c.b16 %v1541, %v1533
  %v2062 = vpack.c.b16 %v1542, %v1534
  %v2063 = vpack.c.b16 %v1543, %v1535
  %v2064 = vpack.c.b16 %v1552, %v1544
  %v2065 = vpack.c.b16 %v1553, %v1545
  %v2066 = vpack.c.b16 %v1554, %v1546
  %v2067 = vpack.c.b16 %v1555, %v1547
  %v2068 = vpack.c.b16 %v1556, %v1548
  %v2069 = vpack.c.b16 %v1557, %v1549
  %v2070 = vpack.c.b16 %v1558, %v1550
  %v2071 = vpack.c.b16 %v1559, %v1551
  %v2072 = vpack.c.b16 %v1568, %v1560
  %v2073 = vpack.c.b16 %v1569, %v1561
  %v2074 = vpack.c.b16 %v1570, %v1562
  %v2075 = vpack.c.b16 %v1571, %v1563
  %v2076 = vpack.c.b16 %v1572, %v1564
  %v2077 = vpack.c.b16 %v1573, %v1565
  %v2078 = vpack.c.b16 %v1574, %v1566
  %v2079 = vpack.c.b16 %v1575, %v1567
  %v2080 = vpack.c.b16 %v1584, %v1576
  %v2081 = vpack.c.b16 %v1585, %v1577
  %v2082 = vpack.c.b16 %v1586, %v1578
  %v2083 = vpack.c.b16 %v1587, %v1579
  %v2084 = vpack.c.b16 %v1588, %v1580
  %v2085 = vpack.c.b16 %v1589, %v1581
  %v2086 = vpack.c.b16 %v1590, %v1582
  %v2087 = vpack.c.b16 %v1591, %v1583
  %v2088 = vpack.c.b16 %v1600, %v1592
  %v2089 = vpack.c.b16 %v1601, %v1593
  %v2090 = vpack.c.b16 %v1602, %v1594
  %v2091 = vpack.c.b16 %v1603, %v1595
  %v2092 = vpack.c.b16 %v1604, %v1596
  %v2093 = vpack.c.b16 %v1605, %v1597
  %v2094 = vpack.c.b16 %v1606, %v1598
  %v2095 = vpack.c.b16 %v1607, %v1599
  %v2096 = vpack.c.b16 %v1616, %v1608
  %v2097 = vpack.c.b16 %v1617, %v1609
  %v2098 = vpack.c.b16 %v1618, %v1610
  %v2099 = vpack.c.b16 %v1619, %v1611
  %v2100 = vpack.c.b16 %v1620, %v1612
  %v2101 = vpack.c.b16 %v1621, %v1613
  %v2102 = vpack.c.b16 %v1622, %v1614
  %v2103 = vpack.c.b16 %v1623, %v1615
  %v2104 = vpack.c.b16 %v1632, %v1624
  %v2105 = vpack.c.b16 %v1633, %v1625
  %v2106 = vpack.c.b16 %v1634, %v1626
  %v2107 = vpack.c.b16 %v1635, %v1627
  %v2108 = vpack.c.b16 %v1636, %v1628
  %v2109 = vpack.c.b16 %v1637, %v1629
  %v2110 = vpack.c.b16 %v1638, %v1630
  %v2111 = vpack.c.b16 %v1639, %v1631
  %v2112 = vpack.c.b16 %v1648, %v1640
  %v2113 = vpack.c.b16 %v1649, %v1641
  %v2114 = vpack.c.b16 %v1650, %v1642
  %v2115 = vpack.c.b16 %v1651, %v1643
  %v2116 = vpack.c.b16 %v1652, %v1644
  %v2117 = vpack.c.b16 %v1653, %v1645
  %v2118 = vpack.c.b16 %v1654, %v1646
  %v2119 = vpack.c.b16 %v1655, %v1647
  %v2120 = vpack.c.b16 %v1664, %v1656
  %v2121 = vpack.c.b16 %v1665, %v1657
  %v2122 = vpack.c.b16 %v1666, %v1658
  %v2123 = vpack.c.b16 %v1667, %v1659
  %v2124 = vpack.c.b16 %v1668, %v1660
  %v2125 = vpack.c.b16 %v1669, %v1661
  %v2126 = vpack.c.b16 %v1670, %v1662
  %v2127 = vpack.c.b16 %v1671, %v1663
  %v2128 = vpack.c.b16 %v1680, %v1672
  %v2129 = vpack.c.b16 %v1681, %v1673
  %v2130 = vpack.c.b16 %v1682, %v1674
  %v2131 = vpack.c.b16 %v1683, %v1675
  %v2132 = vpack.c.b16 %v1684, %v1676
  %v2133 = vpack.c.b16 %v1685, %v1677
  %v2134 = vpack.c.b16 %v1686, %v1678
  %v2135 = vpack.c.b16 %v1687, %v1679
  %v2136 = vpack.c.b16 %v1696, %v1688
  %v2137 = vpack.c.b16 %v1697, %v1689
  %v2138 = vpack.c.b16 %v1698, %v1690
  %v2139 = vpack.c.b16 %v1699, %v1691
  %v2140 = vpack.c.b16 %v1700, %v1692
  %v2141 = vpack.c.b16 %v1701, %v1693
  %v2142 = vpack.c.b16 %v1702, %v1694
  %v2143 = vpack.c.b16 %v1703, %v1695
  %v2144 = vpack.c.b16 %v1712, %v1704
  %v2145 = vpack.c.b16 %v1713, %v1705
  %v2146 = vpack.c.b16 %v1714, %v1706
  %v2147 = vpack.c.b16 %v1715, %v1707
  %v2148 = vpack.c.b16 %v1716, %v1708
  %v2149 = vpack.c.b16 %v1717, %v1709
  %v2150 = vpack.c.b16 %v1718, %v1710
  %v2151 = vpack.c.b16 %v1719, %v1711
  %v2152 = vpack.c.b16 %v1728, %v1720
  %v2153 = vpack.c.b16 %v1729, %v1721
  %v2154 = vpack.c.b16 %v1730, %v1722
  %v2155 = vpack.c.b16 %v1731, %v1723
  %v2156 = vpack.c.b16 %v1732, %v1724
  %v2157 = vpack.c.b16 %v1733, %v1725
  %v2158 = vpack.c.b16 %v1734, %v1726
  %v2159 = vpack.c.b16 %v1735, %v1727
  %v2160 = vpack.c.b16 %v1744, %v1736
  %v2161 = vpack.c.b16 %v1745, %v1737
  %v2162 = vpack.c.b16 %v1746, %v1738
  %v2163 = vpack.c.b16 %v1747, %v1739
  %v2164 = vpack.c.b16 %v1748, %v1740
  %v2165 = vpack.c.b16 %v1749, %v1741
  %v2166 = vpack.c.b16 %v1750, %v1742
  %v2167 = vpack.c.b16 %v1751, %v1743
  %v2168 = vpack.c.b16 %v1760, %v1752
  %v2169 = vpack.c.b16 %v1761, %v1753
  %v2170 = vpack.c.b16 %v1762, %v1754
  %v2171 = vpack.c.b16 %v1763, %v1755
  %v2172 = vpack.c.b16 %v1764, %v1756
  %v2173 = vpack.c.b16 %v1765, %v1757
  %v2174 = vpack.c.b16 %v1766, %v1758
  %v2175 = vpack.c.b16 %v1767, %v1759
  %v2176 = vpack.c.b16 %v1776, %v1768
  %v2177 = vpack.c.b16 %v1777, %v1769
  %v2178 = vpack.c.b16 %v1778, %v1770
  %v2179 = vpack.c.b16 %v1779, %v1771
  %v2180 = vpack.c.b16 %v1780, %v1772
  %v2181 = vpack.c.b16 %v1781, %v1773
  %v2182 = vpack.c.b16 %v1782, %v1774
  %v2183 = vpack.c.b16 %v1783, %v1775
  %v2184 = vpack.c.b16 %v1792, %v1784
  %v2185 = vpack.c.b16 %v1793, %v1785
  %v2186 = vpack.c.b16 %v1794, %v1786
  %v2187 = vpack.c.b16 %v1795, %v1787
  %v2188 = vpack.c.b16 %v1796, %v1788
  %v2189 = vpack.c.b16 %v1797, %v1789
  %v2190 = vpack.c.b16 %v1798, %v1790
  %v2191 = vpack.c.b16 %v1799, %v1791
  %v2192 = vpack.c.b16 %v1808, %v1800
  %v2193 = vpack.c.b16 %v1809, %v1801
  %v2194 = vpack.c.b16 %v1810, %v1802
  %v2195 = vpack.c.b16 %v1811, %v1803
  %v2196 = vpack.c.b16 %v1812, %v1804
  %v2197 = vpack.c.b16 %v1813, %v1805
  %v2198 = vpack.c.b16 %v1814, %v1806
  %v2199 = vpack.c.b16 %v1815, %v1807
  %2584 = vmatprep.subr.bf16.mxu0 %v1817
  %2585 = vmatpush1.bf16.msra.mxu0 %v1816
  %2586 = vmatprep.subr.bf16.mxu0 %v1825
  %2587 = vmatpush1.bf16.msra.mxu0 %v1824
  %2588 = vmatprep.subr.bf16.mxu0 %v1833
  %2589 = vmatpush1.bf16.msra.mxu0 %v1832
  %2590 = vmatprep.subr.bf16.mxu0 %v1841
  %2591 = vmatpush1.bf16.msra.mxu0 %v1840
  %2592 = vmatprep.subr.bf16.mxu0 %v1849
  %2593 = vmatpush1.bf16.msra.mxu0 %v1848
  %2594 = vmatprep.subr.bf16.mxu0 %v1857
  %2595 = vmatpush1.bf16.msra.mxu0 %v1856
  %2596 = vmatprep.subr.bf16.mxu0 %v1865
  %2597 = vmatpush1.bf16.msra.mxu0 %v1864
  %2598 = vmatprep.subr.bf16.mxu0 %v1873
  %2599 = vmatpush1.bf16.msra.mxu0 %v1872
  %2600 = vmatprep.subr.bf16.mxu0 %v1881
  %2601 = vmatpush1.bf16.msra.mxu0 %v1880
  %2602 = vmatprep.subr.bf16.mxu0 %v1889
  %2603 = vmatpush1.bf16.msra.mxu0 %v1888
  %2604 = vmatprep.subr.bf16.mxu0 %v1897
  %2605 = vmatpush1.bf16.msra.mxu0 %v1896
  %2606 = vmatprep.subr.bf16.mxu0 %v1905
  %2607 = vmatpush1.bf16.msra.mxu0 %v1904
  %2608 = vmatprep.subr.bf16.mxu0 %v1913
  %2609 = vmatpush1.bf16.msra.mxu0 %v1912
  %2610 = vmatprep.subr.bf16.mxu0 %v1921
  %2611 = vmatpush1.bf16.msra.mxu0 %v1920
  %2612 = vmatprep.subr.bf16.mxu0 %v1929
  %2613 = vmatpush1.bf16.msra.mxu0 %v1928
  %2614 = vmatprep.subr.bf16.mxu0 %v1937
  %2615 = vmatpush1.bf16.msra.mxu0 %v1936
  %2616 = vmatprep.mubr.bf16.mxu0 %v233
  %2617 = vmatmul.mubr.bf16.gmra.mrb[0].mxu0 %v232
  %v2618 = vpop.f32.mrb[0].mxu0
  %v2619 = vadd.f32 %v627, %v2618
  %v2620 = vpop.f32.mrb[0].mxu0
  %v2621 = vadd.f32 %v631, %v2620
  %v2622 = vpop.f32.mrb[0].mxu0
  %v2623 = vadd.f32 %v627, %v2622
  %v2624 = vpop.f32.mrb[0].mxu0
  %v2625 = vadd.f32 %v631, %v2624
  %2626 = vdwg.mxu0
  %2627 = vmatprep.subr.bf16.mxu0 %v1945
  %2628 = vmatpush1.bf16.msra.mxu0 %v1944
  %2629 = vmatprep.subr.bf16.mxu0 %v1953
  %2630 = vmatpush1.bf16.msra.mxu0 %v1952
  %2631 = vmatprep.subr.bf16.mxu0 %v1961
  %2632 = vmatpush1.bf16.msra.mxu0 %v1960
  %2633 = vmatprep.subr.bf16.mxu0 %v1969
  %2634 = vmatpush1.bf16.msra.mxu0 %v1968
  %2635 = vmatprep.subr.bf16.mxu0 %v1977
  %2636 = vmatpush1.bf16.msra.mxu0 %v1976
  %2637 = vmatprep.subr.bf16.mxu0 %v1985
  %2638 = vmatpush1.bf16.msra.mxu0 %v1984
  %2639 = vmatprep.subr.bf16.mxu0 %v1993
  %2640 = vmatpush1.bf16.msra.mxu0 %v1992
  %2641 = vmatprep.subr.bf16.mxu0 %v2001
  %2642 = vmatpush1.bf16.msra.mxu0 %v2000
  %2643 = vmatprep.subr.bf16.mxu0 %v2009
  %2644 = vmatpush1.bf16.msra.mxu0 %v2008
  %2645 = vmatprep.subr.bf16.mxu0 %v2017
  %2646 = vmatpush1.bf16.msra.mxu0 %v2016
  %2647 = vmatprep.subr.bf16.mxu0 %v2025
  %2648 = vmatpush1.bf16.msra.mxu0 %v2024
  %2649 = vmatprep.subr.bf16.mxu0 %v2033
  %2650 = vmatpush1.bf16.msra.mxu0 %v2032
  %2651 = vmatprep.subr.bf16.mxu0 %v2041
  %2652 = vmatpush1.bf16.msra.mxu0 %v2040
  %2653 = vmatprep.subr.bf16.mxu0 %v2049
  %2654 = vmatpush1.bf16.msra.mxu0 %v2048
  %2655 = vmatprep.subr.bf16.mxu0 %v2057
  %2656 = vmatpush1.bf16.msra.mxu0 %v2056
  %2657 = vmatprep.subr.bf16.mxu0 %v2065
  %2658 = vmatpush1.bf16.msra.mxu0 %v2064
  %2659 = vmatprep.mubr.bf16.mxu0 %v235
  %2660 = vmatmul.mubr.bf16.gmra.mrb[0].mxu0 %v234
  %v2661 = vpop.f32.mrb[0].mxu0
  %v2662 = vadd.f32 %v2619, %v2661
  %v2663 = vpop.f32.mrb[0].mxu0
  %v2664 = vadd.f32 %v2621, %v2663
  %v2665 = vpop.f32.mrb[0].mxu0
  %v2666 = vadd.f32 %v2623, %v2665
  %v2667 = vpop.f32.mrb[0].mxu0
  %v2668 = vadd.f32 %v2625, %v2667
  %2669 = vdwg.mxu0
  %2670 = vmatprep.subr.bf16.mxu0 %v2073
  %2671 = vmatpush1.bf16.msra.mxu0 %v2072
  %2672 = vmatprep.subr.bf16.mxu0 %v2081
  %2673 = vmatpush1.bf16.msra.mxu0 %v2080
  %2674 = vmatprep.subr.bf16.mxu0 %v2089
  %2675 = vmatpush1.bf16.msra.mxu0 %v2088
  %2676 = vmatprep.subr.bf16.mxu0 %v2097
  %2677 = vmatpush1.bf16.msra.mxu0 %v2096
  %2678 = vmatprep.subr.bf16.mxu0 %v2105
  %2679 = vmatpush1.bf16.msra.mxu0 %v2104
  %2680 = vmatprep.subr.bf16.mxu0 %v2113
  %2681 = vmatpush1.bf16.msra.mxu0 %v2112
  %2682 = vmatprep.subr.bf16.mxu0 %v2121
  %2683 = vmatpush1.bf16.msra.mxu0 %v2120
  %2684 = vmatprep.subr.bf16.mxu0 %v2129
  %2685 = vmatpush1.bf16.msra.mxu0 %v2128
  %2686 = vmatprep.subr.bf16.mxu0 %v2137
  %2687 = vmatpush1.bf16.msra.mxu0 %v2136
  %2688 = vmatprep.subr.bf16.mxu0 %v2145
  %2689 = vmatpush1.bf16.msra.mxu0 %v2144
  %2690 = vmatprep.subr.bf16.mxu0 %v2153
  %2691 = vmatpush1.bf16.msra.mxu0 %v2152
  %2692 = vmatprep.subr.bf16.mxu0 %v2161
  %2693 = vmatpush1.bf16.msra.mxu0 %v2160
  %2694 = vmatprep.subr.bf16.mxu0 %v2169
  %2695 = vmatpush1.bf16.msra.mxu0 %v2168
  %2696 = vmatprep.subr.bf16.mxu0 %v2177
  %2697 = vmatpush1.bf16.msra.mxu0 %v2176
  %2698 = vmatprep.subr.bf16.mxu0 %v2185
  %2699 = vmatpush1.bf16.msra.mxu0 %v2184
  %2700 = vmatprep.subr.bf16.mxu0 %v2193
  %2701 = vmatpush1.bf16.msra.mxu0 %v2192
  %2702 = vmatprep.mubr.bf16.mxu0 %v237
  %2703 = vmatmul.mubr.bf16.gmra.mrb[0].mxu0 %v236
  %v2704 = vpop.f32.mrb[0].mxu0
  %v2705 = vadd.f32 %v2662, %v2704
  %v2706 = vpop.f32.mrb[0].mxu0
  %v2707 = vadd.f32 %v2664, %v2706
  %v2708 = vpop.f32.mrb[0].mxu0
  %v2709 = vadd.f32 %v2666, %v2708
  %v2710 = vpop.f32.mrb[0].mxu0
  %v2711 = vadd.f32 %v2668, %v2710
  %2712 = vdwg.mxu0
  %2713 = vmatprep.subr.bf16.mxu0 %v1819
  %2714 = vmatpush1.bf16.msra.mxu0 %v1818
  %2715 = vmatprep.subr.bf16.mxu0 %v1827
  %2716 = vmatpush1.bf16.msra.mxu0 %v1826
  %2717 = vmatprep.subr.bf16.mxu0 %v1835
  %2718 = vmatpush1.bf16.msra.mxu0 %v1834
  %2719 = vmatprep.subr.bf16.mxu0 %v1843
  %2720 = vmatpush1.bf16.msra.mxu0 %v1842
  %2721 = vmatprep.subr.bf16.mxu0 %v1851
  %2722 = vmatpush1.bf16.msra.mxu0 %v1850
  %2723 = vmatprep.subr.bf16.mxu0 %v1859
  %2724 = vmatpush1.bf16.msra.mxu0 %v1858
  %2725 = vmatprep.subr.bf16.mxu0 %v1867
  %2726 = vmatpush1.bf16.msra.mxu0 %v1866
  %2727 = vmatprep.subr.bf16.mxu0 %v1875
  %2728 = vmatpush1.bf16.msra.mxu0 %v1874
  %2729 = vmatprep.subr.bf16.mxu0 %v1883
  %2730 = vmatpush1.bf16.msra.mxu0 %v1882
  %2731 = vmatprep.subr.bf16.mxu0 %v1891
  %2732 = vmatpush1.bf16.msra.mxu0 %v1890
  %2733 = vmatprep.subr.bf16.mxu0 %v1899
  %2734 = vmatpush1.bf16.msra.mxu0 %v1898
  %2735 = vmatprep.subr.bf16.mxu0 %v1907
  %2736 = vmatpush1.bf16.msra.mxu0 %v1906
  %2737 = vmatprep.subr.bf16.mxu0 %v1915
  %2738 = vmatpush1.bf16.msra.mxu0 %v1914
  %2739 = vmatprep.subr.bf16.mxu0 %v1923
  %2740 = vmatpush1.bf16.msra.mxu0 %v1922
  %2741 = vmatprep.subr.bf16.mxu0 %v1931
  %2742 = vmatpush1.bf16.msra.mxu0 %v1930
  %2743 = vmatprep.subr.bf16.mxu0 %v1939
  %2744 = vmatpush1.bf16.msra.mxu0 %v1938
  %2745 = vmatprep.mubr.bf16.mxu0 %v233
  %2746 = vmatmul.mubr.bf16.gmra.mrb[0].mxu0 %v232
  %v2747 = vpop.f32.mrb[0].mxu0
  %v2748 = vadd.f32 %v635, %v2747
  %v2749 = vpop.f32.mrb[0].mxu0
  %v2750 = vadd.f32 %v639, %v2749
  %v2751 = vpop.f32.mrb[0].mxu0
  %v2752 = vadd.f32 %v635, %v2751
  %v2753 = vpop.f32.mrb[0].mxu0
  %v2754 = vadd.f32 %v639, %v2753
  %2755 = vdwg.mxu0
  %2756 = vmatprep.subr.bf16.mxu0 %v1947
  %2757 = vmatpush1.bf16.msra.mxu0 %v1946
  %2758 = vmatprep.subr.bf16.mxu0 %v1955
  %2759 = vmatpush1.bf16.msra.mxu0 %v1954
  %2760 = vmatprep.subr.bf16.mxu0 %v1963
  %2761 = vmatpush1.bf16.msra.mxu0 %v1962
  %2762 = vmatprep.subr.bf16.mxu0 %v1971
  %2763 = vmatpush1.bf16.msra.mxu0 %v1970
  %2764 = vmatprep.subr.bf16.mxu0 %v1979
  %2765 = vmatpush1.bf16.msra.mxu0 %v1978
  %2766 = vmatprep.subr.bf16.mxu0 %v1987
  %2767 = vmatpush1.bf16.msra.mxu0 %v1986
  %2768 = vmatprep.subr.bf16.mxu0 %v1995
  %2769 = vmatpush1.bf16.msra.mxu0 %v1994
  %2770 = vmatprep.subr.bf16.mxu0 %v2003
  %2771 = vmatpush1.bf16.msra.mxu0 %v2002
  %2772 = vmatprep.subr.bf16.mxu0 %v2011
  %2773 = vmatpush1.bf16.msra.mxu0 %v2010
  %2774 = vmatprep.subr.bf16.mxu0 %v2019
  %2775 = vmatpush1.bf16.msra.mxu0 %v2018
  %2776 = vmatprep.subr.bf16.mxu0 %v2027
  %2777 = vmatpush1.bf16.msra.mxu0 %v2026
  %2778 = vmatprep.subr.bf16.mxu0 %v2035
  %2779 = vmatpush1.bf16.msra.mxu0 %v2034
  %2780 = vmatprep.subr.bf16.mxu0 %v2043
  %2781 = vmatpush1.bf16.msra.mxu0 %v2042
  %2782 = vmatprep.subr.bf16.mxu0 %v2051
  %2783 = vmatpush1.bf16.msra.mxu0 %v2050
  %2784 = vmatprep.subr.bf16.mxu0 %v2059
  %2785 = vmatpush1.bf16.msra.mxu0 %v2058
  %2786 = vmatprep.subr.bf16.mxu0 %v2067
  %2787 = vmatpush1.bf16.msra.mxu0 %v2066
  %2788 = vmatprep.mubr.bf16.mxu0 %v235
  %2789 = vmatmul.mubr.bf16.gmra.mrb[0].mxu0 %v234
  %v2790 = vpop.f32.mrb[0].mxu0
  %v2791 = vadd.f32 %v2748, %v2790
  %v2792 = vpop.f32.mrb[0].mxu0
  %v2793 = vadd.f32 %v2750, %v2792
  %v2794 = vpop.f32.mrb[0].mxu0
  %v2795 = vadd.f32 %v2752, %v2794
  %v2796 = vpop.f32.mrb[0].mxu0
  %v2797 = vadd.f32 %v2754, %v2796
  %2798 = vdwg.mxu0
  %2799 = vmatprep.subr.bf16.mxu0 %v2075
  %2800 = vmatpush1.bf16.msra.mxu0 %v2074
  %2801 = vmatprep.subr.bf16.mxu0 %v2083
  %2802 = vmatpush1.bf16.msra.mxu0 %v2082
  %2803 = vmatprep.subr.bf16.mxu0 %v2091
  %2804 = vmatpush1.bf16.msra.mxu0 %v2090
  %2805 = vmatprep.subr.bf16.mxu0 %v2099
  %2806 = vmatpush1.bf16.msra.mxu0 %v2098
  %2807 = vmatprep.subr.bf16.mxu0 %v2107
  %2808 = vmatpush1.bf16.msra.mxu0 %v2106
  %2809 = vmatprep.subr.bf16.mxu0 %v2115
  %2810 = vmatpush1.bf16.msra.mxu0 %v2114
  %2811 = vmatprep.subr.bf16.mxu0 %v2123
  %2812 = vmatpush1.bf16.msra.mxu0 %v2122
  %2813 = vmatprep.subr.bf16.mxu0 %v2131
  %2814 = vmatpush1.bf16.msra.mxu0 %v2130
  %2815 = vmatprep.subr.bf16.mxu0 %v2139
  %2816 = vmatpush1.bf16.msra.mxu0 %v2138
  %2817 = vmatprep.subr.bf16.mxu0 %v2147
  %2818 = vmatpush1.bf16.msra.mxu0 %v2146
  %2819 = vmatprep.subr.bf16.mxu0 %v2155
  %2820 = vmatpush1.bf16.msra.mxu0 %v2154
  %2821 = vmatprep.subr.bf16.mxu0 %v2163
  %2822 = vmatpush1.bf16.msra.mxu0 %v2162
  %2823 = vmatprep.subr.bf16.mxu0 %v2171
  %2824 = vmatpush1.bf16.msra.mxu0 %v2170
  %2825 = vmatprep.subr.bf16.mxu0 %v2179
  %2826 = vmatpush1.bf16.msra.mxu0 %v2178
  %2827 = vmatprep.subr.bf16.mxu0 %v2187
  %2828 = vmatpush1.bf16.msra.mxu0 %v2186
  %2829 = vmatprep.subr.bf16.mxu0 %v2195
  %2830 = vmatpush1.bf16.msra.mxu0 %v2194
  %2831 = vmatprep.mubr.bf16.mxu0 %v237
  %2832 = vmatmul.mubr.bf16.gmra.mrb[0].mxu0 %v236
  %v2833 = vpop.f32.mrb[0].mxu0
  %v2834 = vadd.f32 %v2791, %v2833
  %v2835 = vpop.f32.mrb[0].mxu0
  %v2836 = vadd.f32 %v2793, %v2835
  %v2837 = vpop.f32.mrb[0].mxu0
  %v2838 = vadd.f32 %v2795, %v2837
  %v2839 = vpop.f32.mrb[0].mxu0
  %v2840 = vadd.f32 %v2797, %v2839
  %2841 = vdwg.mxu0
  %2842 = vmatprep.subr.bf16.mxu0 %v1821
  %2843 = vmatpush1.bf16.msra.mxu0 %v1820
  %2844 = vmatprep.subr.bf16.mxu0 %v1829
  %2845 = vmatpush1.bf16.msra.mxu0 %v1828
  %2846 = vmatprep.subr.bf16.mxu0 %v1837
  %2847 = vmatpush1.bf16.msra.mxu0 %v1836
  %2848 = vmatprep.subr.bf16.mxu0 %v1845
  %2849 = vmatpush1.bf16.msra.mxu0 %v1844
  %2850 = vmatprep.subr.bf16.mxu0 %v1853
  %2851 = vmatpush1.bf16.msra.mxu0 %v1852
  %2852 = vmatprep.subr.bf16.mxu0 %v1861
  %2853 = vmatpush1.bf16.msra.mxu0 %v1860
  %2854 = vmatprep.subr.bf16.mxu0 %v1869
  %2855 = vmatpush1.bf16.msra.mxu0 %v1868
  %2856 = vmatprep.subr.bf16.mxu0 %v1877
  %2857 = vmatpush1.bf16.msra.mxu0 %v1876
  %2858 = vmatprep.subr.bf16.mxu0 %v1885
  %2859 = vmatpush1.bf16.msra.mxu0 %v1884
  %2860 = vmatprep.subr.bf16.mxu0 %v1893
  %2861 = vmatpush1.bf16.msra.mxu0 %v1892
  %2862 = vmatprep.subr.bf16.mxu0 %v1901
  %2863 = vmatpush1.bf16.msra.mxu0 %v1900
  %2864 = vmatprep.subr.bf16.mxu0 %v1909
  %2865 = vmatpush1.bf16.msra.mxu0 %v1908
  %2866 = vmatprep.subr.bf16.mxu0 %v1917
  %2867 = vmatpush1.bf16.msra.mxu0 %v1916
  %2868 = vmatprep.subr.bf16.mxu0 %v1925
  %2869 = vmatpush1.bf16.msra.mxu0 %v1924
  %2870 = vmatprep.subr.bf16.mxu0 %v1933
  %2871 = vmatpush1.bf16.msra.mxu0 %v1932
  %2872 = vmatprep.subr.bf16.mxu0 %v1941
  %2873 = vmatpush1.bf16.msra.mxu0 %v1940
  %2874 = vmatprep.mubr.bf16.mxu0 %v233
  %2875 = vmatmul.mubr.bf16.gmra.mrb[0].mxu0 %v232
  %v2876 = vpop.f32.mrb[0].mxu0
  %v2877 = vadd.f32 %v643, %v2876
  %v2878 = vpop.f32.mrb[0].mxu0
  %v2879 = vadd.f32 %v647, %v2878
  %v2880 = vpop.f32.mrb[0].mxu0
  %v2881 = vadd.f32 %v643, %v2880
  %v2882 = vpop.f32.mrb[0].mxu0
  %v2883 = vadd.f32 %v647, %v2882
  %2884 = vdwg.mxu0
  %2885 = vmatprep.subr.bf16.mxu0 %v1949
  %2886 = vmatpush1.bf16.msra.mxu0 %v1948
  %2887 = vmatprep.subr.bf16.mxu0 %v1957
  %2888 = vmatpush1.bf16.msra.mxu0 %v1956
  %2889 = vmatprep.subr.bf16.mxu0 %v1965
  %2890 = vmatpush1.bf16.msra.mxu0 %v1964
  %2891 = vmatprep.subr.bf16.mxu0 %v1973
  %2892 = vmatpush1.bf16.msra.mxu0 %v1972
  %2893 = vmatprep.subr.bf16.mxu0 %v1981
  %2894 = vmatpush1.bf16.msra.mxu0 %v1980
  %2895 = vmatprep.subr.bf16.mxu0 %v1989
  %2896 = vmatpush1.bf16.msra.mxu0 %v1988
  %2897 = vmatprep.subr.bf16.mxu0 %v1997
  %2898 = vmatpush1.bf16.msra.mxu0 %v1996
  %2899 = vmatprep.subr.bf16.mxu0 %v2005
  %2900 = vmatpush1.bf16.msra.mxu0 %v2004
  %2901 = vmatprep.subr.bf16.mxu0 %v2013
  %2902 = vmatpush1.bf16.msra.mxu0 %v2012
  %2903 = vmatprep.subr.bf16.mxu0 %v2021
  %2904 = vmatpush1.bf16.msra.mxu0 %v2020
  %2905 = vmatprep.subr.bf16.mxu0 %v2029
  %2906 = vmatpush1.bf16.msra.mxu0 %v2028
  %2907 = vmatprep.subr.bf16.mxu0 %v2037
  %2908 = vmatpush1.bf16.msra.mxu0 %v2036
  %2909 = vmatprep.subr.bf16.mxu0 %v2045
  %2910 = vmatpush1.bf16.msra.mxu0 %v2044
  %2911 = vmatprep.subr.bf16.mxu0 %v2053
  %2912 = vmatpush1.bf16.msra.mxu0 %v2052
  %2913 = vmatprep.subr.bf16.mxu0 %v2061
  %2914 = vmatpush1.bf16.msra.mxu0 %v2060
  %2915 = vmatprep.subr.bf16.mxu0 %v2069
  %2916 = vmatpush1.bf16.msra.mxu0 %v2068
  %2917 = vmatprep.mubr.bf16.mxu0 %v235
  %2918 = vmatmul.mubr.bf16.gmra.mrb[0].mxu0 %v234
  %v2919 = vpop.f32.mrb[0].mxu0
  %v2920 = vadd.f32 %v2877, %v2919
  %v2921 = vpop.f32.mrb[0].mxu0
  %v2922 = vadd.f32 %v2879, %v2921
  %v2923 = vpop.f32.mrb[0].mxu0
  %v2924 = vadd.f32 %v2881, %v2923
  %v2925 = vpop.f32.mrb[0].mxu0
  %v2926 = vadd.f32 %v2883, %v2925
  %2927 = vdwg.mxu0
  %2928 = vmatprep.subr.bf16.mxu0 %v2077
  %2929 = vmatpush1.bf16.msra.mxu0 %v2076
  %2930 = vmatprep.subr.bf16.mxu0 %v2085
  %2931 = vmatpush1.bf16.msra.mxu0 %v2084
  %2932 = vmatprep.subr.bf16.mxu0 %v2093
  %2933 = vmatpush1.bf16.msra.mxu0 %v2092
  %2934 = vmatprep.subr.bf16.mxu0 %v2101
  %2935 = vmatpush1.bf16.msra.mxu0 %v2100
  %2936 = vmatprep.subr.bf16.mxu0 %v2109
  %2937 = vmatpush1.bf16.msra.mxu0 %v2108
  %2938 = vmatprep.subr.bf16.mxu0 %v2117
  %2939 = vmatpush1.bf16.msra.mxu0 %v2116
  %2940 = vmatprep.subr.bf16.mxu0 %v2125
  %2941 = vmatpush1.bf16.msra.mxu0 %v2124
  %2942 = vmatprep.subr.bf16.mxu0 %v2133
  %2943 = vmatpush1.bf16.msra.mxu0 %v2132
  %2944 = vmatprep.subr.bf16.mxu0 %v2141
  %2945 = vmatpush1.bf16.msra.mxu0 %v2140
  %2946 = vmatprep.subr.bf16.mxu0 %v2149
  %2947 = vmatpush1.bf16.msra.mxu0 %v2148
  %2948 = vmatprep.subr.bf16.mxu0 %v2157
  %2949 = vmatpush1.bf16.msra.mxu0 %v2156
  %2950 = vmatprep.subr.bf16.mxu0 %v2165
  %2951 = vmatpush1.bf16.msra.mxu0 %v2164
  %2952 = vmatprep.subr.bf16.mxu0 %v2173
  %2953 = vmatpush1.bf16.msra.mxu0 %v2172
  %2954 = vmatprep.subr.bf16.mxu0 %v2181
  %2955 = vmatpush1.bf16.msra.mxu0 %v2180
  %2956 = vmatprep.subr.bf16.mxu0 %v2189
  %2957 = vmatpush1.bf16.msra.mxu0 %v2188
  %2958 = vmatprep.subr.bf16.mxu0 %v2197
  %2959 = vmatpush1.bf16.msra.mxu0 %v2196
  %2960 = vmatprep.mubr.bf16.mxu0 %v237
  %2961 = vmatmul.mubr.bf16.gmra.mrb[0].mxu0 %v236
  %v2962 = vpop.f32.mrb[0].mxu0
  %v2963 = vadd.f32 %v2920, %v2962
  %v2964 = vpop.f32.mrb[0].mxu0
  %v2965 = vadd.f32 %v2922, %v2964
  %v2966 = vpop.f32.mrb[0].mxu0
  %v2967 = vadd.f32 %v2924, %v2966
  %v2968 = vpop.f32.mrb[0].mxu0
  %v2969 = vadd.f32 %v2926, %v2968
  %2970 = vdwg.mxu0
  %2971 = vmatprep.subr.bf16.mxu0 %v1823
  %2972 = vmatpush1.bf16.msra.mxu0 %v1822
  %2973 = vmatprep.subr.bf16.mxu0 %v1831
  %2974 = vmatpush1.bf16.msra.mxu0 %v1830
  %2975 = vmatprep.subr.bf16.mxu0 %v1839
  %2976 = vmatpush1.bf16.msra.mxu0 %v1838
  %2977 = vmatprep.subr.bf16.mxu0 %v1847
  %2978 = vmatpush1.bf16.msra.mxu0 %v1846
  %2979 = vmatprep.subr.bf16.mxu0 %v1855
  %2980 = vmatpush1.bf16.msra.mxu0 %v1854
  %2981 = vmatprep.subr.bf16.mxu0 %v1863
  %2982 = vmatpush1.bf16.msra.mxu0 %v1862
  %2983 = vmatprep.subr.bf16.mxu0 %v1871
  %2984 = vmatpush1.bf16.msra.mxu0 %v1870
  %2985 = vmatprep.subr.bf16.mxu0 %v1879
  %2986 = vmatpush1.bf16.msra.mxu0 %v1878
  %2987 = vmatprep.subr.bf16.mxu0 %v1887
  %2988 = vmatpush1.bf16.msra.mxu0 %v1886
  %2989 = vmatprep.subr.bf16.mxu0 %v1895
  %2990 = vmatpush1.bf16.msra.mxu0 %v1894
  %2991 = vmatprep.subr.bf16.mxu0 %v1903
  %2992 = vmatpush1.bf16.msra.mxu0 %v1902
  %2993 = vmatprep.subr.bf16.mxu0 %v1911
  %2994 = vmatpush1.bf16.msra.mxu0 %v1910
  %2995 = vmatprep.subr.bf16.mxu0 %v1919
  %2996 = vmatpush1.bf16.msra.mxu0 %v1918
  %2997 = vmatprep.subr.bf16.mxu0 %v1927
  %2998 = vmatpush1.bf16.msra.mxu0 %v1926
  %2999 = vmatprep.subr.bf16.mxu0 %v1935
  %3000 = vmatpush1.bf16.msra.mxu0 %v1934
  %3001 = vmatprep.subr.bf16.mxu0 %v1943
  %3002 = vmatpush1.bf16.msra.mxu0 %v1942
  %3003 = vmatprep.mubr.bf16.mxu0 %v233
  %3004 = vmatmul.mubr.bf16.gmra.mrb[0].mxu0 %v232
  %v3005 = vpop.f32.mrb[0].mxu0
  %v3006 = vadd.f32 %v651, %v3005
  %v3007 = vpop.f32.mrb[0].mxu0
  %v3008 = vadd.f32 %v655, %v3007
  %v3009 = vpop.f32.mrb[0].mxu0
  %v3010 = vadd.f32 %v651, %v3009
  %v3011 = vpop.f32.mrb[0].mxu0
  %v3012 = vadd.f32 %v655, %v3011
  %3013 = vdwg.mxu0
  %3014 = vmatprep.subr.bf16.mxu0 %v1951
  %3015 = vmatpush1.bf16.msra.mxu0 %v1950
  %3016 = vmatprep.subr.bf16.mxu0 %v1959
  %3017 = vmatpush1.bf16.msra.mxu0 %v1958
  %3018 = vmatprep.subr.bf16.mxu0 %v1967
  %3019 = vmatpush1.bf16.msra.mxu0 %v1966
  %3020 = vmatprep.subr.bf16.mxu0 %v1975
  %3021 = vmatpush1.bf16.msra.mxu0 %v1974
  %3022 = vmatprep.subr.bf16.mxu0 %v1983
  %3023 = vmatpush1.bf16.msra.mxu0 %v1982
  %3024 = vmatprep.subr.bf16.mxu0 %v1991
  %3025 = vmatpush1.bf16.msra.mxu0 %v1990
  %3026 = vmatprep.subr.bf16.mxu0 %v1999
  %3027 = vmatpush1.bf16.msra.mxu0 %v1998
  %3028 = vmatprep.subr.bf16.mxu0 %v2007
  %3029 = vmatpush1.bf16.msra.mxu0 %v2006
  %3030 = vmatprep.subr.bf16.mxu0 %v2015
  %3031 = vmatpush1.bf16.msra.mxu0 %v2014
  %3032 = vmatprep.subr.bf16.mxu0 %v2023
  %3033 = vmatpush1.bf16.msra.mxu0 %v2022
  %3034 = vmatprep.subr.bf16.mxu0 %v2031
  %3035 = vmatpush1.bf16.msra.mxu0 %v2030
  %3036 = vmatprep.subr.bf16.mxu0 %v2039
  %3037 = vmatpush1.bf16.msra.mxu0 %v2038
  %3038 = vmatprep.subr.bf16.mxu0 %v2047
  %3039 = vmatpush1.bf16.msra.mxu0 %v2046
  %3040 = vmatprep.subr.bf16.mxu0 %v2055
  %3041 = vmatpush1.bf16.msra.mxu0 %v2054
  %3042 = vmatprep.subr.bf16.mxu0 %v2063
  %3043 = vmatpush1.bf16.msra.mxu0 %v2062
  %3044 = vmatprep.subr.bf16.mxu0 %v2071
  %3045 = vmatpush1.bf16.msra.mxu0 %v2070
  %3046 = vmatprep.mubr.bf16.mxu0 %v235
  %3047 = vmatmul.mubr.bf16.gmra.mrb[0].mxu0 %v234
  %v3048 = vpop.f32.mrb[0].mxu0
  %v3049 = vadd.f32 %v3006, %v3048
  %v3050 = vpop.f32.mrb[0].mxu0
  %v3051 = vadd.f32 %v3008, %v3050
  %v3052 = vpop.f32.mrb[0].mxu0
  %v3053 = vadd.f32 %v3010, %v3052
  %v3054 = vpop.f32.mrb[0].mxu0
  %v3055 = vadd.f32 %v3012, %v3054
  %3056 = vdwg.mxu0
  %3057 = vmatprep.subr.bf16.mxu0 %v2079
  %3058 = vmatpush1.bf16.msra.mxu0 %v2078
  %3059 = vmatprep.subr.bf16.mxu0 %v2087
  %3060 = vmatpush1.bf16.msra.mxu0 %v2086
  %3061 = vmatprep.subr.bf16.mxu0 %v2095
  %3062 = vmatpush1.bf16.msra.mxu0 %v2094
  %3063 = vmatprep.subr.bf16.mxu0 %v2103
  %3064 = vmatpush1.bf16.msra.mxu0 %v2102
  %3065 = vmatprep.subr.bf16.mxu0 %v2111
  %3066 = vmatpush1.bf16.msra.mxu0 %v2110
  %3067 = vmatprep.subr.bf16.mxu0 %v2119
  %3068 = vmatpush1.bf16.msra.mxu0 %v2118
  %3069 = vmatprep.subr.bf16.mxu0 %v2127
  %3070 = vmatpush1.bf16.msra.mxu0 %v2126
  %3071 = vmatprep.subr.bf16.mxu0 %v2135
  %3072 = vmatpush1.bf16.msra.mxu0 %v2134
  %3073 = vmatprep.subr.bf16.mxu0 %v2143
  %3074 = vmatpush1.bf16.msra.mxu0 %v2142
  %3075 = vmatprep.subr.bf16.mxu0 %v2151
  %3076 = vmatpush1.bf16.msra.mxu0 %v2150
  %3077 = vmatprep.subr.bf16.mxu0 %v2159
  %3078 = vmatpush1.bf16.msra.mxu0 %v2158
  %3079 = vmatprep.subr.bf16.mxu0 %v2167
  %3080 = vmatpush1.bf16.msra.mxu0 %v2166
  %3081 = vmatprep.subr.bf16.mxu0 %v2175
  %3082 = vmatpush1.bf16.msra.mxu0 %v2174
  %3083 = vmatprep.subr.bf16.mxu0 %v2183
  %3084 = vmatpush1.bf16.msra.mxu0 %v2182
  %3085 = vmatprep.subr.bf16.mxu0 %v2191
  %3086 = vmatpush1.bf16.msra.mxu0 %v2190
  %3087 = vmatprep.subr.bf16.mxu0 %v2199
  %3088 = vmatpush1.bf16.msra.mxu0 %v2198
  %3089 = vmatprep.mubr.bf16.mxu0 %v237
  %3090 = vmatmul.mubr.bf16.gmra.mrb[0].mxu0 %v236
  %v3091 = vpop.f32.mrb[0].mxu0
  %v3092 = vadd.f32 %v3049, %v3091
  %v3093 = vpop.f32.mrb[0].mxu0
  %v3094 = vadd.f32 %v3051, %v3093
  %v3095 = vpop.f32.mrb[0].mxu0
  %v3096 = vadd.f32 %v3053, %v3095
  %v3097 = vpop.f32.mrb[0].mxu0
  %v3098 = vadd.f32 %v3055, %v3097
  %3099 = vdwg.mxu0
  %v3100 = vmax.f32 %v2705, 0.0
  %v3101 = vmax.f32 %v2707, 0.0
  %v3102 = vmax.f32 %v2834, 0.0
  %v3103 = vmax.f32 %v2836, 0.0
  %v3104 = vmax.f32 %v2963, 0.0
  %v3105 = vmax.f32 %v2965, 0.0
  %v3106 = vmax.f32 %v3092, 0.0
  %v3107 = vmax.f32 %v3094, 0.0
  %v3108 = vmax.f32 %v2709, 0.0
  %v3109 = vmax.f32 %v2711, 0.0
  %v3110 = vmax.f32 %v2838, 0.0
  %v3111 = vmax.f32 %v2840, 0.0
  %v3112 = vmax.f32 %v2967, 0.0
  %v3113 = vmax.f32 %v2969, 0.0
  %v3114 = vmax.f32 %v3096, 0.0
  %v3115 = vmax.f32 %v3098, 0.0
  %v3116 = vpack.c.bf16 %v3108, %v3100
  %v3117 = vpack.c.bf16 %v3109, %v3101
  %v3118 = vpack.c.bf16 %v3110, %v3102
  %v3119 = vpack.c.bf16 %v3111, %v3103
  %v3120 = vpack.c.bf16 %v3112, %v3104
  %v3121 = vpack.c.bf16 %v3113, %v3105
  %v3122 = vpack.c.bf16 %v3114, %v3106
  %v3123 = vpack.c.bf16 %v3115, %v3107
  %v3124 = vld [vmem:[%s6] sm:$0xff]
  %v3125 = vld [vmem:[%s6 + $0x8] sm:$0xff]
  %v3126 = vld [vmem:[%s6 + $0x10] sm:$0xff]
  %v3127 = vld [vmem:[%s6 + $0x18] sm:$0xff]
  %v3128 = vld [vmem:[%s6 + $0x20] sm:$0xff]
  %v3129 = vld [vmem:[%s6 + $0x28] sm:$0xff]
  %v3130 = vld [vmem:[%s6 + $0x30] sm:$0xff]
  %v3131 = vld [vmem:[%s6 + $0x38] sm:$0xff]
  %v3132 = vld [vmem:[%s6 + $0x40] sm:$0xff]
  %v3133 = vld [vmem:[%s6 + $0x48] sm:$0xff]
  %v3134 = vld [vmem:[%s6 + $0x50] sm:$0xff]
  %v3135 = vld [vmem:[%s6 + $0x58] sm:$0xff]
  %v3136 = vld [vmem:[%s6 + $0x60] sm:$0xff]
  %v3137 = vld [vmem:[%s6 + $0x68] sm:$0xff]
  %v3138 = vld [vmem:[%s6 + $0x70] sm:$0xff]
  %v3139 = vld [vmem:[%s6 + $0x78] sm:$0xff]
  %v3140 = vld [vmem:[%s6 + $0x80] sm:$0xff]
  %v3141 = vld [vmem:[%s6 + $0x88] sm:$0xff]
  %v3142 = vld [vmem:[%s6 + $0x90] sm:$0xff]
  %v3143 = vld [vmem:[%s6 + $0x98] sm:$0xff]
  %v3144 = vld [vmem:[%s6 + $0xa0] sm:$0xff]
  %v3145 = vld [vmem:[%s6 + $0xa8] sm:$0xff]
  %v3146 = vld [vmem:[%s6 + $0xb0] sm:$0xff]
  %v3147 = vld [vmem:[%s6 + $0xb8] sm:$0xff]
  %v3148 = vld [vmem:[%s6 + $0xc0] sm:$0xff]
  %v3149 = vld [vmem:[%s6 + $0xc8] sm:$0xff]
  %v3150 = vld [vmem:[%s6 + $0xd0] sm:$0xff]
  %v3151 = vld [vmem:[%s6 + $0xd8] sm:$0xff]
  %v3152 = vld [vmem:[%s6 + $0xe0] sm:$0xff]
  %v3153 = vld [vmem:[%s6 + $0xe8] sm:$0xff]
  %v3154 = vld [vmem:[%s6 + $0xf0] sm:$0xff]
  %v3155 = vld [vmem:[%s6 + $0xf8] sm:$0xff]
  %v3156 = vld [vmem:[%s6 + $0x100] sm:$0xff]
  %v3157 = vld [vmem:[%s6 + $0x108] sm:$0xff]
  %v3158 = vld [vmem:[%s6 + $0x110] sm:$0xff]
  %v3159 = vld [vmem:[%s6 + $0x118] sm:$0xff]
  %v3160 = vld [vmem:[%s6 + $0x120] sm:$0xff]
  %v3161 = vld [vmem:[%s6 + $0x128] sm:$0xff]
  %v3162 = vld [vmem:[%s6 + $0x130] sm:$0xff]
  %v3163 = vld [vmem:[%s6 + $0x138] sm:$0xff]
  %v3164 = vld [vmem:[%s6 + $0x140] sm:$0xff]
  %v3165 = vld [vmem:[%s6 + $0x148] sm:$0xff]
  %v3166 = vld [vmem:[%s6 + $0x150] sm:$0xff]
  %v3167 = vld [vmem:[%s6 + $0x158] sm:$0xff]
  %v3168 = vld [vmem:[%s6 + $0x160] sm:$0xff]
  %v3169 = vld [vmem:[%s6 + $0x168] sm:$0xff]
  %v3170 = vld [vmem:[%s6 + $0x170] sm:$0xff]
  %v3171 = vld [vmem:[%s6 + $0x178] sm:$0xff]
  %v3172 = vld [vmem:[%s6 + $0x180] sm:$0xff]
  %v3173 = vld [vmem:[%s6 + $0x188] sm:$0xff]
  %v3174 = vld [vmem:[%s6 + $0x190] sm:$0xff]
  %v3175 = vld [vmem:[%s6 + $0x198] sm:$0xff]
  %v3176 = vld [vmem:[%s6 + $0x1a0] sm:$0xff]
  %v3177 = vld [vmem:[%s6 + $0x1a8] sm:$0xff]
  %v3178 = vld [vmem:[%s6 + $0x1b0] sm:$0xff]
  %v3179 = vld [vmem:[%s6 + $0x1b8] sm:$0xff]
  %v3180 = vld [vmem:[%s6 + $0x1c0] sm:$0xff]
  %v3181 = vld [vmem:[%s6 + $0x1c8] sm:$0xff]
  %v3182 = vld [vmem:[%s6 + $0x1d0] sm:$0xff]
  %v3183 = vld [vmem:[%s6 + $0x1d8] sm:$0xff]
  %v3184 = vld [vmem:[%s6 + $0x1e0] sm:$0xff]
  %v3185 = vld [vmem:[%s6 + $0x1e8] sm:$0xff]
  %v3186 = vld [vmem:[%s6 + $0x1f0] sm:$0xff]
  %v3187 = vld [vmem:[%s6 + $0x1f8] sm:$0xff]
  %v3188 = vld [vmem:[%s6 + $0x200] sm:$0xff]
  %v3189 = vld [vmem:[%s6 + $0x208] sm:$0xff]
  %v3190 = vld [vmem:[%s6 + $0x210] sm:$0xff]
  %v3191 = vld [vmem:[%s6 + $0x218] sm:$0xff]
  %v3192 = vld [vmem:[%s6 + $0x220] sm:$0xff]
  %v3193 = vld [vmem:[%s6 + $0x228] sm:$0xff]
  %v3194 = vld [vmem:[%s6 + $0x230] sm:$0xff]
  %v3195 = vld [vmem:[%s6 + $0x238] sm:$0xff]
  %v3196 = vld [vmem:[%s6 + $0x240] sm:$0xff]
  %v3197 = vld [vmem:[%s6 + $0x248] sm:$0xff]
  %v3198 = vld [vmem:[%s6 + $0x250] sm:$0xff]
  %v3199 = vld [vmem:[%s6 + $0x258] sm:$0xff]
  %v3200 = vld [vmem:[%s6 + $0x260] sm:$0xff]
  %v3201 = vld [vmem:[%s6 + $0x268] sm:$0xff]
  %v3202 = vld [vmem:[%s6 + $0x270] sm:$0xff]
  %v3203 = vld [vmem:[%s6 + $0x278] sm:$0xff]
  %v3204 = vld [vmem:[%s6 + $0x280] sm:$0xff]
  %v3205 = vld [vmem:[%s6 + $0x288] sm:$0xff]
  %v3206 = vld [vmem:[%s6 + $0x290] sm:$0xff]
  %v3207 = vld [vmem:[%s6 + $0x298] sm:$0xff]
  %v3208 = vld [vmem:[%s6 + $0x2a0] sm:$0xff]
  %v3209 = vld [vmem:[%s6 + $0x2a8] sm:$0xff]
  %v3210 = vld [vmem:[%s6 + $0x2b0] sm:$0xff]
  %v3211 = vld [vmem:[%s6 + $0x2b8] sm:$0xff]
  %v3212 = vld [vmem:[%s6 + $0x2c0] sm:$0xff]
  %v3213 = vld [vmem:[%s6 + $0x2c8] sm:$0xff]
  %v3214 = vld [vmem:[%s6 + $0x2d0] sm:$0xff]
  %v3215 = vld [vmem:[%s6 + $0x2d8] sm:$0xff]
  %v3216 = vld [vmem:[%s6 + $0x2e0] sm:$0xff]
  %v3217 = vld [vmem:[%s6 + $0x2e8] sm:$0xff]
  %v3218 = vld [vmem:[%s6 + $0x2f0] sm:$0xff]
  %v3219 = vld [vmem:[%s6 + $0x2f8] sm:$0xff]
  %v3220 = vld [vmem:[%s6 + $0x300] sm:$0xff]
  %v3221 = vld [vmem:[%s6 + $0x308] sm:$0xff]
  %v3222 = vld [vmem:[%s6 + $0x310] sm:$0xff]
  %v3223 = vld [vmem:[%s6 + $0x318] sm:$0xff]
  %v3224 = vld [vmem:[%s6 + $0x320] sm:$0xff]
  %v3225 = vld [vmem:[%s6 + $0x328] sm:$0xff]
  %v3226 = vld [vmem:[%s6 + $0x330] sm:$0xff]
  %v3227 = vld [vmem:[%s6 + $0x338] sm:$0xff]
  %v3228 = vld [vmem:[%s6 + $0x340] sm:$0xff]
  %v3229 = vld [vmem:[%s6 + $0x348] sm:$0xff]
  %v3230 = vld [vmem:[%s6 + $0x350] sm:$0xff]
  %v3231 = vld [vmem:[%s6 + $0x358] sm:$0xff]
  %v3232 = vld [vmem:[%s6 + $0x360] sm:$0xff]
  %v3233 = vld [vmem:[%s6 + $0x368] sm:$0xff]
  %v3234 = vld [vmem:[%s6 + $0x370] sm:$0xff]
  %v3235 = vld [vmem:[%s6 + $0x378] sm:$0xff]
  %v3236 = vld [vmem:[%s6 + $0x380] sm:$0xff]
  %v3237 = vld [vmem:[%s6 + $0x388] sm:$0xff]
  %v3238 = vld [vmem:[%s6 + $0x390] sm:$0xff]
  %v3239 = vld [vmem:[%s6 + $0x398] sm:$0xff]
  %v3240 = vld [vmem:[%s6 + $0x3a0] sm:$0xff]
  %v3241 = vld [vmem:[%s6 + $0x3a8] sm:$0xff]
  %v3242 = vld [vmem:[%s6 + $0x3b0] sm:$0xff]
  %v3243 = vld [vmem:[%s6 + $0x3b8] sm:$0xff]
  %v3244 = vld [vmem:[%s6 + $0x3c0] sm:$0xff]
  %v3245 = vld [vmem:[%s6 + $0x3c8] sm:$0xff]
  %v3246 = vld [vmem:[%s6 + $0x3d0] sm:$0xff]
  %v3247 = vld [vmem:[%s6 + $0x3d8] sm:$0xff]
  %v3248 = vld [vmem:[%s6 + $0x3e0] sm:$0xff]
  %v3249 = vld [vmem:[%s6 + $0x3e8] sm:$0xff]
  %v3250 = vld [vmem:[%s6 + $0x3f0] sm:$0xff]
  %v3251 = vld [vmem:[%s6 + $0x3f8] sm:$0xff]
  %v3252 = vld [vmem:[%s6 + $0x400] sm:$0xff]
  %v3253 = vld [vmem:[%s6 + $0x408] sm:$0xff]
  %v3254 = vld [vmem:[%s6 + $0x410] sm:$0xff]
  %v3255 = vld [vmem:[%s6 + $0x418] sm:$0xff]
  %v3256 = vld [vmem:[%s6 + $0x420] sm:$0xff]
  %v3257 = vld [vmem:[%s6 + $0x428] sm:$0xff]
  %v3258 = vld [vmem:[%s6 + $0x430] sm:$0xff]
  %v3259 = vld [vmem:[%s6 + $0x438] sm:$0xff]
  %v3260 = vld [vmem:[%s6 + $0x440] sm:$0xff]
  %v3261 = vld [vmem:[%s6 + $0x448] sm:$0xff]
  %v3262 = vld [vmem:[%s6 + $0x450] sm:$0xff]
  %v3263 = vld [vmem:[%s6 + $0x458] sm:$0xff]
  %v3264 = vld [vmem:[%s6 + $0x460] sm:$0xff]
  %v3265 = vld [vmem:[%s6 + $0x468] sm:$0xff]
  %v3266 = vld [vmem:[%s6 + $0x470] sm:$0xff]
  %v3267 = vld [vmem:[%s6 + $0x478] sm:$0xff]
  %v3268 = vld [vmem:[%s6 + $0x480] sm:$0xff]
  %v3269 = vld [vmem:[%s6 + $0x488] sm:$0xff]
  %v3270 = vld [vmem:[%s6 + $0x490] sm:$0xff]
  %v3271 = vld [vmem:[%s6 + $0x498] sm:$0xff]
  %v3272 = vld [vmem:[%s6 + $0x4a0] sm:$0xff]
  %v3273 = vld [vmem:[%s6 + $0x4a8] sm:$0xff]
  %v3274 = vld [vmem:[%s6 + $0x4b0] sm:$0xff]
  %v3275 = vld [vmem:[%s6 + $0x4b8] sm:$0xff]
  %v3276 = vld [vmem:[%s6 + $0x4c0] sm:$0xff]
  %v3277 = vld [vmem:[%s6 + $0x4c8] sm:$0xff]
  %v3278 = vld [vmem:[%s6 + $0x4d0] sm:$0xff]
  %v3279 = vld [vmem:[%s6 + $0x4d8] sm:$0xff]
  %v3280 = vld [vmem:[%s6 + $0x4e0] sm:$0xff]
  %v3281 = vld [vmem:[%s6 + $0x4e8] sm:$0xff]
  %v3282 = vld [vmem:[%s6 + $0x4f0] sm:$0xff]
  %v3283 = vld [vmem:[%s6 + $0x4f8] sm:$0xff]
  %v3284 = vld [vmem:[%s6 + $0x500] sm:$0xff]
  %v3285 = vld [vmem:[%s6 + $0x508] sm:$0xff]
  %v3286 = vld [vmem:[%s6 + $0x510] sm:$0xff]
  %v3287 = vld [vmem:[%s6 + $0x518] sm:$0xff]
  %v3288 = vld [vmem:[%s6 + $0x520] sm:$0xff]
  %v3289 = vld [vmem:[%s6 + $0x528] sm:$0xff]
  %v3290 = vld [vmem:[%s6 + $0x530] sm:$0xff]
  %v3291 = vld [vmem:[%s6 + $0x538] sm:$0xff]
  %v3292 = vld [vmem:[%s6 + $0x540] sm:$0xff]
  %v3293 = vld [vmem:[%s6 + $0x548] sm:$0xff]
  %v3294 = vld [vmem:[%s6 + $0x550] sm:$0xff]
  %v3295 = vld [vmem:[%s6 + $0x558] sm:$0xff]
  %v3296 = vld [vmem:[%s6 + $0x560] sm:$0xff]
  %v3297 = vld [vmem:[%s6 + $0x568] sm:$0xff]
  %v3298 = vld [vmem:[%s6 + $0x570] sm:$0xff]
  %v3299 = vld [vmem:[%s6 + $0x578] sm:$0xff]
  %v3300 = vld [vmem:[%s6 + $0x580] sm:$0xff]
  %v3301 = vld [vmem:[%s6 + $0x588] sm:$0xff]
  %v3302 = vld [vmem:[%s6 + $0x590] sm:$0xff]
  %v3303 = vld [vmem:[%s6 + $0x598] sm:$0xff]
  %v3304 = vld [vmem:[%s6 + $0x5a0] sm:$0xff]
  %v3305 = vld [vmem:[%s6 + $0x5a8] sm:$0xff]
  %v3306 = vld [vmem:[%s6 + $0x5b0] sm:$0xff]
  %v3307 = vld [vmem:[%s6 + $0x5b8] sm:$0xff]
  %v3308 = vld [vmem:[%s6 + $0x5c0] sm:$0xff]
  %v3309 = vld [vmem:[%s6 + $0x5c8] sm:$0xff]
  %v3310 = vld [vmem:[%s6 + $0x5d0] sm:$0xff]
  %v3311 = vld [vmem:[%s6 + $0x5d8] sm:$0xff]
  %v3312 = vld [vmem:[%s6 + $0x5e0] sm:$0xff]
  %v3313 = vld [vmem:[%s6 + $0x5e8] sm:$0xff]
  %v3314 = vld [vmem:[%s6 + $0x5f0] sm:$0xff]
  %v3315 = vld [vmem:[%s6 + $0x5f8] sm:$0xff]
  %v3316 = vld [vmem:[%s6 + $0x600] sm:$0xff]
  %v3317 = vld [vmem:[%s6 + $0x608] sm:$0xff]
  %v3318 = vld [vmem:[%s6 + $0x610] sm:$0xff]
  %v3319 = vld [vmem:[%s6 + $0x618] sm:$0xff]
  %v3320 = vld [vmem:[%s6 + $0x620] sm:$0xff]
  %v3321 = vld [vmem:[%s6 + $0x628] sm:$0xff]
  %v3322 = vld [vmem:[%s6 + $0x630] sm:$0xff]
  %v3323 = vld [vmem:[%s6 + $0x638] sm:$0xff]
  %v3324 = vld [vmem:[%s6 + $0x640] sm:$0xff]
  %v3325 = vld [vmem:[%s6 + $0x648] sm:$0xff]
  %v3326 = vld [vmem:[%s6 + $0x650] sm:$0xff]
  %v3327 = vld [vmem:[%s6 + $0x658] sm:$0xff]
  %v3328 = vld [vmem:[%s6 + $0x660] sm:$0xff]
  %v3329 = vld [vmem:[%s6 + $0x668] sm:$0xff]
  %v3330 = vld [vmem:[%s6 + $0x670] sm:$0xff]
  %v3331 = vld [vmem:[%s6 + $0x678] sm:$0xff]
  %v3332 = vld [vmem:[%s6 + $0x680] sm:$0xff]
  %v3333 = vld [vmem:[%s6 + $0x688] sm:$0xff]
  %v3334 = vld [vmem:[%s6 + $0x690] sm:$0xff]
  %v3335 = vld [vmem:[%s6 + $0x698] sm:$0xff]
  %v3336 = vld [vmem:[%s6 + $0x6a0] sm:$0xff]
  %v3337 = vld [vmem:[%s6 + $0x6a8] sm:$0xff]
  %v3338 = vld [vmem:[%s6 + $0x6b0] sm:$0xff]
  %v3339 = vld [vmem:[%s6 + $0x6b8] sm:$0xff]
  %v3340 = vld [vmem:[%s6 + $0x6c0] sm:$0xff]
  %v3341 = vld [vmem:[%s6 + $0x6c8] sm:$0xff]
  %v3342 = vld [vmem:[%s6 + $0x6d0] sm:$0xff]
  %v3343 = vld [vmem:[%s6 + $0x6d8] sm:$0xff]
  %v3344 = vld [vmem:[%s6 + $0x6e0] sm:$0xff]
  %v3345 = vld [vmem:[%s6 + $0x6e8] sm:$0xff]
  %v3346 = vld [vmem:[%s6 + $0x6f0] sm:$0xff]
  %v3347 = vld [vmem:[%s6 + $0x6f8] sm:$0xff]
  %v3348 = vld [vmem:[%s6 + $0x700] sm:$0xff]
  %v3349 = vld [vmem:[%s6 + $0x708] sm:$0xff]
  %v3350 = vld [vmem:[%s6 + $0x710] sm:$0xff]
  %v3351 = vld [vmem:[%s6 + $0x718] sm:$0xff]
  %v3352 = vld [vmem:[%s6 + $0x720] sm:$0xff]
  %v3353 = vld [vmem:[%s6 + $0x728] sm:$0xff]
  %v3354 = vld [vmem:[%s6 + $0x730] sm:$0xff]
  %v3355 = vld [vmem:[%s6 + $0x738] sm:$0xff]
  %v3356 = vld [vmem:[%s6 + $0x740] sm:$0xff]
  %v3357 = vld [vmem:[%s6 + $0x748] sm:$0xff]
  %v3358 = vld [vmem:[%s6 + $0x750] sm:$0xff]
  %v3359 = vld [vmem:[%s6 + $0x758] sm:$0xff]
  %v3360 = vld [vmem:[%s6 + $0x760] sm:$0xff]
  %v3361 = vld [vmem:[%s6 + $0x768] sm:$0xff]
  %v3362 = vld [vmem:[%s6 + $0x770] sm:$0xff]
  %v3363 = vld [vmem:[%s6 + $0x778] sm:$0xff]
  %v3364 = vld [vmem:[%s6 + $0x780] sm:$0xff]
  %v3365 = vld [vmem:[%s6 + $0x788] sm:$0xff]
  %v3366 = vld [vmem:[%s6 + $0x790] sm:$0xff]
  %v3367 = vld [vmem:[%s6 + $0x798] sm:$0xff]
  %v3368 = vld [vmem:[%s6 + $0x7a0] sm:$0xff]
  %v3369 = vld [vmem:[%s6 + $0x7a8] sm:$0xff]
  %v3370 = vld [vmem:[%s6 + $0x7b0] sm:$0xff]
  %v3371 = vld [vmem:[%s6 + $0x7b8] sm:$0xff]
  %v3372 = vld [vmem:[%s6 + $0x7c0] sm:$0xff]
  %v3373 = vld [vmem:[%s6 + $0x7c8] sm:$0xff]
  %v3374 = vld [vmem:[%s6 + $0x7d0] sm:$0xff]
  %v3375 = vld [vmem:[%s6 + $0x7d8] sm:$0xff]
  %v3376 = vld [vmem:[%s6 + $0x7e0] sm:$0xff]
  %v3377 = vld [vmem:[%s6 + $0x7e8] sm:$0xff]
  %v3378 = vld [vmem:[%s6 + $0x7f0] sm:$0xff]
  %v3379 = vld [vmem:[%s6 + $0x7f8] sm:$0xff]
  %v3380 = vld [vmem:[%s6 + $0x800] sm:$0xff]
  %v3381 = vld [vmem:[%s6 + $0x808] sm:$0xff]
  %v3382 = vld [vmem:[%s6 + $0x810] sm:$0xff]
  %v3383 = vld [vmem:[%s6 + $0x818] sm:$0xff]
  %v3384 = vld [vmem:[%s6 + $0x820] sm:$0xff]
  %v3385 = vld [vmem:[%s6 + $0x828] sm:$0xff]
  %v3386 = vld [vmem:[%s6 + $0x830] sm:$0xff]
  %v3387 = vld [vmem:[%s6 + $0x838] sm:$0xff]
  %v3388 = vld [vmem:[%s6 + $0x840] sm:$0xff]
  %v3389 = vld [vmem:[%s6 + $0x848] sm:$0xff]
  %v3390 = vld [vmem:[%s6 + $0x850] sm:$0xff]
  %v3391 = vld [vmem:[%s6 + $0x858] sm:$0xff]
  %v3392 = vld [vmem:[%s6 + $0x860] sm:$0xff]
  %v3393 = vld [vmem:[%s6 + $0x868] sm:$0xff]
  %v3394 = vld [vmem:[%s6 + $0x870] sm:$0xff]
  %v3395 = vld [vmem:[%s6 + $0x878] sm:$0xff]
  %v3396 = vld [vmem:[%s6 + $0x880] sm:$0xff]
  %v3397 = vld [vmem:[%s6 + $0x888] sm:$0xff]
  %v3398 = vld [vmem:[%s6 + $0x890] sm:$0xff]
  %v3399 = vld [vmem:[%s6 + $0x898] sm:$0xff]
  %v3400 = vld [vmem:[%s6 + $0x8a0] sm:$0xff]
  %v3401 = vld [vmem:[%s6 + $0x8a8] sm:$0xff]
  %v3402 = vld [vmem:[%s6 + $0x8b0] sm:$0xff]
  %v3403 = vld [vmem:[%s6 + $0x8b8] sm:$0xff]
  %v3404 = vld [vmem:[%s6 + $0x8c0] sm:$0xff]
  %v3405 = vld [vmem:[%s6 + $0x8c8] sm:$0xff]
  %v3406 = vld [vmem:[%s6 + $0x8d0] sm:$0xff]
  %v3407 = vld [vmem:[%s6 + $0x8d8] sm:$0xff]
  %v3408 = vld [vmem:[%s6 + $0x8e0] sm:$0xff]
  %v3409 = vld [vmem:[%s6 + $0x8e8] sm:$0xff]
  %v3410 = vld [vmem:[%s6 + $0x8f0] sm:$0xff]
  %v3411 = vld [vmem:[%s6 + $0x8f8] sm:$0xff]
  %v3412 = vld [vmem:[%s6 + $0x900] sm:$0xff]
  %v3413 = vld [vmem:[%s6 + $0x908] sm:$0xff]
  %v3414 = vld [vmem:[%s6 + $0x910] sm:$0xff]
  %v3415 = vld [vmem:[%s6 + $0x918] sm:$0xff]
  %v3416 = vld [vmem:[%s6 + $0x920] sm:$0xff]
  %v3417 = vld [vmem:[%s6 + $0x928] sm:$0xff]
  %v3418 = vld [vmem:[%s6 + $0x930] sm:$0xff]
  %v3419 = vld [vmem:[%s6 + $0x938] sm:$0xff]
  %v3420 = vld [vmem:[%s6 + $0x940] sm:$0xff]
  %v3421 = vld [vmem:[%s6 + $0x948] sm:$0xff]
  %v3422 = vld [vmem:[%s6 + $0x950] sm:$0xff]
  %v3423 = vld [vmem:[%s6 + $0x958] sm:$0xff]
  %v3424 = vld [vmem:[%s6 + $0x960] sm:$0xff]
  %v3425 = vld [vmem:[%s6 + $0x968] sm:$0xff]
  %v3426 = vld [vmem:[%s6 + $0x970] sm:$0xff]
  %v3427 = vld [vmem:[%s6 + $0x978] sm:$0xff]
  %v3428 = vld [vmem:[%s6 + $0x980] sm:$0xff]
  %v3429 = vld [vmem:[%s6 + $0x988] sm:$0xff]
  %v3430 = vld [vmem:[%s6 + $0x990] sm:$0xff]
  %v3431 = vld [vmem:[%s6 + $0x998] sm:$0xff]
  %v3432 = vld [vmem:[%s6 + $0x9a0] sm:$0xff]
  %v3433 = vld [vmem:[%s6 + $0x9a8] sm:$0xff]
  %v3434 = vld [vmem:[%s6 + $0x9b0] sm:$0xff]
  %v3435 = vld [vmem:[%s6 + $0x9b8] sm:$0xff]
  %v3436 = vld [vmem:[%s6 + $0x9c0] sm:$0xff]
  %v3437 = vld [vmem:[%s6 + $0x9c8] sm:$0xff]
  %v3438 = vld [vmem:[%s6 + $0x9d0] sm:$0xff]
  %v3439 = vld [vmem:[%s6 + $0x9d8] sm:$0xff]
  %v3440 = vld [vmem:[%s6 + $0x9e0] sm:$0xff]
  %v3441 = vld [vmem:[%s6 + $0x9e8] sm:$0xff]
  %v3442 = vld [vmem:[%s6 + $0x9f0] sm:$0xff]
  %v3443 = vld [vmem:[%s6 + $0x9f8] sm:$0xff]
  %v3444 = vld [vmem:[%s6 + $0xa00] sm:$0xff]
  %v3445 = vld [vmem:[%s6 + $0xa08] sm:$0xff]
  %v3446 = vld [vmem:[%s6 + $0xa10] sm:$0xff]
  %v3447 = vld [vmem:[%s6 + $0xa18] sm:$0xff]
  %v3448 = vld [vmem:[%s6 + $0xa20] sm:$0xff]
  %v3449 = vld [vmem:[%s6 + $0xa28] sm:$0xff]
  %v3450 = vld [vmem:[%s6 + $0xa30] sm:$0xff]
  %v3451 = vld [vmem:[%s6 + $0xa38] sm:$0xff]
  %v3452 = vld [vmem:[%s6 + $0xa40] sm:$0xff]
  %v3453 = vld [vmem:[%s6 + $0xa48] sm:$0xff]
  %v3454 = vld [vmem:[%s6 + $0xa50] sm:$0xff]
  %v3455 = vld [vmem:[%s6 + $0xa58] sm:$0xff]
  %v3456 = vld [vmem:[%s6 + $0xa60] sm:$0xff]
  %v3457 = vld [vmem:[%s6 + $0xa68] sm:$0xff]
  %v3458 = vld [vmem:[%s6 + $0xa70] sm:$0xff]
  %v3459 = vld [vmem:[%s6 + $0xa78] sm:$0xff]
  %v3460 = vld [vmem:[%s6 + $0xa80] sm:$0xff]
  %v3461 = vld [vmem:[%s6 + $0xa88] sm:$0xff]
  %v3462 = vld [vmem:[%s6 + $0xa90] sm:$0xff]
  %v3463 = vld [vmem:[%s6 + $0xa98] sm:$0xff]
  %v3464 = vld [vmem:[%s6 + $0xaa0] sm:$0xff]
  %v3465 = vld [vmem:[%s6 + $0xaa8] sm:$0xff]
  %v3466 = vld [vmem:[%s6 + $0xab0] sm:$0xff]
  %v3467 = vld [vmem:[%s6 + $0xab8] sm:$0xff]
  %v3468 = vld [vmem:[%s6 + $0xac0] sm:$0xff]
  %v3469 = vld [vmem:[%s6 + $0xac8] sm:$0xff]
  %v3470 = vld [vmem:[%s6 + $0xad0] sm:$0xff]
  %v3471 = vld [vmem:[%s6 + $0xad8] sm:$0xff]
  %v3472 = vld [vmem:[%s6 + $0xae0] sm:$0xff]
  %v3473 = vld [vmem:[%s6 + $0xae8] sm:$0xff]
  %v3474 = vld [vmem:[%s6 + $0xaf0] sm:$0xff]
  %v3475 = vld [vmem:[%s6 + $0xaf8] sm:$0xff]
  %v3476 = vld [vmem:[%s6 + $0xb00] sm:$0xff]
  %v3477 = vld [vmem:[%s6 + $0xb08] sm:$0xff]
  %v3478 = vld [vmem:[%s6 + $0xb10] sm:$0xff]
  %v3479 = vld [vmem:[%s6 + $0xb18] sm:$0xff]
  %v3480 = vld [vmem:[%s6 + $0xb20] sm:$0xff]
  %v3481 = vld [vmem:[%s6 + $0xb28] sm:$0xff]
  %v3482 = vld [vmem:[%s6 + $0xb30] sm:$0xff]
  %v3483 = vld [vmem:[%s6 + $0xb38] sm:$0xff]
  %v3484 = vld [vmem:[%s6 + $0xb40] sm:$0xff]
  %v3485 = vld [vmem:[%s6 + $0xb48] sm:$0xff]
  %v3486 = vld [vmem:[%s6 + $0xb50] sm:$0xff]
  %v3487 = vld [vmem:[%s6 + $0xb58] sm:$0xff]
  %v3488 = vld [vmem:[%s6 + $0xb60] sm:$0xff]
  %v3489 = vld [vmem:[%s6 + $0xb68] sm:$0xff]
  %v3490 = vld [vmem:[%s6 + $0xb70] sm:$0xff]
  %v3491 = vld [vmem:[%s6 + $0xb78] sm:$0xff]
  %v3492 = vld [vmem:[%s6 + $0xb80] sm:$0xff]
  %v3493 = vld [vmem:[%s6 + $0xb88] sm:$0xff]
  %v3494 = vld [vmem:[%s6 + $0xb90] sm:$0xff]
  %v3495 = vld [vmem:[%s6 + $0xb98] sm:$0xff]
  %v3496 = vld [vmem:[%s6 + $0xba0] sm:$0xff]
  %v3497 = vld [vmem:[%s6 + $0xba8] sm:$0xff]
  %v3498 = vld [vmem:[%s6 + $0xbb0] sm:$0xff]
  %v3499 = vld [vmem:[%s6 + $0xbb8] sm:$0xff]
  %v3500 = vld [vmem:[%s6 + $0xbc0] sm:$0xff]
  %v3501 = vld [vmem:[%s6 + $0xbc8] sm:$0xff]
  %v3502 = vld [vmem:[%s6 + $0xbd0] sm:$0xff]
  %v3503 = vld [vmem:[%s6 + $0xbd8] sm:$0xff]
  %v3504 = vld [vmem:[%s6 + $0xbe0] sm:$0xff]
  %v3505 = vld [vmem:[%s6 + $0xbe8] sm:$0xff]
  %v3506 = vld [vmem:[%s6 + $0xbf0] sm:$0xff]
  %v3507 = vld [vmem:[%s6 + $0xbf8] sm:$0xff]
  %v3508 = vld [vmem:[%s7] sm:$0x3f]
  %v3510 = vlaneseq
  %v3511 = vshrl.u32 %v3510, 7
  %v3512 = vsub.s32 0, %v3511
  %v3513 = vrot.slane %v3508, %v3512
  %v3514 = vlaneseq
  %v3515 = vshrl.u32 %v3514, 7
  %v3516 = vsub.s32 1, %v3515
  %v3517 = vrot.slane %v3508, %v3516
  %v3518 = vlaneseq
  %v3519 = vshrl.u32 %v3518, 7
  %v3520 = vsub.s32 2, %v3519
  %v3521 = vrot.slane %v3508, %v3520
  %v3522 = vlaneseq
  %v3523 = vshrl.u32 %v3522, 7
  %v3524 = vsub.s32 3, %v3523
  %v3525 = vrot.slane %v3508, %v3524
  %v3526 = vlaneseq
  %v3527 = vshrl.u32 %v3526, 7
  %v3528 = vsub.s32 4, %v3527
  %v3529 = vrot.slane %v3508, %v3528
  %v3530 = vlaneseq
  %v3531 = vshrl.u32 %v3530, 7
  %v3532 = vsub.s32 5, %v3531
  %v3533 = vrot.slane %v3508, %v3532
  %v3924 = vunpack.c.l.b16 %v3124
  %v3925 = vunpack.c.h.b16 %v3124
  %v3926 = vunpack.c.l.b16 %v3125
  %v3927 = vunpack.c.h.b16 %v3125
  %v3928 = vunpack.c.l.b16 %v3126
  %v3929 = vunpack.c.h.b16 %v3126
  %v3930 = vunpack.c.l.b16 %v3127
  %v3931 = vunpack.c.h.b16 %v3127
  %v3932 = vunpack.c.l.b16 %v3128
  %v3933 = vunpack.c.h.b16 %v3128
  %v3934 = vunpack.c.l.b16 %v3129
  %v3935 = vunpack.c.h.b16 %v3129
  %v3936 = vunpack.c.l.b16 %v3130
  %v3937 = vunpack.c.h.b16 %v3130
  %v3938 = vunpack.c.l.b16 %v3131
  %v3939 = vunpack.c.h.b16 %v3131
  %v3940 = vunpack.c.l.b16 %v3132
  %v3941 = vunpack.c.h.b16 %v3132
  %v3942 = vunpack.c.l.b16 %v3133
  %v3943 = vunpack.c.h.b16 %v3133
  %v3944 = vunpack.c.l.b16 %v3134
  %v3945 = vunpack.c.h.b16 %v3134
  %v3946 = vunpack.c.l.b16 %v3135
  %v3947 = vunpack.c.h.b16 %v3135
  %v3948 = vunpack.c.l.b16 %v3136
  %v3949 = vunpack.c.h.b16 %v3136
  %v3950 = vunpack.c.l.b16 %v3137
  %v3951 = vunpack.c.h.b16 %v3137
  %v3952 = vunpack.c.l.b16 %v3138
  %v3953 = vunpack.c.h.b16 %v3138
  %v3954 = vunpack.c.l.b16 %v3139
  %v3955 = vunpack.c.h.b16 %v3139
  %v3956 = vunpack.c.l.b16 %v3140
  %v3957 = vunpack.c.h.b16 %v3140
  %v3958 = vunpack.c.l.b16 %v3141
  %v3959 = vunpack.c.h.b16 %v3141
  %v3960 = vunpack.c.l.b16 %v3142
  %v3961 = vunpack.c.h.b16 %v3142
  %v3962 = vunpack.c.l.b16 %v3143
  %v3963 = vunpack.c.h.b16 %v3143
  %v3964 = vunpack.c.l.b16 %v3144
  %v3965 = vunpack.c.h.b16 %v3144
  %v3966 = vunpack.c.l.b16 %v3145
  %v3967 = vunpack.c.h.b16 %v3145
  %v3968 = vunpack.c.l.b16 %v3146
  %v3969 = vunpack.c.h.b16 %v3146
  %v3970 = vunpack.c.l.b16 %v3147
  %v3971 = vunpack.c.h.b16 %v3147
  %v3972 = vunpack.c.l.b16 %v3148
  %v3973 = vunpack.c.h.b16 %v3148
  %v3974 = vunpack.c.l.b16 %v3149
  %v3975 = vunpack.c.h.b16 %v3149
  %v3976 = vunpack.c.l.b16 %v3150
  %v3977 = vunpack.c.h.b16 %v3150
  %v3978 = vunpack.c.l.b16 %v3151
  %v3979 = vunpack.c.h.b16 %v3151
  %v3980 = vunpack.c.l.b16 %v3152
  %v3981 = vunpack.c.h.b16 %v3152
  %v3982 = vunpack.c.l.b16 %v3153
  %v3983 = vunpack.c.h.b16 %v3153
  %v3984 = vunpack.c.l.b16 %v3154
  %v3985 = vunpack.c.h.b16 %v3154
  %v3986 = vunpack.c.l.b16 %v3155
  %v3987 = vunpack.c.h.b16 %v3155
  %v3988 = vunpack.c.l.b16 %v3156
  %v3989 = vunpack.c.h.b16 %v3156
  %v3990 = vunpack.c.l.b16 %v3157
  %v3991 = vunpack.c.h.b16 %v3157
  %v3992 = vunpack.c.l.b16 %v3158
  %v3993 = vunpack.c.h.b16 %v3158
  %v3994 = vunpack.c.l.b16 %v3159
  %v3995 = vunpack.c.h.b16 %v3159
  %v3996 = vunpack.c.l.b16 %v3160
  %v3997 = vunpack.c.h.b16 %v3160
  %v3998 = vunpack.c.l.b16 %v3161
  %v3999 = vunpack.c.h.b16 %v3161
  %v4000 = vunpack.c.l.b16 %v3162
  %v4001 = vunpack.c.h.b16 %v3162
  %v4002 = vunpack.c.l.b16 %v3163
  %v4003 = vunpack.c.h.b16 %v3163
  %v4004 = vunpack.c.l.b16 %v3164
  %v4005 = vunpack.c.h.b16 %v3164
  %v4006 = vunpack.c.l.b16 %v3165
  %v4007 = vunpack.c.h.b16 %v3165
  %v4008 = vunpack.c.l.b16 %v3166
  %v4009 = vunpack.c.h.b16 %v3166
  %v4010 = vunpack.c.l.b16 %v3167
  %v4011 = vunpack.c.h.b16 %v3167
  %v4012 = vunpack.c.l.b16 %v3168
  %v4013 = vunpack.c.h.b16 %v3168
  %v4014 = vunpack.c.l.b16 %v3169
  %v4015 = vunpack.c.h.b16 %v3169
  %v4016 = vunpack.c.l.b16 %v3170
  %v4017 = vunpack.c.h.b16 %v3170
  %v4018 = vunpack.c.l.b16 %v3171
  %v4019 = vunpack.c.h.b16 %v3171
  %v4020 = vunpack.c.l.b16 %v3172
  %v4021 = vunpack.c.h.b16 %v3172
  %v4022 = vunpack.c.l.b16 %v3173
  %v4023 = vunpack.c.h.b16 %v3173
  %v4024 = vunpack.c.l.b16 %v3174
  %v4025 = vunpack.c.h.b16 %v3174
  %v4026 = vunpack.c.l.b16 %v3175
  %v4027 = vunpack.c.h.b16 %v3175
  %v4028 = vunpack.c.l.b16 %v3176
  %v4029 = vunpack.c.h.b16 %v3176
  %v4030 = vunpack.c.l.b16 %v3177
  %v4031 = vunpack.c.h.b16 %v3177
  %v4032 = vunpack.c.l.b16 %v3178
  %v4033 = vunpack.c.h.b16 %v3178
  %v4034 = vunpack.c.l.b16 %v3179
  %v4035 = vunpack.c.h.b16 %v3179
  %v4036 = vunpack.c.l.b16 %v3180
  %v4037 = vunpack.c.h.b16 %v3180
  %v4038 = vunpack.c.l.b16 %v3181
  %v4039 = vunpack.c.h.b16 %v3181
  %v4040 = vunpack.c.l.b16 %v3182
  %v4041 = vunpack.c.h.b16 %v3182
  %v4042 = vunpack.c.l.b16 %v3183
  %v4043 = vunpack.c.h.b16 %v3183
  %v4044 = vunpack.c.l.b16 %v3184
  %v4045 = vunpack.c.h.b16 %v3184
  %v4046 = vunpack.c.l.b16 %v3185
  %v4047 = vunpack.c.h.b16 %v3185
  %v4048 = vunpack.c.l.b16 %v3186
  %v4049 = vunpack.c.h.b16 %v3186
  %v4050 = vunpack.c.l.b16 %v3187
  %v4051 = vunpack.c.h.b16 %v3187
  %v4052 = vunpack.c.l.b16 %v3188
  %v4053 = vunpack.c.h.b16 %v3188
  %v4054 = vunpack.c.l.b16 %v3189
  %v4055 = vunpack.c.h.b16 %v3189
  %v4056 = vunpack.c.l.b16 %v3190
  %v4057 = vunpack.c.h.b16 %v3190
  %v4058 = vunpack.c.l.b16 %v3191
  %v4059 = vunpack.c.h.b16 %v3191
  %v4060 = vunpack.c.l.b16 %v3192
  %v4061 = vunpack.c.h.b16 %v3192
  %v4062 = vunpack.c.l.b16 %v3193
  %v4063 = vunpack.c.h.b16 %v3193
  %v4064 = vunpack.c.l.b16 %v3194
  %v4065 = vunpack.c.h.b16 %v3194
  %v4066 = vunpack.c.l.b16 %v3195
  %v4067 = vunpack.c.h.b16 %v3195
  %v4068 = vunpack.c.l.b16 %v3196
  %v4069 = vunpack.c.h.b16 %v3196
  %v4070 = vunpack.c.l.b16 %v3197
  %v4071 = vunpack.c.h.b16 %v3197
  %v4072 = vunpack.c.l.b16 %v3198
  %v4073 = vunpack.c.h.b16 %v3198
  %v4074 = vunpack.c.l.b16 %v3199
  %v4075 = vunpack.c.h.b16 %v3199
  %v4076 = vunpack.c.l.b16 %v3200
  %v4077 = vunpack.c.h.b16 %v3200
  %v4078 = vunpack.c.l.b16 %v3201
  %v4079 = vunpack.c.h.b16 %v3201
  %v4080 = vunpack.c.l.b16 %v3202
  %v4081 = vunpack.c.h.b16 %v3202
  %v4082 = vunpack.c.l.b16 %v3203
  %v4083 = vunpack.c.h.b16 %v3203
  %v4084 = vunpack.c.l.b16 %v3204
  %v4085 = vunpack.c.h.b16 %v3204
  %v4086 = vunpack.c.l.b16 %v3205
  %v4087 = vunpack.c.h.b16 %v3205
  %v4088 = vunpack.c.l.b16 %v3206
  %v4089 = vunpack.c.h.b16 %v3206
  %v4090 = vunpack.c.l.b16 %v3207
  %v4091 = vunpack.c.h.b16 %v3207
  %v4092 = vunpack.c.l.b16 %v3208
  %v4093 = vunpack.c.h.b16 %v3208
  %v4094 = vunpack.c.l.b16 %v3209
  %v4095 = vunpack.c.h.b16 %v3209
  %v4096 = vunpack.c.l.b16 %v3210
  %v4097 = vunpack.c.h.b16 %v3210
  %v4098 = vunpack.c.l.b16 %v3211
  %v4099 = vunpack.c.h.b16 %v3211
  %v4100 = vunpack.c.l.b16 %v3212
  %v4101 = vunpack.c.h.b16 %v3212
  %v4102 = vunpack.c.l.b16 %v3213
  %v4103 = vunpack.c.h.b16 %v3213
  %v4104 = vunpack.c.l.b16 %v3214
  %v4105 = vunpack.c.h.b16 %v3214
  %v4106 = vunpack.c.l.b16 %v3215
  %v4107 = vunpack.c.h.b16 %v3215
  %v4108 = vunpack.c.l.b16 %v3216
  %v4109 = vunpack.c.h.b16 %v3216
  %v4110 = vunpack.c.l.b16 %v3217
  %v4111 = vunpack.c.h.b16 %v3217
  %v4112 = vunpack.c.l.b16 %v3218
  %v4113 = vunpack.c.h.b16 %v3218
  %v4114 = vunpack.c.l.b16 %v3219
  %v4115 = vunpack.c.h.b16 %v3219
  %v4116 = vunpack.c.l.b16 %v3220
  %v4117 = vunpack.c.h.b16 %v3220
  %v4118 = vunpack.c.l.b16 %v3221
  %v4119 = vunpack.c.h.b16 %v3221
  %v4120 = vunpack.c.l.b16 %v3222
  %v4121 = vunpack.c.h.b16 %v3222
  %v4122 = vunpack.c.l.b16 %v3223
  %v4123 = vunpack.c.h.b16 %v3223
  %v4124 = vunpack.c.l.b16 %v3224
  %v4125 = vunpack.c.h.b16 %v3224
  %v4126 = vunpack.c.l.b16 %v3225
  %v4127 = vunpack.c.h.b16 %v3225
  %v4128 = vunpack.c.l.b16 %v3226
  %v4129 = vunpack.c.h.b16 %v3226
  %v4130 = vunpack.c.l.b16 %v3227
  %v4131 = vunpack.c.h.b16 %v3227
  %v4132 = vunpack.c.l.b16 %v3228
  %v4133 = vunpack.c.h.b16 %v3228
  %v4134 = vunpack.c.l.b16 %v3229
  %v4135 = vunpack.c.h.b16 %v3229
  %v4136 = vunpack.c.l.b16 %v3230
  %v4137 = vunpack.c.h.b16 %v3230
  %v4138 = vunpack.c.l.b16 %v3231
  %v4139 = vunpack.c.h.b16 %v3231
  %v4140 = vunpack.c.l.b16 %v3232
  %v4141 = vunpack.c.h.b16 %v3232
  %v4142 = vunpack.c.l.b16 %v3233
  %v4143 = vunpack.c.h.b16 %v3233
  %v4144 = vunpack.c.l.b16 %v3234
  %v4145 = vunpack.c.h.b16 %v3234
  %v4146 = vunpack.c.l.b16 %v3235
  %v4147 = vunpack.c.h.b16 %v3235
  %v4148 = vunpack.c.l.b16 %v3236
  %v4149 = vunpack.c.h.b16 %v3236
  %v4150 = vunpack.c.l.b16 %v3237
  %v4151 = vunpack.c.h.b16 %v3237
  %v4152 = vunpack.c.l.b16 %v3238
  %v4153 = vunpack.c.h.b16 %v3238
  %v4154 = vunpack.c.l.b16 %v3239
  %v4155 = vunpack.c.h.b16 %v3239
  %v4156 = vunpack.c.l.b16 %v3240
  %v4157 = vunpack.c.h.b16 %v3240
  %v4158 = vunpack.c.l.b16 %v3241
  %v4159 = vunpack.c.h.b16 %v3241
  %v4160 = vunpack.c.l.b16 %v3242
  %v4161 = vunpack.c.h.b16 %v3242
  %v4162 = vunpack.c.l.b16 %v3243
  %v4163 = vunpack.c.h.b16 %v3243
  %v4164 = vunpack.c.l.b16 %v3244
  %v4165 = vunpack.c.h.b16 %v3244
  %v4166 = vunpack.c.l.b16 %v3245
  %v4167 = vunpack.c.h.b16 %v3245
  %v4168 = vunpack.c.l.b16 %v3246
  %v4169 = vunpack.c.h.b16 %v3246
  %v4170 = vunpack.c.l.b16 %v3247
  %v4171 = vunpack.c.h.b16 %v3247
  %v4172 = vunpack.c.l.b16 %v3248
  %v4173 = vunpack.c.h.b16 %v3248
  %v4174 = vunpack.c.l.b16 %v3249
  %v4175 = vunpack.c.h.b16 %v3249
  %v4176 = vunpack.c.l.b16 %v3250
  %v4177 = vunpack.c.h.b16 %v3250
  %v4178 = vunpack.c.l.b16 %v3251
  %v4179 = vunpack.c.h.b16 %v3251
  %v4180 = vunpack.c.l.b16 %v3252
  %v4181 = vunpack.c.h.b16 %v3252
  %v4182 = vunpack.c.l.b16 %v3253
  %v4183 = vunpack.c.h.b16 %v3253
  %v4184 = vunpack.c.l.b16 %v3254
  %v4185 = vunpack.c.h.b16 %v3254
  %v4186 = vunpack.c.l.b16 %v3255
  %v4187 = vunpack.c.h.b16 %v3255
  %v4188 = vunpack.c.l.b16 %v3256
  %v4189 = vunpack.c.h.b16 %v3256
  %v4190 = vunpack.c.l.b16 %v3257
  %v4191 = vunpack.c.h.b16 %v3257
  %v4192 = vunpack.c.l.b16 %v3258
  %v4193 = vunpack.c.h.b16 %v3258
  %v4194 = vunpack.c.l.b16 %v3259
  %v4195 = vunpack.c.h.b16 %v3259
  %v4196 = vunpack.c.l.b16 %v3260
  %v4197 = vunpack.c.h.b16 %v3260
  %v4198 = vunpack.c.l.b16 %v3261
  %v4199 = vunpack.c.h.b16 %v3261
  %v4200 = vunpack.c.l.b16 %v3262
  %v4201 = vunpack.c.h.b16 %v3262
  %v4202 = vunpack.c.l.b16 %v3263
  %v4203 = vunpack.c.h.b16 %v3263
  %v4204 = vunpack.c.l.b16 %v3264
  %v4205 = vunpack.c.h.b16 %v3264
  %v4206 = vunpack.c.l.b16 %v3265
  %v4207 = vunpack.c.h.b16 %v3265
  %v4208 = vunpack.c.l.b16 %v3266
  %v4209 = vunpack.c.h.b16 %v3266
  %v4210 = vunpack.c.l.b16 %v3267
  %v4211 = vunpack.c.h.b16 %v3267
  %v4212 = vunpack.c.l.b16 %v3268
  %v4213 = vunpack.c.h.b16 %v3268
  %v4214 = vunpack.c.l.b16 %v3269
  %v4215 = vunpack.c.h.b16 %v3269
  %v4216 = vunpack.c.l.b16 %v3270
  %v4217 = vunpack.c.h.b16 %v3270
  %v4218 = vunpack.c.l.b16 %v3271
  %v4219 = vunpack.c.h.b16 %v3271
  %v4220 = vunpack.c.l.b16 %v3272
  %v4221 = vunpack.c.h.b16 %v3272
  %v4222 = vunpack.c.l.b16 %v3273
  %v4223 = vunpack.c.h.b16 %v3273
  %v4224 = vunpack.c.l.b16 %v3274
  %v4225 = vunpack.c.h.b16 %v3274
  %v4226 = vunpack.c.l.b16 %v3275
  %v4227 = vunpack.c.h.b16 %v3275
  %v4228 = vunpack.c.l.b16 %v3276
  %v4229 = vunpack.c.h.b16 %v3276
  %v4230 = vunpack.c.l.b16 %v3277
  %v4231 = vunpack.c.h.b16 %v3277
  %v4232 = vunpack.c.l.b16 %v3278
  %v4233 = vunpack.c.h.b16 %v3278
  %v4234 = vunpack.c.l.b16 %v3279
  %v4235 = vunpack.c.h.b16 %v3279
  %v4236 = vunpack.c.l.b16 %v3280
  %v4237 = vunpack.c.h.b16 %v3280
  %v4238 = vunpack.c.l.b16 %v3281
  %v4239 = vunpack.c.h.b16 %v3281
  %v4240 = vunpack.c.l.b16 %v3282
  %v4241 = vunpack.c.h.b16 %v3282
  %v4242 = vunpack.c.l.b16 %v3283
  %v4243 = vunpack.c.h.b16 %v3283
  %v4244 = vunpack.c.l.b16 %v3284
  %v4245 = vunpack.c.h.b16 %v3284
  %v4246 = vunpack.c.l.b16 %v3285
  %v4247 = vunpack.c.h.b16 %v3285
  %v4248 = vunpack.c.l.b16 %v3286
  %v4249 = vunpack.c.h.b16 %v3286
  %v4250 = vunpack.c.l.b16 %v3287
  %v4251 = vunpack.c.h.b16 %v3287
  %v4252 = vunpack.c.l.b16 %v3288
  %v4253 = vunpack.c.h.b16 %v3288
  %v4254 = vunpack.c.l.b16 %v3289
  %v4255 = vunpack.c.h.b16 %v3289
  %v4256 = vunpack.c.l.b16 %v3290
  %v4257 = vunpack.c.h.b16 %v3290
  %v4258 = vunpack.c.l.b16 %v3291
  %v4259 = vunpack.c.h.b16 %v3291
  %v4260 = vunpack.c.l.b16 %v3292
  %v4261 = vunpack.c.h.b16 %v3292
  %v4262 = vunpack.c.l.b16 %v3293
  %v4263 = vunpack.c.h.b16 %v3293
  %v4264 = vunpack.c.l.b16 %v3294
  %v4265 = vunpack.c.h.b16 %v3294
  %v4266 = vunpack.c.l.b16 %v3295
  %v4267 = vunpack.c.h.b16 %v3295
  %v4268 = vunpack.c.l.b16 %v3296
  %v4269 = vunpack.c.h.b16 %v3296
  %v4270 = vunpack.c.l.b16 %v3297
  %v4271 = vunpack.c.h.b16 %v3297
  %v4272 = vunpack.c.l.b16 %v3298
  %v4273 = vunpack.c.h.b16 %v3298
  %v4274 = vunpack.c.l.b16 %v3299
  %v4275 = vunpack.c.h.b16 %v3299
  %v4276 = vunpack.c.l.b16 %v3300
  %v4277 = vunpack.c.h.b16 %v3300
  %v4278 = vunpack.c.l.b16 %v3301
  %v4279 = vunpack.c.h.b16 %v3301
  %v4280 = vunpack.c.l.b16 %v3302
  %v4281 = vunpack.c.h.b16 %v3302
  %v4282 = vunpack.c.l.b16 %v3303
  %v4283 = vunpack.c.h.b16 %v3303
  %v4284 = vunpack.c.l.b16 %v3304
  %v4285 = vunpack.c.h.b16 %v3304
  %v4286 = vunpack.c.l.b16 %v3305
  %v4287 = vunpack.c.h.b16 %v3305
  %v4288 = vunpack.c.l.b16 %v3306
  %v4289 = vunpack.c.h.b16 %v3306
  %v4290 = vunpack.c.l.b16 %v3307
  %v4291 = vunpack.c.h.b16 %v3307
  %v4292 = vunpack.c.l.b16 %v3308
  %v4293 = vunpack.c.h.b16 %v3308
  %v4294 = vunpack.c.l.b16 %v3309
  %v4295 = vunpack.c.h.b16 %v3309
  %v4296 = vunpack.c.l.b16 %v3310
  %v4297 = vunpack.c.h.b16 %v3310
  %v4298 = vunpack.c.l.b16 %v3311
  %v4299 = vunpack.c.h.b16 %v3311
  %v4300 = vunpack.c.l.b16 %v3312
  %v4301 = vunpack.c.h.b16 %v3312
  %v4302 = vunpack.c.l.b16 %v3313
  %v4303 = vunpack.c.h.b16 %v3313
  %v4304 = vunpack.c.l.b16 %v3314
  %v4305 = vunpack.c.h.b16 %v3314
  %v4306 = vunpack.c.l.b16 %v3315
  %v4307 = vunpack.c.h.b16 %v3315
  %v4308 = vunpack.c.l.b16 %v3316
  %v4309 = vunpack.c.h.b16 %v3316
  %v4310 = vunpack.c.l.b16 %v3317
  %v4311 = vunpack.c.h.b16 %v3317
  %v4312 = vunpack.c.l.b16 %v3318
  %v4313 = vunpack.c.h.b16 %v3318
  %v4314 = vunpack.c.l.b16 %v3319
  %v4315 = vunpack.c.h.b16 %v3319
  %v4316 = vunpack.c.l.b16 %v3320
  %v4317 = vunpack.c.h.b16 %v3320
  %v4318 = vunpack.c.l.b16 %v3321
  %v4319 = vunpack.c.h.b16 %v3321
  %v4320 = vunpack.c.l.b16 %v3322
  %v4321 = vunpack.c.h.b16 %v3322
  %v4322 = vunpack.c.l.b16 %v3323
  %v4323 = vunpack.c.h.b16 %v3323
  %v4324 = vunpack.c.l.b16 %v3324
  %v4325 = vunpack.c.h.b16 %v3324
  %v4326 = vunpack.c.l.b16 %v3325
  %v4327 = vunpack.c.h.b16 %v3325
  %v4328 = vunpack.c.l.b16 %v3326
  %v4329 = vunpack.c.h.b16 %v3326
  %v4330 = vunpack.c.l.b16 %v3327
  %v4331 = vunpack.c.h.b16 %v3327
  %v4332 = vunpack.c.l.b16 %v3328
  %v4333 = vunpack.c.h.b16 %v3328
  %v4334 = vunpack.c.l.b16 %v3329
  %v4335 = vunpack.c.h.b16 %v3329
  %v4336 = vunpack.c.l.b16 %v3330
  %v4337 = vunpack.c.h.b16 %v3330
  %v4338 = vunpack.c.l.b16 %v3331
  %v4339 = vunpack.c.h.b16 %v3331
  %v4340 = vunpack.c.l.b16 %v3332
  %v4341 = vunpack.c.h.b16 %v3332
  %v4342 = vunpack.c.l.b16 %v3333
  %v4343 = vunpack.c.h.b16 %v3333
  %v4344 = vunpack.c.l.b16 %v3334
  %v4345 = vunpack.c.h.b16 %v3334
  %v4346 = vunpack.c.l.b16 %v3335
  %v4347 = vunpack.c.h.b16 %v3335
  %v4348 = vunpack.c.l.b16 %v3336
  %v4349 = vunpack.c.h.b16 %v3336
  %v4350 = vunpack.c.l.b16 %v3337
  %v4351 = vunpack.c.h.b16 %v3337
  %v4352 = vunpack.c.l.b16 %v3338
  %v4353 = vunpack.c.h.b16 %v3338
  %v4354 = vunpack.c.l.b16 %v3339
  %v4355 = vunpack.c.h.b16 %v3339
  %v4356 = vunpack.c.l.b16 %v3340
  %v4357 = vunpack.c.h.b16 %v3340
  %v4358 = vunpack.c.l.b16 %v3341
  %v4359 = vunpack.c.h.b16 %v3341
  %v4360 = vunpack.c.l.b16 %v3342
  %v4361 = vunpack.c.h.b16 %v3342
  %v4362 = vunpack.c.l.b16 %v3343
  %v4363 = vunpack.c.h.b16 %v3343
  %v4364 = vunpack.c.l.b16 %v3344
  %v4365 = vunpack.c.h.b16 %v3344
  %v4366 = vunpack.c.l.b16 %v3345
  %v4367 = vunpack.c.h.b16 %v3345
  %v4368 = vunpack.c.l.b16 %v3346
  %v4369 = vunpack.c.h.b16 %v3346
  %v4370 = vunpack.c.l.b16 %v3347
  %v4371 = vunpack.c.h.b16 %v3347
  %v4372 = vunpack.c.l.b16 %v3348
  %v4373 = vunpack.c.h.b16 %v3348
  %v4374 = vunpack.c.l.b16 %v3349
  %v4375 = vunpack.c.h.b16 %v3349
  %v4376 = vunpack.c.l.b16 %v3350
  %v4377 = vunpack.c.h.b16 %v3350
  %v4378 = vunpack.c.l.b16 %v3351
  %v4379 = vunpack.c.h.b16 %v3351
  %v4380 = vunpack.c.l.b16 %v3352
  %v4381 = vunpack.c.h.b16 %v3352
  %v4382 = vunpack.c.l.b16 %v3353
  %v4383 = vunpack.c.h.b16 %v3353
  %v4384 = vunpack.c.l.b16 %v3354
  %v4385 = vunpack.c.h.b16 %v3354
  %v4386 = vunpack.c.l.b16 %v3355
  %v4387 = vunpack.c.h.b16 %v3355
  %v4388 = vunpack.c.l.b16 %v3356
  %v4389 = vunpack.c.h.b16 %v3356
  %v4390 = vunpack.c.l.b16 %v3357
  %v4391 = vunpack.c.h.b16 %v3357
  %v4392 = vunpack.c.l.b16 %v3358
  %v4393 = vunpack.c.h.b16 %v3358
  %v4394 = vunpack.c.l.b16 %v3359
  %v4395 = vunpack.c.h.b16 %v3359
  %v4396 = vunpack.c.l.b16 %v3360
  %v4397 = vunpack.c.h.b16 %v3360
  %v4398 = vunpack.c.l.b16 %v3361
  %v4399 = vunpack.c.h.b16 %v3361
  %v4400 = vunpack.c.l.b16 %v3362
  %v4401 = vunpack.c.h.b16 %v3362
  %v4402 = vunpack.c.l.b16 %v3363
  %v4403 = vunpack.c.h.b16 %v3363
  %v4404 = vunpack.c.l.b16 %v3364
  %v4405 = vunpack.c.h.b16 %v3364
  %v4406 = vunpack.c.l.b16 %v3365
  %v4407 = vunpack.c.h.b16 %v3365
  %v4408 = vunpack.c.l.b16 %v3366
  %v4409 = vunpack.c.h.b16 %v3366
  %v4410 = vunpack.c.l.b16 %v3367
  %v4411 = vunpack.c.h.b16 %v3367
  %v4412 = vunpack.c.l.b16 %v3368
  %v4413 = vunpack.c.h.b16 %v3368
  %v4414 = vunpack.c.l.b16 %v3369
  %v4415 = vunpack.c.h.b16 %v3369
  %v4416 = vunpack.c.l.b16 %v3370
  %v4417 = vunpack.c.h.b16 %v3370
  %v4418 = vunpack.c.l.b16 %v3371
  %v4419 = vunpack.c.h.b16 %v3371
  %v4420 = vunpack.c.l.b16 %v3372
  %v4421 = vunpack.c.h.b16 %v3372
  %v4422 = vunpack.c.l.b16 %v3373
  %v4423 = vunpack.c.h.b16 %v3373
  %v4424 = vunpack.c.l.b16 %v3374
  %v4425 = vunpack.c.h.b16 %v3374
  %v4426 = vunpack.c.l.b16 %v3375
  %v4427 = vunpack.c.h.b16 %v3375
  %v4428 = vunpack.c.l.b16 %v3376
  %v4429 = vunpack.c.h.b16 %v3376
  %v4430 = vunpack.c.l.b16 %v3377
  %v4431 = vunpack.c.h.b16 %v3377
  %v4432 = vunpack.c.l.b16 %v3378
  %v4433 = vunpack.c.h.b16 %v3378
  %v4434 = vunpack.c.l.b16 %v3379
  %v4435 = vunpack.c.h.b16 %v3379
  %v4436 = vunpack.c.l.b16 %v3380
  %v4437 = vunpack.c.h.b16 %v3380
  %v4438 = vunpack.c.l.b16 %v3381
  %v4439 = vunpack.c.h.b16 %v3381
  %v4440 = vunpack.c.l.b16 %v3382
  %v4441 = vunpack.c.h.b16 %v3382
  %v4442 = vunpack.c.l.b16 %v3383
  %v4443 = vunpack.c.h.b16 %v3383
  %v4444 = vunpack.c.l.b16 %v3384
  %v4445 = vunpack.c.h.b16 %v3384
  %v4446 = vunpack.c.l.b16 %v3385
  %v4447 = vunpack.c.h.b16 %v3385
  %v4448 = vunpack.c.l.b16 %v3386
  %v4449 = vunpack.c.h.b16 %v3386
  %v4450 = vunpack.c.l.b16 %v3387
  %v4451 = vunpack.c.h.b16 %v3387
  %v4452 = vunpack.c.l.b16 %v3388
  %v4453 = vunpack.c.h.b16 %v3388
  %v4454 = vunpack.c.l.b16 %v3389
  %v4455 = vunpack.c.h.b16 %v3389
  %v4456 = vunpack.c.l.b16 %v3390
  %v4457 = vunpack.c.h.b16 %v3390
  %v4458 = vunpack.c.l.b16 %v3391
  %v4459 = vunpack.c.h.b16 %v3391
  %v4460 = vunpack.c.l.b16 %v3392
  %v4461 = vunpack.c.h.b16 %v3392
  %v4462 = vunpack.c.l.b16 %v3393
  %v4463 = vunpack.c.h.b16 %v3393
  %v4464 = vunpack.c.l.b16 %v3394
  %v4465 = vunpack.c.h.b16 %v3394
  %v4466 = vunpack.c.l.b16 %v3395
  %v4467 = vunpack.c.h.b16 %v3395
  %v4468 = vunpack.c.l.b16 %v3396
  %v4469 = vunpack.c.h.b16 %v3396
  %v4470 = vunpack.c.l.b16 %v3397
  %v4471 = vunpack.c.h.b16 %v3397
  %v4472 = vunpack.c.l.b16 %v3398
  %v4473 = vunpack.c.h.b16 %v3398
  %v4474 = vunpack.c.l.b16 %v3399
  %v4475 = vunpack.c.h.b16 %v3399
  %v4476 = vunpack.c.l.b16 %v3400
  %v4477 = vunpack.c.h.b16 %v3400
  %v4478 = vunpack.c.l.b16 %v3401
  %v4479 = vunpack.c.h.b16 %v3401
  %v4480 = vunpack.c.l.b16 %v3402
  %v4481 = vunpack.c.h.b16 %v3402
  %v4482 = vunpack.c.l.b16 %v3403
  %v4483 = vunpack.c.h.b16 %v3403
  %v4484 = vunpack.c.l.b16 %v3404
  %v4485 = vunpack.c.h.b16 %v3404
  %v4486 = vunpack.c.l.b16 %v3405
  %v4487 = vunpack.c.h.b16 %v3405
  %v4488 = vunpack.c.l.b16 %v3406
  %v4489 = vunpack.c.h.b16 %v3406
  %v4490 = vunpack.c.l.b16 %v3407
  %v4491 = vunpack.c.h.b16 %v3407
  %v4492 = vunpack.c.l.b16 %v3408
  %v4493 = vunpack.c.h.b16 %v3408
  %v4494 = vunpack.c.l.b16 %v3409
  %v4495 = vunpack.c.h.b16 %v3409
  %v4496 = vunpack.c.l.b16 %v3410
  %v4497 = vunpack.c.h.b16 %v3410
  %v4498 = vunpack.c.l.b16 %v3411
  %v4499 = vunpack.c.h.b16 %v3411
  %v4500 = vunpack.c.l.b16 %v3412
  %v4501 = vunpack.c.h.b16 %v3412
  %v4502 = vunpack.c.l.b16 %v3413
  %v4503 = vunpack.c.h.b16 %v3413
  %v4504 = vunpack.c.l.b16 %v3414
  %v4505 = vunpack.c.h.b16 %v3414
  %v4506 = vunpack.c.l.b16 %v3415
  %v4507 = vunpack.c.h.b16 %v3415
  %v4508 = vunpack.c.l.b16 %v3416
  %v4509 = vunpack.c.h.b16 %v3416
  %v4510 = vunpack.c.l.b16 %v3417
  %v4511 = vunpack.c.h.b16 %v3417
  %v4512 = vunpack.c.l.b16 %v3418
  %v4513 = vunpack.c.h.b16 %v3418
  %v4514 = vunpack.c.l.b16 %v3419
  %v4515 = vunpack.c.h.b16 %v3419
  %v4516 = vunpack.c.l.b16 %v3420
  %v4517 = vunpack.c.h.b16 %v3420
  %v4518 = vunpack.c.l.b16 %v3421
  %v4519 = vunpack.c.h.b16 %v3421
  %v4520 = vunpack.c.l.b16 %v3422
  %v4521 = vunpack.c.h.b16 %v3422
  %v4522 = vunpack.c.l.b16 %v3423
  %v4523 = vunpack.c.h.b16 %v3423
  %v4524 = vunpack.c.l.b16 %v3424
  %v4525 = vunpack.c.h.b16 %v3424
  %v4526 = vunpack.c.l.b16 %v3425
  %v4527 = vunpack.c.h.b16 %v3425
  %v4528 = vunpack.c.l.b16 %v3426
  %v4529 = vunpack.c.h.b16 %v3426
  %v4530 = vunpack.c.l.b16 %v3427
  %v4531 = vunpack.c.h.b16 %v3427
  %v4532 = vunpack.c.l.b16 %v3428
  %v4533 = vunpack.c.h.b16 %v3428
  %v4534 = vunpack.c.l.b16 %v3429
  %v4535 = vunpack.c.h.b16 %v3429
  %v4536 = vunpack.c.l.b16 %v3430
  %v4537 = vunpack.c.h.b16 %v3430
  %v4538 = vunpack.c.l.b16 %v3431
  %v4539 = vunpack.c.h.b16 %v3431
  %v4540 = vunpack.c.l.b16 %v3432
  %v4541 = vunpack.c.h.b16 %v3432
  %v4542 = vunpack.c.l.b16 %v3433
  %v4543 = vunpack.c.h.b16 %v3433
  %v4544 = vunpack.c.l.b16 %v3434
  %v4545 = vunpack.c.h.b16 %v3434
  %v4546 = vunpack.c.l.b16 %v3435
  %v4547 = vunpack.c.h.b16 %v3435
  %v4548 = vunpack.c.l.b16 %v3436
  %v4549 = vunpack.c.h.b16 %v3436
  %v4550 = vunpack.c.l.b16 %v3437
  %v4551 = vunpack.c.h.b16 %v3437
  %v4552 = vunpack.c.l.b16 %v3438
  %v4553 = vunpack.c.h.b16 %v3438
  %v4554 = vunpack.c.l.b16 %v3439
  %v4555 = vunpack.c.h.b16 %v3439
  %v4556 = vunpack.c.l.b16 %v3440
  %v4557 = vunpack.c.h.b16 %v3440
  %v4558 = vunpack.c.l.b16 %v3441
  %v4559 = vunpack.c.h.b16 %v3441
  %v4560 = vunpack.c.l.b16 %v3442
  %v4561 = vunpack.c.h.b16 %v3442
  %v4562 = vunpack.c.l.b16 %v3443
  %v4563 = vunpack.c.h.b16 %v3443
  %v4564 = vunpack.c.l.b16 %v3444
  %v4565 = vunpack.c.h.b16 %v3444
  %v4566 = vunpack.c.l.b16 %v3445
  %v4567 = vunpack.c.h.b16 %v3445
  %v4568 = vunpack.c.l.b16 %v3446
  %v4569 = vunpack.c.h.b16 %v3446
  %v4570 = vunpack.c.l.b16 %v3447
  %v4571 = vunpack.c.h.b16 %v3447
  %v4572 = vunpack.c.l.b16 %v3448
  %v4573 = vunpack.c.h.b16 %v3448
  %v4574 = vunpack.c.l.b16 %v3449
  %v4575 = vunpack.c.h.b16 %v3449
  %v4576 = vunpack.c.l.b16 %v3450
  %v4577 = vunpack.c.h.b16 %v3450
  %v4578 = vunpack.c.l.b16 %v3451
  %v4579 = vunpack.c.h.b16 %v3451
  %v4580 = vunpack.c.l.b16 %v3452
  %v4581 = vunpack.c.h.b16 %v3452
  %v4582 = vunpack.c.l.b16 %v3453
  %v4583 = vunpack.c.h.b16 %v3453
  %v4584 = vunpack.c.l.b16 %v3454
  %v4585 = vunpack.c.h.b16 %v3454
  %v4586 = vunpack.c.l.b16 %v3455
  %v4587 = vunpack.c.h.b16 %v3455
  %v4588 = vunpack.c.l.b16 %v3456
  %v4589 = vunpack.c.h.b16 %v3456
  %v4590 = vunpack.c.l.b16 %v3457
  %v4591 = vunpack.c.h.b16 %v3457
  %v4592 = vunpack.c.l.b16 %v3458
  %v4593 = vunpack.c.h.b16 %v3458
  %v4594 = vunpack.c.l.b16 %v3459
  %v4595 = vunpack.c.h.b16 %v3459
  %v4596 = vunpack.c.l.b16 %v3460
  %v4597 = vunpack.c.h.b16 %v3460
  %v4598 = vunpack.c.l.b16 %v3461
  %v4599 = vunpack.c.h.b16 %v3461
  %v4600 = vunpack.c.l.b16 %v3462
  %v4601 = vunpack.c.h.b16 %v3462
  %v4602 = vunpack.c.l.b16 %v3463
  %v4603 = vunpack.c.h.b16 %v3463
  %v4604 = vunpack.c.l.b16 %v3464
  %v4605 = vunpack.c.h.b16 %v3464
  %v4606 = vunpack.c.l.b16 %v3465
  %v4607 = vunpack.c.h.b16 %v3465
  %v4608 = vunpack.c.l.b16 %v3466
  %v4609 = vunpack.c.h.b16 %v3466
  %v4610 = vunpack.c.l.b16 %v3467
  %v4611 = vunpack.c.h.b16 %v3467
  %v4612 = vunpack.c.l.b16 %v3468
  %v4613 = vunpack.c.h.b16 %v3468
  %v4614 = vunpack.c.l.b16 %v3469
  %v4615 = vunpack.c.h.b16 %v3469
  %v4616 = vunpack.c.l.b16 %v3470
  %v4617 = vunpack.c.h.b16 %v3470
  %v4618 = vunpack.c.l.b16 %v3471
  %v4619 = vunpack.c.h.b16 %v3471
  %v4620 = vunpack.c.l.b16 %v3472
  %v4621 = vunpack.c.h.b16 %v3472
  %v4622 = vunpack.c.l.b16 %v3473
  %v4623 = vunpack.c.h.b16 %v3473
  %v4624 = vunpack.c.l.b16 %v3474
  %v4625 = vunpack.c.h.b16 %v3474
  %v4626 = vunpack.c.l.b16 %v3475
  %v4627 = vunpack.c.h.b16 %v3475
  %v4628 = vunpack.c.l.b16 %v3476
  %v4629 = vunpack.c.h.b16 %v3476
  %v4630 = vunpack.c.l.b16 %v3477
  %v4631 = vunpack.c.h.b16 %v3477
  %v4632 = vunpack.c.l.b16 %v3478
  %v4633 = vunpack.c.h.b16 %v3478
  %v4634 = vunpack.c.l.b16 %v3479
  %v4635 = vunpack.c.h.b16 %v3479
  %v4636 = vunpack.c.l.b16 %v3480
  %v4637 = vunpack.c.h.b16 %v3480
  %v4638 = vunpack.c.l.b16 %v3481
  %v4639 = vunpack.c.h.b16 %v3481
  %v4640 = vunpack.c.l.b16 %v3482
  %v4641 = vunpack.c.h.b16 %v3482
  %v4642 = vunpack.c.l.b16 %v3483
  %v4643 = vunpack.c.h.b16 %v3483
  %v4644 = vunpack.c.l.b16 %v3484
  %v4645 = vunpack.c.h.b16 %v3484
  %v4646 = vunpack.c.l.b16 %v3485
  %v4647 = vunpack.c.h.b16 %v3485
  %v4648 = vunpack.c.l.b16 %v3486
  %v4649 = vunpack.c.h.b16 %v3486
  %v4650 = vunpack.c.l.b16 %v3487
  %v4651 = vunpack.c.h.b16 %v3487
  %v4652 = vunpack.c.l.b16 %v3488
  %v4653 = vunpack.c.h.b16 %v3488
  %v4654 = vunpack.c.l.b16 %v3489
  %v4655 = vunpack.c.h.b16 %v3489
  %v4656 = vunpack.c.l.b16 %v3490
  %v4657 = vunpack.c.h.b16 %v3490
  %v4658 = vunpack.c.l.b16 %v3491
  %v4659 = vunpack.c.h.b16 %v3491
  %v4660 = vunpack.c.l.b16 %v3492
  %v4661 = vunpack.c.h.b16 %v3492
  %v4662 = vunpack.c.l.b16 %v3493
  %v4663 = vunpack.c.h.b16 %v3493
  %v4664 = vunpack.c.l.b16 %v3494
  %v4665 = vunpack.c.h.b16 %v3494
  %v4666 = vunpack.c.l.b16 %v3495
  %v4667 = vunpack.c.h.b16 %v3495
  %v4668 = vunpack.c.l.b16 %v3496
  %v4669 = vunpack.c.h.b16 %v3496
  %v4670 = vunpack.c.l.b16 %v3497
  %v4671 = vunpack.c.h.b16 %v3497
  %v4672 = vunpack.c.l.b16 %v3498
  %v4673 = vunpack.c.h.b16 %v3498
  %v4674 = vunpack.c.l.b16 %v3499
  %v4675 = vunpack.c.h.b16 %v3499
  %v4676 = vunpack.c.l.b16 %v3500
  %v4677 = vunpack.c.h.b16 %v3500
  %v4678 = vunpack.c.l.b16 %v3501
  %v4679 = vunpack.c.h.b16 %v3501
  %v4680 = vunpack.c.l.b16 %v3502
  %v4681 = vunpack.c.h.b16 %v3502
  %v4682 = vunpack.c.l.b16 %v3503
  %v4683 = vunpack.c.h.b16 %v3503
  %v4684 = vunpack.c.l.b16 %v3504
  %v4685 = vunpack.c.h.b16 %v3504
  %v4686 = vunpack.c.l.b16 %v3505
  %v4687 = vunpack.c.h.b16 %v3505
  %v4688 = vunpack.c.l.b16 %v3506
  %v4689 = vunpack.c.h.b16 %v3506
  %v4690 = vunpack.c.l.b16 %v3507
  %v4691 = vunpack.c.h.b16 %v3507
  %v4692 = vpack.c.b16 %v3930, %v3924
  %v4693 = vpack.c.b16 %v3931, %v3925
  %v4694 = vpack.c.b16 %v3932, %v3926
  %v4695 = vpack.c.b16 %v3933, %v3927
  %v4696 = vpack.c.b16 %v3934, %v3928
  %v4697 = vpack.c.b16 %v3935, %v3929
  %v4698 = vpack.c.b16 %v3942, %v3936
  %v4699 = vpack.c.b16 %v3943, %v3937
  %v4700 = vpack.c.b16 %v3944, %v3938
  %v4701 = vpack.c.b16 %v3945, %v3939
  %v4702 = vpack.c.b16 %v3946, %v3940
  %v4703 = vpack.c.b16 %v3947, %v3941
  %v4704 = vpack.c.b16 %v3954, %v3948
  %v4705 = vpack.c.b16 %v3955, %v3949
  %v4706 = vpack.c.b16 %v3956, %v3950
  %v4707 = vpack.c.b16 %v3957, %v3951
  %v4708 = vpack.c.b16 %v3958, %v3952
  %v4709 = vpack.c.b16 %v3959, %v3953
  %v4710 = vpack.c.b16 %v3966, %v3960
  %v4711 = vpack.c.b16 %v3967, %v3961
  %v4712 = vpack.c.b16 %v3968, %v3962
  %v4713 = vpack.c.b16 %v3969, %v3963
  %v4714 = vpack.c.b16 %v3970, %v3964
  %v4715 = vpack.c.b16 %v3971, %v3965
  %v4716 = vpack.c.b16 %v3978, %v3972
  %v4717 = vpack.c.b16 %v3979, %v3973
  %v4718 = vpack.c.b16 %v3980, %v3974
  %v4719 = vpack.c.b16 %v3981, %v3975
  %v4720 = vpack.c.b16 %v3982, %v3976
  %v4721 = vpack.c.b16 %v3983, %v3977
  %v4722 = vpack.c.b16 %v3990, %v3984
  %v4723 = vpack.c.b16 %v3991, %v3985
  %v4724 = vpack.c.b16 %v3992, %v3986
  %v4725 = vpack.c.b16 %v3993, %v3987
  %v4726 = vpack.c.b16 %v3994, %v3988
  %v4727 = vpack.c.b16 %v3995, %v3989
  %v4728 = vpack.c.b16 %v4002, %v3996
  %v4729 = vpack.c.b16 %v4003, %v3997
  %v4730 = vpack.c.b16 %v4004, %v3998
  %v4731 = vpack.c.b16 %v4005, %v3999
  %v4732 = vpack.c.b16 %v4006, %v4000
  %v4733 = vpack.c.b16 %v4007, %v4001
  %v4734 = vpack.c.b16 %v4014, %v4008
  %v4735 = vpack.c.b16 %v4015, %v4009
  %v4736 = vpack.c.b16 %v4016, %v4010
  %v4737 = vpack.c.b16 %v4017, %v4011
  %v4738 = vpack.c.b16 %v4018, %v4012
  %v4739 = vpack.c.b16 %v4019, %v4013
  %v4740 = vpack.c.b16 %v4026, %v4020
  %v4741 = vpack.c.b16 %v4027, %v4021
  %v4742 = vpack.c.b16 %v4028, %v4022
  %v4743 = vpack.c.b16 %v4029, %v4023
  %v4744 = vpack.c.b16 %v4030, %v4024
  %v4745 = vpack.c.b16 %v4031, %v4025
  %v4746 = vpack.c.b16 %v4038, %v4032
  %v4747 = vpack.c.b16 %v4039, %v4033
  %v4748 = vpack.c.b16 %v4040, %v4034
  %v4749 = vpack.c.b16 %v4041, %v4035
  %v4750 = vpack.c.b16 %v4042, %v4036
  %v4751 = vpack.c.b16 %v4043, %v4037
  %v4752 = vpack.c.b16 %v4050, %v4044
  %v4753 = vpack.c.b16 %v4051, %v4045
  %v4754 = vpack.c.b16 %v4052, %v4046
  %v4755 = vpack.c.b16 %v4053, %v4047
  %v4756 = vpack.c.b16 %v4054, %v4048
  %v4757 = vpack.c.b16 %v4055, %v4049
  %v4758 = vpack.c.b16 %v4062, %v4056
  %v4759 = vpack.c.b16 %v4063, %v4057
  %v4760 = vpack.c.b16 %v4064, %v4058
  %v4761 = vpack.c.b16 %v4065, %v4059
  %v4762 = vpack.c.b16 %v4066, %v4060
  %v4763 = vpack.c.b16 %v4067, %v4061
  %v4764 = vpack.c.b16 %v4074, %v4068
  %v4765 = vpack.c.b16 %v4075, %v4069
  %v4766 = vpack.c.b16 %v4076, %v4070
  %v4767 = vpack.c.b16 %v4077, %v4071
  %v4768 = vpack.c.b16 %v4078, %v4072
  %v4769 = vpack.c.b16 %v4079, %v4073
  %v4770 = vpack.c.b16 %v4086, %v4080
  %v4771 = vpack.c.b16 %v4087, %v4081
  %v4772 = vpack.c.b16 %v4088, %v4082
  %v4773 = vpack.c.b16 %v4089, %v4083
  %v4774 = vpack.c.b16 %v4090, %v4084
  %v4775 = vpack.c.b16 %v4091, %v4085
  %v4776 = vpack.c.b16 %v4098, %v4092
  %v4777 = vpack.c.b16 %v4099, %v4093
  %v4778 = vpack.c.b16 %v4100, %v4094
  %v4779 = vpack.c.b16 %v4101, %v4095
  %v4780 = vpack.c.b16 %v4102, %v4096
  %v4781 = vpack.c.b16 %v4103, %v4097
  %v4782 = vpack.c.b16 %v4110, %v4104
  %v4783 = vpack.c.b16 %v4111, %v4105
  %v4784 = vpack.c.b16 %v4112, %v4106
  %v4785 = vpack.c.b16 %v4113, %v4107
  %v4786 = vpack.c.b16 %v4114, %v4108
  %v4787 = vpack.c.b16 %v4115, %v4109
  %v4788 = vpack.c.b16 %v4122, %v4116
  %v4789 = vpack.c.b16 %v4123, %v4117
  %v4790 = vpack.c.b16 %v4124, %v4118
  %v4791 = vpack.c.b16 %v4125, %v4119
  %v4792 = vpack.c.b16 %v4126, %v4120
  %v4793 = vpack.c.b16 %v4127, %v4121
  %v4794 = vpack.c.b16 %v4134, %v4128
  %v4795 = vpack.c.b16 %v4135, %v4129
  %v4796 = vpack.c.b16 %v4136, %v4130
  %v4797 = vpack.c.b16 %v4137, %v4131
  %v4798 = vpack.c.b16 %v4138, %v4132
  %v4799 = vpack.c.b16 %v4139, %v4133
  %v4800 = vpack.c.b16 %v4146, %v4140
  %v4801 = vpack.c.b16 %v4147, %v4141
  %v4802 = vpack.c.b16 %v4148, %v4142
  %v4803 = vpack.c.b16 %v4149, %v4143
  %v4804 = vpack.c.b16 %v4150, %v4144
  %v4805 = vpack.c.b16 %v4151, %v4145
  %v4806 = vpack.c.b16 %v4158, %v4152
  %v4807 = vpack.c.b16 %v4159, %v4153
  %v4808 = vpack.c.b16 %v4160, %v4154
  %v4809 = vpack.c.b16 %v4161, %v4155
  %v4810 = vpack.c.b16 %v4162, %v4156
  %v4811 = vpack.c.b16 %v4163, %v4157
  %v4812 = vpack.c.b16 %v4170, %v4164
  %v4813 = vpack.c.b16 %v4171, %v4165
  %v4814 = vpack.c.b16 %v4172, %v4166
  %v4815 = vpack.c.b16 %v4173, %v4167
  %v4816 = vpack.c.b16 %v4174, %v4168
  %v4817 = vpack.c.b16 %v4175, %v4169
  %v4818 = vpack.c.b16 %v4182, %v4176
  %v4819 = vpack.c.b16 %v4183, %v4177
  %v4820 = vpack.c.b16 %v4184, %v4178
  %v4821 = vpack.c.b16 %v4185, %v4179
  %v4822 = vpack.c.b16 %v4186, %v4180
  %v4823 = vpack.c.b16 %v4187, %v4181
  %v4824 = vpack.c.b16 %v4194, %v4188
  %v4825 = vpack.c.b16 %v4195, %v4189
  %v4826 = vpack.c.b16 %v4196, %v4190
  %v4827 = vpack.c.b16 %v4197, %v4191
  %v4828 = vpack.c.b16 %v4198, %v4192
  %v4829 = vpack.c.b16 %v4199, %v4193
  %v4830 = vpack.c.b16 %v4206, %v4200
  %v4831 = vpack.c.b16 %v4207, %v4201
  %v4832 = vpack.c.b16 %v4208, %v4202
  %v4833 = vpack.c.b16 %v4209, %v4203
  %v4834 = vpack.c.b16 %v4210, %v4204
  %v4835 = vpack.c.b16 %v4211, %v4205
  %v4836 = vpack.c.b16 %v4218, %v4212
  %v4837 = vpack.c.b16 %v4219, %v4213
  %v4838 = vpack.c.b16 %v4220, %v4214
  %v4839 = vpack.c.b16 %v4221, %v4215
  %v4840 = vpack.c.b16 %v4222, %v4216
  %v4841 = vpack.c.b16 %v4223, %v4217
  %v4842 = vpack.c.b16 %v4230, %v4224
  %v4843 = vpack.c.b16 %v4231, %v4225
  %v4844 = vpack.c.b16 %v4232, %v4226
  %v4845 = vpack.c.b16 %v4233, %v4227
  %v4846 = vpack.c.b16 %v4234, %v4228
  %v4847 = vpack.c.b16 %v4235, %v4229
  %v4848 = vpack.c.b16 %v4242, %v4236
  %v4849 = vpack.c.b16 %v4243, %v4237
  %v4850 = vpack.c.b16 %v4244, %v4238
  %v4851 = vpack.c.b16 %v4245, %v4239
  %v4852 = vpack.c.b16 %v4246, %v4240
  %v4853 = vpack.c.b16 %v4247, %v4241
  %v4854 = vpack.c.b16 %v4254, %v4248
  %v4855 = vpack.c.b16 %v4255, %v4249
  %v4856 = vpack.c.b16 %v4256, %v4250
  %v4857 = vpack.c.b16 %v4257, %v4251
  %v4858 = vpack.c.b16 %v4258, %v4252
  %v4859 = vpack.c.b16 %v4259, %v4253
  %v4860 = vpack.c.b16 %v4266, %v4260
  %v4861 = vpack.c.b16 %v4267, %v4261
  %v4862 = vpack.c.b16 %v4268, %v4262
  %v4863 = vpack.c.b16 %v4269, %v4263
  %v4864 = vpack.c.b16 %v4270, %v4264
  %v4865 = vpack.c.b16 %v4271, %v4265
  %v4866 = vpack.c.b16 %v4278, %v4272
  %v4867 = vpack.c.b16 %v4279, %v4273
  %v4868 = vpack.c.b16 %v4280, %v4274
  %v4869 = vpack.c.b16 %v4281, %v4275
  %v4870 = vpack.c.b16 %v4282, %v4276
  %v4871 = vpack.c.b16 %v4283, %v4277
  %v4872 = vpack.c.b16 %v4290, %v4284
  %v4873 = vpack.c.b16 %v4291, %v4285
  %v4874 = vpack.c.b16 %v4292, %v4286
  %v4875 = vpack.c.b16 %v4293, %v4287
  %v4876 = vpack.c.b16 %v4294, %v4288
  %v4877 = vpack.c.b16 %v4295, %v4289
  %v4878 = vpack.c.b16 %v4302, %v4296
  %v4879 = vpack.c.b16 %v4303, %v4297
  %v4880 = vpack.c.b16 %v4304, %v4298
  %v4881 = vpack.c.b16 %v4305, %v4299
  %v4882 = vpack.c.b16 %v4306, %v4300
  %v4883 = vpack.c.b16 %v4307, %v4301
  %v4884 = vpack.c.b16 %v4314, %v4308
  %v4885 = vpack.c.b16 %v4315, %v4309
  %v4886 = vpack.c.b16 %v4316, %v4310
  %v4887 = vpack.c.b16 %v4317, %v4311
  %v4888 = vpack.c.b16 %v4318, %v4312
  %v4889 = vpack.c.b16 %v4319, %v4313
  %v4890 = vpack.c.b16 %v4326, %v4320
  %v4891 = vpack.c.b16 %v4327, %v4321
  %v4892 = vpack.c.b16 %v4328, %v4322
  %v4893 = vpack.c.b16 %v4329, %v4323
  %v4894 = vpack.c.b16 %v4330, %v4324
  %v4895 = vpack.c.b16 %v4331, %v4325
  %v4896 = vpack.c.b16 %v4338, %v4332
  %v4897 = vpack.c.b16 %v4339, %v4333
  %v4898 = vpack.c.b16 %v4340, %v4334
  %v4899 = vpack.c.b16 %v4341, %v4335
  %v4900 = vpack.c.b16 %v4342, %v4336
  %v4901 = vpack.c.b16 %v4343, %v4337
  %v4902 = vpack.c.b16 %v4350, %v4344
  %v4903 = vpack.c.b16 %v4351, %v4345
  %v4904 = vpack.c.b16 %v4352, %v4346
  %v4905 = vpack.c.b16 %v4353, %v4347
  %v4906 = vpack.c.b16 %v4354, %v4348
  %v4907 = vpack.c.b16 %v4355, %v4349
  %v4908 = vpack.c.b16 %v4362, %v4356
  %v4909 = vpack.c.b16 %v4363, %v4357
  %v4910 = vpack.c.b16 %v4364, %v4358
  %v4911 = vpack.c.b16 %v4365, %v4359
  %v4912 = vpack.c.b16 %v4366, %v4360
  %v4913 = vpack.c.b16 %v4367, %v4361
  %v4914 = vpack.c.b16 %v4374, %v4368
  %v4915 = vpack.c.b16 %v4375, %v4369
  %v4916 = vpack.c.b16 %v4376, %v4370
  %v4917 = vpack.c.b16 %v4377, %v4371
  %v4918 = vpack.c.b16 %v4378, %v4372
  %v4919 = vpack.c.b16 %v4379, %v4373
  %v4920 = vpack.c.b16 %v4386, %v4380
  %v4921 = vpack.c.b16 %v4387, %v4381
  %v4922 = vpack.c.b16 %v4388, %v4382
  %v4923 = vpack.c.b16 %v4389, %v4383
  %v4924 = vpack.c.b16 %v4390, %v4384
  %v4925 = vpack.c.b16 %v4391, %v4385
  %v4926 = vpack.c.b16 %v4398, %v4392
  %v4927 = vpack.c.b16 %v4399, %v4393
  %v4928 = vpack.c.b16 %v4400, %v4394
  %v4929 = vpack.c.b16 %v4401, %v4395
  %v4930 = vpack.c.b16 %v4402, %v4396
  %v4931 = vpack.c.b16 %v4403, %v4397
  %v4932 = vpack.c.b16 %v4410, %v4404
  %v4933 = vpack.c.b16 %v4411, %v4405
  %v4934 = vpack.c.b16 %v4412, %v4406
  %v4935 = vpack.c.b16 %v4413, %v4407
  %v4936 = vpack.c.b16 %v4414, %v4408
  %v4937 = vpack.c.b16 %v4415, %v4409
  %v4938 = vpack.c.b16 %v4422, %v4416
  %v4939 = vpack.c.b16 %v4423, %v4417
  %v4940 = vpack.c.b16 %v4424, %v4418
  %v4941 = vpack.c.b16 %v4425, %v4419
  %v4942 = vpack.c.b16 %v4426, %v4420
  %v4943 = vpack.c.b16 %v4427, %v4421
  %v4944 = vpack.c.b16 %v4434, %v4428
  %v4945 = vpack.c.b16 %v4435, %v4429
  %v4946 = vpack.c.b16 %v4436, %v4430
  %v4947 = vpack.c.b16 %v4437, %v4431
  %v4948 = vpack.c.b16 %v4438, %v4432
  %v4949 = vpack.c.b16 %v4439, %v4433
  %v4950 = vpack.c.b16 %v4446, %v4440
  %v4951 = vpack.c.b16 %v4447, %v4441
  %v4952 = vpack.c.b16 %v4448, %v4442
  %v4953 = vpack.c.b16 %v4449, %v4443
  %v4954 = vpack.c.b16 %v4450, %v4444
  %v4955 = vpack.c.b16 %v4451, %v4445
  %v4956 = vpack.c.b16 %v4458, %v4452
  %v4957 = vpack.c.b16 %v4459, %v4453
  %v4958 = vpack.c.b16 %v4460, %v4454
  %v4959 = vpack.c.b16 %v4461, %v4455
  %v4960 = vpack.c.b16 %v4462, %v4456
  %v4961 = vpack.c.b16 %v4463, %v4457
  %v4962 = vpack.c.b16 %v4470, %v4464
  %v4963 = vpack.c.b16 %v4471, %v4465
  %v4964 = vpack.c.b16 %v4472, %v4466
  %v4965 = vpack.c.b16 %v4473, %v4467
  %v4966 = vpack.c.b16 %v4474, %v4468
  %v4967 = vpack.c.b16 %v4475, %v4469
  %v4968 = vpack.c.b16 %v4482, %v4476
  %v4969 = vpack.c.b16 %v4483, %v4477
  %v4970 = vpack.c.b16 %v4484, %v4478
  %v4971 = vpack.c.b16 %v4485, %v4479
  %v4972 = vpack.c.b16 %v4486, %v4480
  %v4973 = vpack.c.b16 %v4487, %v4481
  %v4974 = vpack.c.b16 %v4494, %v4488
  %v4975 = vpack.c.b16 %v4495, %v4489
  %v4976 = vpack.c.b16 %v4496, %v4490
  %v4977 = vpack.c.b16 %v4497, %v4491
  %v4978 = vpack.c.b16 %v4498, %v4492
  %v4979 = vpack.c.b16 %v4499, %v4493
  %v4980 = vpack.c.b16 %v4506, %v4500
  %v4981 = vpack.c.b16 %v4507, %v4501
  %v4982 = vpack.c.b16 %v4508, %v4502
  %v4983 = vpack.c.b16 %v4509, %v4503
  %v4984 = vpack.c.b16 %v4510, %v4504
  %v4985 = vpack.c.b16 %v4511, %v4505
  %v4986 = vpack.c.b16 %v4518, %v4512
  %v4987 = vpack.c.b16 %v4519, %v4513
  %v4988 = vpack.c.b16 %v4520, %v4514
  %v4989 = vpack.c.b16 %v4521, %v4515
  %v4990 = vpack.c.b16 %v4522, %v4516
  %v4991 = vpack.c.b16 %v4523, %v4517
  %v4992 = vpack.c.b16 %v4530, %v4524
  %v4993 = vpack.c.b16 %v4531, %v4525
  %v4994 = vpack.c.b16 %v4532, %v4526
  %v4995 = vpack.c.b16 %v4533, %v4527
  %v4996 = vpack.c.b16 %v4534, %v4528
  %v4997 = vpack.c.b16 %v4535, %v4529
  %v4998 = vpack.c.b16 %v4542, %v4536
  %v4999 = vpack.c.b16 %v4543, %v4537
  %v5000 = vpack.c.b16 %v4544, %v4538
  %v5001 = vpack.c.b16 %v4545, %v4539
  %v5002 = vpack.c.b16 %v4546, %v4540
  %v5003 = vpack.c.b16 %v4547, %v4541
  %v5004 = vpack.c.b16 %v4554, %v4548
  %v5005 = vpack.c.b16 %v4555, %v4549
  %v5006 = vpack.c.b16 %v4556, %v4550
  %v5007 = vpack.c.b16 %v4557, %v4551
  %v5008 = vpack.c.b16 %v4558, %v4552
  %v5009 = vpack.c.b16 %v4559, %v4553
  %v5010 = vpack.c.b16 %v4566, %v4560
  %v5011 = vpack.c.b16 %v4567, %v4561
  %v5012 = vpack.c.b16 %v4568, %v4562
  %v5013 = vpack.c.b16 %v4569, %v4563
  %v5014 = vpack.c.b16 %v4570, %v4564
  %v5015 = vpack.c.b16 %v4571, %v4565
  %v5016 = vpack.c.b16 %v4578, %v4572
  %v5017 = vpack.c.b16 %v4579, %v4573
  %v5018 = vpack.c.b16 %v4580, %v4574
  %v5019 = vpack.c.b16 %v4581, %v4575
  %v5020 = vpack.c.b16 %v4582, %v4576
  %v5021 = vpack.c.b16 %v4583, %v4577
  %v5022 = vpack.c.b16 %v4590, %v4584
  %v5023 = vpack.c.b16 %v4591, %v4585
  %v5024 = vpack.c.b16 %v4592, %v4586
  %v5025 = vpack.c.b16 %v4593, %v4587
  %v5026 = vpack.c.b16 %v4594, %v4588
  %v5027 = vpack.c.b16 %v4595, %v4589
  %v5028 = vpack.c.b16 %v4602, %v4596
  %v5029 = vpack.c.b16 %v4603, %v4597
  %v5030 = vpack.c.b16 %v4604, %v4598
  %v5031 = vpack.c.b16 %v4605, %v4599
  %v5032 = vpack.c.b16 %v4606, %v4600
  %v5033 = vpack.c.b16 %v4607, %v4601
  %v5034 = vpack.c.b16 %v4614, %v4608
  %v5035 = vpack.c.b16 %v4615, %v4609
  %v5036 = vpack.c.b16 %v4616, %v4610
  %v5037 = vpack.c.b16 %v4617, %v4611
  %v5038 = vpack.c.b16 %v4618, %v4612
  %v5039 = vpack.c.b16 %v4619, %v4613
  %v5040 = vpack.c.b16 %v4626, %v4620
  %v5041 = vpack.c.b16 %v4627, %v4621
  %v5042 = vpack.c.b16 %v4628, %v4622
  %v5043 = vpack.c.b16 %v4629, %v4623
  %v5044 = vpack.c.b16 %v4630, %v4624
  %v5045 = vpack.c.b16 %v4631, %v4625
  %v5046 = vpack.c.b16 %v4638, %v4632
  %v5047 = vpack.c.b16 %v4639, %v4633
  %v5048 = vpack.c.b16 %v4640, %v4634
  %v5049 = vpack.c.b16 %v4641, %v4635
  %v5050 = vpack.c.b16 %v4642, %v4636
  %v5051 = vpack.c.b16 %v4643, %v4637
  %v5052 = vpack.c.b16 %v4650, %v4644
  %v5053 = vpack.c.b16 %v4651, %v4645
  %v5054 = vpack.c.b16 %v4652, %v4646
  %v5055 = vpack.c.b16 %v4653, %v4647
  %v5056 = vpack.c.b16 %v4654, %v4648
  %v5057 = vpack.c.b16 %v4655, %v4649
  %v5058 = vpack.c.b16 %v4662, %v4656
  %v5059 = vpack.c.b16 %v4663, %v4657
  %v5060 = vpack.c.b16 %v4664, %v4658
  %v5061 = vpack.c.b16 %v4665, %v4659
  %v5062 = vpack.c.b16 %v4666, %v4660
  %v5063 = vpack.c.b16 %v4667, %v4661
  %v5064 = vpack.c.b16 %v4674, %v4668
  %v5065 = vpack.c.b16 %v4675, %v4669
  %v5066 = vpack.c.b16 %v4676, %v4670
  %v5067 = vpack.c.b16 %v4677, %v4671
  %v5068 = vpack.c.b16 %v4678, %v4672
  %v5069 = vpack.c.b16 %v4679, %v4673
  %v5070 = vpack.c.b16 %v4686, %v4680
  %v5071 = vpack.c.b16 %v4687, %v4681
  %v5072 = vpack.c.b16 %v4688, %v4682
  %v5073 = vpack.c.b16 %v4689, %v4683
  %v5074 = vpack.c.b16 %v4690, %v4684
  %v5075 = vpack.c.b16 %v4691, %v4685
  %5460 = vmatprep.subr.bf16.mxu0 %v4693
  %5461 = vmatpush1.bf16.msra.mxu0 %v4692
  %5462 = vmatprep.subr.bf16.mxu0 %v4699
  %5463 = vmatpush1.bf16.msra.mxu0 %v4698
  %5464 = vmatprep.subr.bf16.mxu0 %v4705
  %5465 = vmatpush1.bf16.msra.mxu0 %v4704
  %5466 = vmatprep.subr.bf16.mxu0 %v4711
  %5467 = vmatpush1.bf16.msra.mxu0 %v4710
  %5468 = vmatprep.subr.bf16.mxu0 %v4717
  %5469 = vmatpush1.bf16.msra.mxu0 %v4716
  %5470 = vmatprep.subr.bf16.mxu0 %v4723
  %5471 = vmatpush1.bf16.msra.mxu0 %v4722
  %5472 = vmatprep.subr.bf16.mxu0 %v4729
  %5473 = vmatpush1.bf16.msra.mxu0 %v4728
  %5474 = vmatprep.subr.bf16.mxu0 %v4735
  %5475 = vmatpush1.bf16.msra.mxu0 %v4734
  %5476 = vmatprep.subr.bf16.mxu0 %v4741
  %5477 = vmatpush1.bf16.msra.mxu0 %v4740
  %5478 = vmatprep.subr.bf16.mxu0 %v4747
  %5479 = vmatpush1.bf16.msra.mxu0 %v4746
  %5480 = vmatprep.subr.bf16.mxu0 %v4753
  %5481 = vmatpush1.bf16.msra.mxu0 %v4752
  %5482 = vmatprep.subr.bf16.mxu0 %v4759
  %5483 = vmatpush1.bf16.msra.mxu0 %v4758
  %5484 = vmatprep.subr.bf16.mxu0 %v4765
  %5485 = vmatpush1.bf16.msra.mxu0 %v4764
  %5486 = vmatprep.subr.bf16.mxu0 %v4771
  %5487 = vmatpush1.bf16.msra.mxu0 %v4770
  %5488 = vmatprep.subr.bf16.mxu0 %v4777
  %5489 = vmatpush1.bf16.msra.mxu0 %v4776
  %5490 = vmatprep.subr.bf16.mxu0 %v4783
  %5491 = vmatpush1.bf16.msra.mxu0 %v4782
  %5492 = vmatprep.mubr.bf16.mxu0 %v3117
  %5493 = vmatmul.mubr.bf16.gmra.mrb[0].mxu0 %v3116
  %v5494 = vpop.f32.mrb[0].mxu0
  %v5495 = vadd.f32 %v3513, %v5494
  %v5496 = vpop.f32.mrb[0].mxu0
  %v5497 = vadd.f32 %v3517, %v5496
  %v5498 = vpop.f32.mrb[0].mxu0
  %v5499 = vadd.f32 %v3513, %v5498
  %v5500 = vpop.f32.mrb[0].mxu0
  %v5501 = vadd.f32 %v3517, %v5500
  %5502 = vdwg.mxu0
  %5503 = vmatprep.subr.bf16.mxu0 %v4789
  %5504 = vmatpush1.bf16.msra.mxu0 %v4788
  %5505 = vmatprep.subr.bf16.mxu0 %v4795
  %5506 = vmatpush1.bf16.msra.mxu0 %v4794
  %5507 = vmatprep.subr.bf16.mxu0 %v4801
  %5508 = vmatpush1.bf16.msra.mxu0 %v4800
  %5509 = vmatprep.subr.bf16.mxu0 %v4807
  %5510 = vmatpush1.bf16.msra.mxu0 %v4806
  %5511 = vmatprep.subr.bf16.mxu0 %v4813
  %5512 = vmatpush1.bf16.msra.mxu0 %v4812
  %5513 = vmatprep.subr.bf16.mxu0 %v4819
  %5514 = vmatpush1.bf16.msra.mxu0 %v4818
  %5515 = vmatprep.subr.bf16.mxu0 %v4825
  %5516 = vmatpush1.bf16.msra.mxu0 %v4824
  %5517 = vmatprep.subr.bf16.mxu0 %v4831
  %5518 = vmatpush1.bf16.msra.mxu0 %v4830
  %5519 = vmatprep.subr.bf16.mxu0 %v4837
  %5520 = vmatpush1.bf16.msra.mxu0 %v4836
  %5521 = vmatprep.subr.bf16.mxu0 %v4843
  %5522 = vmatpush1.bf16.msra.mxu0 %v4842
  %5523 = vmatprep.subr.bf16.mxu0 %v4849
  %5524 = vmatpush1.bf16.msra.mxu0 %v4848
  %5525 = vmatprep.subr.bf16.mxu0 %v4855
  %5526 = vmatpush1.bf16.msra.mxu0 %v4854
  %5527 = vmatprep.subr.bf16.mxu0 %v4861
  %5528 = vmatpush1.bf16.msra.mxu0 %v4860
  %5529 = vmatprep.subr.bf16.mxu0 %v4867
  %5530 = vmatpush1.bf16.msra.mxu0 %v4866
  %5531 = vmatprep.subr.bf16.mxu0 %v4873
  %5532 = vmatpush1.bf16.msra.mxu0 %v4872
  %5533 = vmatprep.subr.bf16.mxu0 %v4879
  %5534 = vmatpush1.bf16.msra.mxu0 %v4878
  %5535 = vmatprep.mubr.bf16.mxu0 %v3119
  %5536 = vmatmul.mubr.bf16.gmra.mrb[0].mxu0 %v3118
  %v5537 = vpop.f32.mrb[0].mxu0
  %v5538 = vadd.f32 %v5495, %v5537
  %v5539 = vpop.f32.mrb[0].mxu0
  %v5540 = vadd.f32 %v5497, %v5539
  %v5541 = vpop.f32.mrb[0].mxu0
  %v5542 = vadd.f32 %v5499, %v5541
  %v5543 = vpop.f32.mrb[0].mxu0
  %v5544 = vadd.f32 %v5501, %v5543
  %5545 = vdwg.mxu0
  %5546 = vmatprep.subr.bf16.mxu0 %v4885
  %5547 = vmatpush1.bf16.msra.mxu0 %v4884
  %5548 = vmatprep.subr.bf16.mxu0 %v4891
  %5549 = vmatpush1.bf16.msra.mxu0 %v4890
  %5550 = vmatprep.subr.bf16.mxu0 %v4897
  %5551 = vmatpush1.bf16.msra.mxu0 %v4896
  %5552 = vmatprep.subr.bf16.mxu0 %v4903
  %5553 = vmatpush1.bf16.msra.mxu0 %v4902
  %5554 = vmatprep.subr.bf16.mxu0 %v4909
  %5555 = vmatpush1.bf16.msra.mxu0 %v4908
  %5556 = vmatprep.subr.bf16.mxu0 %v4915
  %5557 = vmatpush1.bf16.msra.mxu0 %v4914
  %5558 = vmatprep.subr.bf16.mxu0 %v4921
  %5559 = vmatpush1.bf16.msra.mxu0 %v4920
  %5560 = vmatprep.subr.bf16.mxu0 %v4927
  %5561 = vmatpush1.bf16.msra.mxu0 %v4926
  %5562 = vmatprep.subr.bf16.mxu0 %v4933
  %5563 = vmatpush1.bf16.msra.mxu0 %v4932
  %5564 = vmatprep.subr.bf16.mxu0 %v4939
  %5565 = vmatpush1.bf16.msra.mxu0 %v4938
  %5566 = vmatprep.subr.bf16.mxu0 %v4945
  %5567 = vmatpush1.bf16.msra.mxu0 %v4944
  %5568 = vmatprep.subr.bf16.mxu0 %v4951
  %5569 = vmatpush1.bf16.msra.mxu0 %v4950
  %5570 = vmatprep.subr.bf16.mxu0 %v4957
  %5571 = vmatpush1.bf16.msra.mxu0 %v4956
  %5572 = vmatprep.subr.bf16.mxu0 %v4963
  %5573 = vmatpush1.bf16.msra.mxu0 %v4962
  %5574 = vmatprep.subr.bf16.mxu0 %v4969
  %5575 = vmatpush1.bf16.msra.mxu0 %v4968
  %5576 = vmatprep.subr.bf16.mxu0 %v4975
  %5577 = vmatpush1.bf16.msra.mxu0 %v4974
  %5578 = vmatprep.mubr.bf16.mxu0 %v3121
  %5579 = vmatmul.mubr.bf16.gmra.mrb[0].mxu0 %v3120
  %v5580 = vpop.f32.mrb[0].mxu0
  %v5581 = vadd.f32 %v5538, %v5580
  %v5582 = vpop.f32.mrb[0].mxu0
  %v5583 = vadd.f32 %v5540, %v5582
  %v5584 = vpop.f32.mrb[0].mxu0
  %v5585 = vadd.f32 %v5542, %v5584
  %v5586 = vpop.f32.mrb[0].mxu0
  %v5587 = vadd.f32 %v5544, %v5586
  %5588 = vdwg.mxu0
  %5589 = vmatprep.subr.bf16.mxu0 %v4981
  %5590 = vmatpush1.bf16.msra.mxu0 %v4980
  %5591 = vmatprep.subr.bf16.mxu0 %v4987
  %5592 = vmatpush1.bf16.msra.mxu0 %v4986
  %5593 = vmatprep.subr.bf16.mxu0 %v4993
  %5594 = vmatpush1.bf16.msra.mxu0 %v4992
  %5595 = vmatprep.subr.bf16.mxu0 %v4999
  %5596 = vmatpush1.bf16.msra.mxu0 %v4998
  %5597 = vmatprep.subr.bf16.mxu0 %v5005
  %5598 = vmatpush1.bf16.msra.mxu0 %v5004
  %5599 = vmatprep.subr.bf16.mxu0 %v5011
  %5600 = vmatpush1.bf16.msra.mxu0 %v5010
  %5601 = vmatprep.subr.bf16.mxu0 %v5017
  %5602 = vmatpush1.bf16.msra.mxu0 %v5016
  %5603 = vmatprep.subr.bf16.mxu0 %v5023
  %5604 = vmatpush1.bf16.msra.mxu0 %v5022
  %5605 = vmatprep.subr.bf16.mxu0 %v5029
  %5606 = vmatpush1.bf16.msra.mxu0 %v5028
  %5607 = vmatprep.subr.bf16.mxu0 %v5035
  %5608 = vmatpush1.bf16.msra.mxu0 %v5034
  %5609 = vmatprep.subr.bf16.mxu0 %v5041
  %5610 = vmatpush1.bf16.msra.mxu0 %v5040
  %5611 = vmatprep.subr.bf16.mxu0 %v5047
  %5612 = vmatpush1.bf16.msra.mxu0 %v5046
  %5613 = vmatprep.subr.bf16.mxu0 %v5053
  %5614 = vmatpush1.bf16.msra.mxu0 %v5052
  %5615 = vmatprep.subr.bf16.mxu0 %v5059
  %5616 = vmatpush1.bf16.msra.mxu0 %v5058
  %5617 = vmatprep.subr.bf16.mxu0 %v5065
  %5618 = vmatpush1.bf16.msra.mxu0 %v5064
  %5619 = vmatprep.subr.bf16.mxu0 %v5071
  %5620 = vmatpush1.bf16.msra.mxu0 %v5070
  %5621 = vmatprep.mubr.bf16.mxu0 %v3123
  %5622 = vmatmul.mubr.bf16.gmra.mrb[0].mxu0 %v3122
  %v5623 = vpop.f32.mrb[0].mxu0
  %v5624 = vadd.f32 %v5581, %v5623
  %v5625 = vpop.f32.mrb[0].mxu0
  %v5626 = vadd.f32 %v5583, %v5625
  %v5627 = vpop.f32.mrb[0].mxu0
  %v5628 = vadd.f32 %v5585, %v5627
  %v5629 = vpop.f32.mrb[0].mxu0
  %v5630 = vadd.f32 %v5587, %v5629
  %5631 = vdwg.mxu0
  %5632 = vmatprep.subr.bf16.mxu0 %v4695
  %5633 = vmatpush1.bf16.msra.mxu0 %v4694
  %5634 = vmatprep.subr.bf16.mxu0 %v4701
  %5635 = vmatpush1.bf16.msra.mxu0 %v4700
  %5636 = vmatprep.subr.bf16.mxu0 %v4707
  %5637 = vmatpush1.bf16.msra.mxu0 %v4706
  %5638 = vmatprep.subr.bf16.mxu0 %v4713
  %5639 = vmatpush1.bf16.msra.mxu0 %v4712
  %5640 = vmatprep.subr.bf16.mxu0 %v4719
  %5641 = vmatpush1.bf16.msra.mxu0 %v4718
  %5642 = vmatprep.subr.bf16.mxu0 %v4725
  %5643 = vmatpush1.bf16.msra.mxu0 %v4724
  %5644 = vmatprep.subr.bf16.mxu0 %v4731
  %5645 = vmatpush1.bf16.msra.mxu0 %v4730
  %5646 = vmatprep.subr.bf16.mxu0 %v4737
  %5647 = vmatpush1.bf16.msra.mxu0 %v4736
  %5648 = vmatprep.subr.bf16.mxu0 %v4743
  %5649 = vmatpush1.bf16.msra.mxu0 %v4742
  %5650 = vmatprep.subr.bf16.mxu0 %v4749
  %5651 = vmatpush1.bf16.msra.mxu0 %v4748
  %5652 = vmatprep.subr.bf16.mxu0 %v4755
  %5653 = vmatpush1.bf16.msra.mxu0 %v4754
  %5654 = vmatprep.subr.bf16.mxu0 %v4761
  %5655 = vmatpush1.bf16.msra.mxu0 %v4760
  %5656 = vmatprep.subr.bf16.mxu0 %v4767
  %5657 = vmatpush1.bf16.msra.mxu0 %v4766
  %5658 = vmatprep.subr.bf16.mxu0 %v4773
  %5659 = vmatpush1.bf16.msra.mxu0 %v4772
  %5660 = vmatprep.subr.bf16.mxu0 %v4779
  %5661 = vmatpush1.bf16.msra.mxu0 %v4778
  %5662 = vmatprep.subr.bf16.mxu0 %v4785
  %5663 = vmatpush1.bf16.msra.mxu0 %v4784
  %5664 = vmatprep.mubr.bf16.mxu0 %v3117
  %5665 = vmatmul.mubr.bf16.gmra.mrb[0].mxu0 %v3116
  %v5666 = vpop.f32.mrb[0].mxu0
  %v5667 = vadd.f32 %v3521, %v5666
  %v5668 = vpop.f32.mrb[0].mxu0
  %v5669 = vadd.f32 %v3525, %v5668
  %v5670 = vpop.f32.mrb[0].mxu0
  %v5671 = vadd.f32 %v3521, %v5670
  %v5672 = vpop.f32.mrb[0].mxu0
  %v5673 = vadd.f32 %v3525, %v5672
  %5674 = vdwg.mxu0
  %5675 = vmatprep.subr.bf16.mxu0 %v4791
  %5676 = vmatpush1.bf16.msra.mxu0 %v4790
  %5677 = vmatprep.subr.bf16.mxu0 %v4797
  %5678 = vmatpush1.bf16.msra.mxu0 %v4796
  %5679 = vmatprep.subr.bf16.mxu0 %v4803
  %5680 = vmatpush1.bf16.msra.mxu0 %v4802
  %5681 = vmatprep.subr.bf16.mxu0 %v4809
  %5682 = vmatpush1.bf16.msra.mxu0 %v4808
  %5683 = vmatprep.subr.bf16.mxu0 %v4815
  %5684 = vmatpush1.bf16.msra.mxu0 %v4814
  %5685 = vmatprep.subr.bf16.mxu0 %v4821
  %5686 = vmatpush1.bf16.msra.mxu0 %v4820
  %5687 = vmatprep.subr.bf16.mxu0 %v4827
  %5688 = vmatpush1.bf16.msra.mxu0 %v4826
  %5689 = vmatprep.subr.bf16.mxu0 %v4833
  %5690 = vmatpush1.bf16.msra.mxu0 %v4832
  %5691 = vmatprep.subr.bf16.mxu0 %v4839
  %5692 = vmatpush1.bf16.msra.mxu0 %v4838
  %5693 = vmatprep.subr.bf16.mxu0 %v4845
  %5694 = vmatpush1.bf16.msra.mxu0 %v4844
  %5695 = vmatprep.subr.bf16.mxu0 %v4851
  %5696 = vmatpush1.bf16.msra.mxu0 %v4850
  %5697 = vmatprep.subr.bf16.mxu0 %v4857
  %5698 = vmatpush1.bf16.msra.mxu0 %v4856
  %5699 = vmatprep.subr.bf16.mxu0 %v4863
  %5700 = vmatpush1.bf16.msra.mxu0 %v4862
  %5701 = vmatprep.subr.bf16.mxu0 %v4869
  %5702 = vmatpush1.bf16.msra.mxu0 %v4868
  %5703 = vmatprep.subr.bf16.mxu0 %v4875
  %5704 = vmatpush1.bf16.msra.mxu0 %v4874
  %5705 = vmatprep.subr.bf16.mxu0 %v4881
  %5706 = vmatpush1.bf16.msra.mxu0 %v4880
  %5707 = vmatprep.mubr.bf16.mxu0 %v3119
  %5708 = vmatmul.mubr.bf16.gmra.mrb[0].mxu0 %v3118
  %v5709 = vpop.f32.mrb[0].mxu0
  %v5710 = vadd.f32 %v5667, %v5709
  %v5711 = vpop.f32.mrb[0].mxu0
  %v5712 = vadd.f32 %v5669, %v5711
  %v5713 = vpop.f32.mrb[0].mxu0
  %v5714 = vadd.f32 %v5671, %v5713
  %v5715 = vpop.f32.mrb[0].mxu0
  %v5716 = vadd.f32 %v5673, %v5715
  %5717 = vdwg.mxu0
  %5718 = vmatprep.subr.bf16.mxu0 %v4887
  %5719 = vmatpush1.bf16.msra.mxu0 %v4886
  %5720 = vmatprep.subr.bf16.mxu0 %v4893
  %5721 = vmatpush1.bf16.msra.mxu0 %v4892
  %5722 = vmatprep.subr.bf16.mxu0 %v4899
  %5723 = vmatpush1.bf16.msra.mxu0 %v4898
  %5724 = vmatprep.subr.bf16.mxu0 %v4905
  %5725 = vmatpush1.bf16.msra.mxu0 %v4904
  %5726 = vmatprep.subr.bf16.mxu0 %v4911
  %5727 = vmatpush1.bf16.msra.mxu0 %v4910
  %5728 = vmatprep.subr.bf16.mxu0 %v4917
  %5729 = vmatpush1.bf16.msra.mxu0 %v4916
  %5730 = vmatprep.subr.bf16.mxu0 %v4923
  %5731 = vmatpush1.bf16.msra.mxu0 %v4922
  %5732 = vmatprep.subr.bf16.mxu0 %v4929
  %5733 = vmatpush1.bf16.msra.mxu0 %v4928
  %5734 = vmatprep.subr.bf16.mxu0 %v4935
  %5735 = vmatpush1.bf16.msra.mxu0 %v4934
  %5736 = vmatprep.subr.bf16.mxu0 %v4941
  %5737 = vmatpush1.bf16.msra.mxu0 %v4940
  %5738 = vmatprep.subr.bf16.mxu0 %v4947
  %5739 = vmatpush1.bf16.msra.mxu0 %v4946
  %5740 = vmatprep.subr.bf16.mxu0 %v4953
  %5741 = vmatpush1.bf16.msra.mxu0 %v4952
  %5742 = vmatprep.subr.bf16.mxu0 %v4959
  %5743 = vmatpush1.bf16.msra.mxu0 %v4958
  %5744 = vmatprep.subr.bf16.mxu0 %v4965
  %5745 = vmatpush1.bf16.msra.mxu0 %v4964
  %5746 = vmatprep.subr.bf16.mxu0 %v4971
  %5747 = vmatpush1.bf16.msra.mxu0 %v4970
  %5748 = vmatprep.subr.bf16.mxu0 %v4977
  %5749 = vmatpush1.bf16.msra.mxu0 %v4976
  %5750 = vmatprep.mubr.bf16.mxu0 %v3121
  %5751 = vmatmul.mubr.bf16.gmra.mrb[0].mxu0 %v3120
  %v5752 = vpop.f32.mrb[0].mxu0
  %v5753 = vadd.f32 %v5710, %v5752
  %v5754 = vpop.f32.mrb[0].mxu0
  %v5755 = vadd.f32 %v5712, %v5754
  %v5756 = vpop.f32.mrb[0].mxu0
  %v5757 = vadd.f32 %v5714, %v5756
  %v5758 = vpop.f32.mrb[0].mxu0
  %v5759 = vadd.f32 %v5716, %v5758
  %5760 = vdwg.mxu0
  %5761 = vmatprep.subr.bf16.mxu0 %v4983
  %5762 = vmatpush1.bf16.msra.mxu0 %v4982
  %5763 = vmatprep.subr.bf16.mxu0 %v4989
  %5764 = vmatpush1.bf16.msra.mxu0 %v4988
  %5765 = vmatprep.subr.bf16.mxu0 %v4995
  %5766 = vmatpush1.bf16.msra.mxu0 %v4994
  %5767 = vmatprep.subr.bf16.mxu0 %v5001
  %5768 = vmatpush1.bf16.msra.mxu0 %v5000
  %5769 = vmatprep.subr.bf16.mxu0 %v5007
  %5770 = vmatpush1.bf16.msra.mxu0 %v5006
  %5771 = vmatprep.subr.bf16.mxu0 %v5013
  %5772 = vmatpush1.bf16.msra.mxu0 %v5012
  %5773 = vmatprep.subr.bf16.mxu0 %v5019
  %5774 = vmatpush1.bf16.msra.mxu0 %v5018
  %5775 = vmatprep.subr.bf16.mxu0 %v5025
  %5776 = vmatpush1.bf16.msra.mxu0 %v5024
  %5777 = vmatprep.subr.bf16.mxu0 %v5031
  %5778 = vmatpush1.bf16.msra.mxu0 %v5030
  %5779 = vmatprep.subr.bf16.mxu0 %v5037
  %5780 = vmatpush1.bf16.msra.mxu0 %v5036
  %5781 = vmatprep.subr.bf16.mxu0 %v5043
  %5782 = vmatpush1.bf16.msra.mxu0 %v5042
  %5783 = vmatprep.subr.bf16.mxu0 %v5049
  %5784 = vmatpush1.bf16.msra.mxu0 %v5048
  %5785 = vmatprep.subr.bf16.mxu0 %v5055
  %5786 = vmatpush1.bf16.msra.mxu0 %v5054
  %5787 = vmatprep.subr.bf16.mxu0 %v5061
  %5788 = vmatpush1.bf16.msra.mxu0 %v5060
  %5789 = vmatprep.subr.bf16.mxu0 %v5067
  %5790 = vmatpush1.bf16.msra.mxu0 %v5066
  %5791 = vmatprep.subr.bf16.mxu0 %v5073
  %5792 = vmatpush1.bf16.msra.mxu0 %v5072
  %5793 = vmatprep.mubr.bf16.mxu0 %v3123
  %5794 = vmatmul.mubr.bf16.gmra.mrb[0].mxu0 %v3122
  %v5795 = vpop.f32.mrb[0].mxu0
  %v5796 = vadd.f32 %v5753, %v5795
  %v5797 = vpop.f32.mrb[0].mxu0
  %v5798 = vadd.f32 %v5755, %v5797
  %v5799 = vpop.f32.mrb[0].mxu0
  %v5800 = vadd.f32 %v5757, %v5799
  %v5801 = vpop.f32.mrb[0].mxu0
  %v5802 = vadd.f32 %v5759, %v5801
  %5803 = vdwg.mxu0
  %5804 = vmatprep.subr.bf16.mxu0 %v4697
  %5805 = vmatpush1.bf16.msra.mxu0 %v4696
  %5806 = vmatprep.subr.bf16.mxu0 %v4703
  %5807 = vmatpush1.bf16.msra.mxu0 %v4702
  %5808 = vmatprep.subr.bf16.mxu0 %v4709
  %5809 = vmatpush1.bf16.msra.mxu0 %v4708
  %5810 = vmatprep.subr.bf16.mxu0 %v4715
  %5811 = vmatpush1.bf16.msra.mxu0 %v4714
  %5812 = vmatprep.subr.bf16.mxu0 %v4721
  %5813 = vmatpush1.bf16.msra.mxu0 %v4720
  %5814 = vmatprep.subr.bf16.mxu0 %v4727
  %5815 = vmatpush1.bf16.msra.mxu0 %v4726
  %5816 = vmatprep.subr.bf16.mxu0 %v4733
  %5817 = vmatpush1.bf16.msra.mxu0 %v4732
  %5818 = vmatprep.subr.bf16.mxu0 %v4739
  %5819 = vmatpush1.bf16.msra.mxu0 %v4738
  %5820 = vmatprep.subr.bf16.mxu0 %v4745
  %5821 = vmatpush1.bf16.msra.mxu0 %v4744
  %5822 = vmatprep.subr.bf16.mxu0 %v4751
  %5823 = vmatpush1.bf16.msra.mxu0 %v4750
  %5824 = vmatprep.subr.bf16.mxu0 %v4757
  %5825 = vmatpush1.bf16.msra.mxu0 %v4756
  %5826 = vmatprep.subr.bf16.mxu0 %v4763
  %5827 = vmatpush1.bf16.msra.mxu0 %v4762
  %5828 = vmatprep.subr.bf16.mxu0 %v4769
  %5829 = vmatpush1.bf16.msra.mxu0 %v4768
  %5830 = vmatprep.subr.bf16.mxu0 %v4775
  %5831 = vmatpush1.bf16.msra.mxu0 %v4774
  %5832 = vmatprep.subr.bf16.mxu0 %v4781
  %5833 = vmatpush1.bf16.msra.mxu0 %v4780
  %5834 = vmatprep.subr.bf16.mxu0 %v4787
  %5835 = vmatpush1.bf16.msra.mxu0 %v4786
  %5836 = vmatprep.mubr.bf16.mxu0 %v3117
  %5837 = vmatmul.mubr.bf16.gmra.mrb[0].mxu0 %v3116
  %v5838 = vpop.f32.mrb[0].mxu0
  %v5839 = vadd.f32 %v3529, %v5838
  %v5840 = vpop.f32.mrb[0].mxu0
  %v5841 = vadd.f32 %v3533, %v5840
  %v5842 = vpop.f32.mrb[0].mxu0
  %v5843 = vadd.f32 %v3529, %v5842
  %v5844 = vpop.f32.mrb[0].mxu0
  %v5845 = vadd.f32 %v3533, %v5844
  %5846 = vdwg.mxu0
  %5847 = vmatprep.subr.bf16.mxu0 %v4793
  %5848 = vmatpush1.bf16.msra.mxu0 %v4792
  %5849 = vmatprep.subr.bf16.mxu0 %v4799
  %5850 = vmatpush1.bf16.msra.mxu0 %v4798
  %5851 = vmatprep.subr.bf16.mxu0 %v4805
  %5852 = vmatpush1.bf16.msra.mxu0 %v4804
  %5853 = vmatprep.subr.bf16.mxu0 %v4811
  %5854 = vmatpush1.bf16.msra.mxu0 %v4810
  %5855 = vmatprep.subr.bf16.mxu0 %v4817
  %5856 = vmatpush1.bf16.msra.mxu0 %v4816
  %5857 = vmatprep.subr.bf16.mxu0 %v4823
  %5858 = vmatpush1.bf16.msra.mxu0 %v4822
  %5859 = vmatprep.subr.bf16.mxu0 %v4829
  %5860 = vmatpush1.bf16.msra.mxu0 %v4828
  %5861 = vmatprep.subr.bf16.mxu0 %v4835
  %5862 = vmatpush1.bf16.msra.mxu0 %v4834
  %5863 = vmatprep.subr.bf16.mxu0 %v4841
  %5864 = vmatpush1.bf16.msra.mxu0 %v4840
  %5865 = vmatprep.subr.bf16.mxu0 %v4847
  %5866 = vmatpush1.bf16.msra.mxu0 %v4846
  %5867 = vmatprep.subr.bf16.mxu0 %v4853
  %5868 = vmatpush1.bf16.msra.mxu0 %v4852
  %5869 = vmatprep.subr.bf16.mxu0 %v4859
  %5870 = vmatpush1.bf16.msra.mxu0 %v4858
  %5871 = vmatprep.subr.bf16.mxu0 %v4865
  %5872 = vmatpush1.bf16.msra.mxu0 %v4864
  %5873 = vmatprep.subr.bf16.mxu0 %v4871
  %5874 = vmatpush1.bf16.msra.mxu0 %v4870
  %5875 = vmatprep.subr.bf16.mxu0 %v4877
  %5876 = vmatpush1.bf16.msra.mxu0 %v4876
  %5877 = vmatprep.subr.bf16.mxu0 %v4883
  %5878 = vmatpush1.bf16.msra.mxu0 %v4882
  %5879 = vmatprep.mubr.bf16.mxu0 %v3119
  %5880 = vmatmul.mubr.bf16.gmra.mrb[0].mxu0 %v3118
  %v5881 = vpop.f32.mrb[0].mxu0
  %v5882 = vadd.f32 %v5839, %v5881
  %v5883 = vpop.f32.mrb[0].mxu0
  %v5884 = vadd.f32 %v5841, %v5883
  %v5885 = vpop.f32.mrb[0].mxu0
  %v5886 = vadd.f32 %v5843, %v5885
  %v5887 = vpop.f32.mrb[0].mxu0
  %v5888 = vadd.f32 %v5845, %v5887
  %5889 = vdwg.mxu0
  %5890 = vmatprep.subr.bf16.mxu0 %v4889
  %5891 = vmatpush1.bf16.msra.mxu0 %v4888
  %5892 = vmatprep.subr.bf16.mxu0 %v4895
  %5893 = vmatpush1.bf16.msra.mxu0 %v4894
  %5894 = vmatprep.subr.bf16.mxu0 %v4901
  %5895 = vmatpush1.bf16.msra.mxu0 %v4900
  %5896 = vmatprep.subr.bf16.mxu0 %v4907
  %5897 = vmatpush1.bf16.msra.mxu0 %v4906
  %5898 = vmatprep.subr.bf16.mxu0 %v4913
  %5899 = vmatpush1.bf16.msra.mxu0 %v4912
  %5900 = vmatprep.subr.bf16.mxu0 %v4919
  %5901 = vmatpush1.bf16.msra.mxu0 %v4918
  %5902 = vmatprep.subr.bf16.mxu0 %v4925
  %5903 = vmatpush1.bf16.msra.mxu0 %v4924
  %5904 = vmatprep.subr.bf16.mxu0 %v4931
  %5905 = vmatpush1.bf16.msra.mxu0 %v4930
  %5906 = vmatprep.subr.bf16.mxu0 %v4937
  %5907 = vmatpush1.bf16.msra.mxu0 %v4936
  %5908 = vmatprep.subr.bf16.mxu0 %v4943
  %5909 = vmatpush1.bf16.msra.mxu0 %v4942
  %5910 = vmatprep.subr.bf16.mxu0 %v4949
  %5911 = vmatpush1.bf16.msra.mxu0 %v4948
  %5912 = vmatprep.subr.bf16.mxu0 %v4955
  %5913 = vmatpush1.bf16.msra.mxu0 %v4954
  %5914 = vmatprep.subr.bf16.mxu0 %v4961
  %5915 = vmatpush1.bf16.msra.mxu0 %v4960
  %5916 = vmatprep.subr.bf16.mxu0 %v4967
  %5917 = vmatpush1.bf16.msra.mxu0 %v4966
  %5918 = vmatprep.subr.bf16.mxu0 %v4973
  %5919 = vmatpush1.bf16.msra.mxu0 %v4972
  %5920 = vmatprep.subr.bf16.mxu0 %v4979
  %5921 = vmatpush1.bf16.msra.mxu0 %v4978
  %5922 = vmatprep.mubr.bf16.mxu0 %v3121
  %5923 = vmatmul.mubr.bf16.gmra.mrb[0].mxu0 %v3120
  %v5924 = vpop.f32.mrb[0].mxu0
  %v5925 = vadd.f32 %v5882, %v5924
  %v5926 = vpop.f32.mrb[0].mxu0
  %v5927 = vadd.f32 %v5884, %v5926
  %v5928 = vpop.f32.mrb[0].mxu0
  %v5929 = vadd.f32 %v5886, %v5928
  %v5930 = vpop.f32.mrb[0].mxu0
  %v5931 = vadd.f32 %v5888, %v5930
  %5932 = vdwg.mxu0
  %5933 = vmatprep.subr.bf16.mxu0 %v4985
  %5934 = vmatpush1.bf16.msra.mxu0 %v4984
  %5935 = vmatprep.subr.bf16.mxu0 %v4991
  %5936 = vmatpush1.bf16.msra.mxu0 %v4990
  %5937 = vmatprep.subr.bf16.mxu0 %v4997
  %5938 = vmatpush1.bf16.msra.mxu0 %v4996
  %5939 = vmatprep.subr.bf16.mxu0 %v5003
  %5940 = vmatpush1.bf16.msra.mxu0 %v5002
  %5941 = vmatprep.subr.bf16.mxu0 %v5009
  %5942 = vmatpush1.bf16.msra.mxu0 %v5008
  %5943 = vmatprep.subr.bf16.mxu0 %v5015
  %5944 = vmatpush1.bf16.msra.mxu0 %v5014
  %5945 = vmatprep.subr.bf16.mxu0 %v5021
  %5946 = vmatpush1.bf16.msra.mxu0 %v5020
  %5947 = vmatprep.subr.bf16.mxu0 %v5027
  %5948 = vmatpush1.bf16.msra.mxu0 %v5026
  %5949 = vmatprep.subr.bf16.mxu0 %v5033
  %5950 = vmatpush1.bf16.msra.mxu0 %v5032
  %5951 = vmatprep.subr.bf16.mxu0 %v5039
  %5952 = vmatpush1.bf16.msra.mxu0 %v5038
  %5953 = vmatprep.subr.bf16.mxu0 %v5045
  %5954 = vmatpush1.bf16.msra.mxu0 %v5044
  %5955 = vmatprep.subr.bf16.mxu0 %v5051
  %5956 = vmatpush1.bf16.msra.mxu0 %v5050
  %5957 = vmatprep.subr.bf16.mxu0 %v5057
  %5958 = vmatpush1.bf16.msra.mxu0 %v5056
  %5959 = vmatprep.subr.bf16.mxu0 %v5063
  %5960 = vmatpush1.bf16.msra.mxu0 %v5062
  %5961 = vmatprep.subr.bf16.mxu0 %v5069
  %5962 = vmatpush1.bf16.msra.mxu0 %v5068
  %5963 = vmatprep.subr.bf16.mxu0 %v5075
  %5964 = vmatpush1.bf16.msra.mxu0 %v5074
  %5965 = vmatprep.mubr.bf16.mxu0 %v3123
  %5966 = vmatmul.mubr.bf16.gmra.mrb[0].mxu0 %v3122
  %v5967 = vpop.f32.mrb[0].mxu0
  %v5968 = vadd.f32 %v5925, %v5967
  %v5969 = vpop.f32.mrb[0].mxu0
  %v5970 = vadd.f32 %v5927, %v5969
  %v5971 = vpop.f32.mrb[0].mxu0
  %v5972 = vadd.f32 %v5929, %v5971
  %v5973 = vpop.f32.mrb[0].mxu0
  %v5974 = vadd.f32 %v5931, %v5973
  %5975 = vdwg.mxu0
  %v5976 = vadd.f32 %v220, %v5624
  %v5977 = vadd.f32 %v221, %v5626
  %v5978 = vadd.f32 %v222, %v5796
  %v5979 = vadd.f32 %v223, %v5798
  %v5980 = vadd.f32 %v224, %v5968
  %v5981 = vadd.f32 %v225, %v5970
  %v5982 = vadd.f32 %v226, %v5628
  %v5983 = vadd.f32 %v227, %v5630
  %v5984 = vadd.f32 %v228, %v5800
  %v5985 = vadd.f32 %v229, %v5802
  %v5986 = vadd.f32 %v230, %v5972
  %v5987 = vadd.f32 %v231, %v5974
  %v5988 = vld [vmem:[%s8] sm:$0x3f]
  %v5989 = vld [vmem:[%s9] sm:$0x3f]
  %v5990 = vadd.f32 %v5976, %v5977
  %v5991 = vadd.f32 %v5990, %v5978
  %v5992 = vadd.f32 %v5991, %v5979
  %v5993 = vadd.f32 %v5992, %v5980
  %v5994 = vadd.f32 %v5993, %v5981
  %5995 = vadd.xlane.f32.xlu0 %v5994
  %v5996 = vpop.xlane.xlu0 %5995
  %v5997 = vadd.f32 %v5982, %v5983
  %v5998 = vadd.f32 %v5997, %v5984
  %v5999 = vadd.f32 %v5998, %v5985
  %v6000 = vadd.f32 %v5999, %v5986
  %v6001 = vadd.f32 %v6000, %v5987
  %6002 = vadd.xlane.f32.xlu0 %v6001
  %v6003 = vpop.xlane.xlu0 %6002
  %v6004 = vmul.f32 %v5996, %v87
  %v6005 = vmul.f32 %v6003, %v87
  %v6006 = vsub.f32 %v5976, %v6004
  %v6007 = vsub.f32 %v5977, %v6004
  %v6008 = vsub.f32 %v5978, %v6004
  %v6009 = vsub.f32 %v5979, %v6004
  %v6010 = vsub.f32 %v5980, %v6004
  %v6011 = vsub.f32 %v5981, %v6004
  %v6012 = vsub.f32 %v5982, %v6005
  %v6013 = vsub.f32 %v5983, %v6005
  %v6014 = vsub.f32 %v5984, %v6005
  %v6015 = vsub.f32 %v5985, %v6005
  %v6016 = vsub.f32 %v5986, %v6005
  %v6017 = vsub.f32 %v5987, %v6005
  %v6018 = vmul.f32 %v6006, %v6006
  %v6019 = vmul.f32 %v6007, %v6007
  %v6020 = vmul.f32 %v6008, %v6008
  %v6021 = vmul.f32 %v6009, %v6009
  %v6022 = vmul.f32 %v6010, %v6010
  %v6023 = vmul.f32 %v6011, %v6011
  %v6024 = vmul.f32 %v6012, %v6012
  %v6025 = vmul.f32 %v6013, %v6013
  %v6026 = vmul.f32 %v6014, %v6014
  %v6027 = vmul.f32 %v6015, %v6015
  %v6028 = vmul.f32 %v6016, %v6016
  %v6029 = vmul.f32 %v6017, %v6017
  %v6030 = vadd.f32 %v6018, %v6019
  %v6031 = vadd.f32 %v6030, %v6020
  %v6032 = vadd.f32 %v6031, %v6021
  %v6033 = vadd.f32 %v6032, %v6022
  %v6034 = vadd.f32 %v6033, %v6023
  %6035 = vadd.xlane.f32.xlu0 %v6034
  %v6036 = vpop.xlane.xlu0 %6035
  %v6037 = vadd.f32 %v6024, %v6025
  %v6038 = vadd.f32 %v6037, %v6026
  %v6039 = vadd.f32 %v6038, %v6027
  %v6040 = vadd.f32 %v6039, %v6028
  %v6041 = vadd.f32 %v6040, %v6029
  %6042 = vadd.xlane.f32.xlu0 %v6041
  %v6043 = vpop.xlane.xlu0 %6042
  %v6044 = vmul.f32 %v6036, %v87
  %v6045 = vmul.f32 %v6043, %v87
  %v6046 = vadd.f32 %v6044, 1e-05
  %v6047 = vadd.f32 %v6045, 1e-05
  %v6048 = vrsqrt.pop %v6046
  %v6049 = vrsqrt.pop %v6047
  %v6050 = vmul.f32 %v6006, %v6048
  %v6051 = vmul.f32 %v6007, %v6048
  %v6052 = vmul.f32 %v6008, %v6048
  %v6053 = vmul.f32 %v6009, %v6048
  %v6054 = vmul.f32 %v6010, %v6048
  %v6055 = vmul.f32 %v6011, %v6048
  %v6056 = vmul.f32 %v6012, %v6049
  %v6057 = vmul.f32 %v6013, %v6049
  %v6058 = vmul.f32 %v6014, %v6049
  %v6059 = vmul.f32 %v6015, %v6049
  %v6060 = vmul.f32 %v6016, %v6049
  %v6061 = vmul.f32 %v6017, %v6049
  %v6063 = vlaneseq
  %v6064 = vshrl.u32 %v6063, 7
  %v6065 = vsub.s32 0, %v6064
  %v6066 = vrot.slane %v5988, %v6065
  %v6067 = vlaneseq
  %v6068 = vshrl.u32 %v6067, 7
  %v6069 = vsub.s32 1, %v6068
  %v6070 = vrot.slane %v5988, %v6069
  %v6071 = vlaneseq
  %v6072 = vshrl.u32 %v6071, 7
  %v6073 = vsub.s32 2, %v6072
  %v6074 = vrot.slane %v5988, %v6073
  %v6075 = vlaneseq
  %v6076 = vshrl.u32 %v6075, 7
  %v6077 = vsub.s32 3, %v6076
  %v6078 = vrot.slane %v5988, %v6077
  %v6079 = vlaneseq
  %v6080 = vshrl.u32 %v6079, 7
  %v6081 = vsub.s32 4, %v6080
  %v6082 = vrot.slane %v5988, %v6081
  %v6083 = vlaneseq
  %v6084 = vshrl.u32 %v6083, 7
  %v6085 = vsub.s32 5, %v6084
  %v6086 = vrot.slane %v5988, %v6085
  %v6093 = vmul.f32 %v6050, %v6066
  %v6094 = vmul.f32 %v6051, %v6070
  %v6095 = vmul.f32 %v6052, %v6074
  %v6096 = vmul.f32 %v6053, %v6078
  %v6097 = vmul.f32 %v6054, %v6082
  %v6098 = vmul.f32 %v6055, %v6086
  %v6099 = vmul.f32 %v6056, %v6066
  %v6100 = vmul.f32 %v6057, %v6070
  %v6101 = vmul.f32 %v6058, %v6074
  %v6102 = vmul.f32 %v6059, %v6078
  %v6103 = vmul.f32 %v6060, %v6082
  %v6104 = vmul.f32 %v6061, %v6086
  %v6106 = vlaneseq
  %v6107 = vshrl.u32 %v6106, 7
  %v6108 = vsub.s32 0, %v6107
  %v6109 = vrot.slane %v5989, %v6108
  %v6110 = vlaneseq
  %v6111 = vshrl.u32 %v6110, 7
  %v6112 = vsub.s32 1, %v6111
  %v6113 = vrot.slane %v5989, %v6112
  %v6114 = vlaneseq
  %v6115 = vshrl.u32 %v6114, 7
  %v6116 = vsub.s32 2, %v6115
  %v6117 = vrot.slane %v5989, %v6116
  %v6118 = vlaneseq
  %v6119 = vshrl.u32 %v6118, 7
  %v6120 = vsub.s32 3, %v6119
  %v6121 = vrot.slane %v5989, %v6120
  %v6122 = vlaneseq
  %v6123 = vshrl.u32 %v6122, 7
  %v6124 = vsub.s32 4, %v6123
  %v6125 = vrot.slane %v5989, %v6124
  %v6126 = vlaneseq
  %v6127 = vshrl.u32 %v6126, 7
  %v6128 = vsub.s32 5, %v6127
  %v6129 = vrot.slane %v5989, %v6128
  %v6136 = vadd.f32 %v6093, %v6109
  %v6137 = vadd.f32 %v6094, %v6113
  %v6138 = vadd.f32 %v6095, %v6117
  %v6139 = vadd.f32 %v6096, %v6121
  %v6140 = vadd.f32 %v6097, %v6125
  %v6141 = vadd.f32 %v6098, %v6129
  %v6142 = vadd.f32 %v6099, %v6109
  %v6143 = vadd.f32 %v6100, %v6113
  %v6144 = vadd.f32 %v6101, %v6117
  %v6145 = vadd.f32 %v6102, %v6121
  %v6146 = vadd.f32 %v6103, %v6125
  %v6147 = vadd.f32 %v6104, %v6129
  %6148 = vst [vmem:[%s10] sm:$0xff] %v6136
  %6149 = vst [vmem:[%s10 + $0x8] sm:$0xff] %v6137
  %6150 = vst [vmem:[%s10 + $0x10] sm:$0xff] %v6138
  %6151 = vst [vmem:[%s10 + $0x18] sm:$0xff] %v6139
  %6152 = vst [vmem:[%s10 + $0x20] sm:$0xff] %v6140
  %6153 = vst [vmem:[%s10 + $0x28] sm:$0xff] %v6141
  %6154 = vst [vmem:[%s10 + $0x30] sm:$0xff] %v6142
  %6155 = vst [vmem:[%s10 + $0x38] sm:$0xff] %v6143
  %6156 = vst [vmem:[%s10 + $0x40] sm:$0xff] %v6144
  %6157 = vst [vmem:[%s10 + $0x48] sm:$0xff] %v6145
  %6158 = vst [vmem:[%s10 + $0x50] sm:$0xff] %v6146
  %6159 = vst [vmem:[%s10 + $0x58] sm:$0xff] %v6147
  // Predicated region
  $region42: #{decoder_forward.7} parent=0 // pred_check
    _
  $region43: #{decoder_forward.7} parent=0 // pred_check_branch
    %6161 = sbr.rel (0) target = $region45
  $region44: #{decoder_forward.7} parent=0 // pred_region
    _
  $region45: #{decoder_forward.7} parent=0 // pred_fallthru
    _
  // Predicated region
  $region46: #{decoder_forward.7} parent=0 // pred_check
    _
  $region47: #{decoder_forward.7} parent=0 // pred_check_branch
    %6163 = sbr.rel (0) target = $region49
  $region48: #{decoder_forward.7} parent=0 // pred_region
    _
  $region49: #{decoder_forward.7} parent=0 // pred_fallthru
    _

// kernel: decoder_forward.11
$region0: #{decoder_forward.11}
  #allocation0 [shape = 'u32[]', space=smem, size = 0x4, offset = 0x4, fixed_abs, tag = 'smem constant byte address 0x4 - core index']
  #allocation1 [shape = 'u32[144,128]{1,0:T(1,128)}', space=vmem, size = 0x12000, scoped, tag = 'internal scratch']
  %s0 = inlined_call_operand.vmem [shape: f32[16,768], index: 0, kind: input, shape index: {}]
  %s1 = inlined_call_operand.vmem [shape: f32[16,768], index: 1, kind: input, shape index: {}]
  %s2 = inlined_call_operand.vmem [shape: f32[1,768], index: 2, kind: input, shape index: {}]
  %s3 = inlined_call_operand.vmem [shape: f32[1,768], index: 3, kind: input, shape index: {}]
  %s4 = inlined_call_operand.vmem [shape: bf16[768,1024], index: 4, kind: input, shape index: {}]
  %s5 = inlined_call_operand.vmem [shape: f32[1,1024], index: 5, kind: input, shape index: {}]
  %s6 = inlined_call_operand.vmem [shape: bf16[1024,768], index: 6, kind: input, shape index: {}]
  %s7 = inlined_call_operand.vmem [shape: f32[1,768], index: 7, kind: input, shape index: {}]
  %s8 = inlined_call_operand.vmem [shape: f32[1,768], index: 8, kind: input, shape index: {}]
  %s9 = inlined_call_operand.vmem [shape: f32[1,768], index: 9, kind: input, shape index: {}]
  %s10 = inlined_call_operand.hbm [shape: f32[16,768], index: 10, kind: output, shape index: {}]
  %s11 = sld [smem:[#allocation0]]
  $region50: #{decoder_forward.11} parent=0
    _
  %s13 = ssub.s32 1, %s11
  %s14 = scalar_select 0, %s13, %s11
  $region1: #{decoder_forward.11} parent=0
    #allocation2 [shape = 'u8[49152]{0}', space=vmem, size = 0xc000, scoped, tag = 'output window, operand 0, single buffered']
    #allocation3 [shape = 's32[1]{0}', space=sflag, size = 0x4, scoped, tag = 'scoped memory for decoder_forward.11']
    %15 = vsyncpa [#allocation3], 0
    // Predicated region
    $region2: #{decoder_forward.11} parent=1 // pred_check
      _
    $region3: #{decoder_forward.11} parent=1 // pred_check_branch
      %17 = sbr.rel (0) target = $region5
    $region4: #{decoder_forward.11} parent=1 // pred_region
      _
    $region5: #{decoder_forward.11} parent=1 // pred_fallthru
      _
    // Predicated region
    $region6: #{decoder_forward.11} parent=1 // pred_check
      _
    $region7: #{decoder_forward.11} parent=1 // pred_check_branch
      %19 = sbr.rel (0) target = $region9
    $region8: #{decoder_forward.11} parent=1 // pred_region
      _
    $region9: #{decoder_forward.11} parent=1 // pred_fallthru
      _
    // Predicated region
    $region10: #{decoder_forward.11} parent=1 // pred_check
      _
    $region11: #{decoder_forward.11} parent=1 // pred_check_branch
      %21 = sbr.rel (0) target = $region13
    $region12: #{decoder_forward.11} parent=1 // pred_region
      _
    $region13: #{decoder_forward.11} parent=1 // pred_fallthru
      _
    // Predicated region
    $region14: #{decoder_forward.11} parent=1 // pred_check
      _
    $region15: #{decoder_forward.11} parent=1 // pred_check_branch
      %23 = sbr.rel (0) target = $region17
    $region16: #{decoder_forward.11} parent=1 // pred_region
      _
    $region17: #{decoder_forward.11} parent=1 // pred_fallthru
      _
    // Predicated region
    $region18: #{decoder_forward.11} parent=1 // pred_check
      _
    $region19: #{decoder_forward.11} parent=1 // pred_check_branch
      %25 = sbr.rel (0) target = $region21
    $region20: #{decoder_forward.11} parent=1 // pred_region
      _
    $region21: #{decoder_forward.11} parent=1 // pred_fallthru
      _
    // Predicated region
    $region22: #{decoder_forward.11} parent=1 // pred_check
      _
    $region23: #{decoder_forward.11} parent=1 // pred_check_branch
      %27 = sbr.rel (0) target = $region25
    $region24: #{decoder_forward.11} parent=1 // pred_region
      _
    $region25: #{decoder_forward.11} parent=1 // pred_fallthru
      _
    // Predicated region
    $region26: #{decoder_forward.11} parent=1 // pred_check
      _
    $region27: #{decoder_forward.11} parent=1 // pred_check_branch
      %29 = sbr.rel (0) target = $region29
    $region28: #{decoder_forward.11} parent=1 // pred_region
      _
    $region29: #{decoder_forward.11} parent=1 // pred_fallthru
      _
    // Predicated region
    $region30: #{decoder_forward.11} parent=1 // pred_check
      _
    $region31: #{decoder_forward.11} parent=1 // pred_check_branch
      %31 = sbr.rel (0) target = $region33
    $region32: #{decoder_forward.11} parent=1 // pred_region
      _
    $region33: #{decoder_forward.11} parent=1 // pred_fallthru
      _
    // Predicated region
    $region34: #{decoder_forward.11} parent=1 // pred_check
      _
    $region35: #{decoder_forward.11} parent=1 // pred_check_branch
      %33 = sbr.rel (0) target = $region37
    $region36: #{decoder_forward.11} parent=1 // pred_region
      _
    $region37: #{decoder_forward.11} parent=1 // pred_fallthru
      _
    // Predicated region
    $region38: #{decoder_forward.11} parent=1 // pred_check
      _
    $region39: #{decoder_forward.11} parent=1 // pred_check_branch
      %35 = sbr.rel (0) target = $region41
    $region40: #{decoder_forward.11} parent=1 // pred_region
      _
    $region41: #{decoder_forward.11} parent=1 // pred_fallthru
      _
    %v36 = vld [vmem:[%s0] sm:$0xff]
    %v37 = vld [vmem:[%s0 + $0x8] sm:$0xff]
    %v38 = vld [vmem:[%s0 + $0x10] sm:$0xff]
    %v39 = vld [vmem:[%s0 + $0x18] sm:$0xff]
    %v40 = vld [vmem:[%s0 + $0x20] sm:$0xff]
    %v41 = vld [vmem:[%s0 + $0x28] sm:$0xff]
    %v42 = vld [vmem:[%s0 + $0x30] sm:$0xff]
    %v43 = vld [vmem:[%s0 + $0x38] sm:$0xff]
    %v44 = vld [vmem:[%s0 + $0x40] sm:$0xff]
    %v45 = vld [vmem:[%s0 + $0x48] sm:$0xff]
    %v46 = vld [vmem:[%s0 + $0x50] sm:$0xff]
    %v47 = vld [vmem:[%s0 + $0x58] sm:$0xff]
    %v48 = vld [vmem:[%s1] sm:$0xff]
    %v49 = vld [vmem:[%s1 + $0x8] sm:$0xff]
    %v50 = vld [vmem:[%s1 + $0x10] sm:$0xff]
    %v51 = vld [vmem:[%s1 + $0x18] sm:$0xff]
    %v52 = vld [vmem:[%s1 + $0x20] sm:$0xff]
    %v53 = vld [vmem:[%s1 + $0x28] sm:$0xff]
    %v54 = vld [vmem:[%s1 + $0x30] sm:$0xff]
    %v55 = vld [vmem:[%s1 + $0x38] sm:$0xff]
    %v56 = vld [vmem:[%s1 + $0x40] sm:$0xff]
    %v57 = vld [vmem:[%s1 + $0x48] sm:$0xff]
    %v58 = vld [vmem:[%s1 + $0x50] sm:$0xff]
    %v59 = vld [vmem:[%s1 + $0x58] sm:$0xff]
    %v60 = vadd.f32 %v36, %v48
    %v61 = vadd.f32 %v37, %v49
    %v62 = vadd.f32 %v38, %v50
    %v63 = vadd.f32 %v39, %v51
    %v64 = vadd.f32 %v40, %v52
    %v65 = vadd.f32 %v41, %v53
    %v66 = vadd.f32 %v42, %v54
    %v67 = vadd.f32 %v43, %v55
    %v68 = vadd.f32 %v44, %v56
    %v69 = vadd.f32 %v45, %v57
    %v70 = vadd.f32 %v46, %v58
    %v71 = vadd.f32 %v47, %v59
    %v72 = vld [vmem:[%s2] sm:$0x3f]
    %v73 = vld [vmem:[%s3] sm:$0x3f]
    %v74 = vadd.f32 %v60, %v61
    %v75 = vadd.f32 %v74, %v62
    %v76 = vadd.f32 %v75, %v63
    %v77 = vadd.f32 %v76, %v64
    %v78 = vadd.f32 %v77, %v65
    %79 = vadd.xlane.f32.xlu0 %v78
    %v80 = vpop.xlane.xlu0 %79
    %v81 = vadd.f32 %v66, %v67
    %v82 = vadd.f32 %v81, %v68
    %v83 = vadd.f32 %v82, %v69
    %v84 = vadd.f32 %v83, %v70
    %v85 = vadd.f32 %v84, %v71
    %86 = vadd.xlane.f32.xlu0 %v85
    %v87 = vpop.xlane.xlu0 %86
    %v88 = vrcp.pop 768.0
    %v89 = vmul.f32 %v80, %v88
    %v90 = vmul.f32 %v87, %v88
    %v91 = vsub.f32 %v60, %v89
    %v92 = vsub.f32 %v61, %v89
    %v93 = vsub.f32 %v62, %v89
    %v94 = vsub.f32 %v63, %v89
    %v95 = vsub.f32 %v64, %v89
    %v96 = vsub.f32 %v65, %v89
    %v97 = vsub.f32 %v66, %v90
    %v98 = vsub.f32 %v67, %v90
    %v99 = vsub.f32 %v68, %v90
    %v100 = vsub.f32 %v69, %v90
    %v101 = vsub.f32 %v70, %v90
    %v102 = vsub.f32 %v71, %v90
    %v103 = vmul.f32 %v91, %v91
    %v104 = vmul.f32 %v92, %v92
    %v105 = vmul.f32 %v93, %v93
    %v106 = vmul.f32 %v94, %v94
    %v107 = vmul.f32 %v95, %v95
    %v108 = vmul.f32 %v96, %v96
    %v109 = vmul.f32 %v97, %v97
    %v110 = vmul.f32 %v98, %v98
    %v111 = vmul.f32 %v99, %v99
    %v112 = vmul.f32 %v100, %v100
    %v113 = vmul.f32 %v101, %v101
    %v114 = vmul.f32 %v102, %v102
    %v115 = vadd.f32 %v103, %v104
    %v116 = vadd.f32 %v115, %v105
    %v117 = vadd.f32 %v116, %v106
    %v118 = vadd.f32 %v117, %v107
    %v119 = vadd.f32 %v118, %v108
    %120 = vadd.xlane.f32.xlu0 %v119
    %v121 = vpop.xlane.xlu0 %120
    %v122 = vadd.f32 %v109, %v110
    %v123 = vadd.f32 %v122, %v111
    %v124 = vadd.f32 %v123, %v112
    %v125 = vadd.f32 %v124, %v113
    %v126 = vadd.f32 %v125, %v114
    %127 = vadd.xlane.f32.xlu0 %v126
    %v128 = vpop.xlane.xlu0 %127
    %v129 = vmul.f32 %v121, %v88
    %v130 = vmul.f32 %v128, %v88
    %v131 = vadd.f32 %v129, 1e-05
    %v132 = vadd.f32 %v130, 1e-05
    %v133 = vrsqrt.pop %v131
    %v134 = vrsqrt.pop %v132
    %v135 = vmul.f32 %v91, %v133
    %v136 = vmul.f32 %v92, %v133
    %v137 = vmul.f32 %v93, %v133
    %v138 = vmul.f32 %v94, %v133
    %v139 = vmul.f32 %v95, %v133
    %v140 = vmul.f32 %v96, %v133
    %v141 = vmul.f32 %v97, %v134
    %v142 = vmul.f32 %v98, %v134
    %v143 = vmul.f32 %v99, %v134
    %v144 = vmul.f32 %v100, %v134
    %v145 = vmul.f32 %v101, %v134
    %v146 = vmul.f32 %v102, %v134
    %v148 = vlaneseq
    %v149 = vshrl.u32 %v148, 7
    %v150 = vsub.s32 0, %v149
    %v151 = vrot.slane %v72, %v150
    %v152 = vlaneseq
    %v153 = vshrl.u32 %v152, 7
    %v154 = vsub.s32 1, %v153
    %v155 = vrot.slane %v72, %v154
    %v156 = vlaneseq
    %v157 = vshrl.u32 %v156, 7
    %v158 = vsub.s32 2, %v157
    %v159 = vrot.slane %v72, %v158
    %v160 = vlaneseq
    %v161 = vshrl.u32 %v160, 7
    %v162 = vsub.s32 3, %v161
    %v163 = vrot.slane %v72, %v162
    %v164 = vlaneseq
    %v165 = vshrl.u32 %v164, 7
    %v166 = vsub.s32 4, %v165
    %v167 = vrot.slane %v72, %v166
    %v168 = vlaneseq
    %v169 = vshrl.u32 %v168, 7
    %v170 = vsub.s32 5, %v169
    %v171 = vrot.slane %v72, %v170
    %v178 = vmul.f32 %v135, %v151
    %v179 = vmul.f32 %v136, %v155
    %v180 = vmul.f32 %v137, %v159
    %v181 = vmul.f32 %v138, %v163
    %v182 = vmul.f32 %v139, %v167
    %v183 = vmul.f32 %v140, %v171
    %v184 = vmul.f32 %v141, %v151
    %v185 = vmul.f32 %v142, %v155
    %v186 = vmul.f32 %v143, %v159
    %v187 = vmul.f32 %v144, %v163
    %v188 = vmul.f32 %v145, %v167
    %v189 = vmul.f32 %v146, %v171
    %v191 = vlaneseq
    %v192 = vshrl.u32 %v191, 7
    %v193 = vsub.s32 0, %v192
    %v194 = vrot.slane %v73, %v193
    %v195 = vlaneseq
    %v196 = vshrl.u32 %v195, 7
    %v197 = vsub.s32 1, %v196
    %v198 = vrot.slane %v73, %v197
    %v199 = vlaneseq
    %v200 = vshrl.u32 %v199, 7
    %v201 = vsub.s32 2, %v200
    %v202 = vrot.slane %v73, %v201
    %v203 = vlaneseq
    %v204 = vshrl.u32 %v203, 7
    %v205 = vsub.s32 3, %v204
    %v206 = vrot.slane %v73, %v205
    %v207 = vlaneseq
    %v208 = vshrl.u32 %v207, 7
    %v209 = vsub.s32 4, %v208
    %v210 = vrot.slane %v73, %v209
    %v211 = vlaneseq
    %v212 = vshrl.u32 %v211, 7
    %v213 = vsub.s32 5, %v212
    %v214 = vrot.slane %v73, %v213
    %v221 = vadd.f32 %v178, %v194
    %v222 = vadd.f32 %v179, %v198
    %v223 = vadd.f32 %v180, %v202
    %v224 = vadd.f32 %v181, %v206
    %v225 = vadd.f32 %v182, %v210
    %v226 = vadd.f32 %v183, %v214
    %v227 = vadd.f32 %v184, %v194
    %v228 = vadd.f32 %v185, %v198
    %v229 = vadd.f32 %v186, %v202
    %v230 = vadd.f32 %v187, %v206
    %v231 = vadd.f32 %v188, %v210
    %v232 = vadd.f32 %v189, %v214
    %v233 = vpack.c.bf16 %v227, %v221
    %v234 = vpack.c.bf16 %v228, %v222
    %v235 = vpack.c.bf16 %v229, %v223
    %v236 = vpack.c.bf16 %v230, %v224
    %v237 = vpack.c.bf16 %v231, %v225
    %v238 = vpack.c.bf16 %v232, %v226
    %v239 = vld [vmem:[%s4] sm:$0xff]
    %v240 = vld [vmem:[%s4 + $0x8] sm:$0xff]
    %v241 = vld [vmem:[%s4 + $0x10] sm:$0xff]
    %v242 = vld [vmem:[%s4 + $0x18] sm:$0xff]
    %v243 = vld [vmem:[%s4 + $0x20] sm:$0xff]
    %v244 = vld [vmem:[%s4 + $0x28] sm:$0xff]
    %v245 = vld [vmem:[%s4 + $0x30] sm:$0xff]
    %v246 = vld [vmem:[%s4 + $0x38] sm:$0xff]
    %v247 = vld [vmem:[%s4 + $0x40] sm:$0xff]
    %v248 = vld [vmem:[%s4 + $0x48] sm:$0xff]
    %v249 = vld [vmem:[%s4 + $0x50] sm:$0xff]
    %v250 = vld [vmem:[%s4 + $0x58] sm:$0xff]
    %v251 = vld [vmem:[%s4 + $0x60] sm:$0xff]
    %v252 = vld [vmem:[%s4 + $0x68] sm:$0xff]
    %v253 = vld [vmem:[%s4 + $0x70] sm:$0xff]
    %v254 = vld [vmem:[%s4 + $0x78] sm:$0xff]
    %v255 = vld [vmem:[%s4 + $0x80] sm:$0xff]
    %v256 = vld [vmem:[%s4 + $0x88] sm:$0xff]
    %v257 = vld [vmem:[%s4 + $0x90] sm:$0xff]
    %v258 = vld [vmem:[%s4 + $0x98] sm:$0xff]
    %v259 = vld [vmem:[%s4 + $0xa0] sm:$0xff]
    %v260 = vld [vmem:[%s4 + $0xa8] sm:$0xff]
    %v261 = vld [vmem:[%s4 + $0xb0] sm:$0xff]
    %v262 = vld [vmem:[%s4 + $0xb8] sm:$0xff]
    %v263 = vld [vmem:[%s4 + $0xc0] sm:$0xff]
    %v264 = vld [vmem:[%s4 + $0xc8] sm:$0xff]
    %v265 = vld [vmem:[%s4 + $0xd0] sm:$0xff]
    %v266 = vld [vmem:[%s4 + $0xd8] sm:$0xff]
    %v267 = vld [vmem:[%s4 + $0xe0] sm:$0xff]
    %v268 = vld [vmem:[%s4 + $0xe8] sm:$0xff]
    %v269 = vld [vmem:[%s4 + $0xf0] sm:$0xff]
    %v270 = vld [vmem:[%s4 + $0xf8] sm:$0xff]
    %v271 = vld [vmem:[%s4 + $0x100] sm:$0xff]
    %v272 = vld [vmem:[%s4 + $0x108] sm:$0xff]
    %v273 = vld [vmem:[%s4 + $0x110] sm:$0xff]
    %v274 = vld [vmem:[%s4 + $0x118] sm:$0xff]
    %v275 = vld [vmem:[%s4 + $0x120] sm:$0xff]
    %v276 = vld [vmem:[%s4 + $0x128] sm:$0xff]
    %v277 = vld [vmem:[%s4 + $0x130] sm:$0xff]
    %v278 = vld [vmem:[%s4 + $0x138] sm:$0xff]
    %v279 = vld [vmem:[%s4 + $0x140] sm:$0xff]
    %v280 = vld [vmem:[%s4 + $0x148] sm:$0xff]
    %v281 = vld [vmem:[%s4 + $0x150] sm:$0xff]
    %v282 = vld [vmem:[%s4 + $0x158] sm:$0xff]
    %v283 = vld [vmem:[%s4 + $0x160] sm:$0xff]
    %v284 = vld [vmem:[%s4 + $0x168] sm:$0xff]
    %v285 = vld [vmem:[%s4 + $0x170] sm:$0xff]
    %v286 = vld [vmem:[%s4 + $0x178] sm:$0xff]
    %v287 = vld [vmem:[%s4 + $0x180] sm:$0xff]
    %v288 = vld [vmem:[%s4 + $0x188] sm:$0xff]
    %v289 = vld [vmem:[%s4 + $0x190] sm:$0xff]
    %v290 = vld [vmem:[%s4 + $0x198] sm:$0xff]
    %v291 = vld [vmem:[%s4 + $0x1a0] sm:$0xff]
    %v292 = vld [vmem:[%s4 + $0x1a8] sm:$0xff]
    %v293 = vld [vmem:[%s4 + $0x1b0] sm:$0xff]
    %v294 = vld [vmem:[%s4 + $0x1b8] sm:$0xff]
    %v295 = vld [vmem:[%s4 + $0x1c0] sm:$0xff]
    %v296 = vld [vmem:[%s4 + $0x1c8] sm:$0xff]
    %v297 = vld [vmem:[%s4 + $0x1d0] sm:$0xff]
    %v298 = vld [vmem:[%s4 + $0x1d8] sm:$0xff]
    %v299 = vld [vmem:[%s4 + $0x1e0] sm:$0xff]
    %v300 = vld [vmem:[%s4 + $0x1e8] sm:$0xff]
    %v301 = vld [vmem:[%s4 + $0x1f0] sm:$0xff]
    %v302 = vld [vmem:[%s4 + $0x1f8] sm:$0xff]
    %v303 = vld [vmem:[%s4 + $0x200] sm:$0xff]
    %v304 = vld [vmem:[%s4 + $0x208] sm:$0xff]
    %v305 = vld [vmem:[%s4 + $0x210] sm:$0xff]
    %v306 = vld [vmem:[%s4 + $0x218] sm:$0xff]
    %v307 = vld [vmem:[%s4 + $0x220] sm:$0xff]
    %v308 = vld [vmem:[%s4 + $0x228] sm:$0xff]
    %v309 = vld [vmem:[%s4 + $0x230] sm:$0xff]
    %v310 = vld [vmem:[%s4 + $0x238] sm:$0xff]
    %v311 = vld [vmem:[%s4 + $0x240] sm:$0xff]
    %v312 = vld [vmem:[%s4 + $0x248] sm:$0xff]
    %v313 = vld [vmem:[%s4 + $0x250] sm:$0xff]
    %v314 = vld [vmem:[%s4 + $0x258] sm:$0xff]
    %v315 = vld [vmem:[%s4 + $0x260] sm:$0xff]
    %v316 = vld [vmem:[%s4 + $0x268] sm:$0xff]
    %v317 = vld [vmem:[%s4 + $0x270] sm:$0xff]
    %v318 = vld [vmem:[%s4 + $0x278] sm:$0xff]
    %v319 = vld [vmem:[%s4 + $0x280] sm:$0xff]
    %v320 = vld [vmem:[%s4 + $0x288] sm:$0xff]
    %v321 = vld [vmem:[%s4 + $0x290] sm:$0xff]
    %v322 = vld [vmem:[%s4 + $0x298] sm:$0xff]
    %v323 = vld [vmem:[%s4 + $0x2a0] sm:$0xff]
    %v324 = vld [vmem:[%s4 + $0x2a8] sm:$0xff]
    %v325 = vld [vmem:[%s4 + $0x2b0] sm:$0xff]
    %v326 = vld [vmem:[%s4 + $0x2b8] sm:$0xff]
    %v327 = vld [vmem:[%s4 + $0x2c0] sm:$0xff]
    %v328 = vld [vmem:[%s4 + $0x2c8] sm:$0xff]
    %v329 = vld [vmem:[%s4 + $0x2d0] sm:$0xff]
    %v330 = vld [vmem:[%s4 + $0x2d8] sm:$0xff]
    %v331 = vld [vmem:[%s4 + $0x2e0] sm:$0xff]
    %v332 = vld [vmem:[%s4 + $0x2e8] sm:$0xff]
    %v333 = vld [vmem:[%s4 + $0x2f0] sm:$0xff]
    %v334 = vld [vmem:[%s4 + $0x2f8] sm:$0xff]
    %v335 = vld [vmem:[%s4 + $0x300] sm:$0xff]
    %v336 = vld [vmem:[%s4 + $0x308] sm:$0xff]
    %v337 = vld [vmem:[%s4 + $0x310] sm:$0xff]
    %v338 = vld [vmem:[%s4 + $0x318] sm:$0xff]
    %v339 = vld [vmem:[%s4 + $0x320] sm:$0xff]
    %v340 = vld [vmem:[%s4 + $0x328] sm:$0xff]
    %v341 = vld [vmem:[%s4 + $0x330] sm:$0xff]
    %v342 = vld [vmem:[%s4 + $0x338] sm:$0xff]
    %v343 = vld [vmem:[%s4 + $0x340] sm:$0xff]
    %v344 = vld [vmem:[%s4 + $0x348] sm:$0xff]
    %v345 = vld [vmem:[%s4 + $0x350] sm:$0xff]
    %v346 = vld [vmem:[%s4 + $0x358] sm:$0xff]
    %v347 = vld [vmem:[%s4 + $0x360] sm:$0xff]
    %v348 = vld [vmem:[%s4 + $0x368] sm:$0xff]
    %v349 = vld [vmem:[%s4 + $0x370] sm:$0xff]
    %v350 = vld [vmem:[%s4 + $0x378] sm:$0xff]
    %v351 = vld [vmem:[%s4 + $0x380] sm:$0xff]
    %v352 = vld [vmem:[%s4 + $0x388] sm:$0xff]
    %v353 = vld [vmem:[%s4 + $0x390] sm:$0xff]
    %v354 = vld [vmem:[%s4 + $0x398] sm:$0xff]
    %v355 = vld [vmem:[%s4 + $0x3a0] sm:$0xff]
    %v356 = vld [vmem:[%s4 + $0x3a8] sm:$0xff]
    %v357 = vld [vmem:[%s4 + $0x3b0] sm:$0xff]
    %v358 = vld [vmem:[%s4 + $0x3b8] sm:$0xff]
    %v359 = vld [vmem:[%s4 + $0x3c0] sm:$0xff]
    %v360 = vld [vmem:[%s4 + $0x3c8] sm:$0xff]
    %v361 = vld [vmem:[%s4 + $0x3d0] sm:$0xff]
    %v362 = vld [vmem:[%s4 + $0x3d8] sm:$0xff]
    %v363 = vld [vmem:[%s4 + $0x3e0] sm:$0xff]
    %v364 = vld [vmem:[%s4 + $0x3e8] sm:$0xff]
    %v365 = vld [vmem:[%s4 + $0x3f0] sm:$0xff]
    %v366 = vld [vmem:[%s4 + $0x3f8] sm:$0xff]
    %v367 = vld [vmem:[%s4 + $0x400] sm:$0xff]
    %v368 = vld [vmem:[%s4 + $0x408] sm:$0xff]
    %v369 = vld [vmem:[%s4 + $0x410] sm:$0xff]
    %v370 = vld [vmem:[%s4 + $0x418] sm:$0xff]
    %v371 = vld [vmem:[%s4 + $0x420] sm:$0xff]
    %v372 = vld [vmem:[%s4 + $0x428] sm:$0xff]
    %v373 = vld [vmem:[%s4 + $0x430] sm:$0xff]
    %v374 = vld [vmem:[%s4 + $0x438] sm:$0xff]
    %v375 = vld [vmem:[%s4 + $0x440] sm:$0xff]
    %v376 = vld [vmem:[%s4 + $0x448] sm:$0xff]
    %v377 = vld [vmem:[%s4 + $0x450] sm:$0xff]
    %v378 = vld [vmem:[%s4 + $0x458] sm:$0xff]
    %v379 = vld [vmem:[%s4 + $0x460] sm:$0xff]
    %v380 = vld [vmem:[%s4 + $0x468] sm:$0xff]
    %v381 = vld [vmem:[%s4 + $0x470] sm:$0xff]
    %v382 = vld [vmem:[%s4 + $0x478] sm:$0xff]
    %v383 = vld [vmem:[%s4 + $0x480] sm:$0xff]
    %v384 = vld [vmem:[%s4 + $0x488] sm:$0xff]
    %v385 = vld [vmem:[%s4 + $0x490] sm:$0xff]
    %v386 = vld [vmem:[%s4 + $0x498] sm:$0xff]
    %v387 = vld [vmem:[%s4 + $0x4a0] sm:$0xff]
    %v388 = vld [vmem:[%s4 + $0x4a8] sm:$0xff]
    %v389 = vld [vmem:[%s4 + $0x4b0] sm:$0xff]
    %v390 = vld [vmem:[%s4 + $0x4b8] sm:$0xff]
    %v391 = vld [vmem:[%s4 + $0x4c0] sm:$0xff]
    %v392 = vld [vmem:[%s4 + $0x4c8] sm:$0xff]
    %v393 = vld [vmem:[%s4 + $0x4d0] sm:$0xff]
    %v394 = vld [vmem:[%s4 + $0x4d8] sm:$0xff]
    %v395 = vld [vmem:[%s4 + $0x4e0] sm:$0xff]
    %v396 = vld [vmem:[%s4 + $0x4e8] sm:$0xff]
    %v397 = vld [vmem:[%s4 + $0x4f0] sm:$0xff]
    %v398 = vld [vmem:[%s4 + $0x4f8] sm:$0xff]
    %v399 = vld [vmem:[%s4 + $0x500] sm:$0xff]
    %v400 = vld [vmem:[%s4 + $0x508] sm:$0xff]
    %v401 = vld [vmem:[%s4 + $0x510] sm:$0xff]
    %v402 = vld [vmem:[%s4 + $0x518] sm:$0xff]
    %v403 = vld [vmem:[%s4 + $0x520] sm:$0xff]
    %v404 = vld [vmem:[%s4 + $0x528] sm:$0xff]
    %v405 = vld [vmem:[%s4 + $0x530] sm:$0xff]
    %v406 = vld [vmem:[%s4 + $0x538] sm:$0xff]
    %v407 = vld [vmem:[%s4 + $0x540] sm:$0xff]
    %v408 = vld [vmem:[%s4 + $0x548] sm:$0xff]
    %v409 = vld [vmem:[%s4 + $0x550] sm:$0xff]
    %v410 = vld [vmem:[%s4 + $0x558] sm:$0xff]
    %v411 = vld [vmem:[%s4 + $0x560] sm:$0xff]
    %v412 = vld [vmem:[%s4 + $0x568] sm:$0xff]
    %v413 = vld [vmem:[%s4 + $0x570] sm:$0xff]
    %v414 = vld [vmem:[%s4 + $0x578] sm:$0xff]
    %v415 = vld [vmem:[%s4 + $0x580] sm:$0xff]
    %v416 = vld [vmem:[%s4 + $0x588] sm:$0xff]
    %v417 = vld [vmem:[%s4 + $0x590] sm:$0xff]
    %v418 = vld [vmem:[%s4 + $0x598] sm:$0xff]
    %v419 = vld [vmem:[%s4 + $0x5a0] sm:$0xff]
    %v420 = vld [vmem:[%s4 + $0x5a8] sm:$0xff]
    %v421 = vld [vmem:[%s4 + $0x5b0] sm:$0xff]
    %v422 = vld [vmem:[%s4 + $0x5b8] sm:$0xff]
    %v423 = vld [vmem:[%s4 + $0x5c0] sm:$0xff]
    %v424 = vld [vmem:[%s4 + $0x5c8] sm:$0xff]
    %v425 = vld [vmem:[%s4 + $0x5d0] sm:$0xff]
    %v426 = vld [vmem:[%s4 + $0x5d8] sm:$0xff]
    %v427 = vld [vmem:[%s4 + $0x5e0] sm:$0xff]
    %v428 = vld [vmem:[%s4 + $0x5e8] sm:$0xff]
    %v429 = vld [vmem:[%s4 + $0x5f0] sm:$0xff]
    %v430 = vld [vmem:[%s4 + $0x5f8] sm:$0xff]
    %v431 = vld [vmem:[%s4 + $0x600] sm:$0xff]
    %v432 = vld [vmem:[%s4 + $0x608] sm:$0xff]
    %v433 = vld [vmem:[%s4 + $0x610] sm:$0xff]
    %v434 = vld [vmem:[%s4 + $0x618] sm:$0xff]
    %v435 = vld [vmem:[%s4 + $0x620] sm:$0xff]
    %v436 = vld [vmem:[%s4 + $0x628] sm:$0xff]
    %v437 = vld [vmem:[%s4 + $0x630] sm:$0xff]
    %v438 = vld [vmem:[%s4 + $0x638] sm:$0xff]
    %v439 = vld [vmem:[%s4 + $0x640] sm:$0xff]
    %v440 = vld [vmem:[%s4 + $0x648] sm:$0xff]
    %v441 = vld [vmem:[%s4 + $0x650] sm:$0xff]
    %v442 = vld [vmem:[%s4 + $0x658] sm:$0xff]
    %v443 = vld [vmem:[%s4 + $0x660] sm:$0xff]
    %v444 = vld [vmem:[%s4 + $0x668] sm:$0xff]
    %v445 = vld [vmem:[%s4 + $0x670] sm:$0xff]
    %v446 = vld [vmem:[%s4 + $0x678] sm:$0xff]
    %v447 = vld [vmem:[%s4 + $0x680] sm:$0xff]
    %v448 = vld [vmem:[%s4 + $0x688] sm:$0xff]
    %v449 = vld [vmem:[%s4 + $0x690] sm:$0xff]
    %v450 = vld [vmem:[%s4 + $0x698] sm:$0xff]
    %v451 = vld [vmem:[%s4 + $0x6a0] sm:$0xff]
    %v452 = vld [vmem:[%s4 + $0x6a8] sm:$0xff]
    %v453 = vld [vmem:[%s4 + $0x6b0] sm:$0xff]
    %v454 = vld [vmem:[%s4 + $0x6b8] sm:$0xff]
    %v455 = vld [vmem:[%s4 + $0x6c0] sm:$0xff]
    %v456 = vld [vmem:[%s4 + $0x6c8] sm:$0xff]
    %v457 = vld [vmem:[%s4 + $0x6d0] sm:$0xff]
    %v458 = vld [vmem:[%s4 + $0x6d8] sm:$0xff]
    %v459 = vld [vmem:[%s4 + $0x6e0] sm:$0xff]
    %v460 = vld [vmem:[%s4 + $0x6e8] sm:$0xff]
    %v461 = vld [vmem:[%s4 + $0x6f0] sm:$0xff]
    %v462 = vld [vmem:[%s4 + $0x6f8] sm:$0xff]
    %v463 = vld [vmem:[%s4 + $0x700] sm:$0xff]
    %v464 = vld [vmem:[%s4 + $0x708] sm:$0xff]
    %v465 = vld [vmem:[%s4 + $0x710] sm:$0xff]
    %v466 = vld [vmem:[%s4 + $0x718] sm:$0xff]
    %v467 = vld [vmem:[%s4 + $0x720] sm:$0xff]
    %v468 = vld [vmem:[%s4 + $0x728] sm:$0xff]
    %v469 = vld [vmem:[%s4 + $0x730] sm:$0xff]
    %v470 = vld [vmem:[%s4 + $0x738] sm:$0xff]
    %v471 = vld [vmem:[%s4 + $0x740] sm:$0xff]
    %v472 = vld [vmem:[%s4 + $0x748] sm:$0xff]
    %v473 = vld [vmem:[%s4 + $0x750] sm:$0xff]
    %v474 = vld [vmem:[%s4 + $0x758] sm:$0xff]
    %v475 = vld [vmem:[%s4 + $0x760] sm:$0xff]
    %v476 = vld [vmem:[%s4 + $0x768] sm:$0xff]
    %v477 = vld [vmem:[%s4 + $0x770] sm:$0xff]
    %v478 = vld [vmem:[%s4 + $0x778] sm:$0xff]
    %v479 = vld [vmem:[%s4 + $0x780] sm:$0xff]
    %v480 = vld [vmem:[%s4 + $0x788] sm:$0xff]
    %v481 = vld [vmem:[%s4 + $0x790] sm:$0xff]
    %v482 = vld [vmem:[%s4 + $0x798] sm:$0xff]
    %v483 = vld [vmem:[%s4 + $0x7a0] sm:$0xff]
    %v484 = vld [vmem:[%s4 + $0x7a8] sm:$0xff]
    %v485 = vld [vmem:[%s4 + $0x7b0] sm:$0xff]
    %v486 = vld [vmem:[%s4 + $0x7b8] sm:$0xff]
    %v487 = vld [vmem:[%s4 + $0x7c0] sm:$0xff]
    %v488 = vld [vmem:[%s4 + $0x7c8] sm:$0xff]
    %v489 = vld [vmem:[%s4 + $0x7d0] sm:$0xff]
    %v490 = vld [vmem:[%s4 + $0x7d8] sm:$0xff]
    %v491 = vld [vmem:[%s4 + $0x7e0] sm:$0xff]
    %v492 = vld [vmem:[%s4 + $0x7e8] sm:$0xff]
    %v493 = vld [vmem:[%s4 + $0x7f0] sm:$0xff]
    %v494 = vld [vmem:[%s4 + $0x7f8] sm:$0xff]
    %v495 = vld [vmem:[%s4 + $0x800] sm:$0xff]
    %v496 = vld [vmem:[%s4 + $0x808] sm:$0xff]
    %v497 = vld [vmem:[%s4 + $0x810] sm:$0xff]
    %v498 = vld [vmem:[%s4 + $0x818] sm:$0xff]
    %v499 = vld [vmem:[%s4 + $0x820] sm:$0xff]
    %v500 = vld [vmem:[%s4 + $0x828] sm:$0xff]
    %v501 = vld [vmem:[%s4 + $0x830] sm:$0xff]
    %v502 = vld [vmem:[%s4 + $0x838] sm:$0xff]
    %v503 = vld [vmem:[%s4 + $0x840] sm:$0xff]
    %v504 = vld [vmem:[%s4 + $0x848] sm:$0xff]
    %v505 = vld [vmem:[%s4 + $0x850] sm:$0xff]
    %v506 = vld [vmem:[%s4 + $0x858] sm:$0xff]
    %v507 = vld [vmem:[%s4 + $0x860] sm:$0xff]
    %v508 = vld [vmem:[%s4 + $0x868] sm:$0xff]
    %v509 = vld [vmem:[%s4 + $0x870] sm:$0xff]
    %v510 = vld [vmem:[%s4 + $0x878] sm:$0xff]
    %v511 = vld [vmem:[%s4 + $0x880] sm:$0xff]
    %v512 = vld [vmem:[%s4 + $0x888] sm:$0xff]
    %v513 = vld [vmem:[%s4 + $0x890] sm:$0xff]
    %v514 = vld [vmem:[%s4 + $0x898] sm:$0xff]
    %v515 = vld [vmem:[%s4 + $0x8a0] sm:$0xff]
    %v516 = vld [vmem:[%s4 + $0x8a8] sm:$0xff]
    %v517 = vld [vmem:[%s4 + $0x8b0] sm:$0xff]
    %v518 = vld [vmem:[%s4 + $0x8b8] sm:$0xff]
    %v519 = vld [vmem:[%s4 + $0x8c0] sm:$0xff]
    %v520 = vld [vmem:[%s4 + $0x8c8] sm:$0xff]
    %v521 = vld [vmem:[%s4 + $0x8d0] sm:$0xff]
    %v522 = vld [vmem:[%s4 + $0x8d8] sm:$0xff]
    %v523 = vld [vmem:[%s4 + $0x8e0] sm:$0xff]
    %v524 = vld [vmem:[%s4 + $0x8e8] sm:$0xff]
    %v525 = vld [vmem:[%s4 + $0x8f0] sm:$0xff]
    %v526 = vld [vmem:[%s4 + $0x8f8] sm:$0xff]
    %v527 = vld [vmem:[%s4 + $0x900] sm:$0xff]
    %v528 = vld [vmem:[%s4 + $0x908] sm:$0xff]
    %v529 = vld [vmem:[%s4 + $0x910] sm:$0xff]
    %v530 = vld [vmem:[%s4 + $0x918] sm:$0xff]
    %v531 = vld [vmem:[%s4 + $0x920] sm:$0xff]
    %v532 = vld [vmem:[%s4 + $0x928] sm:$0xff]
    %v533 = vld [vmem:[%s4 + $0x930] sm:$0xff]
    %v534 = vld [vmem:[%s4 + $0x938] sm:$0xff]
    %v535 = vld [vmem:[%s4 + $0x940] sm:$0xff]
    %v536 = vld [vmem:[%s4 + $0x948] sm:$0xff]
    %v537 = vld [vmem:[%s4 + $0x950] sm:$0xff]
    %v538 = vld [vmem:[%s4 + $0x958] sm:$0xff]
    %v539 = vld [vmem:[%s4 + $0x960] sm:$0xff]
    %v540 = vld [vmem:[%s4 + $0x968] sm:$0xff]
    %v541 = vld [vmem:[%s4 + $0x970] sm:$0xff]
    %v542 = vld [vmem:[%s4 + $0x978] sm:$0xff]
    %v543 = vld [vmem:[%s4 + $0x980] sm:$0xff]
    %v544 = vld [vmem:[%s4 + $0x988] sm:$0xff]
    %v545 = vld [vmem:[%s4 + $0x990] sm:$0xff]
    %v546 = vld [vmem:[%s4 + $0x998] sm:$0xff]
    %v547 = vld [vmem:[%s4 + $0x9a0] sm:$0xff]
    %v548 = vld [vmem:[%s4 + $0x9a8] sm:$0xff]
    %v549 = vld [vmem:[%s4 + $0x9b0] sm:$0xff]
    %v550 = vld [vmem:[%s4 + $0x9b8] sm:$0xff]
    %v551 = vld [vmem:[%s4 + $0x9c0] sm:$0xff]
    %v552 = vld [vmem:[%s4 + $0x9c8] sm:$0xff]
    %v553 = vld [vmem:[%s4 + $0x9d0] sm:$0xff]
    %v554 = vld [vmem:[%s4 + $0x9d8] sm:$0xff]
    %v555 = vld [vmem:[%s4 + $0x9e0] sm:$0xff]
    %v556 = vld [vmem:[%s4 + $0x9e8] sm:$0xff]
    %v557 = vld [vmem:[%s4 + $0x9f0] sm:$0xff]
    %v558 = vld [vmem:[%s4 + $0x9f8] sm:$0xff]
    %v559 = vld [vmem:[%s4 + $0xa00] sm:$0xff]
    %v560 = vld [vmem:[%s4 + $0xa08] sm:$0xff]
    %v561 = vld [vmem:[%s4 + $0xa10] sm:$0xff]
    %v562 = vld [vmem:[%s4 + $0xa18] sm:$0xff]
    %v563 = vld [vmem:[%s4 + $0xa20] sm:$0xff]
    %v564 = vld [vmem:[%s4 + $0xa28] sm:$0xff]
    %v565 = vld [vmem:[%s4 + $0xa30] sm:$0xff]
    %v566 = vld [vmem:[%s4 + $0xa38] sm:$0xff]
    %v567 = vld [vmem:[%s4 + $0xa40] sm:$0xff]
    %v568 = vld [vmem:[%s4 + $0xa48] sm:$0xff]
    %v569 = vld [vmem:[%s4 + $0xa50] sm:$0xff]
    %v570 = vld [vmem:[%s4 + $0xa58] sm:$0xff]
    %v571 = vld [vmem:[%s4 + $0xa60] sm:$0xff]
    %v572 = vld [vmem:[%s4 + $0xa68] sm:$0xff]
    %v573 = vld [vmem:[%s4 + $0xa70] sm:$0xff]
    %v574 = vld [vmem:[%s4 + $0xa78] sm:$0xff]
    %v575 = vld [vmem:[%s4 + $0xa80] sm:$0xff]
    %v576 = vld [vmem:[%s4 + $0xa88] sm:$0xff]
    %v577 = vld [vmem:[%s4 + $0xa90] sm:$0xff]
    %v578 = vld [vmem:[%s4 + $0xa98] sm:$0xff]
    %v579 = vld [vmem:[%s4 + $0xaa0] sm:$0xff]
    %v580 = vld [vmem:[%s4 + $0xaa8] sm:$0xff]
    %v581 = vld [vmem:[%s4 + $0xab0] sm:$0xff]
    %v582 = vld [vmem:[%s4 + $0xab8] sm:$0xff]
    %v583 = vld [vmem:[%s4 + $0xac0] sm:$0xff]
    %v584 = vld [vmem:[%s4 + $0xac8] sm:$0xff]
    %v585 = vld [vmem:[%s4 + $0xad0] sm:$0xff]
    %v586 = vld [vmem:[%s4 + $0xad8] sm:$0xff]
    %v587 = vld [vmem:[%s4 + $0xae0] sm:$0xff]
    %v588 = vld [vmem:[%s4 + $0xae8] sm:$0xff]
    %v589 = vld [vmem:[%s4 + $0xaf0] sm:$0xff]
    %v590 = vld [vmem:[%s4 + $0xaf8] sm:$0xff]
    %v591 = vld [vmem:[%s4 + $0xb00] sm:$0xff]
    %v592 = vld [vmem:[%s4 + $0xb08] sm:$0xff]
    %v593 = vld [vmem:[%s4 + $0xb10] sm:$0xff]
    %v594 = vld [vmem:[%s4 + $0xb18] sm:$0xff]
    %v595 = vld [vmem:[%s4 + $0xb20] sm:$0xff]
    %v596 = vld [vmem:[%s4 + $0xb28] sm:$0xff]
    %v597 = vld [vmem:[%s4 + $0xb30] sm:$0xff]
    %v598 = vld [vmem:[%s4 + $0xb38] sm:$0xff]
    %v599 = vld [vmem:[%s4 + $0xb40] sm:$0xff]
    %v600 = vld [vmem:[%s4 + $0xb48] sm:$0xff]
    %v601 = vld [vmem:[%s4 + $0xb50] sm:$0xff]
    %v602 = vld [vmem:[%s4 + $0xb58] sm:$0xff]
    %v603 = vld [vmem:[%s4 + $0xb60] sm:$0xff]
    %v604 = vld [vmem:[%s4 + $0xb68] sm:$0xff]
    %v605 = vld [vmem:[%s4 + $0xb70] sm:$0xff]
    %v606 = vld [vmem:[%s4 + $0xb78] sm:$0xff]
    %v607 = vld [vmem:[%s4 + $0xb80] sm:$0xff]
    %v608 = vld [vmem:[%s4 + $0xb88] sm:$0xff]
    %v609 = vld [vmem:[%s4 + $0xb90] sm:$0xff]
    %v610 = vld [vmem:[%s4 + $0xb98] sm:$0xff]
    %v611 = vld [vmem:[%s4 + $0xba0] sm:$0xff]
    %v612 = vld [vmem:[%s4 + $0xba8] sm:$0xff]
    %v613 = vld [vmem:[%s4 + $0xbb0] sm:$0xff]
    %v614 = vld [vmem:[%s4 + $0xbb8] sm:$0xff]
    %v615 = vld [vmem:[%s4 + $0xbc0] sm:$0xff]
    %v616 = vld [vmem:[%s4 + $0xbc8] sm:$0xff]
    %v617 = vld [vmem:[%s4 + $0xbd0] sm:$0xff]
    %v618 = vld [vmem:[%s4 + $0xbd8] sm:$0xff]
    %v619 = vld [vmem:[%s4 + $0xbe0] sm:$0xff]
    %v620 = vld [vmem:[%s4 + $0xbe8] sm:$0xff]
    %v621 = vld [vmem:[%s4 + $0xbf0] sm:$0xff]
    %v622 = vld [vmem:[%s4 + $0xbf8] sm:$0xff]
    %v623 = vld [vmem:[%s5] sm:$0xff]
    %v625 = vlaneseq
    %v626 = vshrl.u32 %v625, 7
    %v627 = vsub.s32 0, %v626
    %v628 = vrot.slane %v623, %v627
    %v629 = vlaneseq
    %v630 = vshrl.u32 %v629, 7
    %v631 = vsub.s32 1, %v630
    %v632 = vrot.slane %v623, %v631
    %v633 = vlaneseq
    %v634 = vshrl.u32 %v633, 7
    %v635 = vsub.s32 2, %v634
    %v636 = vrot.slane %v623, %v635
    %v637 = vlaneseq
    %v638 = vshrl.u32 %v637, 7
    %v639 = vsub.s32 3, %v638
    %v640 = vrot.slane %v623, %v639
    %v641 = vlaneseq
    %v642 = vshrl.u32 %v641, 7
    %v643 = vsub.s32 4, %v642
    %v644 = vrot.slane %v623, %v643
    %v645 = vlaneseq
    %v646 = vshrl.u32 %v645, 7
    %v647 = vsub.s32 5, %v646
    %v648 = vrot.slane %v623, %v647
    %v649 = vlaneseq
    %v650 = vshrl.u32 %v649, 7
    %v651 = vsub.s32 6, %v650
    %v652 = vrot.slane %v623, %v651
    %v653 = vlaneseq
    %v654 = vshrl.u32 %v653, 7
    %v655 = vsub.s32 7, %v654
    %v656 = vrot.slane %v623, %v655
    %v1049 = vunpack.c.l.b16 %v239
    %v1050 = vunpack.c.h.b16 %v239
    %v1051 = vunpack.c.l.b16 %v240
    %v1052 = vunpack.c.h.b16 %v240
    %v1053 = vunpack.c.l.b16 %v241
    %v1054 = vunpack.c.h.b16 %v241
    %v1055 = vunpack.c.l.b16 %v242
    %v1056 = vunpack.c.h.b16 %v242
    %v1057 = vunpack.c.l.b16 %v243
    %v1058 = vunpack.c.h.b16 %v243
    %v1059 = vunpack.c.l.b16 %v244
    %v1060 = vunpack.c.h.b16 %v244
    %v1061 = vunpack.c.l.b16 %v245
    %v1062 = vunpack.c.h.b16 %v245
    %v1063 = vunpack.c.l.b16 %v246
    %v1064 = vunpack.c.h.b16 %v246
    %v1065 = vunpack.c.l.b16 %v247
    %v1066 = vunpack.c.h.b16 %v247
    %v1067 = vunpack.c.l.b16 %v248
    %v1068 = vunpack.c.h.b16 %v248
    %v1069 = vunpack.c.l.b16 %v249
    %v1070 = vunpack.c.h.b16 %v249
    %v1071 = vunpack.c.l.b16 %v250
    %v1072 = vunpack.c.h.b16 %v250
    %v1073 = vunpack.c.l.b16 %v251
    %v1074 = vunpack.c.h.b16 %v251
    %v1075 = vunpack.c.l.b16 %v252
    %v1076 = vunpack.c.h.b16 %v252
    %v1077 = vunpack.c.l.b16 %v253
    %v1078 = vunpack.c.h.b16 %v253
    %v1079 = vunpack.c.l.b16 %v254
    %v1080 = vunpack.c.h.b16 %v254
    %v1081 = vunpack.c.l.b16 %v255
    %v1082 = vunpack.c.h.b16 %v255
    %v1083 = vunpack.c.l.b16 %v256
    %v1084 = vunpack.c.h.b16 %v256
    %v1085 = vunpack.c.l.b16 %v257
    %v1086 = vunpack.c.h.b16 %v257
    %v1087 = vunpack.c.l.b16 %v258
    %v1088 = vunpack.c.h.b16 %v258
    %v1089 = vunpack.c.l.b16 %v259
    %v1090 = vunpack.c.h.b16 %v259
    %v1091 = vunpack.c.l.b16 %v260
    %v1092 = vunpack.c.h.b16 %v260
    %v1093 = vunpack.c.l.b16 %v261
    %v1094 = vunpack.c.h.b16 %v261
    %v1095 = vunpack.c.l.b16 %v262
    %v1096 = vunpack.c.h.b16 %v262
    %v1097 = vunpack.c.l.b16 %v263
    %v1098 = vunpack.c.h.b16 %v263
    %v1099 = vunpack.c.l.b16 %v264
    %v1100 = vunpack.c.h.b16 %v264
    %v1101 = vunpack.c.l.b16 %v265
    %v1102 = vunpack.c.h.b16 %v265
    %v1103 = vunpack.c.l.b16 %v266
    %v1104 = vunpack.c.h.b16 %v266
    %v1105 = vunpack.c.l.b16 %v267
    %v1106 = vunpack.c.h.b16 %v267
    %v1107 = vunpack.c.l.b16 %v268
    %v1108 = vunpack.c.h.b16 %v268
    %v1109 = vunpack.c.l.b16 %v269
    %v1110 = vunpack.c.h.b16 %v269
    %v1111 = vunpack.c.l.b16 %v270
    %v1112 = vunpack.c.h.b16 %v270
    %v1113 = vunpack.c.l.b16 %v271
    %v1114 = vunpack.c.h.b16 %v271
    %v1115 = vunpack.c.l.b16 %v272
    %v1116 = vunpack.c.h.b16 %v272
    %v1117 = vunpack.c.l.b16 %v273
    %v1118 = vunpack.c.h.b16 %v273
    %v1119 = vunpack.c.l.b16 %v274
    %v1120 = vunpack.c.h.b16 %v274
    %v1121 = vunpack.c.l.b16 %v275
    %v1122 = vunpack.c.h.b16 %v275
    %v1123 = vunpack.c.l.b16 %v276
    %v1124 = vunpack.c.h.b16 %v276
    %v1125 = vunpack.c.l.b16 %v277
    %v1126 = vunpack.c.h.b16 %v277
    %v1127 = vunpack.c.l.b16 %v278
    %v1128 = vunpack.c.h.b16 %v278
    %v1129 = vunpack.c.l.b16 %v279
    %v1130 = vunpack.c.h.b16 %v279
    %v1131 = vunpack.c.l.b16 %v280
    %v1132 = vunpack.c.h.b16 %v280
    %v1133 = vunpack.c.l.b16 %v281
    %v1134 = vunpack.c.h.b16 %v281
    %v1135 = vunpack.c.l.b16 %v282
    %v1136 = vunpack.c.h.b16 %v282
    %v1137 = vunpack.c.l.b16 %v283
    %v1138 = vunpack.c.h.b16 %v283
    %v1139 = vunpack.c.l.b16 %v284
    %v1140 = vunpack.c.h.b16 %v284
    %v1141 = vunpack.c.l.b16 %v285
    %v1142 = vunpack.c.h.b16 %v285
    %v1143 = vunpack.c.l.b16 %v286
    %v1144 = vunpack.c.h.b16 %v286
    %v1145 = vunpack.c.l.b16 %v287
    %v1146 = vunpack.c.h.b16 %v287
    %v1147 = vunpack.c.l.b16 %v288
    %v1148 = vunpack.c.h.b16 %v288
    %v1149 = vunpack.c.l.b16 %v289
    %v1150 = vunpack.c.h.b16 %v289
    %v1151 = vunpack.c.l.b16 %v290
    %v1152 = vunpack.c.h.b16 %v290
    %v1153 = vunpack.c.l.b16 %v291
    %v1154 = vunpack.c.h.b16 %v291
    %v1155 = vunpack.c.l.b16 %v292
    %v1156 = vunpack.c.h.b16 %v292
    %v1157 = vunpack.c.l.b16 %v293
    %v1158 = vunpack.c.h.b16 %v293
    %v1159 = vunpack.c.l.b16 %v294
    %v1160 = vunpack.c.h.b16 %v294
    %v1161 = vunpack.c.l.b16 %v295
    %v1162 = vunpack.c.h.b16 %v295
    %v1163 = vunpack.c.l.b16 %v296
    %v1164 = vunpack.c.h.b16 %v296
    %v1165 = vunpack.c.l.b16 %v297
    %v1166 = vunpack.c.h.b16 %v297
    %v1167 = vunpack.c.l.b16 %v298
    %v1168 = vunpack.c.h.b16 %v298
    %v1169 = vunpack.c.l.b16 %v299
    %v1170 = vunpack.c.h.b16 %v299
    %v1171 = vunpack.c.l.b16 %v300
    %v1172 = vunpack.c.h.b16 %v300
    %v1173 = vunpack.c.l.b16 %v301
    %v1174 = vunpack.c.h.b16 %v301
    %v1175 = vunpack.c.l.b16 %v302
    %v1176 = vunpack.c.h.b16 %v302
    %v1177 = vunpack.c.l.b16 %v303
    %v1178 = vunpack.c.h.b16 %v303
    %v1179 = vunpack.c.l.b16 %v304
    %v1180 = vunpack.c.h.b16 %v304
    %v1181 = vunpack.c.l.b16 %v305
    %v1182 = vunpack.c.h.b16 %v305
    %v1183 = vunpack.c.l.b16 %v306
    %v1184 = vunpack.c.h.b16 %v306
    %v1185 = vunpack.c.l.b16 %v307
    %v1186 = vunpack.c.h.b16 %v307
    %v1187 = vunpack.c.l.b16 %v308
    %v1188 = vunpack.c.h.b16 %v308
    %v1189 = vunpack.c.l.b16 %v309
    %v1190 = vunpack.c.h.b16 %v309
    %v1191 = vunpack.c.l.b16 %v310
    %v1192 = vunpack.c.h.b16 %v310
    %v1193 = vunpack.c.l.b16 %v311
    %v1194 = vunpack.c.h.b16 %v311
    %v1195 = vunpack.c.l.b16 %v312
    %v1196 = vunpack.c.h.b16 %v312
    %v1197 = vunpack.c.l.b16 %v313
    %v1198 = vunpack.c.h.b16 %v313
    %v1199 = vunpack.c.l.b16 %v314
    %v1200 = vunpack.c.h.b16 %v314
    %v1201 = vunpack.c.l.b16 %v315
    %v1202 = vunpack.c.h.b16 %v315
    %v1203 = vunpack.c.l.b16 %v316
    %v1204 = vunpack.c.h.b16 %v316
    %v1205 = vunpack.c.l.b16 %v317
    %v1206 = vunpack.c.h.b16 %v317
    %v1207 = vunpack.c.l.b16 %v318
    %v1208 = vunpack.c.h.b16 %v318
    %v1209 = vunpack.c.l.b16 %v319
    %v1210 = vunpack.c.h.b16 %v319
    %v1211 = vunpack.c.l.b16 %v320
    %v1212 = vunpack.c.h.b16 %v320
    %v1213 = vunpack.c.l.b16 %v321
    %v1214 = vunpack.c.h.b16 %v321
    %v1215 = vunpack.c.l.b16 %v322
    %v1216 = vunpack.c.h.b16 %v322
    %v1217 = vunpack.c.l.b16 %v323
    %v1218 = vunpack.c.h.b16 %v323
    %v1219 = vunpack.c.l.b16 %v324
    %v1220 = vunpack.c.h.b16 %v324
    %v1221 = vunpack.c.l.b16 %v325
    %v1222 = vunpack.c.h.b16 %v325
    %v1223 = vunpack.c.l.b16 %v326
    %v1224 = vunpack.c.h.b16 %v326
    %v1225 = vunpack.c.l.b16 %v327
    %v1226 = vunpack.c.h.b16 %v327
    %v1227 = vunpack.c.l.b16 %v328
    %v1228 = vunpack.c.h.b16 %v328
    %v1229 = vunpack.c.l.b16 %v329
    %v1230 = vunpack.c.h.b16 %v329
    %v1231 = vunpack.c.l.b16 %v330
    %v1232 = vunpack.c.h.b16 %v330
    %v1233 = vunpack.c.l.b16 %v331
    %v1234 = vunpack.c.h.b16 %v331
    %v1235 = vunpack.c.l.b16 %v332
    %v1236 = vunpack.c.h.b16 %v332
    %v1237 = vunpack.c.l.b16 %v333
    %v1238 = vunpack.c.h.b16 %v333
    %v1239 = vunpack.c.l.b16 %v334
    %v1240 = vunpack.c.h.b16 %v334
    %v1241 = vunpack.c.l.b16 %v335
    %v1242 = vunpack.c.h.b16 %v335
    %v1243 = vunpack.c.l.b16 %v336
    %v1244 = vunpack.c.h.b16 %v336
    %v1245 = vunpack.c.l.b16 %v337
    %v1246 = vunpack.c.h.b16 %v337
    %v1247 = vunpack.c.l.b16 %v338
    %v1248 = vunpack.c.h.b16 %v338
    %v1249 = vunpack.c.l.b16 %v339
    %v1250 = vunpack.c.h.b16 %v339
    %v1251 = vunpack.c.l.b16 %v340
    %v1252 = vunpack.c.h.b16 %v340
    %v1253 = vunpack.c.l.b16 %v341
    %v1254 = vunpack.c.h.b16 %v341
    %v1255 = vunpack.c.l.b16 %v342
    %v1256 = vunpack.c.h.b16 %v342
    %v1257 = vunpack.c.l.b16 %v343
    %v1258 = vunpack.c.h.b16 %v343
    %v1259 = vunpack.c.l.b16 %v344
    %v1260 = vunpack.c.h.b16 %v344
    %v1261 = vunpack.c.l.b16 %v345
    %v1262 = vunpack.c.h.b16 %v345
    %v1263 = vunpack.c.l.b16 %v346
    %v1264 = vunpack.c.h.b16 %v346
    %v1265 = vunpack.c.l.b16 %v347
    %v1266 = vunpack.c.h.b16 %v347
    %v1267 = vunpack.c.l.b16 %v348
    %v1268 = vunpack.c.h.b16 %v348
    %v1269 = vunpack.c.l.b16 %v349
    %v1270 = vunpack.c.h.b16 %v349
    %v1271 = vunpack.c.l.b16 %v350
    %v1272 = vunpack.c.h.b16 %v350
    %v1273 = vunpack.c.l.b16 %v351
    %v1274 = vunpack.c.h.b16 %v351
    %v1275 = vunpack.c.l.b16 %v352
    %v1276 = vunpack.c.h.b16 %v352
    %v1277 = vunpack.c.l.b16 %v353
    %v1278 = vunpack.c.h.b16 %v353
    %v1279 = vunpack.c.l.b16 %v354
    %v1280 = vunpack.c.h.b16 %v354
    %v1281 = vunpack.c.l.b16 %v355
    %v1282 = vunpack.c.h.b16 %v355
    %v1283 = vunpack.c.l.b16 %v356
    %v1284 = vunpack.c.h.b16 %v356
    %v1285 = vunpack.c.l.b16 %v357
    %v1286 = vunpack.c.h.b16 %v357
    %v1287 = vunpack.c.l.b16 %v358
    %v1288 = vunpack.c.h.b16 %v358
    %v1289 = vunpack.c.l.b16 %v359
    %v1290 = vunpack.c.h.b16 %v359
    %v1291 = vunpack.c.l.b16 %v360
    %v1292 = vunpack.c.h.b16 %v360
    %v1293 = vunpack.c.l.b16 %v361
    %v1294 = vunpack.c.h.b16 %v361
    %v1295 = vunpack.c.l.b16 %v362
    %v1296 = vunpack.c.h.b16 %v362
    %v1297 = vunpack.c.l.b16 %v363
    %v1298 = vunpack.c.h.b16 %v363
    %v1299 = vunpack.c.l.b16 %v364
    %v1300 = vunpack.c.h.b16 %v364
    %v1301 = vunpack.c.l.b16 %v365
    %v1302 = vunpack.c.h.b16 %v365
    %v1303 = vunpack.c.l.b16 %v366
    %v1304 = vunpack.c.h.b16 %v366
    %v1305 = vunpack.c.l.b16 %v367
    %v1306 = vunpack.c.h.b16 %v367
    %v1307 = vunpack.c.l.b16 %v368
    %v1308 = vunpack.c.h.b16 %v368
    %v1309 = vunpack.c.l.b16 %v369
    %v1310 = vunpack.c.h.b16 %v369
    %v1311 = vunpack.c.l.b16 %v370
    %v1312 = vunpack.c.h.b16 %v370
    %v1313 = vunpack.c.l.b16 %v371
    %v1314 = vunpack.c.h.b16 %v371
    %v1315 = vunpack.c.l.b16 %v372
    %v1316 = vunpack.c.h.b16 %v372
    %v1317 = vunpack.c.l.b16 %v373
    %v1318 = vunpack.c.h.b16 %v373
    %v1319 = vunpack.c.l.b16 %v374
    %v1320 = vunpack.c.h.b16 %v374
    %v1321 = vunpack.c.l.b16 %v375
    %v1322 = vunpack.c.h.b16 %v375
    %v1323 = vunpack.c.l.b16 %v376
    %v1324 = vunpack.c.h.b16 %v376
    %v1325 = vunpack.c.l.b16 %v377
    %v1326 = vunpack.c.h.b16 %v377
    %v1327 = vunpack.c.l.b16 %v378
    %v1328 = vunpack.c.h.b16 %v378
    %v1329 = vunpack.c.l.b16 %v379
    %v1330 = vunpack.c.h.b16 %v379
    %v1331 = vunpack.c.l.b16 %v380
    %v1332 = vunpack.c.h.b16 %v380
    %v1333 = vunpack.c.l.b16 %v381
    %v1334 = vunpack.c.h.b16 %v381
    %v1335 = vunpack.c.l.b16 %v382
    %v1336 = vunpack.c.h.b16 %v382
    %v1337 = vunpack.c.l.b16 %v383
    %v1338 = vunpack.c.h.b16 %v383
    %v1339 = vunpack.c.l.b16 %v384
    %v1340 = vunpack.c.h.b16 %v384
    %v1341 = vunpack.c.l.b16 %v385
    %v1342 = vunpack.c.h.b16 %v385
    %v1343 = vunpack.c.l.b16 %v386
    %v1344 = vunpack.c.h.b16 %v386
    %v1345 = vunpack.c.l.b16 %v387
    %v1346 = vunpack.c.h.b16 %v387
    %v1347 = vunpack.c.l.b16 %v388
    %v1348 = vunpack.c.h.b16 %v388
    %v1349 = vunpack.c.l.b16 %v389
    %v1350 = vunpack.c.h.b16 %v389
    %v1351 = vunpack.c.l.b16 %v390
    %v1352 = vunpack.c.h.b16 %v390
    %v1353 = vunpack.c.l.b16 %v391
    %v1354 = vunpack.c.h.b16 %v391
    %v1355 = vunpack.c.l.b16 %v392
    %v1356 = vunpack.c.h.b16 %v392
    %v1357 = vunpack.c.l.b16 %v393
    %v1358 = vunpack.c.h.b16 %v393
    %v1359 = vunpack.c.l.b16 %v394
    %v1360 = vunpack.c.h.b16 %v394
    %v1361 = vunpack.c.l.b16 %v395
    %v1362 = vunpack.c.h.b16 %v395
    %v1363 = vunpack.c.l.b16 %v396
    %v1364 = vunpack.c.h.b16 %v396
    %v1365 = vunpack.c.l.b16 %v397
    %v1366 = vunpack.c.h.b16 %v397
    %v1367 = vunpack.c.l.b16 %v398
    %v1368 = vunpack.c.h.b16 %v398
    %v1369 = vunpack.c.l.b16 %v399
    %v1370 = vunpack.c.h.b16 %v399
    %v1371 = vunpack.c.l.b16 %v400
    %v1372 = vunpack.c.h.b16 %v400
    %v1373 = vunpack.c.l.b16 %v401
    %v1374 = vunpack.c.h.b16 %v401
    %v1375 = vunpack.c.l.b16 %v402
    %v1376 = vunpack.c.h.b16 %v402
    %v1377 = vunpack.c.l.b16 %v403
    %v1378 = vunpack.c.h.b16 %v403
    %v1379 = vunpack.c.l.b16 %v404
    %v1380 = vunpack.c.h.b16 %v404
    %v1381 = vunpack.c.l.b16 %v405
    %v1382 = vunpack.c.h.b16 %v405
    %v1383 = vunpack.c.l.b16 %v406
    %v1384 = vunpack.c.h.b16 %v406
    %v1385 = vunpack.c.l.b16 %v407
    %v1386 = vunpack.c.h.b16 %v407
    %v1387 = vunpack.c.l.b16 %v408
    %v1388 = vunpack.c.h.b16 %v408
    %v1389 = vunpack.c.l.b16 %v409
    %v1390 = vunpack.c.h.b16 %v409
    %v1391 = vunpack.c.l.b16 %v410
    %v1392 = vunpack.c.h.b16 %v410
    %v1393 = vunpack.c.l.b16 %v411
    %v1394 = vunpack.c.h.b16 %v411
    %v1395 = vunpack.c.l.b16 %v412
    %v1396 = vunpack.c.h.b16 %v412
    %v1397 = vunpack.c.l.b16 %v413
    %v1398 = vunpack.c.h.b16 %v413
    %v1399 = vunpack.c.l.b16 %v414
    %v1400 = vunpack.c.h.b16 %v414
    %v1401 = vunpack.c.l.b16 %v415
    %v1402 = vunpack.c.h.b16 %v415
    %v1403 = vunpack.c.l.b16 %v416
    %v1404 = vunpack.c.h.b16 %v416
    %v1405 = vunpack.c.l.b16 %v417
    %v1406 = vunpack.c.h.b16 %v417
    %v1407 = vunpack.c.l.b16 %v418
    %v1408 = vunpack.c.h.b16 %v418
    %v1409 = vunpack.c.l.b16 %v419
    %v1410 = vunpack.c.h.b16 %v419
    %v1411 = vunpack.c.l.b16 %v420
    %v1412 = vunpack.c.h.b16 %v420
    %v1413 = vunpack.c.l.b16 %v421
    %v1414 = vunpack.c.h.b16 %v421
    %v1415 = vunpack.c.l.b16 %v422
    %v1416 = vunpack.c.h.b16 %v422
    %v1417 = vunpack.c.l.b16 %v423
    %v1418 = vunpack.c.h.b16 %v423
    %v1419 = vunpack.c.l.b16 %v424
    %v1420 = vunpack.c.h.b16 %v424
    %v1421 = vunpack.c.l.b16 %v425
    %v1422 = vunpack.c.h.b16 %v425
    %v1423 = vunpack.c.l.b16 %v426
    %v1424 = vunpack.c.h.b16 %v426
    %v1425 = vunpack.c.l.b16 %v427
    %v1426 = vunpack.c.h.b16 %v427
    %v1427 = vunpack.c.l.b16 %v428
    %v1428 = vunpack.c.h.b16 %v428
    %v1429 = vunpack.c.l.b16 %v429
    %v1430 = vunpack.c.h.b16 %v429
    %v1431 = vunpack.c.l.b16 %v430
    %v1432 = vunpack.c.h.b16 %v430
    %v1433 = vunpack.c.l.b16 %v431
    %v1434 = vunpack.c.h.b16 %v431
    %v1435 = vunpack.c.l.b16 %v432
    %v1436 = vunpack.c.h.b16 %v432
    %v1437 = vunpack.c.l.b16 %v433
    %v1438 = vunpack.c.h.b16 %v433
    %v1439 = vunpack.c.l.b16 %v434
    %v1440 = vunpack.c.h.b16 %v434
    %v1441 = vunpack.c.l.b16 %v435
    %v1442 = vunpack.c.h.b16 %v435
    %v1443 = vunpack.c.l.b16 %v436
    %v1444 = vunpack.c.h.b16 %v436
    %v1445 = vunpack.c.l.b16 %v437
    %v1446 = vunpack.c.h.b16 %v437
    %v1447 = vunpack.c.l.b16 %v438
    %v1448 = vunpack.c.h.b16 %v438
    %v1449 = vunpack.c.l.b16 %v439
    %v1450 = vunpack.c.h.b16 %v439
    %v1451 = vunpack.c.l.b16 %v440
    %v1452 = vunpack.c.h.b16 %v440
    %v1453 = vunpack.c.l.b16 %v441
    %v1454 = vunpack.c.h.b16 %v441
    %v1455 = vunpack.c.l.b16 %v442
    %v1456 = vunpack.c.h.b16 %v442
    %v1457 = vunpack.c.l.b16 %v443
    %v1458 = vunpack.c.h.b16 %v443
    %v1459 = vunpack.c.l.b16 %v444
    %v1460 = vunpack.c.h.b16 %v444
    %v1461 = vunpack.c.l.b16 %v445
    %v1462 = vunpack.c.h.b16 %v445
    %v1463 = vunpack.c.l.b16 %v446
    %v1464 = vunpack.c.h.b16 %v446
    %v1465 = vunpack.c.l.b16 %v447
    %v1466 = vunpack.c.h.b16 %v447
    %v1467 = vunpack.c.l.b16 %v448
    %v1468 = vunpack.c.h.b16 %v448
    %v1469 = vunpack.c.l.b16 %v449
    %v1470 = vunpack.c.h.b16 %v449
    %v1471 = vunpack.c.l.b16 %v450
    %v1472 = vunpack.c.h.b16 %v450
    %v1473 = vunpack.c.l.b16 %v451
    %v1474 = vunpack.c.h.b16 %v451
    %v1475 = vunpack.c.l.b16 %v452
    %v1476 = vunpack.c.h.b16 %v452
    %v1477 = vunpack.c.l.b16 %v453
    %v1478 = vunpack.c.h.b16 %v453
    %v1479 = vunpack.c.l.b16 %v454
    %v1480 = vunpack.c.h.b16 %v454
    %v1481 = vunpack.c.l.b16 %v455
    %v1482 = vunpack.c.h.b16 %v455
    %v1483 = vunpack.c.l.b16 %v456
    %v1484 = vunpack.c.h.b16 %v456
    %v1485 = vunpack.c.l.b16 %v457
    %v1486 = vunpack.c.h.b16 %v457
    %v1487 = vunpack.c.l.b16 %v458
    %v1488 = vunpack.c.h.b16 %v458
    %v1489 = vunpack.c.l.b16 %v459
    %v1490 = vunpack.c.h.b16 %v459
    %v1491 = vunpack.c.l.b16 %v460
    %v1492 = vunpack.c.h.b16 %v460
    %v1493 = vunpack.c.l.b16 %v461
    %v1494 = vunpack.c.h.b16 %v461
    %v1495 = vunpack.c.l.b16 %v462
    %v1496 = vunpack.c.h.b16 %v462
    %v1497 = vunpack.c.l.b16 %v463
    %v1498 = vunpack.c.h.b16 %v463
    %v1499 = vunpack.c.l.b16 %v464
    %v1500 = vunpack.c.h.b16 %v464
    %v1501 = vunpack.c.l.b16 %v465
    %v1502 = vunpack.c.h.b16 %v465
    %v1503 = vunpack.c.l.b16 %v466
    %v1504 = vunpack.c.h.b16 %v466
    %v1505 = vunpack.c.l.b16 %v467
    %v1506 = vunpack.c.h.b16 %v467
    %v1507 = vunpack.c.l.b16 %v468
    %v1508 = vunpack.c.h.b16 %v468
    %v1509 = vunpack.c.l.b16 %v469
    %v1510 = vunpack.c.h.b16 %v469
    %v1511 = vunpack.c.l.b16 %v470
    %v1512 = vunpack.c.h.b16 %v470
    %v1513 = vunpack.c.l.b16 %v471
    %v1514 = vunpack.c.h.b16 %v471
    %v1515 = vunpack.c.l.b16 %v472
    %v1516 = vunpack.c.h.b16 %v472
    %v1517 = vunpack.c.l.b16 %v473
    %v1518 = vunpack.c.h.b16 %v473
    %v1519 = vunpack.c.l.b16 %v474
    %v1520 = vunpack.c.h.b16 %v474
    %v1521 = vunpack.c.l.b16 %v475
    %v1522 = vunpack.c.h.b16 %v475
    %v1523 = vunpack.c.l.b16 %v476
    %v1524 = vunpack.c.h.b16 %v476
    %v1525 = vunpack.c.l.b16 %v477
    %v1526 = vunpack.c.h.b16 %v477
    %v1527 = vunpack.c.l.b16 %v478
    %v1528 = vunpack.c.h.b16 %v478
    %v1529 = vunpack.c.l.b16 %v479
    %v1530 = vunpack.c.h.b16 %v479
    %v1531 = vunpack.c.l.b16 %v480
    %v1532 = vunpack.c.h.b16 %v480
    %v1533 = vunpack.c.l.b16 %v481
    %v1534 = vunpack.c.h.b16 %v481
    %v1535 = vunpack.c.l.b16 %v482
    %v1536 = vunpack.c.h.b16 %v482
    %v1537 = vunpack.c.l.b16 %v483
    %v1538 = vunpack.c.h.b16 %v483
    %v1539 = vunpack.c.l.b16 %v484
    %v1540 = vunpack.c.h.b16 %v484
    %v1541 = vunpack.c.l.b16 %v485
    %v1542 = vunpack.c.h.b16 %v485
    %v1543 = vunpack.c.l.b16 %v486
    %v1544 = vunpack.c.h.b16 %v486
    %v1545 = vunpack.c.l.b16 %v487
    %v1546 = vunpack.c.h.b16 %v487
    %v1547 = vunpack.c.l.b16 %v488
    %v1548 = vunpack.c.h.b16 %v488
    %v1549 = vunpack.c.l.b16 %v489
    %v1550 = vunpack.c.h.b16 %v489
    %v1551 = vunpack.c.l.b16 %v490
    %v1552 = vunpack.c.h.b16 %v490
    %v1553 = vunpack.c.l.b16 %v491
    %v1554 = vunpack.c.h.b16 %v491
    %v1555 = vunpack.c.l.b16 %v492
    %v1556 = vunpack.c.h.b16 %v492
    %v1557 = vunpack.c.l.b16 %v493
    %v1558 = vunpack.c.h.b16 %v493
    %v1559 = vunpack.c.l.b16 %v494
    %v1560 = vunpack.c.h.b16 %v494
    %v1561 = vunpack.c.l.b16 %v495
    %v1562 = vunpack.c.h.b16 %v495
    %v1563 = vunpack.c.l.b16 %v496
    %v1564 = vunpack.c.h.b16 %v496
    %v1565 = vunpack.c.l.b16 %v497
    %v1566 = vunpack.c.h.b16 %v497
    %v1567 = vunpack.c.l.b16 %v498
    %v1568 = vunpack.c.h.b16 %v498
    %v1569 = vunpack.c.l.b16 %v499
    %v1570 = vunpack.c.h.b16 %v499
    %v1571 = vunpack.c.l.b16 %v500
    %v1572 = vunpack.c.h.b16 %v500
    %v1573 = vunpack.c.l.b16 %v501
    %v1574 = vunpack.c.h.b16 %v501
    %v1575 = vunpack.c.l.b16 %v502
    %v1576 = vunpack.c.h.b16 %v502
    %v1577 = vunpack.c.l.b16 %v503
    %v1578 = vunpack.c.h.b16 %v503
    %v1579 = vunpack.c.l.b16 %v504
    %v1580 = vunpack.c.h.b16 %v504
    %v1581 = vunpack.c.l.b16 %v505
    %v1582 = vunpack.c.h.b16 %v505
    %v1583 = vunpack.c.l.b16 %v506
    %v1584 = vunpack.c.h.b16 %v506
    %v1585 = vunpack.c.l.b16 %v507
    %v1586 = vunpack.c.h.b16 %v507
    %v1587 = vunpack.c.l.b16 %v508
    %v1588 = vunpack.c.h.b16 %v508
    %v1589 = vunpack.c.l.b16 %v509
    %v1590 = vunpack.c.h.b16 %v509
    %v1591 = vunpack.c.l.b16 %v510
    %v1592 = vunpack.c.h.b16 %v510
    %v1593 = vunpack.c.l.b16 %v511
    %v1594 = vunpack.c.h.b16 %v511
    %v1595 = vunpack.c.l.b16 %v512
    %v1596 = vunpack.c.h.b16 %v512
    %v1597 = vunpack.c.l.b16 %v513
    %v1598 = vunpack.c.h.b16 %v513
    %v1599 = vunpack.c.l.b16 %v514
    %v1600 = vunpack.c.h.b16 %v514
    %v1601 = vunpack.c.l.b16 %v515
    %v1602 = vunpack.c.h.b16 %v515
    %v1603 = vunpack.c.l.b16 %v516
    %v1604 = vunpack.c.h.b16 %v516
    %v1605 = vunpack.c.l.b16 %v517
    %v1606 = vunpack.c.h.b16 %v517
    %v1607 = vunpack.c.l.b16 %v518
    %v1608 = vunpack.c.h.b16 %v518
    %v1609 = vunpack.c.l.b16 %v519
    %v1610 = vunpack.c.h.b16 %v519
    %v1611 = vunpack.c.l.b16 %v520
    %v1612 = vunpack.c.h.b16 %v520
    %v1613 = vunpack.c.l.b16 %v521
    %v1614 = vunpack.c.h.b16 %v521
    %v1615 = vunpack.c.l.b16 %v522
    %v1616 = vunpack.c.h.b16 %v522
    %v1617 = vunpack.c.l.b16 %v523
    %v1618 = vunpack.c.h.b16 %v523
    %v1619 = vunpack.c.l.b16 %v524
    %v1620 = vunpack.c.h.b16 %v524
    %v1621 = vunpack.c.l.b16 %v525
    %v1622 = vunpack.c.h.b16 %v525
    %v1623 = vunpack.c.l.b16 %v526
    %v1624 = vunpack.c.h.b16 %v526
    %v1625 = vunpack.c.l.b16 %v527
    %v1626 = vunpack.c.h.b16 %v527
    %v1627 = vunpack.c.l.b16 %v528
    %v1628 = vunpack.c.h.b16 %v528
    %v1629 = vunpack.c.l.b16 %v529
    %v1630 = vunpack.c.h.b16 %v529
    %v1631 = vunpack.c.l.b16 %v530
    %v1632 = vunpack.c.h.b16 %v530
    %v1633 = vunpack.c.l.b16 %v531
    %v1634 = vunpack.c.h.b16 %v531
    %v1635 = vunpack.c.l.b16 %v532
    %v1636 = vunpack.c.h.b16 %v532
    %v1637 = vunpack.c.l.b16 %v533
    %v1638 = vunpack.c.h.b16 %v533
    %v1639 = vunpack.c.l.b16 %v534
    %v1640 = vunpack.c.h.b16 %v534
    %v1641 = vunpack.c.l.b16 %v535
    %v1642 = vunpack.c.h.b16 %v535
    %v1643 = vunpack.c.l.b16 %v536
    %v1644 = vunpack.c.h.b16 %v536
    %v1645 = vunpack.c.l.b16 %v537
    %v1646 = vunpack.c.h.b16 %v537
    %v1647 = vunpack.c.l.b16 %v538
    %v1648 = vunpack.c.h.b16 %v538
    %v1649 = vunpack.c.l.b16 %v539
    %v1650 = vunpack.c.h.b16 %v539
    %v1651 = vunpack.c.l.b16 %v540
    %v1652 = vunpack.c.h.b16 %v540
    %v1653 = vunpack.c.l.b16 %v541
    %v1654 = vunpack.c.h.b16 %v541
    %v1655 = vunpack.c.l.b16 %v542
    %v1656 = vunpack.c.h.b16 %v542
    %v1657 = vunpack.c.l.b16 %v543
    %v1658 = vunpack.c.h.b16 %v543
    %v1659 = vunpack.c.l.b16 %v544
    %v1660 = vunpack.c.h.b16 %v544
    %v1661 = vunpack.c.l.b16 %v545
    %v1662 = vunpack.c.h.b16 %v545
    %v1663 = vunpack.c.l.b16 %v546
    %v1664 = vunpack.c.h.b16 %v546
    %v1665 = vunpack.c.l.b16 %v547
    %v1666 = vunpack.c.h.b16 %v547
    %v1667 = vunpack.c.l.b16 %v548
    %v1668 = vunpack.c.h.b16 %v548
    %v1669 = vunpack.c.l.b16 %v549
    %v1670 = vunpack.c.h.b16 %v549
    %v1671 = vunpack.c.l.b16 %v550
    %v1672 = vunpack.c.h.b16 %v550
    %v1673 = vunpack.c.l.b16 %v551
    %v1674 = vunpack.c.h.b16 %v551
    %v1675 = vunpack.c.l.b16 %v552
    %v1676 = vunpack.c.h.b16 %v552
    %v1677 = vunpack.c.l.b16 %v553
    %v1678 = vunpack.c.h.b16 %v553
    %v1679 = vunpack.c.l.b16 %v554
    %v1680 = vunpack.c.h.b16 %v554
    %v1681 = vunpack.c.l.b16 %v555
    %v1682 = vunpack.c.h.b16 %v555
    %v1683 = vunpack.c.l.b16 %v556
    %v1684 = vunpack.c.h.b16 %v556
    %v1685 = vunpack.c.l.b16 %v557
    %v1686 = vunpack.c.h.b16 %v557
    %v1687 = vunpack.c.l.b16 %v558
    %v1688 = vunpack.c.h.b16 %v558
    %v1689 = vunpack.c.l.b16 %v559
    %v1690 = vunpack.c.h.b16 %v559
    %v1691 = vunpack.c.l.b16 %v560
    %v1692 = vunpack.c.h.b16 %v560
    %v1693 = vunpack.c.l.b16 %v561
    %v1694 = vunpack.c.h.b16 %v561
    %v1695 = vunpack.c.l.b16 %v562
    %v1696 = vunpack.c.h.b16 %v562
    %v1697 = vunpack.c.l.b16 %v563
    %v1698 = vunpack.c.h.b16 %v563
    %v1699 = vunpack.c.l.b16 %v564
    %v1700 = vunpack.c.h.b16 %v564
    %v1701 = vunpack.c.l.b16 %v565
    %v1702 = vunpack.c.h.b16 %v565
    %v1703 = vunpack.c.l.b16 %v566
    %v1704 = vunpack.c.h.b16 %v566
    %v1705 = vunpack.c.l.b16 %v567
    %v1706 = vunpack.c.h.b16 %v567
    %v1707 = vunpack.c.l.b16 %v568
    %v1708 = vunpack.c.h.b16 %v568
    %v1709 = vunpack.c.l.b16 %v569
    %v1710 = vunpack.c.h.b16 %v569
    %v1711 = vunpack.c.l.b16 %v570
    %v1712 = vunpack.c.h.b16 %v570
    %v1713 = vunpack.c.l.b16 %v571
    %v1714 = vunpack.c.h.b16 %v571
    %v1715 = vunpack.c.l.b16 %v572
    %v1716 = vunpack.c.h.b16 %v572
    %v1717 = vunpack.c.l.b16 %v573
    %v1718 = vunpack.c.h.b16 %v573
    %v1719 = vunpack.c.l.b16 %v574
    %v1720 = vunpack.c.h.b16 %v574
    %v1721 = vunpack.c.l.b16 %v575
    %v1722 = vunpack.c.h.b16 %v575
    %v1723 = vunpack.c.l.b16 %v576
    %v1724 = vunpack.c.h.b16 %v576
    %v1725 = vunpack.c.l.b16 %v577
    %v1726 = vunpack.c.h.b16 %v577
    %v1727 = vunpack.c.l.b16 %v578
    %v1728 = vunpack.c.h.b16 %v578
    %v1729 = vunpack.c.l.b16 %v579
    %v1730 = vunpack.c.h.b16 %v579
    %v1731 = vunpack.c.l.b16 %v580
    %v1732 = vunpack.c.h.b16 %v580
    %v1733 = vunpack.c.l.b16 %v581
    %v1734 = vunpack.c.h.b16 %v581
    %v1735 = vunpack.c.l.b16 %v582
    %v1736 = vunpack.c.h.b16 %v582
    %v1737 = vunpack.c.l.b16 %v583
    %v1738 = vunpack.c.h.b16 %v583
    %v1739 = vunpack.c.l.b16 %v584
    %v1740 = vunpack.c.h.b16 %v584
    %v1741 = vunpack.c.l.b16 %v585
    %v1742 = vunpack.c.h.b16 %v585
    %v1743 = vunpack.c.l.b16 %v586
    %v1744 = vunpack.c.h.b16 %v586
    %v1745 = vunpack.c.l.b16 %v587
    %v1746 = vunpack.c.h.b16 %v587
    %v1747 = vunpack.c.l.b16 %v588
    %v1748 = vunpack.c.h.b16 %v588
    %v1749 = vunpack.c.l.b16 %v589
    %v1750 = vunpack.c.h.b16 %v589
    %v1751 = vunpack.c.l.b16 %v590
    %v1752 = vunpack.c.h.b16 %v590
    %v1753 = vunpack.c.l.b16 %v591
    %v1754 = vunpack.c.h.b16 %v591
    %v1755 = vunpack.c.l.b16 %v592
    %v1756 = vunpack.c.h.b16 %v592
    %v1757 = vunpack.c.l.b16 %v593
    %v1758 = vunpack.c.h.b16 %v593
    %v1759 = vunpack.c.l.b16 %v594
    %v1760 = vunpack.c.h.b16 %v594
    %v1761 = vunpack.c.l.b16 %v595
    %v1762 = vunpack.c.h.b16 %v595
    %v1763 = vunpack.c.l.b16 %v596
    %v1764 = vunpack.c.h.b16 %v596
    %v1765 = vunpack.c.l.b16 %v597
    %v1766 = vunpack.c.h.b16 %v597
    %v1767 = vunpack.c.l.b16 %v598
    %v1768 = vunpack.c.h.b16 %v598
    %v1769 = vunpack.c.l.b16 %v599
    %v1770 = vunpack.c.h.b16 %v599
    %v1771 = vunpack.c.l.b16 %v600
    %v1772 = vunpack.c.h.b16 %v600
    %v1773 = vunpack.c.l.b16 %v601
    %v1774 = vunpack.c.h.b16 %v601
    %v1775 = vunpack.c.l.b16 %v602
    %v1776 = vunpack.c.h.b16 %v602
    %v1777 = vunpack.c.l.b16 %v603
    %v1778 = vunpack.c.h.b16 %v603
    %v1779 = vunpack.c.l.b16 %v604
    %v1780 = vunpack.c.h.b16 %v604
    %v1781 = vunpack.c.l.b16 %v605
    %v1782 = vunpack.c.h.b16 %v605
    %v1783 = vunpack.c.l.b16 %v606
    %v1784 = vunpack.c.h.b16 %v606
    %v1785 = vunpack.c.l.b16 %v607
    %v1786 = vunpack.c.h.b16 %v607
    %v1787 = vunpack.c.l.b16 %v608
    %v1788 = vunpack.c.h.b16 %v608
    %v1789 = vunpack.c.l.b16 %v609
    %v1790 = vunpack.c.h.b16 %v609
    %v1791 = vunpack.c.l.b16 %v610
    %v1792 = vunpack.c.h.b16 %v610
    %v1793 = vunpack.c.l.b16 %v611
    %v1794 = vunpack.c.h.b16 %v611
    %v1795 = vunpack.c.l.b16 %v612
    %v1796 = vunpack.c.h.b16 %v612
    %v1797 = vunpack.c.l.b16 %v613
    %v1798 = vunpack.c.h.b16 %v613
    %v1799 = vunpack.c.l.b16 %v614
    %v1800 = vunpack.c.h.b16 %v614
    %v1801 = vunpack.c.l.b16 %v615
    %v1802 = vunpack.c.h.b16 %v615
    %v1803 = vunpack.c.l.b16 %v616
    %v1804 = vunpack.c.h.b16 %v616
    %v1805 = vunpack.c.l.b16 %v617
    %v1806 = vunpack.c.h.b16 %v617
    %v1807 = vunpack.c.l.b16 %v618
    %v1808 = vunpack.c.h.b16 %v618
    %v1809 = vunpack.c.l.b16 %v619
    %v1810 = vunpack.c.h.b16 %v619
    %v1811 = vunpack.c.l.b16 %v620
    %v1812 = vunpack.c.h.b16 %v620
    %v1813 = vunpack.c.l.b16 %v621
    %v1814 = vunpack.c.h.b16 %v621
    %v1815 = vunpack.c.l.b16 %v622
    %v1816 = vunpack.c.h.b16 %v622
    %v1817 = vpack.c.b16 %v1057, %v1049
    %v1818 = vpack.c.b16 %v1058, %v1050
    %v1819 = vpack.c.b16 %v1059, %v1051
    %v1820 = vpack.c.b16 %v1060, %v1052
    %v1821 = vpack.c.b16 %v1061, %v1053
    %v1822 = vpack.c.b16 %v1062, %v1054
    %v1823 = vpack.c.b16 %v1063, %v1055
    %v1824 = vpack.c.b16 %v1064, %v1056
    %v1825 = vpack.c.b16 %v1073, %v1065
    %v1826 = vpack.c.b16 %v1074, %v1066
    %v1827 = vpack.c.b16 %v1075, %v1067
    %v1828 = vpack.c.b16 %v1076, %v1068
    %v1829 = vpack.c.b16 %v1077, %v1069
    %v1830 = vpack.c.b16 %v1078, %v1070
    %v1831 = vpack.c.b16 %v1079, %v1071
    %v1832 = vpack.c.b16 %v1080, %v1072
    %v1833 = vpack.c.b16 %v1089, %v1081
    %v1834 = vpack.c.b16 %v1090, %v1082
    %v1835 = vpack.c.b16 %v1091, %v1083
    %v1836 = vpack.c.b16 %v1092, %v1084
    %v1837 = vpack.c.b16 %v1093, %v1085
    %v1838 = vpack.c.b16 %v1094, %v1086
    %v1839 = vpack.c.b16 %v1095, %v1087
    %v1840 = vpack.c.b16 %v1096, %v1088
    %v1841 = vpack.c.b16 %v1105, %v1097
    %v1842 = vpack.c.b16 %v1106, %v1098
    %v1843 = vpack.c.b16 %v1107, %v1099
    %v1844 = vpack.c.b16 %v1108, %v1100
    %v1845 = vpack.c.b16 %v1109, %v1101
    %v1846 = vpack.c.b16 %v1110, %v1102
    %v1847 = vpack.c.b16 %v1111, %v1103
    %v1848 = vpack.c.b16 %v1112, %v1104
    %v1849 = vpack.c.b16 %v1121, %v1113
    %v1850 = vpack.c.b16 %v1122, %v1114
    %v1851 = vpack.c.b16 %v1123, %v1115
    %v1852 = vpack.c.b16 %v1124, %v1116
    %v1853 = vpack.c.b16 %v1125, %v1117
    %v1854 = vpack.c.b16 %v1126, %v1118
    %v1855 = vpack.c.b16 %v1127, %v1119
    %v1856 = vpack.c.b16 %v1128, %v1120
    %v1857 = vpack.c.b16 %v1137, %v1129
    %v1858 = vpack.c.b16 %v1138, %v1130
    %v1859 = vpack.c.b16 %v1139, %v1131
    %v1860 = vpack.c.b16 %v1140, %v1132
    %v1861 = vpack.c.b16 %v1141, %v1133
    %v1862 = vpack.c.b16 %v1142, %v1134
    %v1863 = vpack.c.b16 %v1143, %v1135
    %v1864 = vpack.c.b16 %v1144, %v1136
    %v1865 = vpack.c.b16 %v1153, %v1145
    %v1866 = vpack.c.b16 %v1154, %v1146
    %v1867 = vpack.c.b16 %v1155, %v1147
    %v1868 = vpack.c.b16 %v1156, %v1148
    %v1869 = vpack.c.b16 %v1157, %v1149
    %v1870 = vpack.c.b16 %v1158, %v1150
    %v1871 = vpack.c.b16 %v1159, %v1151
    %v1872 = vpack.c.b16 %v1160, %v1152
    %v1873 = vpack.c.b16 %v1169, %v1161
    %v1874 = vpack.c.b16 %v1170, %v1162
    %v1875 = vpack.c.b16 %v1171, %v1163
    %v1876 = vpack.c.b16 %v1172, %v1164
    %v1877 = vpack.c.b16 %v1173, %v1165
    %v1878 = vpack.c.b16 %v1174, %v1166
    %v1879 = vpack.c.b16 %v1175, %v1167
    %v1880 = vpack.c.b16 %v1176, %v1168
    %v1881 = vpack.c.b16 %v1185, %v1177
    %v1882 = vpack.c.b16 %v1186, %v1178
    %v1883 = vpack.c.b16 %v1187, %v1179
    %v1884 = vpack.c.b16 %v1188, %v1180
    %v1885 = vpack.c.b16 %v1189, %v1181
    %v1886 = vpack.c.b16 %v1190, %v1182
    %v1887 = vpack.c.b16 %v1191, %v1183
    %v1888 = vpack.c.b16 %v1192, %v1184
    %v1889 = vpack.c.b16 %v1201, %v1193
    %v1890 = vpack.c.b16 %v1202, %v1194
    %v1891 = vpack.c.b16 %v1203, %v1195
    %v1892 = vpack.c.b16 %v1204, %v1196
    %v1893 = vpack.c.b16 %v1205, %v1197
    %v1894 = vpack.c.b16 %v1206, %v1198
    %v1895 = vpack.c.b16 %v1207, %v1199
    %v1896 = vpack.c.b16 %v1208, %v1200
    %v1897 = vpack.c.b16 %v1217, %v1209
    %v1898 = vpack.c.b16 %v1218, %v1210
    %v1899 = vpack.c.b16 %v1219, %v1211
    %v1900 = vpack.c.b16 %v1220, %v1212
    %v1901 = vpack.c.b16 %v1221, %v1213
    %v1902 = vpack.c.b16 %v1222, %v1214
    %v1903 = vpack.c.b16 %v1223, %v1215
    %v1904 = vpack.c.b16 %v1224, %v1216
    %v1905 = vpack.c.b16 %v1233, %v1225
    %v1906 = vpack.c.b16 %v1234, %v1226
    %v1907 = vpack.c.b16 %v1235, %v1227
    %v1908 = vpack.c.b16 %v1236, %v1228
    %v1909 = vpack.c.b16 %v1237, %v1229
    %v1910 = vpack.c.b16 %v1238, %v1230
    %v1911 = vpack.c.b16 %v1239, %v1231
    %v1912 = vpack.c.b16 %v1240, %v1232
    %v1913 = vpack.c.b16 %v1249, %v1241
    %v1914 = vpack.c.b16 %v1250, %v1242
    %v1915 = vpack.c.b16 %v1251, %v1243
    %v1916 = vpack.c.b16 %v1252, %v1244
    %v1917 = vpack.c.b16 %v1253, %v1245
    %v1918 = vpack.c.b16 %v1254, %v1246
    %v1919 = vpack.c.b16 %v1255, %v1247
    %v1920 = vpack.c.b16 %v1256, %v1248
    %v1921 = vpack.c.b16 %v1265, %v1257
    %v1922 = vpack.c.b16 %v1266, %v1258
    %v1923 = vpack.c.b16 %v1267, %v1259
    %v1924 = vpack.c.b16 %v1268, %v1260
    %v1925 = vpack.c.b16 %v1269, %v1261
    %v1926 = vpack.c.b16 %v1270, %v1262
    %v1927 = vpack.c.b16 %v1271, %v1263
    %v1928 = vpack.c.b16 %v1272, %v1264
    %v1929 = vpack.c.b16 %v1281, %v1273
    %v1930 = vpack.c.b16 %v1282, %v1274
    %v1931 = vpack.c.b16 %v1283, %v1275
    %v1932 = vpack.c.b16 %v1284, %v1276
    %v1933 = vpack.c.b16 %v1285, %v1277
    %v1934 = vpack.c.b16 %v1286, %v1278
    %v1935 = vpack.c.b16 %v1287, %v1279
    %v1936 = vpack.c.b16 %v1288, %v1280
    %v1937 = vpack.c.b16 %v1297, %v1289
    %v1938 = vpack.c.b16 %v1298, %v1290
    %v1939 = vpack.c.b16 %v1299, %v1291
    %v1940 = vpack.c.b16 %v1300, %v1292
    %v1941 = vpack.c.b16 %v1301, %v1293
    %v1942 = vpack.c.b16 %v1302, %v1294
    %v1943 = vpack.c.b16 %v1303, %v1295
    %v1944 = vpack.c.b16 %v1304, %v1296
    %v1945 = vpack.c.b16 %v1313, %v1305
    %v1946 = vpack.c.b16 %v1314, %v1306
    %v1947 = vpack.c.b16 %v1315, %v1307
    %v1948 = vpack.c.b16 %v1316, %v1308
    %v1949 = vpack.c.b16 %v1317, %v1309
    %v1950 = vpack.c.b16 %v1318, %v1310
    %v1951 = vpack.c.b16 %v1319, %v1311
    %v1952 = vpack.c.b16 %v1320, %v1312
    %v1953 = vpack.c.b16 %v1329, %v1321
    %v1954 = vpack.c.b16 %v1330, %v1322
    %v1955 = vpack.c.b16 %v1331, %v1323
    %v1956 = vpack.c.b16 %v1332, %v1324
    %v1957 = vpack.c.b16 %v1333, %v1325
    %v1958 = vpack.c.b16 %v1334, %v1326
    %v1959 = vpack.c.b16 %v1335, %v1327
    %v1960 = vpack.c.b16 %v1336, %v1328
    %v1961 = vpack.c.b16 %v1345, %v1337
    %v1962 = vpack.c.b16 %v1346, %v1338
    %v1963 = vpack.c.b16 %v1347, %v1339
    %v1964 = vpack.c.b16 %v1348, %v1340
    %v1965 = vpack.c.b16 %v1349, %v1341
    %v1966 = vpack.c.b16 %v1350, %v1342
    %v1967 = vpack.c.b16 %v1351, %v1343
    %v1968 = vpack.c.b16 %v1352, %v1344
    %v1969 = vpack.c.b16 %v1361, %v1353
    %v1970 = vpack.c.b16 %v1362, %v1354
    %v1971 = vpack.c.b16 %v1363, %v1355
    %v1972 = vpack.c.b16 %v1364, %v1356
    %v1973 = vpack.c.b16 %v1365, %v1357
    %v1974 = vpack.c.b16 %v1366, %v1358
    %v1975 = vpack.c.b16 %v1367, %v1359
    %v1976 = vpack.c.b16 %v1368, %v1360
    %v1977 = vpack.c.b16 %v1377, %v1369
    %v1978 = vpack.c.b16 %v1378, %v1370
    %v1979 = vpack.c.b16 %v1379, %v1371
    %v1980 = vpack.c.b16 %v1380, %v1372
    %v1981 = vpack.c.b16 %v1381, %v1373
    %v1982 = vpack.c.b16 %v1382, %v1374
    %v1983 = vpack.c.b16 %v1383, %v1375
    %v1984 = vpack.c.b16 %v1384, %v1376
    %v1985 = vpack.c.b16 %v1393, %v1385
    %v1986 = vpack.c.b16 %v1394, %v1386
    %v1987 = vpack.c.b16 %v1395, %v1387
    %v1988 = vpack.c.b16 %v1396, %v1388
    %v1989 = vpack.c.b16 %v1397, %v1389
    %v1990 = vpack.c.b16 %v1398, %v1390
    %v1991 = vpack.c.b16 %v1399, %v1391
    %v1992 = vpack.c.b16 %v1400, %v1392
    %v1993 = vpack.c.b16 %v1409, %v1401
    %v1994 = vpack.c.b16 %v1410, %v1402
    %v1995 = vpack.c.b16 %v1411, %v1403
    %v1996 = vpack.c.b16 %v1412, %v1404
    %v1997 = vpack.c.b16 %v1413, %v1405
    %v1998 = vpack.c.b16 %v1414, %v1406
    %v1999 = vpack.c.b16 %v1415, %v1407
    %v2000 = vpack.c.b16 %v1416, %v1408
    %v2001 = vpack.c.b16 %v1425, %v1417
    %v2002 = vpack.c.b16 %v1426, %v1418
    %v2003 = vpack.c.b16 %v1427, %v1419
    %v2004 = vpack.c.b16 %v1428, %v1420
    %v2005 = vpack.c.b16 %v1429, %v1421
    %v2006 = vpack.c.b16 %v1430, %v1422
    %v2007 = vpack.c.b16 %v1431, %v1423
    %v2008 = vpack.c.b16 %v1432, %v1424
    %v2009 = vpack.c.b16 %v1441, %v1433
    %v2010 = vpack.c.b16 %v1442, %v1434
    %v2011 = vpack.c.b16 %v1443, %v1435
    %v2012 = vpack.c.b16 %v1444, %v1436
    %v2013 = vpack.c.b16 %v1445, %v1437
    %v2014 = vpack.c.b16 %v1446, %v1438
    %v2015 = vpack.c.b16 %v1447, %v1439
    %v2016 = vpack.c.b16 %v1448, %v1440
    %v2017 = vpack.c.b16 %v1457, %v1449
    %v2018 = vpack.c.b16 %v1458, %v1450
    %v2019 = vpack.c.b16 %v1459, %v1451
    %v2020 = vpack.c.b16 %v1460, %v1452
    %v2021 = vpack.c.b16 %v1461, %v1453
    %v2022 = vpack.c.b16 %v1462, %v1454
    %v2023 = vpack.c.b16 %v1463, %v1455
    %v2024 = vpack.c.b16 %v1464, %v1456
    %v2025 = vpack.c.b16 %v1473, %v1465
    %v2026 = vpack.c.b16 %v1474, %v1466
    %v2027 = vpack.c.b16 %v1475, %v1467
    %v2028 = vpack.c.b16 %v1476, %v1468
    %v2029 = vpack.c.b16 %v1477, %v1469
    %v2030 = vpack.c.b16 %v1478, %v1470
    %v2031 = vpack.c.b16 %v1479, %v1471
    %v2032 = vpack.c.b16 %v1480, %v1472
    %v2033 = vpack.c.b16 %v1489, %v1481
    %v2034 = vpack.c.b16 %v1490, %v1482
    %v2035 = vpack.c.b16 %v1491, %v1483
    %v2036 = vpack.c.b16 %v1492, %v1484
    %v2037 = vpack.c.b16 %v1493, %v1485
    %v2038 = vpack.c.b16 %v1494, %v1486
    %v2039 = vpack.c.b16 %v1495, %v1487
    %v2040 = vpack.c.b16 %v1496, %v1488
    %v2041 = vpack.c.b16 %v1505, %v1497
    %v2042 = vpack.c.b16 %v1506, %v1498
    %v2043 = vpack.c.b16 %v1507, %v1499
    %v2044 = vpack.c.b16 %v1508, %v1500
    %v2045 = vpack.c.b16 %v1509, %v1501
    %v2046 = vpack.c.b16 %v1510, %v1502
    %v2047 = vpack.c.b16 %v1511, %v1503
    %v2048 = vpack.c.b16 %v1512, %v1504
    %v2049 = vpack.c.b16 %v1521, %v1513
    %v2050 = vpack.c.b16 %v1522, %v1514
    %v2051 = vpack.c.b16 %v1523, %v1515
    %v2052 = vpack.c.b16 %v1524, %v1516
    %v2053 = vpack.c.b16 %v1525, %v1517
    %v2054 = vpack.c.b16 %v1526, %v1518
    %v2055 = vpack.c.b16 %v1527, %v1519
    %v2056 = vpack.c.b16 %v1528, %v1520
    %v2057 = vpack.c.b16 %v1537, %v1529
    %v2058 = vpack.c.b16 %v1538, %v1530
    %v2059 = vpack.c.b16 %v1539, %v1531
    %v2060 = vpack.c.b16 %v1540, %v1532
    %v2061 = vpack.c.b16 %v1541, %v1533
    %v2062 = vpack.c.b16 %v1542, %v1534
    %v2063 = vpack.c.b16 %v1543, %v1535
    %v2064 = vpack.c.b16 %v1544, %v1536
    %v2065 = vpack.c.b16 %v1553, %v1545
    %v2066 = vpack.c.b16 %v1554, %v1546
    %v2067 = vpack.c.b16 %v1555, %v1547
    %v2068 = vpack.c.b16 %v1556, %v1548
    %v2069 = vpack.c.b16 %v1557, %v1549
    %v2070 = vpack.c.b16 %v1558, %v1550
    %v2071 = vpack.c.b16 %v1559, %v1551
    %v2072 = vpack.c.b16 %v1560, %v1552
    %v2073 = vpack.c.b16 %v1569, %v1561
    %v2074 = vpack.c.b16 %v1570, %v1562
    %v2075 = vpack.c.b16 %v1571, %v1563
    %v2076 = vpack.c.b16 %v1572, %v1564
    %v2077 = vpack.c.b16 %v1573, %v1565
    %v2078 = vpack.c.b16 %v1574, %v1566
    %v2079 = vpack.c.b16 %v1575, %v1567
    %v2080 = vpack.c.b16 %v1576, %v1568
    %v2081 = vpack.c.b16 %v1585, %v1577
    %v2082 = vpack.c.b16 %v1586, %v1578
    %v2083 = vpack.c.b16 %v1587, %v1579
    %v2084 = vpack.c.b16 %v1588, %v1580
    %v2085 = vpack.c.b16 %v1589, %v1581
    %v2086 = vpack.c.b16 %v1590, %v1582
    %v2087 = vpack.c.b16 %v1591, %v1583
    %v2088 = vpack.c.b16 %v1592, %v1584
    %v2089 = vpack.c.b16 %v1601, %v1593
    %v2090 = vpack.c.b16 %v1602, %v1594
    %v2091 = vpack.c.b16 %v1603, %v1595
    %v2092 = vpack.c.b16 %v1604, %v1596
    %v2093 = vpack.c.b16 %v1605, %v1597
    %v2094 = vpack.c.b16 %v1606, %v1598
    %v2095 = vpack.c.b16 %v1607, %v1599
    %v2096 = vpack.c.b16 %v1608, %v1600
    %v2097 = vpack.c.b16 %v1617, %v1609
    %v2098 = vpack.c.b16 %v1618, %v1610
    %v2099 = vpack.c.b16 %v1619, %v1611
    %v2100 = vpack.c.b16 %v1620, %v1612
    %v2101 = vpack.c.b16 %v1621, %v1613
    %v2102 = vpack.c.b16 %v1622, %v1614
    %v2103 = vpack.c.b16 %v1623, %v1615
    %v2104 = vpack.c.b16 %v1624, %v1616
    %v2105 = vpack.c.b16 %v1633, %v1625
    %v2106 = vpack.c.b16 %v1634, %v1626
    %v2107 = vpack.c.b16 %v1635, %v1627
    %v2108 = vpack.c.b16 %v1636, %v1628
    %v2109 = vpack.c.b16 %v1637, %v1629
    %v2110 = vpack.c.b16 %v1638, %v1630
    %v2111 = vpack.c.b16 %v1639, %v1631
    %v2112 = vpack.c.b16 %v1640, %v1632
    %v2113 = vpack.c.b16 %v1649, %v1641
    %v2114 = vpack.c.b16 %v1650, %v1642
    %v2115 = vpack.c.b16 %v1651, %v1643
    %v2116 = vpack.c.b16 %v1652, %v1644
    %v2117 = vpack.c.b16 %v1653, %v1645
    %v2118 = vpack.c.b16 %v1654, %v1646
    %v2119 = vpack.c.b16 %v1655, %v1647
    %v2120 = vpack.c.b16 %v1656, %v1648
    %v2121 = vpack.c.b16 %v1665, %v1657
    %v2122 = vpack.c.b16 %v1666, %v1658
    %v2123 = vpack.c.b16 %v1667, %v1659
    %v2124 = vpack.c.b16 %v1668, %v1660
    %v2125 = vpack.c.b16 %v1669, %v1661
    %v2126 = vpack.c.b16 %v1670, %v1662
    %v2127 = vpack.c.b16 %v1671, %v1663
    %v2128 = vpack.c.b16 %v1672, %v1664
    %v2129 = vpack.c.b16 %v1681, %v1673
    %v2130 = vpack.c.b16 %v1682, %v1674
    %v2131 = vpack.c.b16 %v1683, %v1675
    %v2132 = vpack.c.b16 %v1684, %v1676
    %v2133 = vpack.c.b16 %v1685, %v1677
    %v2134 = vpack.c.b16 %v1686, %v1678
    %v2135 = vpack.c.b16 %v1687, %v1679
    %v2136 = vpack.c.b16 %v1688, %v1680
    %v2137 = vpack.c.b16 %v1697, %v1689
    %v2138 = vpack.c.b16 %v1698, %v1690
    %v2139 = vpack.c.b16 %v1699, %v1691
    %v2140 = vpack.c.b16 %v1700, %v1692
    %v2141 = vpack.c.b16 %v1701, %v1693
    %v2142 = vpack.c.b16 %v1702, %v1694
    %v2143 = vpack.c.b16 %v1703, %v1695
    %v2144 = vpack.c.b16 %v1704, %v1696
    %v2145 = vpack.c.b16 %v1713, %v1705
    %v2146 = vpack.c.b16 %v1714, %v1706
    %v2147 = vpack.c.b16 %v1715, %v1707
    %v2148 = vpack.c.b16 %v1716, %v1708
    %v2149 = vpack.c.b16 %v1717, %v1709
    %v2150 = vpack.c.b16 %v1718, %v1710
    %v2151 = vpack.c.b16 %v1719, %v1711
    %v2152 = vpack.c.b16 %v1720, %v1712
    %v2153 = vpack.c.b16 %v1729, %v1721
    %v2154 = vpack.c.b16 %v1730, %v1722
    %v2155 = vpack.c.b16 %v1731, %v1723
    %v2156 = vpack.c.b16 %v1732, %v1724
    %v2157 = vpack.c.b16 %v1733, %v1725
    %v2158 = vpack.c.b16 %v1734, %v1726
    %v2159 = vpack.c.b16 %v1735, %v1727
    %v2160 = vpack.c.b16 %v1736, %v1728
    %v2161 = vpack.c.b16 %v1745, %v1737
    %v2162 = vpack.c.b16 %v1746, %v1738
    %v2163 = vpack.c.b16 %v1747, %v1739
    %v2164 = vpack.c.b16 %v1748, %v1740
    %v2165 = vpack.c.b16 %v1749, %v1741
    %v2166 = vpack.c.b16 %v1750, %v1742
    %v2167 = vpack.c.b16 %v1751, %v1743
    %v2168 = vpack.c.b16 %v1752, %v1744
    %v2169 = vpack.c.b16 %v1761, %v1753
    %v2170 = vpack.c.b16 %v1762, %v1754
    %v2171 = vpack.c.b16 %v1763, %v1755
    %v2172 = vpack.c.b16 %v1764, %v1756
    %v2173 = vpack.c.b16 %v1765, %v1757
    %v2174 = vpack.c.b16 %v1766, %v1758
    %v2175 = vpack.c.b16 %v1767, %v1759
    %v2176 = vpack.c.b16 %v1768, %v1760
    %v2177 = vpack.c.b16 %v1777, %v1769
    %v2178 = vpack.c.b16 %v1778, %v1770
    %v2179 = vpack.c.b16 %v1779, %v1771
    %v2180 = vpack.c.b16 %v1780, %v1772
    %v2181 = vpack.c.b16 %v1781, %v1773
    %v2182 = vpack.c.b16 %v1782, %v1774
    %v2183 = vpack.c.b16 %v1783, %v1775
    %v2184 = vpack.c.b16 %v1784, %v1776
    %v2185 = vpack.c.b16 %v1793, %v1785
    %v2186 = vpack.c.b16 %v1794, %v1786
    %v2187 = vpack.c.b16 %v1795, %v1787
    %v2188 = vpack.c.b16 %v1796, %v1788
    %v2189 = vpack.c.b16 %v1797, %v1789
    %v2190 = vpack.c.b16 %v1798, %v1790
    %v2191 = vpack.c.b16 %v1799, %v1791
    %v2192 = vpack.c.b16 %v1800, %v1792
    %v2193 = vpack.c.b16 %v1809, %v1801
    %v2194 = vpack.c.b16 %v1810, %v1802
    %v2195 = vpack.c.b16 %v1811, %v1803
    %v2196 = vpack.c.b16 %v1812, %v1804
    %v2197 = vpack.c.b16 %v1813, %v1805
    %v2198 = vpack.c.b16 %v1814, %v1806
    %v2199 = vpack.c.b16 %v1815, %v1807
    %v2200 = vpack.c.b16 %v1816, %v1808
    %2585 = vmatprep.subr.bf16.mxu0 %v1818
    %2586 = vmatpush1.bf16.msra.mxu0 %v1817
    %2587 = vmatprep.subr.bf16.mxu0 %v1826
    %2588 = vmatpush1.bf16.msra.mxu0 %v1825
    %2589 = vmatprep.subr.bf16.mxu0 %v1834
    %2590 = vmatpush1.bf16.msra.mxu0 %v1833
    %2591 = vmatprep.subr.bf16.mxu0 %v1842
    %2592 = vmatpush1.bf16.msra.mxu0 %v1841
    %2593 = vmatprep.subr.bf16.mxu0 %v1850
    %2594 = vmatpush1.bf16.msra.mxu0 %v1849
    %2595 = vmatprep.subr.bf16.mxu0 %v1858
    %2596 = vmatpush1.bf16.msra.mxu0 %v1857
    %2597 = vmatprep.subr.bf16.mxu0 %v1866
    %2598 = vmatpush1.bf16.msra.mxu0 %v1865
    %2599 = vmatprep.subr.bf16.mxu0 %v1874
    %2600 = vmatpush1.bf16.msra.mxu0 %v1873
    %2601 = vmatprep.subr.bf16.mxu0 %v1882
    %2602 = vmatpush1.bf16.msra.mxu0 %v1881
    %2603 = vmatprep.subr.bf16.mxu0 %v1890
    %2604 = vmatpush1.bf16.msra.mxu0 %v1889
    %2605 = vmatprep.subr.bf16.mxu0 %v1898
    %2606 = vmatpush1.bf16.msra.mxu0 %v1897
    %2607 = vmatprep.subr.bf16.mxu0 %v1906
    %2608 = vmatpush1.bf16.msra.mxu0 %v1905
    %2609 = vmatprep.subr.bf16.mxu0 %v1914
    %2610 = vmatpush1.bf16.msra.mxu0 %v1913
    %2611 = vmatprep.subr.bf16.mxu0 %v1922
    %2612 = vmatpush1.bf16.msra.mxu0 %v1921
    %2613 = vmatprep.subr.bf16.mxu0 %v1930
    %2614 = vmatpush1.bf16.msra.mxu0 %v1929
    %2615 = vmatprep.subr.bf16.mxu0 %v1938
    %2616 = vmatpush1.bf16.msra.mxu0 %v1937
    %2617 = vmatprep.mubr.bf16.mxu0 %v234
    %2618 = vmatmul.mubr.bf16.gmra.mrb[0].mxu0 %v233
    %v2619 = vpop.f32.mrb[0].mxu0
    %v2620 = vadd.f32 %v628, %v2619
    %v2621 = vpop.f32.mrb[0].mxu0
    %v2622 = vadd.f32 %v632, %v2621
    %v2623 = vpop.f32.mrb[0].mxu0
    %v2624 = vadd.f32 %v628, %v2623
    %v2625 = vpop.f32.mrb[0].mxu0
    %v2626 = vadd.f32 %v632, %v2625
    %2627 = vdwg.mxu0
    %2628 = vmatprep.subr.bf16.mxu0 %v1946
    %2629 = vmatpush1.bf16.msra.mxu0 %v1945
    %2630 = vmatprep.subr.bf16.mxu0 %v1954
    %2631 = vmatpush1.bf16.msra.mxu0 %v1953
    %2632 = vmatprep.subr.bf16.mxu0 %v1962
    %2633 = vmatpush1.bf16.msra.mxu0 %v1961
    %2634 = vmatprep.subr.bf16.mxu0 %v1970
    %2635 = vmatpush1.bf16.msra.mxu0 %v1969
    %2636 = vmatprep.subr.bf16.mxu0 %v1978
    %2637 = vmatpush1.bf16.msra.mxu0 %v1977
    %2638 = vmatprep.subr.bf16.mxu0 %v1986
    %2639 = vmatpush1.bf16.msra.mxu0 %v1985
    %2640 = vmatprep.subr.bf16.mxu0 %v1994
    %2641 = vmatpush1.bf16.msra.mxu0 %v1993
    %2642 = vmatprep.subr.bf16.mxu0 %v2002
    %2643 = vmatpush1.bf16.msra.mxu0 %v2001
    %2644 = vmatprep.subr.bf16.mxu0 %v2010
    %2645 = vmatpush1.bf16.msra.mxu0 %v2009
    %2646 = vmatprep.subr.bf16.mxu0 %v2018
    %2647 = vmatpush1.bf16.msra.mxu0 %v2017
    %2648 = vmatprep.subr.bf16.mxu0 %v2026
    %2649 = vmatpush1.bf16.msra.mxu0 %v2025
    %2650 = vmatprep.subr.bf16.mxu0 %v2034
    %2651 = vmatpush1.bf16.msra.mxu0 %v2033
    %2652 = vmatprep.subr.bf16.mxu0 %v2042
    %2653 = vmatpush1.bf16.msra.mxu0 %v2041
    %2654 = vmatprep.subr.bf16.mxu0 %v2050
    %2655 = vmatpush1.bf16.msra.mxu0 %v2049
    %2656 = vmatprep.subr.bf16.mxu0 %v2058
    %2657 = vmatpush1.bf16.msra.mxu0 %v2057
    %2658 = vmatprep.subr.bf16.mxu0 %v2066
    %2659 = vmatpush1.bf16.msra.mxu0 %v2065
    %2660 = vmatprep.mubr.bf16.mxu0 %v236
    %2661 = vmatmul.mubr.bf16.gmra.mrb[0].mxu0 %v235
    %v2662 = vpop.f32.mrb[0].mxu0
    %v2663 = vadd.f32 %v2620, %v2662
    %v2664 = vpop.f32.mrb[0].mxu0
    %v2665 = vadd.f32 %v2622, %v2664
    %v2666 = vpop.f32.mrb[0].mxu0
    %v2667 = vadd.f32 %v2624, %v2666
    %v2668 = vpop.f32.mrb[0].mxu0
    %v2669 = vadd.f32 %v2626, %v2668
    %2670 = vdwg.mxu0
    %2671 = vmatprep.subr.bf16.mxu0 %v2074
    %2672 = vmatpush1.bf16.msra.mxu0 %v2073
    %2673 = vmatprep.subr.bf16.mxu0 %v2082
    %2674 = vmatpush1.bf16.msra.mxu0 %v2081
    %2675 = vmatprep.subr.bf16.mxu0 %v2090
    %2676 = vmatpush1.bf16.msra.mxu0 %v2089
    %2677 = vmatprep.subr.bf16.mxu0 %v2098
    %2678 = vmatpush1.bf16.msra.mxu0 %v2097
    %2679 = vmatprep.subr.bf16.mxu0 %v2106
    %2680 = vmatpush1.bf16.msra.mxu0 %v2105
    %2681 = vmatprep.subr.bf16.mxu0 %v2114
    %2682 = vmatpush1.bf16.msra.mxu0 %v2113
    %2683 = vmatprep.subr.bf16.mxu0 %v2122
    %2684 = vmatpush1.bf16.msra.mxu0 %v2121
    %2685 = vmatprep.subr.bf16.mxu0 %v2130
    %2686 = vmatpush1.bf16.msra.mxu0 %v2129
    %2687 = vmatprep.subr.bf16.mxu0 %v2138
    %2688 = vmatpush1.bf16.msra.mxu0 %v2137
    %2689 = vmatprep.subr.bf16.mxu0 %v2146
    %2690 = vmatpush1.bf16.msra.mxu0 %v2145
    %2691 = vmatprep.subr.bf16.mxu0 %v2154
    %2692 = vmatpush1.bf16.msra.mxu0 %v2153
    %2693 = vmatprep.subr.bf16.mxu0 %v2162
    %2694 = vmatpush1.bf16.msra.mxu0 %v2161
    %2695 = vmatprep.subr.bf16.mxu0 %v2170
    %2696 = vmatpush1.bf16.msra.mxu0 %v2169
    %2697 = vmatprep.subr.bf16.mxu0 %v2178
    %2698 = vmatpush1.bf16.msra.mxu0 %v2177
    %2699 = vmatprep.subr.bf16.mxu0 %v2186
    %2700 = vmatpush1.bf16.msra.mxu0 %v2185
    %2701 = vmatprep.subr.bf16.mxu0 %v2194
    %2702 = vmatpush1.bf16.msra.mxu0 %v2193
    %2703 = vmatprep.mubr.bf16.mxu0 %v238
    %2704 = vmatmul.mubr.bf16.gmra.mrb[0].mxu0 %v237
    %v2705 = vpop.f32.mrb[0].mxu0
    %v2706 = vadd.f32 %v2663, %v2705
    %v2707 = vpop.f32.mrb[0].mxu0
    %v2708 = vadd.f32 %v2665, %v2707
    %v2709 = vpop.f32.mrb[0].mxu0
    %v2710 = vadd.f32 %v2667, %v2709
    %v2711 = vpop.f32.mrb[0].mxu0
    %v2712 = vadd.f32 %v2669, %v2711
    %2713 = vdwg.mxu0
    %2714 = vmatprep.subr.bf16.mxu0 %v1820
    %2715 = vmatpush1.bf16.msra.mxu0 %v1819
    %2716 = vmatprep.subr.bf16.mxu0 %v1828
    %2717 = vmatpush1.bf16.msra.mxu0 %v1827
    %2718 = vmatprep.subr.bf16.mxu0 %v1836
    %2719 = vmatpush1.bf16.msra.mxu0 %v1835
    %2720 = vmatprep.subr.bf16.mxu0 %v1844
    %2721 = vmatpush1.bf16.msra.mxu0 %v1843
    %2722 = vmatprep.subr.bf16.mxu0 %v1852
    %2723 = vmatpush1.bf16.msra.mxu0 %v1851
    %2724 = vmatprep.subr.bf16.mxu0 %v1860
    %2725 = vmatpush1.bf16.msra.mxu0 %v1859
    %2726 = vmatprep.subr.bf16.mxu0 %v1868
    %2727 = vmatpush1.bf16.msra.mxu0 %v1867
    %2728 = vmatprep.subr.bf16.mxu0 %v1876
    %2729 = vmatpush1.bf16.msra.mxu0 %v1875
    %2730 = vmatprep.subr.bf16.mxu0 %v1884
    %2731 = vmatpush1.bf16.msra.mxu0 %v1883
    %2732 = vmatprep.subr.bf16.mxu0 %v1892
    %2733 = vmatpush1.bf16.msra.mxu0 %v1891
    %2734 = vmatprep.subr.bf16.mxu0 %v1900
    %2735 = vmatpush1.bf16.msra.mxu0 %v1899
    %2736 = vmatprep.subr.bf16.mxu0 %v1908
    %2737 = vmatpush1.bf16.msra.mxu0 %v1907
    %2738 = vmatprep.subr.bf16.mxu0 %v1916
    %2739 = vmatpush1.bf16.msra.mxu0 %v1915
    %2740 = vmatprep.subr.bf16.mxu0 %v1924
    %2741 = vmatpush1.bf16.msra.mxu0 %v1923
    %2742 = vmatprep.subr.bf16.mxu0 %v1932
    %2743 = vmatpush1.bf16.msra.mxu0 %v1931
    %2744 = vmatprep.subr.bf16.mxu0 %v1940
    %2745 = vmatpush1.bf16.msra.mxu0 %v1939
    %2746 = vmatprep.mubr.bf16.mxu0 %v234
    %2747 = vmatmul.mubr.bf16.gmra.mrb[0].mxu0 %v233
    %v2748 = vpop.f32.mrb[0].mxu0
    %v2749 = vadd.f32 %v636, %v2748
    %v2750 = vpop.f32.mrb[0].mxu0
    %v2751 = vadd.f32 %v640, %v2750
    %v2752 = vpop.f32.mrb[0].mxu0
    %v2753 = vadd.f32 %v636, %v2752
    %v2754 = vpop.f32.mrb[0].mxu0
    %v2755 = vadd.f32 %v640, %v2754
    %2756 = vdwg.mxu0
    %2757 = vmatprep.subr.bf16.mxu0 %v1948
    %2758 = vmatpush1.bf16.msra.mxu0 %v1947
    %2759 = vmatprep.subr.bf16.mxu0 %v1956
    %2760 = vmatpush1.bf16.msra.mxu0 %v1955
    %2761 = vmatprep.subr.bf16.mxu0 %v1964
    %2762 = vmatpush1.bf16.msra.mxu0 %v1963
    %2763 = vmatprep.subr.bf16.mxu0 %v1972
    %2764 = vmatpush1.bf16.msra.mxu0 %v1971
    %2765 = vmatprep.subr.bf16.mxu0 %v1980
    %2766 = vmatpush1.bf16.msra.mxu0 %v1979
    %2767 = vmatprep.subr.bf16.mxu0 %v1988
    %2768 = vmatpush1.bf16.msra.mxu0 %v1987
    %2769 = vmatprep.subr.bf16.mxu0 %v1996
    %2770 = vmatpush1.bf16.msra.mxu0 %v1995
    %2771 = vmatprep.subr.bf16.mxu0 %v2004
    %2772 = vmatpush1.bf16.msra.mxu0 %v2003
    %2773 = vmatprep.subr.bf16.mxu0 %v2012
    %2774 = vmatpush1.bf16.msra.mxu0 %v2011
    %2775 = vmatprep.subr.bf16.mxu0 %v2020
    %2776 = vmatpush1.bf16.msra.mxu0 %v2019
    %2777 = vmatprep.subr.bf16.mxu0 %v2028
    %2778 = vmatpush1.bf16.msra.mxu0 %v2027
    %2779 = vmatprep.subr.bf16.mxu0 %v2036
    %2780 = vmatpush1.bf16.msra.mxu0 %v2035
    %2781 = vmatprep.subr.bf16.mxu0 %v2044
    %2782 = vmatpush1.bf16.msra.mxu0 %v2043
    %2783 = vmatprep.subr.bf16.mxu0 %v2052
    %2784 = vmatpush1.bf16.msra.mxu0 %v2051
    %2785 = vmatprep.subr.bf16.mxu0 %v2060
    %2786 = vmatpush1.bf16.msra.mxu0 %v2059
    %2787 = vmatprep.subr.bf16.mxu0 %v2068
    %2788 = vmatpush1.bf16.msra.mxu0 %v2067
    %2789 = vmatprep.mubr.bf16.mxu0 %v236
    %2790 = vmatmul.mubr.bf16.gmra.mrb[0].mxu0 %v235
    %v2791 = vpop.f32.mrb[0].mxu0
    %v2792 = vadd.f32 %v2749, %v2791
    %v2793 = vpop.f32.mrb[0].mxu0
    %v2794 = vadd.f32 %v2751, %v2793
    %v2795 = vpop.f32.mrb[0].mxu0
    %v2796 = vadd.f32 %v2753, %v2795
    %v2797 = vpop.f32.mrb[0].mxu0
    %v2798 = vadd.f32 %v2755, %v2797
    %2799 = vdwg.mxu0
    %2800 = vmatprep.subr.bf16.mxu0 %v2076
    %2801 = vmatpush1.bf16.msra.mxu0 %v2075
    %2802 = vmatprep.subr.bf16.mxu0 %v2084
    %2803 = vmatpush1.bf16.msra.mxu0 %v2083
    %2804 = vmatprep.subr.bf16.mxu0 %v2092
    %2805 = vmatpush1.bf16.msra.mxu0 %v2091
    %2806 = vmatprep.subr.bf16.mxu0 %v2100
    %2807 = vmatpush1.bf16.msra.mxu0 %v2099
    %2808 = vmatprep.subr.bf16.mxu0 %v2108
    %2809 = vmatpush1.bf16.msra.mxu0 %v2107
    %2810 = vmatprep.subr.bf16.mxu0 %v2116
    %2811 = vmatpush1.bf16.msra.mxu0 %v2115
    %2812 = vmatprep.subr.bf16.mxu0 %v2124
    %2813 = vmatpush1.bf16.msra.mxu0 %v2123
    %2814 = vmatprep.subr.bf16.mxu0 %v2132
    %2815 = vmatpush1.bf16.msra.mxu0 %v2131
    %2816 = vmatprep.subr.bf16.mxu0 %v2140
    %2817 = vmatpush1.bf16.msra.mxu0 %v2139
    %2818 = vmatprep.subr.bf16.mxu0 %v2148
    %2819 = vmatpush1.bf16.msra.mxu0 %v2147
    %2820 = vmatprep.subr.bf16.mxu0 %v2156
    %2821 = vmatpush1.bf16.msra.mxu0 %v2155
    %2822 = vmatprep.subr.bf16.mxu0 %v2164
    %2823 = vmatpush1.bf16.msra.mxu0 %v2163
    %2824 = vmatprep.subr.bf16.mxu0 %v2172
    %2825 = vmatpush1.bf16.msra.mxu0 %v2171
    %2826 = vmatprep.subr.bf16.mxu0 %v2180
    %2827 = vmatpush1.bf16.msra.mxu0 %v2179
    %2828 = vmatprep.subr.bf16.mxu0 %v2188
    %2829 = vmatpush1.bf16.msra.mxu0 %v2187
    %2830 = vmatprep.subr.bf16.mxu0 %v2196
    %2831 = vmatpush1.bf16.msra.mxu0 %v2195
    %2832 = vmatprep.mubr.bf16.mxu0 %v238
    %2833 = vmatmul.mubr.bf16.gmra.mrb[0].mxu0 %v237
    %v2834 = vpop.f32.mrb[0].mxu0
    %v2835 = vadd.f32 %v2792, %v2834
    %v2836 = vpop.f32.mrb[0].mxu0
    %v2837 = vadd.f32 %v2794, %v2836
    %v2838 = vpop.f32.mrb[0].mxu0
    %v2839 = vadd.f32 %v2796, %v2838
    %v2840 = vpop.f32.mrb[0].mxu0
    %v2841 = vadd.f32 %v2798, %v2840
    %2842 = vdwg.mxu0
    %2843 = vmatprep.subr.bf16.mxu0 %v1822
    %2844 = vmatpush1.bf16.msra.mxu0 %v1821
    %2845 = vmatprep.subr.bf16.mxu0 %v1830
    %2846 = vmatpush1.bf16.msra.mxu0 %v1829
    %2847 = vmatprep.subr.bf16.mxu0 %v1838
    %2848 = vmatpush1.bf16.msra.mxu0 %v1837
    %2849 = vmatprep.subr.bf16.mxu0 %v1846
    %2850 = vmatpush1.bf16.msra.mxu0 %v1845
    %2851 = vmatprep.subr.bf16.mxu0 %v1854
    %2852 = vmatpush1.bf16.msra.mxu0 %v1853
    %2853 = vmatprep.subr.bf16.mxu0 %v1862
    %2854 = vmatpush1.bf16.msra.mxu0 %v1861
    %2855 = vmatprep.subr.bf16.mxu0 %v1870
    %2856 = vmatpush1.bf16.msra.mxu0 %v1869
    %2857 = vmatprep.subr.bf16.mxu0 %v1878
    %2858 = vmatpush1.bf16.msra.mxu0 %v1877
    %2859 = vmatprep.subr.bf16.mxu0 %v1886
    %2860 = vmatpush1.bf16.msra.mxu0 %v1885
    %2861 = vmatprep.subr.bf16.mxu0 %v1894
    %2862 = vmatpush1.bf16.msra.mxu0 %v1893
    %2863 = vmatprep.subr.bf16.mxu0 %v1902
    %2864 = vmatpush1.bf16.msra.mxu0 %v1901
    %2865 = vmatprep.subr.bf16.mxu0 %v1910
    %2866 = vmatpush1.bf16.msra.mxu0 %v1909
    %2867 = vmatprep.subr.bf16.mxu0 %v1918
    %2868 = vmatpush1.bf16.msra.mxu0 %v1917
    %2869 = vmatprep.subr.bf16.mxu0 %v1926
    %2870 = vmatpush1.bf16.msra.mxu0 %v1925
    %2871 = vmatprep.subr.bf16.mxu0 %v1934
    %2872 = vmatpush1.bf16.msra.mxu0 %v1933
    %2873 = vmatprep.subr.bf16.mxu0 %v1942
    %2874 = vmatpush1.bf16.msra.mxu0 %v1941
    %2875 = vmatprep.mubr.bf16.mxu0 %v234
    %2876 = vmatmul.mubr.bf16.gmra.mrb[0].mxu0 %v233
    %v2877 = vpop.f32.mrb[0].mxu0
    %v2878 = vadd.f32 %v644, %v2877
    %v2879 = vpop.f32.mrb[0].mxu0
    %v2880 = vadd.f32 %v648, %v2879
    %v2881 = vpop.f32.mrb[0].mxu0
    %v2882 = vadd.f32 %v644, %v2881
    %v2883 = vpop.f32.mrb[0].mxu0
    %v2884 = vadd.f32 %v648, %v2883
    %2885 = vdwg.mxu0
    %2886 = vmatprep.subr.bf16.mxu0 %v1950
    %2887 = vmatpush1.bf16.msra.mxu0 %v1949
    %2888 = vmatprep.subr.bf16.mxu0 %v1958
    %2889 = vmatpush1.bf16.msra.mxu0 %v1957
    %2890 = vmatprep.subr.bf16.mxu0 %v1966
    %2891 = vmatpush1.bf16.msra.mxu0 %v1965
    %2892 = vmatprep.subr.bf16.mxu0 %v1974
    %2893 = vmatpush1.bf16.msra.mxu0 %v1973
    %2894 = vmatprep.subr.bf16.mxu0 %v1982
    %2895 = vmatpush1.bf16.msra.mxu0 %v1981
    %2896 = vmatprep.subr.bf16.mxu0 %v1990
    %2897 = vmatpush1.bf16.msra.mxu0 %v1989
    %2898 = vmatprep.subr.bf16.mxu0 %v1998
    %2899 = vmatpush1.bf16.msra.mxu0 %v1997
    %2900 = vmatprep.subr.bf16.mxu0 %v2006
    %2901 = vmatpush1.bf16.msra.mxu0 %v2005
    %2902 = vmatprep.subr.bf16.mxu0 %v2014
    %2903 = vmatpush1.bf16.msra.mxu0 %v2013
    %2904 = vmatprep.subr.bf16.mxu0 %v2022
    %2905 = vmatpush1.bf16.msra.mxu0 %v2021
    %2906 = vmatprep.subr.bf16.mxu0 %v2030
    %2907 = vmatpush1.bf16.msra.mxu0 %v2029
    %2908 = vmatprep.subr.bf16.mxu0 %v2038
    %2909 = vmatpush1.bf16.msra.mxu0 %v2037
    %2910 = vmatprep.subr.bf16.mxu0 %v2046
    %2911 = vmatpush1.bf16.msra.mxu0 %v2045
    %2912 = vmatprep.subr.bf16.mxu0 %v2054
    %2913 = vmatpush1.bf16.msra.mxu0 %v2053
    %2914 = vmatprep.subr.bf16.mxu0 %v2062
    %2915 = vmatpush1.bf16.msra.mxu0 %v2061
    %2916 = vmatprep.subr.bf16.mxu0 %v2070
    %2917 = vmatpush1.bf16.msra.mxu0 %v2069
    %2918 = vmatprep.mubr.bf16.mxu0 %v236
    %2919 = vmatmul.mubr.bf16.gmra.mrb[0].mxu0 %v235
    %v2920 = vpop.f32.mrb[0].mxu0
    %v2921 = vadd.f32 %v2878, %v2920
    %v2922 = vpop.f32.mrb[0].mxu0
    %v2923 = vadd.f32 %v2880, %v2922
    %v2924 = vpop.f32.mrb[0].mxu0
    %v2925 = vadd.f32 %v2882, %v2924
    %v2926 = vpop.f32.mrb[0].mxu0
    %v2927 = vadd.f32 %v2884, %v2926
    %2928 = vdwg.mxu0
    %2929 = vmatprep.subr.bf16.mxu0 %v2078
    %2930 = vmatpush1.bf16.msra.mxu0 %v2077
    %2931 = vmatprep.subr.bf16.mxu0 %v2086
    %2932 = vmatpush1.bf16.msra.mxu0 %v2085
    %2933 = vmatprep.subr.bf16.mxu0 %v2094
    %2934 = vmatpush1.bf16.msra.mxu0 %v2093
    %2935 = vmatprep.subr.bf16.mxu0 %v2102
    %2936 = vmatpush1.bf16.msra.mxu0 %v2101
    %2937 = vmatprep.subr.bf16.mxu0 %v2110
    %2938 = vmatpush1.bf16.msra.mxu0 %v2109
    %2939 = vmatprep.subr.bf16.mxu0 %v2118
    %2940 = vmatpush1.bf16.msra.mxu0 %v2117
    %2941 = vmatprep.subr.bf16.mxu0 %v2126
    %2942 = vmatpush1.bf16.msra.mxu0 %v2125
    %2943 = vmatprep.subr.bf16.mxu0 %v2134
    %2944 = vmatpush1.bf16.msra.mxu0 %v2133
    %2945 = vmatprep.subr.bf16.mxu0 %v2142
    %2946 = vmatpush1.bf16.msra.mxu0 %v2141
    %2947 = vmatprep.subr.bf16.mxu0 %v2150
    %2948 = vmatpush1.bf16.msra.mxu0 %v2149
    %2949 = vmatprep.subr.bf16.mxu0 %v2158
    %2950 = vmatpush1.bf16.msra.mxu0 %v2157
    %2951 = vmatprep.subr.bf16.mxu0 %v2166
    %2952 = vmatpush1.bf16.msra.mxu0 %v2165
    %2953 = vmatprep.subr.bf16.mxu0 %v2174
    %2954 = vmatpush1.bf16.msra.mxu0 %v2173
    %2955 = vmatprep.subr.bf16.mxu0 %v2182
    %2956 = vmatpush1.bf16.msra.mxu0 %v2181
    %2957 = vmatprep.subr.bf16.mxu0 %v2190
    %2958 = vmatpush1.bf16.msra.mxu0 %v2189
    %2959 = vmatprep.subr.bf16.mxu0 %v2198
    %2960 = vmatpush1.bf16.msra.mxu0 %v2197
    %2961 = vmatprep.mubr.bf16.mxu0 %v238
    %2962 = vmatmul.mubr.bf16.gmra.mrb[0].mxu0 %v237
    %v2963 = vpop.f32.mrb[0].mxu0
    %v2964 = vadd.f32 %v2921, %v2963
    %v2965 = vpop.f32.mrb[0].mxu0
    %v2966 = vadd.f32 %v2923, %v2965
    %v2967 = vpop.f32.mrb[0].mxu0
    %v2968 = vadd.f32 %v2925, %v2967
    %v2969 = vpop.f32.mrb[0].mxu0
    %v2970 = vadd.f32 %v2927, %v2969
    %2971 = vdwg.mxu0
    %2972 = vmatprep.subr.bf16.mxu0 %v1824
    %2973 = vmatpush1.bf16.msra.mxu0 %v1823
    %2974 = vmatprep.subr.bf16.mxu0 %v1832
    %2975 = vmatpush1.bf16.msra.mxu0 %v1831
    %2976 = vmatprep.subr.bf16.mxu0 %v1840
    %2977 = vmatpush1.bf16.msra.mxu0 %v1839
    %2978 = vmatprep.subr.bf16.mxu0 %v1848
    %2979 = vmatpush1.bf16.msra.mxu0 %v1847
    %2980 = vmatprep.subr.bf16.mxu0 %v1856
    %2981 = vmatpush1.bf16.msra.mxu0 %v1855
    %2982 = vmatprep.subr.bf16.mxu0 %v1864
    %2983 = vmatpush1.bf16.msra.mxu0 %v1863
    %2984 = vmatprep.subr.bf16.mxu0 %v1872
    %2985 = vmatpush1.bf16.msra.mxu0 %v1871
    %2986 = vmatprep.subr.bf16.mxu0 %v1880
    %2987 = vmatpush1.bf16.msra.mxu0 %v1879
    %2988 = vmatprep.subr.bf16.mxu0 %v1888
    %2989 = vmatpush1.bf16.msra.mxu0 %v1887
    %2990 = vmatprep.subr.bf16.mxu0 %v1896
    %2991 = vmatpush1.bf16.msra.mxu0 %v1895
    %2992 = vmatprep.subr.bf16.mxu0 %v1904
    %2993 = vmatpush1.bf16.msra.mxu0 %v1903
    %2994 = vmatprep.subr.bf16.mxu0 %v1912
    %2995 = vmatpush1.bf16.msra.mxu0 %v1911
    %2996 = vmatprep.subr.bf16.mxu0 %v1920
    %2997 = vmatpush1.bf16.msra.mxu0 %v1919
    %2998 = vmatprep.subr.bf16.mxu0 %v1928
    %2999 = vmatpush1.bf16.msra.mxu0 %v1927
    %3000 = vmatprep.subr.bf16.mxu0 %v1936
    %3001 = vmatpush1.bf16.msra.mxu0 %v1935
    %3002 = vmatprep.subr.bf16.mxu0 %v1944
    %3003 = vmatpush1.bf16.msra.mxu0 %v1943
    %3004 = vmatprep.mubr.bf16.mxu0 %v234
    %3005 = vmatmul.mubr.bf16.gmra.mrb[0].mxu0 %v233
    %v3006 = vpop.f32.mrb[0].mxu0
    %v3007 = vadd.f32 %v652, %v3006
    %v3008 = vpop.f32.mrb[0].mxu0
    %v3009 = vadd.f32 %v656, %v3008
    %v3010 = vpop.f32.mrb[0].mxu0
    %v3011 = vadd.f32 %v652, %v3010
    %v3012 = vpop.f32.mrb[0].mxu0
    %v3013 = vadd.f32 %v656, %v3012
    %3014 = vdwg.mxu0
    %3015 = vmatprep.subr.bf16.mxu0 %v1952
    %3016 = vmatpush1.bf16.msra.mxu0 %v1951
    %3017 = vmatprep.subr.bf16.mxu0 %v1960
    %3018 = vmatpush1.bf16.msra.mxu0 %v1959
    %3019 = vmatprep.subr.bf16.mxu0 %v1968
    %3020 = vmatpush1.bf16.msra.mxu0 %v1967
    %3021 = vmatprep.subr.bf16.mxu0 %v1976
    %3022 = vmatpush1.bf16.msra.mxu0 %v1975
    %3023 = vmatprep.subr.bf16.mxu0 %v1984
    %3024 = vmatpush1.bf16.msra.mxu0 %v1983
    %3025 = vmatprep.subr.bf16.mxu0 %v1992
    %3026 = vmatpush1.bf16.msra.mxu0 %v1991
    %3027 = vmatprep.subr.bf16.mxu0 %v2000
    %3028 = vmatpush1.bf16.msra.mxu0 %v1999
    %3029 = vmatprep.subr.bf16.mxu0 %v2008
    %3030 = vmatpush1.bf16.msra.mxu0 %v2007
    %3031 = vmatprep.subr.bf16.mxu0 %v2016
    %3032 = vmatpush1.bf16.msra.mxu0 %v2015
    %3033 = vmatprep.subr.bf16.mxu0 %v2024
    %3034 = vmatpush1.bf16.msra.mxu0 %v2023
    %3035 = vmatprep.subr.bf16.mxu0 %v2032
    %3036 = vmatpush1.bf16.msra.mxu0 %v2031
    %3037 = vmatprep.subr.bf16.mxu0 %v2040
    %3038 = vmatpush1.bf16.msra.mxu0 %v2039
    %3039 = vmatprep.subr.bf16.mxu0 %v2048
    %3040 = vmatpush1.bf16.msra.mxu0 %v2047
    %3041 = vmatprep.subr.bf16.mxu0 %v2056
    %3042 = vmatpush1.bf16.msra.mxu0 %v2055
    %3043 = vmatprep.subr.bf16.mxu0 %v2064
    %3044 = vmatpush1.bf16.msra.mxu0 %v2063
    %3045 = vmatprep.subr.bf16.mxu0 %v2072
    %3046 = vmatpush1.bf16.msra.mxu0 %v2071
    %3047 = vmatprep.mubr.bf16.mxu0 %v236
    %3048 = vmatmul.mubr.bf16.gmra.mrb[0].mxu0 %v235
    %v3049 = vpop.f32.mrb[0].mxu0
    %v3050 = vadd.f32 %v3007, %v3049
    %v3051 = vpop.f32.mrb[0].mxu0
    %v3052 = vadd.f32 %v3009, %v3051
    %v3053 = vpop.f32.mrb[0].mxu0
    %v3054 = vadd.f32 %v3011, %v3053
    %v3055 = vpop.f32.mrb[0].mxu0
    %v3056 = vadd.f32 %v3013, %v3055
    %3057 = vdwg.mxu0
    %3058 = vmatprep.subr.bf16.mxu0 %v2080
    %3059 = vmatpush1.bf16.msra.mxu0 %v2079
    %3060 = vmatprep.subr.bf16.mxu0 %v2088
    %3061 = vmatpush1.bf16.msra.mxu0 %v2087
    %3062 = vmatprep.subr.bf16.mxu0 %v2096
    %3063 = vmatpush1.bf16.msra.mxu0 %v2095
    %3064 = vmatprep.subr.bf16.mxu0 %v2104
    %3065 = vmatpush1.bf16.msra.mxu0 %v2103
    %3066 = vmatprep.subr.bf16.mxu0 %v2112
    %3067 = vmatpush1.bf16.msra.mxu0 %v2111
    %3068 = vmatprep.subr.bf16.mxu0 %v2120
    %3069 = vmatpush1.bf16.msra.mxu0 %v2119
    %3070 = vmatprep.subr.bf16.mxu0 %v2128
    %3071 = vmatpush1.bf16.msra.mxu0 %v2127
    %3072 = vmatprep.subr.bf16.mxu0 %v2136
    %3073 = vmatpush1.bf16.msra.mxu0 %v2135
    %3074 = vmatprep.subr.bf16.mxu0 %v2144
    %3075 = vmatpush1.bf16.msra.mxu0 %v2143
    %3076 = vmatprep.subr.bf16.mxu0 %v2152
    %3077 = vmatpush1.bf16.msra.mxu0 %v2151
    %3078 = vmatprep.subr.bf16.mxu0 %v2160
    %3079 = vmatpush1.bf16.msra.mxu0 %v2159
    %3080 = vmatprep.subr.bf16.mxu0 %v2168
    %3081 = vmatpush1.bf16.msra.mxu0 %v2167
    %3082 = vmatprep.subr.bf16.mxu0 %v2176
    %3083 = vmatpush1.bf16.msra.mxu0 %v2175
    %3084 = vmatprep.subr.bf16.mxu0 %v2184
    %3085 = vmatpush1.bf16.msra.mxu0 %v2183
    %3086 = vmatprep.subr.bf16.mxu0 %v2192
    %3087 = vmatpush1.bf16.msra.mxu0 %v2191
    %3088 = vmatprep.subr.bf16.mxu0 %v2200
    %3089 = vmatpush1.bf16.msra.mxu0 %v2199
    %3090 = vmatprep.mubr.bf16.mxu0 %v238
    %3091 = vmatmul.mubr.bf16.gmra.mrb[0].mxu0 %v237
    %v3092 = vpop.f32.mrb[0].mxu0
    %v3093 = vadd.f32 %v3050, %v3092
    %v3094 = vpop.f32.mrb[0].mxu0
    %v3095 = vadd.f32 %v3052, %v3094
    %v3096 = vpop.f32.mrb[0].mxu0
    %v3097 = vadd.f32 %v3054, %v3096
    %v3098 = vpop.f32.mrb[0].mxu0
    %v3099 = vadd.f32 %v3056, %v3098
    %3100 = vdwg.mxu0
    %v3101 = vmax.f32 %v2706, 0.0
    %v3102 = vmax.f32 %v2708, 0.0
    %v3103 = vmax.f32 %v2835, 0.0
    %v3104 = vmax.f32 %v2837, 0.0
    %v3105 = vmax.f32 %v2964, 0.0
    %v3106 = vmax.f32 %v2966, 0.0
    %v3107 = vmax.f32 %v3093, 0.0
    %v3108 = vmax.f32 %v3095, 0.0
    %v3109 = vmax.f32 %v2710, 0.0
    %v3110 = vmax.f32 %v2712, 0.0
    %v3111 = vmax.f32 %v2839, 0.0
    %v3112 = vmax.f32 %v2841, 0.0
    %v3113 = vmax.f32 %v2968, 0.0
    %v3114 = vmax.f32 %v2970, 0.0
    %v3115 = vmax.f32 %v3097, 0.0
    %v3116 = vmax.f32 %v3099, 0.0
    %v3117 = vpack.c.bf16 %v3109, %v3101
    %v3118 = vpack.c.bf16 %v3110, %v3102
    %v3119 = vpack.c.bf16 %v3111, %v3103
    %v3120 = vpack.c.bf16 %v3112, %v3104
    %v3121 = vpack.c.bf16 %v3113, %v3105
    %v3122 = vpack.c.bf16 %v3114, %v3106
    %v3123 = vpack.c.bf16 %v3115, %v3107
    %v3124 = vpack.c.bf16 %v3116, %v3108
    %v3125 = vld [vmem:[%s6] sm:$0xff]
    %v3126 = vld [vmem:[%s6 + $0x8] sm:$0xff]
    %v3127 = vld [vmem:[%s6 + $0x10] sm:$0xff]
    %v3128 = vld [vmem:[%s6 + $0x18] sm:$0xff]
    %v3129 = vld [vmem:[%s6 + $0x20] sm:$0xff]
    %v3130 = vld [vmem:[%s6 + $0x28] sm:$0xff]
    %v3131 = vld [vmem:[%s6 + $0x30] sm:$0xff]
    %v3132 = vld [vmem:[%s6 + $0x38] sm:$0xff]
    %v3133 = vld [vmem:[%s6 + $0x40] sm:$0xff]
    %v3134 = vld [vmem:[%s6 + $0x48] sm:$0xff]
    %v3135 = vld [vmem:[%s6 + $0x50] sm:$0xff]
    %v3136 = vld [vmem:[%s6 + $0x58] sm:$0xff]
    %v3137 = vld [vmem:[%s6 + $0x60] sm:$0xff]
    %v3138 = vld [vmem:[%s6 + $0x68] sm:$0xff]
    %v3139 = vld [vmem:[%s6 + $0x70] sm:$0xff]
    %v3140 = vld [vmem:[%s6 + $0x78] sm:$0xff]
    %v3141 = vld [vmem:[%s6 + $0x80] sm:$0xff]
    %v3142 = vld [vmem:[%s6 + $0x88] sm:$0xff]
    %v3143 = vld [vmem:[%s6 + $0x90] sm:$0xff]
    %v3144 = vld [vmem:[%s6 + $0x98] sm:$0xff]
    %v3145 = vld [vmem:[%s6 + $0xa0] sm:$0xff]
    %v3146 = vld [vmem:[%s6 + $0xa8] sm:$0xff]
    %v3147 = vld [vmem:[%s6 + $0xb0] sm:$0xff]
    %v3148 = vld [vmem:[%s6 + $0xb8] sm:$0xff]
    %v3149 = vld [vmem:[%s6 + $0xc0] sm:$0xff]
    %v3150 = vld [vmem:[%s6 + $0xc8] sm:$0xff]
    %v3151 = vld [vmem:[%s6 + $0xd0] sm:$0xff]
    %v3152 = vld [vmem:[%s6 + $0xd8] sm:$0xff]
    %v3153 = vld [vmem:[%s6 + $0xe0] sm:$0xff]
    %v3154 = vld [vmem:[%s6 + $0xe8] sm:$0xff]
    %v3155 = vld [vmem:[%s6 + $0xf0] sm:$0xff]
    %v3156 = vld [vmem:[%s6 + $0xf8] sm:$0xff]
    %v3157 = vld [vmem:[%s6 + $0x100] sm:$0xff]
    %v3158 = vld [vmem:[%s6 + $0x108] sm:$0xff]
    %v3159 = vld [vmem:[%s6 + $0x110] sm:$0xff]
    %v3160 = vld [vmem:[%s6 + $0x118] sm:$0xff]
    %v3161 = vld [vmem:[%s6 + $0x120] sm:$0xff]
    %v3162 = vld [vmem:[%s6 + $0x128] sm:$0xff]
    %v3163 = vld [vmem:[%s6 + $0x130] sm:$0xff]
    %v3164 = vld [vmem:[%s6 + $0x138] sm:$0xff]
    %v3165 = vld [vmem:[%s6 + $0x140] sm:$0xff]
    %v3166 = vld [vmem:[%s6 + $0x148] sm:$0xff]
    %v3167 = vld [vmem:[%s6 + $0x150] sm:$0xff]
    %v3168 = vld [vmem:[%s6 + $0x158] sm:$0xff]
    %v3169 = vld [vmem:[%s6 + $0x160] sm:$0xff]
    %v3170 = vld [vmem:[%s6 + $0x168] sm:$0xff]
    %v3171 = vld [vmem:[%s6 + $0x170] sm:$0xff]
    %v3172 = vld [vmem:[%s6 + $0x178] sm:$0xff]
    %v3173 = vld [vmem:[%s6 + $0x180] sm:$0xff]
    %v3174 = vld [vmem:[%s6 + $0x188] sm:$0xff]
    %v3175 = vld [vmem:[%s6 + $0x190] sm:$0xff]
    %v3176 = vld [vmem:[%s6 + $0x198] sm:$0xff]
    %v3177 = vld [vmem:[%s6 + $0x1a0] sm:$0xff]
    %v3178 = vld [vmem:[%s6 + $0x1a8] sm:$0xff]
    %v3179 = vld [vmem:[%s6 + $0x1b0] sm:$0xff]
    %v3180 = vld [vmem:[%s6 + $0x1b8] sm:$0xff]
    %v3181 = vld [vmem:[%s6 + $0x1c0] sm:$0xff]
    %v3182 = vld [vmem:[%s6 + $0x1c8] sm:$0xff]
    %v3183 = vld [vmem:[%s6 + $0x1d0] sm:$0xff]
    %v3184 = vld [vmem:[%s6 + $0x1d8] sm:$0xff]
    %v3185 = vld [vmem:[%s6 + $0x1e0] sm:$0xff]
    %v3186 = vld [vmem:[%s6 + $0x1e8] sm:$0xff]
    %v3187 = vld [vmem:[%s6 + $0x1f0] sm:$0xff]
    %v3188 = vld [vmem:[%s6 + $0x1f8] sm:$0xff]
    %v3189 = vld [vmem:[%s6 + $0x200] sm:$0xff]
    %v3190 = vld [vmem:[%s6 + $0x208] sm:$0xff]
    %v3191 = vld [vmem:[%s6 + $0x210] sm:$0xff]
    %v3192 = vld [vmem:[%s6 + $0x218] sm:$0xff]
    %v3193 = vld [vmem:[%s6 + $0x220] sm:$0xff]
    %v3194 = vld [vmem:[%s6 + $0x228] sm:$0xff]
    %v3195 = vld [vmem:[%s6 + $0x230] sm:$0xff]
    %v3196 = vld [vmem:[%s6 + $0x238] sm:$0xff]
    %v3197 = vld [vmem:[%s6 + $0x240] sm:$0xff]
    %v3198 = vld [vmem:[%s6 + $0x248] sm:$0xff]
    %v3199 = vld [vmem:[%s6 + $0x250] sm:$0xff]
    %v3200 = vld [vmem:[%s6 + $0x258] sm:$0xff]
    %v3201 = vld [vmem:[%s6 + $0x260] sm:$0xff]
    %v3202 = vld [vmem:[%s6 + $0x268] sm:$0xff]
    %v3203 = vld [vmem:[%s6 + $0x270] sm:$0xff]
    %v3204 = vld [vmem:[%s6 + $0x278] sm:$0xff]
    %v3205 = vld [vmem:[%s6 + $0x280] sm:$0xff]
    %v3206 = vld [vmem:[%s6 + $0x288] sm:$0xff]
    %v3207 = vld [vmem:[%s6 + $0x290] sm:$0xff]
    %v3208 = vld [vmem:[%s6 + $0x298] sm:$0xff]
    %v3209 = vld [vmem:[%s6 + $0x2a0] sm:$0xff]
    %v3210 = vld [vmem:[%s6 + $0x2a8] sm:$0xff]
    %v3211 = vld [vmem:[%s6 + $0x2b0] sm:$0xff]
    %v3212 = vld [vmem:[%s6 + $0x2b8] sm:$0xff]
    %v3213 = vld [vmem:[%s6 + $0x2c0] sm:$0xff]
    %v3214 = vld [vmem:[%s6 + $0x2c8] sm:$0xff]
    %v3215 = vld [vmem:[%s6 + $0x2d0] sm:$0xff]
    %v3216 = vld [vmem:[%s6 + $0x2d8] sm:$0xff]
    %v3217 = vld [vmem:[%s6 + $0x2e0] sm:$0xff]
    %v3218 = vld [vmem:[%s6 + $0x2e8] sm:$0xff]
    %v3219 = vld [vmem:[%s6 + $0x2f0] sm:$0xff]
    %v3220 = vld [vmem:[%s6 + $0x2f8] sm:$0xff]
    %v3221 = vld [vmem:[%s6 + $0x300] sm:$0xff]
    %v3222 = vld [vmem:[%s6 + $0x308] sm:$0xff]
    %v3223 = vld [vmem:[%s6 + $0x310] sm:$0xff]
    %v3224 = vld [vmem:[%s6 + $0x318] sm:$0xff]
    %v3225 = vld [vmem:[%s6 + $0x320] sm:$0xff]
    %v3226 = vld [vmem:[%s6 + $0x328] sm:$0xff]
    %v3227 = vld [vmem:[%s6 + $0x330] sm:$0xff]
    %v3228 = vld [vmem:[%s6 + $0x338] sm:$0xff]
    %v3229 = vld [vmem:[%s6 + $0x340] sm:$0xff]
    %v3230 = vld [vmem:[%s6 + $0x348] sm:$0xff]
    %v3231 = vld [vmem:[%s6 + $0x350] sm:$0xff]
    %v3232 = vld [vmem:[%s6 + $0x358] sm:$0xff]
    %v3233 = vld [vmem:[%s6 + $0x360] sm:$0xff]
    %v3234 = vld [vmem:[%s6 + $0x368] sm:$0xff]
    %v3235 = vld [vmem:[%s6 + $0x370] sm:$0xff]
    %v3236 = vld [vmem:[%s6 + $0x378] sm:$0xff]
    %v3237 = vld [vmem:[%s6 + $0x380] sm:$0xff]
    %v3238 = vld [vmem:[%s6 + $0x388] sm:$0xff]
    %v3239 = vld [vmem:[%s6 + $0x390] sm:$0xff]
    %v3240 = vld [vmem:[%s6 + $0x398] sm:$0xff]
    %v3241 = vld [vmem:[%s6 + $0x3a0] sm:$0xff]
    %v3242 = vld [vmem:[%s6 + $0x3a8] sm:$0xff]
    %v3243 = vld [vmem:[%s6 + $0x3b0] sm:$0xff]
    %v3244 = vld [vmem:[%s6 + $0x3b8] sm:$0xff]
    %v3245 = vld [vmem:[%s6 + $0x3c0] sm:$0xff]
    %v3246 = vld [vmem:[%s6 + $0x3c8] sm:$0xff]
    %v3247 = vld [vmem:[%s6 + $0x3d0] sm:$0xff]
    %v3248 = vld [vmem:[%s6 + $0x3d8] sm:$0xff]
    %v3249 = vld [vmem:[%s6 + $0x3e0] sm:$0xff]
    %v3250 = vld [vmem:[%s6 + $0x3e8] sm:$0xff]
    %v3251 = vld [vmem:[%s6 + $0x3f0] sm:$0xff]
    %v3252 = vld [vmem:[%s6 + $0x3f8] sm:$0xff]
    %v3253 = vld [vmem:[%s6 + $0x400] sm:$0xff]
    %v3254 = vld [vmem:[%s6 + $0x408] sm:$0xff]
    %v3255 = vld [vmem:[%s6 + $0x410] sm:$0xff]
    %v3256 = vld [vmem:[%s6 + $0x418] sm:$0xff]
    %v3257 = vld [vmem:[%s6 + $0x420] sm:$0xff]
    %v3258 = vld [vmem:[%s6 + $0x428] sm:$0xff]
    %v3259 = vld [vmem:[%s6 + $0x430] sm:$0xff]
    %v3260 = vld [vmem:[%s6 + $0x438] sm:$0xff]
    %v3261 = vld [vmem:[%s6 + $0x440] sm:$0xff]
    %v3262 = vld [vmem:[%s6 + $0x448] sm:$0xff]
    %v3263 = vld [vmem:[%s6 + $0x450] sm:$0xff]
    %v3264 = vld [vmem:[%s6 + $0x458] sm:$0xff]
    %v3265 = vld [vmem:[%s6 + $0x460] sm:$0xff]
    %v3266 = vld [vmem:[%s6 + $0x468] sm:$0xff]
    %v3267 = vld [vmem:[%s6 + $0x470] sm:$0xff]
    %v3268 = vld [vmem:[%s6 + $0x478] sm:$0xff]
    %v3269 = vld [vmem:[%s6 + $0x480] sm:$0xff]
    %v3270 = vld [vmem:[%s6 + $0x488] sm:$0xff]
    %v3271 = vld [vmem:[%s6 + $0x490] sm:$0xff]
    %v3272 = vld [vmem:[%s6 + $0x498] sm:$0xff]
    %v3273 = vld [vmem:[%s6 + $0x4a0] sm:$0xff]
    %v3274 = vld [vmem:[%s6 + $0x4a8] sm:$0xff]
    %v3275 = vld [vmem:[%s6 + $0x4b0] sm:$0xff]
    %v3276 = vld [vmem:[%s6 + $0x4b8] sm:$0xff]
    %v3277 = vld [vmem:[%s6 + $0x4c0] sm:$0xff]
    %v3278 = vld [vmem:[%s6 + $0x4c8] sm:$0xff]
    %v3279 = vld [vmem:[%s6 + $0x4d0] sm:$0xff]
    %v3280 = vld [vmem:[%s6 + $0x4d8] sm:$0xff]
    %v3281 = vld [vmem:[%s6 + $0x4e0] sm:$0xff]
    %v3282 = vld [vmem:[%s6 + $0x4e8] sm:$0xff]
    %v3283 = vld [vmem:[%s6 + $0x4f0] sm:$0xff]
    %v3284 = vld [vmem:[%s6 + $0x4f8] sm:$0xff]
    %v3285 = vld [vmem:[%s6 + $0x500] sm:$0xff]
    %v3286 = vld [vmem:[%s6 + $0x508] sm:$0xff]
    %v3287 = vld [vmem:[%s6 + $0x510] sm:$0xff]
    %v3288 = vld [vmem:[%s6 + $0x518] sm:$0xff]
    %v3289 = vld [vmem:[%s6 + $0x520] sm:$0xff]
    %v3290 = vld [vmem:[%s6 + $0x528] sm:$0xff]
    %v3291 = vld [vmem:[%s6 + $0x530] sm:$0xff]
    %v3292 = vld [vmem:[%s6 + $0x538] sm:$0xff]
    %v3293 = vld [vmem:[%s6 + $0x540] sm:$0xff]
    %v3294 = vld [vmem:[%s6 + $0x548] sm:$0xff]
    %v3295 = vld [vmem:[%s6 + $0x550] sm:$0xff]
    %v3296 = vld [vmem:[%s6 + $0x558] sm:$0xff]
    %v3297 = vld [vmem:[%s6 + $0x560] sm:$0xff]
    %v3298 = vld [vmem:[%s6 + $0x568] sm:$0xff]
    %v3299 = vld [vmem:[%s6 + $0x570] sm:$0xff]
    %v3300 = vld [vmem:[%s6 + $0x578] sm:$0xff]
    %v3301 = vld [vmem:[%s6 + $0x580] sm:$0xff]
    %v3302 = vld [vmem:[%s6 + $0x588] sm:$0xff]
    %v3303 = vld [vmem:[%s6 + $0x590] sm:$0xff]
    %v3304 = vld [vmem:[%s6 + $0x598] sm:$0xff]
    %v3305 = vld [vmem:[%s6 + $0x5a0] sm:$0xff]
    %v3306 = vld [vmem:[%s6 + $0x5a8] sm:$0xff]
    %v3307 = vld [vmem:[%s6 + $0x5b0] sm:$0xff]
    %v3308 = vld [vmem:[%s6 + $0x5b8] sm:$0xff]
    %v3309 = vld [vmem:[%s6 + $0x5c0] sm:$0xff]
    %v3310 = vld [vmem:[%s6 + $0x5c8] sm:$0xff]
    %v3311 = vld [vmem:[%s6 + $0x5d0] sm:$0xff]
    %v3312 = vld [vmem:[%s6 + $0x5d8] sm:$0xff]
    %v3313 = vld [vmem:[%s6 + $0x5e0] sm:$0xff]
    %v3314 = vld [vmem:[%s6 + $0x5e8] sm:$0xff]
    %v3315 = vld [vmem:[%s6 + $0x5f0] sm:$0xff]
    %v3316 = vld [vmem:[%s6 + $0x5f8] sm:$0xff]
    %v3317 = vld [vmem:[%s6 + $0x600] sm:$0xff]
    %v3318 = vld [vmem:[%s6 + $0x608] sm:$0xff]
    %v3319 = vld [vmem:[%s6 + $0x610] sm:$0xff]
    %v3320 = vld [vmem:[%s6 + $0x618] sm:$0xff]
    %v3321 = vld [vmem:[%s6 + $0x620] sm:$0xff]
    %v3322 = vld [vmem:[%s6 + $0x628] sm:$0xff]
    %v3323 = vld [vmem:[%s6 + $0x630] sm:$0xff]
    %v3324 = vld [vmem:[%s6 + $0x638] sm:$0xff]
    %v3325 = vld [vmem:[%s6 + $0x640] sm:$0xff]
    %v3326 = vld [vmem:[%s6 + $0x648] sm:$0xff]
    %v3327 = vld [vmem:[%s6 + $0x650] sm:$0xff]
    %v3328 = vld [vmem:[%s6 + $0x658] sm:$0xff]
    %v3329 = vld [vmem:[%s6 + $0x660] sm:$0xff]
    %v3330 = vld [vmem:[%s6 + $0x668] sm:$0xff]
    %v3331 = vld [vmem:[%s6 + $0x670] sm:$0xff]
    %v3332 = vld [vmem:[%s6 + $0x678] sm:$0xff]
    %v3333 = vld [vmem:[%s6 + $0x680] sm:$0xff]
    %v3334 = vld [vmem:[%s6 + $0x688] sm:$0xff]
    %v3335 = vld [vmem:[%s6 + $0x690] sm:$0xff]
    %v3336 = vld [vmem:[%s6 + $0x698] sm:$0xff]
    %v3337 = vld [vmem:[%s6 + $0x6a0] sm:$0xff]
    %v3338 = vld [vmem:[%s6 + $0x6a8] sm:$0xff]
    %v3339 = vld [vmem:[%s6 + $0x6b0] sm:$0xff]
    %v3340 = vld [vmem:[%s6 + $0x6b8] sm:$0xff]
    %v3341 = vld [vmem:[%s6 + $0x6c0] sm:$0xff]
    %v3342 = vld [vmem:[%s6 + $0x6c8] sm:$0xff]
    %v3343 = vld [vmem:[%s6 + $0x6d0] sm:$0xff]
    %v3344 = vld [vmem:[%s6 + $0x6d8] sm:$0xff]
    %v3345 = vld [vmem:[%s6 + $0x6e0] sm:$0xff]
    %v3346 = vld [vmem:[%s6 + $0x6e8] sm:$0xff]
    %v3347 = vld [vmem:[%s6 + $0x6f0] sm:$0xff]
    %v3348 = vld [vmem:[%s6 + $0x6f8] sm:$0xff]
    %v3349 = vld [vmem:[%s6 + $0x700] sm:$0xff]
    %v3350 = vld [vmem:[%s6 + $0x708] sm:$0xff]
    %v3351 = vld [vmem:[%s6 + $0x710] sm:$0xff]
    %v3352 = vld [vmem:[%s6 + $0x718] sm:$0xff]
    %v3353 = vld [vmem:[%s6 + $0x720] sm:$0xff]
    %v3354 = vld [vmem:[%s6 + $0x728] sm:$0xff]
    %v3355 = vld [vmem:[%s6 + $0x730] sm:$0xff]
    %v3356 = vld [vmem:[%s6 + $0x738] sm:$0xff]
    %v3357 = vld [vmem:[%s6 + $0x740] sm:$0xff]
    %v3358 = vld [vmem:[%s6 + $0x748] sm:$0xff]
    %v3359 = vld [vmem:[%s6 + $0x750] sm:$0xff]
    %v3360 = vld [vmem:[%s6 + $0x758] sm:$0xff]
    %v3361 = vld [vmem:[%s6 + $0x760] sm:$0xff]
    %v3362 = vld [vmem:[%s6 + $0x768] sm:$0xff]
    %v3363 = vld [vmem:[%s6 + $0x770] sm:$0xff]
    %v3364 = vld [vmem:[%s6 + $0x778] sm:$0xff]
    %v3365 = vld [vmem:[%s6 + $0x780] sm:$0xff]
    %v3366 = vld [vmem:[%s6 + $0x788] sm:$0xff]
    %v3367 = vld [vmem:[%s6 + $0x790] sm:$0xff]
    %v3368 = vld [vmem:[%s6 + $0x798] sm:$0xff]
    %v3369 = vld [vmem:[%s6 + $0x7a0] sm:$0xff]
    %v3370 = vld [vmem:[%s6 + $0x7a8] sm:$0xff]
    %v3371 = vld [vmem:[%s6 + $0x7b0] sm:$0xff]
    %v3372 = vld [vmem:[%s6 + $0x7b8] sm:$0xff]
    %v3373 = vld [vmem:[%s6 + $0x7c0] sm:$0xff]
    %v3374 = vld [vmem:[%s6 + $0x7c8] sm:$0xff]
    %v3375 = vld [vmem:[%s6 + $0x7d0] sm:$0xff]
    %v3376 = vld [vmem:[%s6 + $0x7d8] sm:$0xff]
    %v3377 = vld [vmem:[%s6 + $0x7e0] sm:$0xff]
    %v3378 = vld [vmem:[%s6 + $0x7e8] sm:$0xff]
    %v3379 = vld [vmem:[%s6 + $0x7f0] sm:$0xff]
    %v3380 = vld [vmem:[%s6 + $0x7f8] sm:$0xff]
    %v3381 = vld [vmem:[%s6 + $0x800] sm:$0xff]
    %v3382 = vld [vmem:[%s6 + $0x808] sm:$0xff]
    %v3383 = vld [vmem:[%s6 + $0x810] sm:$0xff]
    %v3384 = vld [vmem:[%s6 + $0x818] sm:$0xff]
    %v3385 = vld [vmem:[%s6 + $0x820] sm:$0xff]
    %v3386 = vld [vmem:[%s6 + $0x828] sm:$0xff]
    %v3387 = vld [vmem:[%s6 + $0x830] sm:$0xff]
    %v3388 = vld [vmem:[%s6 + $0x838] sm:$0xff]
    %v3389 = vld [vmem:[%s6 + $0x840] sm:$0xff]
    %v3390 = vld [vmem:[%s6 + $0x848] sm:$0xff]
    %v3391 = vld [vmem:[%s6 + $0x850] sm:$0xff]
    %v3392 = vld [vmem:[%s6 + $0x858] sm:$0xff]
    %v3393 = vld [vmem:[%s6 + $0x860] sm:$0xff]
    %v3394 = vld [vmem:[%s6 + $0x868] sm:$0xff]
    %v3395 = vld [vmem:[%s6 + $0x870] sm:$0xff]
    %v3396 = vld [vmem:[%s6 + $0x878] sm:$0xff]
    %v3397 = vld [vmem:[%s6 + $0x880] sm:$0xff]
    %v3398 = vld [vmem:[%s6 + $0x888] sm:$0xff]
    %v3399 = vld [vmem:[%s6 + $0x890] sm:$0xff]
    %v3400 = vld [vmem:[%s6 + $0x898] sm:$0xff]
    %v3401 = vld [vmem:[%s6 + $0x8a0] sm:$0xff]
    %v3402 = vld [vmem:[%s6 + $0x8a8] sm:$0xff]
    %v3403 = vld [vmem:[%s6 + $0x8b0] sm:$0xff]
    %v3404 = vld [vmem:[%s6 + $0x8b8] sm:$0xff]
    %v3405 = vld [vmem:[%s6 + $0x8c0] sm:$0xff]
    %v3406 = vld [vmem:[%s6 + $0x8c8] sm:$0xff]
    %v3407 = vld [vmem:[%s6 + $0x8d0] sm:$0xff]
    %v3408 = vld [vmem:[%s6 + $0x8d8] sm:$0xff]
    %v3409 = vld [vmem:[%s6 + $0x8e0] sm:$0xff]
    %v3410 = vld [vmem:[%s6 + $0x8e8] sm:$0xff]
    %v3411 = vld [vmem:[%s6 + $0x8f0] sm:$0xff]
    %v3412 = vld [vmem:[%s6 + $0x8f8] sm:$0xff]
    %v3413 = vld [vmem:[%s6 + $0x900] sm:$0xff]
    %v3414 = vld [vmem:[%s6 + $0x908] sm:$0xff]
    %v3415 = vld [vmem:[%s6 + $0x910] sm:$0xff]
    %v3416 = vld [vmem:[%s6 + $0x918] sm:$0xff]
    %v3417 = vld [vmem:[%s6 + $0x920] sm:$0xff]
    %v3418 = vld [vmem:[%s6 + $0x928] sm:$0xff]
    %v3419 = vld [vmem:[%s6 + $0x930] sm:$0xff]
    %v3420 = vld [vmem:[%s6 + $0x938] sm:$0xff]
    %v3421 = vld [vmem:[%s6 + $0x940] sm:$0xff]
    %v3422 = vld [vmem:[%s6 + $0x948] sm:$0xff]
    %v3423 = vld [vmem:[%s6 + $0x950] sm:$0xff]
    %v3424 = vld [vmem:[%s6 + $0x958] sm:$0xff]
    %v3425 = vld [vmem:[%s6 + $0x960] sm:$0xff]
    %v3426 = vld [vmem:[%s6 + $0x968] sm:$0xff]
    %v3427 = vld [vmem:[%s6 + $0x970] sm:$0xff]
    %v3428 = vld [vmem:[%s6 + $0x978] sm:$0xff]
    %v3429 = vld [vmem:[%s6 + $0x980] sm:$0xff]
    %v3430 = vld [vmem:[%s6 + $0x988] sm:$0xff]
    %v3431 = vld [vmem:[%s6 + $0x990] sm:$0xff]
    %v3432 = vld [vmem:[%s6 + $0x998] sm:$0xff]
    %v3433 = vld [vmem:[%s6 + $0x9a0] sm:$0xff]
    %v3434 = vld [vmem:[%s6 + $0x9a8] sm:$0xff]
    %v3435 = vld [vmem:[%s6 + $0x9b0] sm:$0xff]
    %v3436 = vld [vmem:[%s6 + $0x9b8] sm:$0xff]
    %v3437 = vld [vmem:[%s6 + $0x9c0] sm:$0xff]
    %v3438 = vld [vmem:[%s6 + $0x9c8] sm:$0xff]
    %v3439 = vld [vmem:[%s6 + $0x9d0] sm:$0xff]
    %v3440 = vld [vmem:[%s6 + $0x9d8] sm:$0xff]
    %v3441 = vld [vmem:[%s6 + $0x9e0] sm:$0xff]
    %v3442 = vld [vmem:[%s6 + $0x9e8] sm:$0xff]
    %v3443 = vld [vmem:[%s6 + $0x9f0] sm:$0xff]
    %v3444 = vld [vmem:[%s6 + $0x9f8] sm:$0xff]
    %v3445 = vld [vmem:[%s6 + $0xa00] sm:$0xff]
    %v3446 = vld [vmem:[%s6 + $0xa08] sm:$0xff]
    %v3447 = vld [vmem:[%s6 + $0xa10] sm:$0xff]
    %v3448 = vld [vmem:[%s6 + $0xa18] sm:$0xff]
    %v3449 = vld [vmem:[%s6 + $0xa20] sm:$0xff]
    %v3450 = vld [vmem:[%s6 + $0xa28] sm:$0xff]
    %v3451 = vld [vmem:[%s6 + $0xa30] sm:$0xff]
    %v3452 = vld [vmem:[%s6 + $0xa38] sm:$0xff]
    %v3453 = vld [vmem:[%s6 + $0xa40] sm:$0xff]
    %v3454 = vld [vmem:[%s6 + $0xa48] sm:$0xff]
    %v3455 = vld [vmem:[%s6 + $0xa50] sm:$0xff]
    %v3456 = vld [vmem:[%s6 + $0xa58] sm:$0xff]
    %v3457 = vld [vmem:[%s6 + $0xa60] sm:$0xff]
    %v3458 = vld [vmem:[%s6 + $0xa68] sm:$0xff]
    %v3459 = vld [vmem:[%s6 + $0xa70] sm:$0xff]
    %v3460 = vld [vmem:[%s6 + $0xa78] sm:$0xff]
    %v3461 = vld [vmem:[%s6 + $0xa80] sm:$0xff]
    %v3462 = vld [vmem:[%s6 + $0xa88] sm:$0xff]
    %v3463 = vld [vmem:[%s6 + $0xa90] sm:$0xff]
    %v3464 = vld [vmem:[%s6 + $0xa98] sm:$0xff]
    %v3465 = vld [vmem:[%s6 + $0xaa0] sm:$0xff]
    %v3466 = vld [vmem:[%s6 + $0xaa8] sm:$0xff]
    %v3467 = vld [vmem:[%s6 + $0xab0] sm:$0xff]
    %v3468 = vld [vmem:[%s6 + $0xab8] sm:$0xff]
    %v3469 = vld [vmem:[%s6 + $0xac0] sm:$0xff]
    %v3470 = vld [vmem:[%s6 + $0xac8] sm:$0xff]
    %v3471 = vld [vmem:[%s6 + $0xad0] sm:$0xff]
    %v3472 = vld [vmem:[%s6 + $0xad8] sm:$0xff]
    %v3473 = vld [vmem:[%s6 + $0xae0] sm:$0xff]
    %v3474 = vld [vmem:[%s6 + $0xae8] sm:$0xff]
    %v3475 = vld [vmem:[%s6 + $0xaf0] sm:$0xff]
    %v3476 = vld [vmem:[%s6 + $0xaf8] sm:$0xff]
    %v3477 = vld [vmem:[%s6 + $0xb00] sm:$0xff]
    %v3478 = vld [vmem:[%s6 + $0xb08] sm:$0xff]
    %v3479 = vld [vmem:[%s6 + $0xb10] sm:$0xff]
    %v3480 = vld [vmem:[%s6 + $0xb18] sm:$0xff]
    %v3481 = vld [vmem:[%s6 + $0xb20] sm:$0xff]
    %v3482 = vld [vmem:[%s6 + $0xb28] sm:$0xff]
    %v3483 = vld [vmem:[%s6 + $0xb30] sm:$0xff]
    %v3484 = vld [vmem:[%s6 + $0xb38] sm:$0xff]
    %v3485 = vld [vmem:[%s6 + $0xb40] sm:$0xff]
    %v3486 = vld [vmem:[%s6 + $0xb48] sm:$0xff]
    %v3487 = vld [vmem:[%s6 + $0xb50] sm:$0xff]
    %v3488 = vld [vmem:[%s6 + $0xb58] sm:$0xff]
    %v3489 = vld [vmem:[%s6 + $0xb60] sm:$0xff]
    %v3490 = vld [vmem:[%s6 + $0xb68] sm:$0xff]
    %v3491 = vld [vmem:[%s6 + $0xb70] sm:$0xff]
    %v3492 = vld [vmem:[%s6 + $0xb78] sm:$0xff]
    %v3493 = vld [vmem:[%s6 + $0xb80] sm:$0xff]
    %v3494 = vld [vmem:[%s6 + $0xb88] sm:$0xff]
    %v3495 = vld [vmem:[%s6 + $0xb90] sm:$0xff]
    %v3496 = vld [vmem:[%s6 + $0xb98] sm:$0xff]
    %v3497 = vld [vmem:[%s6 + $0xba0] sm:$0xff]
    %v3498 = vld [vmem:[%s6 + $0xba8] sm:$0xff]
    %v3499 = vld [vmem:[%s6 + $0xbb0] sm:$0xff]
    %v3500 = vld [vmem:[%s6 + $0xbb8] sm:$0xff]
    %v3501 = vld [vmem:[%s6 + $0xbc0] sm:$0xff]
    %v3502 = vld [vmem:[%s6 + $0xbc8] sm:$0xff]
    %v3503 = vld [vmem:[%s6 + $0xbd0] sm:$0xff]
    %v3504 = vld [vmem:[%s6 + $0xbd8] sm:$0xff]
    %v3505 = vld [vmem:[%s6 + $0xbe0] sm:$0xff]
    %v3506 = vld [vmem:[%s6 + $0xbe8] sm:$0xff]
    %v3507 = vld [vmem:[%s6 + $0xbf0] sm:$0xff]
    %v3508 = vld [vmem:[%s6 + $0xbf8] sm:$0xff]
    %v3509 = vld [vmem:[%s7] sm:$0x3f]
    %v3511 = vlaneseq
    %v3512 = vshrl.u32 %v3511, 7
    %v3513 = vsub.s32 0, %v3512
    %v3514 = vrot.slane %v3509, %v3513
    %v3515 = vlaneseq
    %v3516 = vshrl.u32 %v3515, 7
    %v3517 = vsub.s32 1, %v3516
    %v3518 = vrot.slane %v3509, %v3517
    %v3519 = vlaneseq
    %v3520 = vshrl.u32 %v3519, 7
    %v3521 = vsub.s32 2, %v3520
    %v3522 = vrot.slane %v3509, %v3521
    %v3523 = vlaneseq
    %v3524 = vshrl.u32 %v3523, 7
    %v3525 = vsub.s32 3, %v3524
    %v3526 = vrot.slane %v3509, %v3525
    %v3527 = vlaneseq
    %v3528 = vshrl.u32 %v3527, 7
    %v3529 = vsub.s32 4, %v3528
    %v3530 = vrot.slane %v3509, %v3529
    %v3531 = vlaneseq
    %v3532 = vshrl.u32 %v3531, 7
    %v3533 = vsub.s32 5, %v3532
    %v3534 = vrot.slane %v3509, %v3533
    %v3925 = vunpack.c.l.b16 %v3125
    %v3926 = vunpack.c.h.b16 %v3125
    %v3927 = vunpack.c.l.b16 %v3126
    %v3928 = vunpack.c.h.b16 %v3126
    %v3929 = vunpack.c.l.b16 %v3127
    %v3930 = vunpack.c.h.b16 %v3127
    %v3931 = vunpack.c.l.b16 %v3128
    %v3932 = vunpack.c.h.b16 %v3128
    %v3933 = vunpack.c.l.b16 %v3129
    %v3934 = vunpack.c.h.b16 %v3129
    %v3935 = vunpack.c.l.b16 %v3130
    %v3936 = vunpack.c.h.b16 %v3130
    %v3937 = vunpack.c.l.b16 %v3131
    %v3938 = vunpack.c.h.b16 %v3131
    %v3939 = vunpack.c.l.b16 %v3132
    %v3940 = vunpack.c.h.b16 %v3132
    %v3941 = vunpack.c.l.b16 %v3133
    %v3942 = vunpack.c.h.b16 %v3133
    %v3943 = vunpack.c.l.b16 %v3134
    %v3944 = vunpack.c.h.b16 %v3134
    %v3945 = vunpack.c.l.b16 %v3135
    %v3946 = vunpack.c.h.b16 %v3135
    %v3947 = vunpack.c.l.b16 %v3136
    %v3948 = vunpack.c.h.b16 %v3136
    %v3949 = vunpack.c.l.b16 %v3137
    %v3950 = vunpack.c.h.b16 %v3137
    %v3951 = vunpack.c.l.b16 %v3138
    %v3952 = vunpack.c.h.b16 %v3138
    %v3953 = vunpack.c.l.b16 %v3139
    %v3954 = vunpack.c.h.b16 %v3139
    %v3955 = vunpack.c.l.b16 %v3140
    %v3956 = vunpack.c.h.b16 %v3140
    %v3957 = vunpack.c.l.b16 %v3141
    %v3958 = vunpack.c.h.b16 %v3141
    %v3959 = vunpack.c.l.b16 %v3142
    %v3960 = vunpack.c.h.b16 %v3142
    %v3961 = vunpack.c.l.b16 %v3143
    %v3962 = vunpack.c.h.b16 %v3143
    %v3963 = vunpack.c.l.b16 %v3144
    %v3964 = vunpack.c.h.b16 %v3144
    %v3965 = vunpack.c.l.b16 %v3145
    %v3966 = vunpack.c.h.b16 %v3145
    %v3967 = vunpack.c.l.b16 %v3146
    %v3968 = vunpack.c.h.b16 %v3146
    %v3969 = vunpack.c.l.b16 %v3147
    %v3970 = vunpack.c.h.b16 %v3147
    %v3971 = vunpack.c.l.b16 %v3148
    %v3972 = vunpack.c.h.b16 %v3148
    %v3973 = vunpack.c.l.b16 %v3149
    %v3974 = vunpack.c.h.b16 %v3149
    %v3975 = vunpack.c.l.b16 %v3150
    %v3976 = vunpack.c.h.b16 %v3150
    %v3977 = vunpack.c.l.b16 %v3151
    %v3978 = vunpack.c.h.b16 %v3151
    %v3979 = vunpack.c.l.b16 %v3152
    %v3980 = vunpack.c.h.b16 %v3152
    %v3981 = vunpack.c.l.b16 %v3153
    %v3982 = vunpack.c.h.b16 %v3153
    %v3983 = vunpack.c.l.b16 %v3154
    %v3984 = vunpack.c.h.b16 %v3154
    %v3985 = vunpack.c.l.b16 %v3155
    %v3986 = vunpack.c.h.b16 %v3155
    %v3987 = vunpack.c.l.b16 %v3156
    %v3988 = vunpack.c.h.b16 %v3156
    %v3989 = vunpack.c.l.b16 %v3157
    %v3990 = vunpack.c.h.b16 %v3157
    %v3991 = vunpack.c.l.b16 %v3158
    %v3992 = vunpack.c.h.b16 %v3158
    %v3993 = vunpack.c.l.b16 %v3159
    %v3994 = vunpack.c.h.b16 %v3159
    %v3995 = vunpack.c.l.b16 %v3160
    %v3996 = vunpack.c.h.b16 %v3160
    %v3997 = vunpack.c.l.b16 %v3161
    %v3998 = vunpack.c.h.b16 %v3161
    %v3999 = vunpack.c.l.b16 %v3162
    %v4000 = vunpack.c.h.b16 %v3162
    %v4001 = vunpack.c.l.b16 %v3163
    %v4002 = vunpack.c.h.b16 %v3163
    %v4003 = vunpack.c.l.b16 %v3164
    %v4004 = vunpack.c.h.b16 %v3164
    %v4005 = vunpack.c.l.b16 %v3165
    %v4006 = vunpack.c.h.b16 %v3165
    %v4007 = vunpack.c.l.b16 %v3166
    %v4008 = vunpack.c.h.b16 %v3166
    %v4009 = vunpack.c.l.b16 %v3167
    %v4010 = vunpack.c.h.b16 %v3167
    %v4011 = vunpack.c.l.b16 %v3168
    %v4012 = vunpack.c.h.b16 %v3168
    %v4013 = vunpack.c.l.b16 %v3169
    %v4014 = vunpack.c.h.b16 %v3169
    %v4015 = vunpack.c.l.b16 %v3170
    %v4016 = vunpack.c.h.b16 %v3170
    %v4017 = vunpack.c.l.b16 %v3171
    %v4018 = vunpack.c.h.b16 %v3171
    %v4019 = vunpack.c.l.b16 %v3172
    %v4020 = vunpack.c.h.b16 %v3172
    %v4021 = vunpack.c.l.b16 %v3173
    %v4022 = vunpack.c.h.b16 %v3173
    %v4023 = vunpack.c.l.b16 %v3174
    %v4024 = vunpack.c.h.b16 %v3174
    %v4025 = vunpack.c.l.b16 %v3175
    %v4026 = vunpack.c.h.b16 %v3175
    %v4027 = vunpack.c.l.b16 %v3176
    %v4028 = vunpack.c.h.b16 %v3176
    %v4029 = vunpack.c.l.b16 %v3177
    %v4030 = vunpack.c.h.b16 %v3177
    %v4031 = vunpack.c.l.b16 %v3178
    %v4032 = vunpack.c.h.b16 %v3178
    %v4033 = vunpack.c.l.b16 %v3179
    %v4034 = vunpack.c.h.b16 %v3179
    %v4035 = vunpack.c.l.b16 %v3180
    %v4036 = vunpack.c.h.b16 %v3180
    %v4037 = vunpack.c.l.b16 %v3181
    %v4038 = vunpack.c.h.b16 %v3181
    %v4039 = vunpack.c.l.b16 %v3182
    %v4040 = vunpack.c.h.b16 %v3182
    %v4041 = vunpack.c.l.b16 %v3183
    %v4042 = vunpack.c.h.b16 %v3183
    %v4043 = vunpack.c.l.b16 %v3184
    %v4044 = vunpack.c.h.b16 %v3184
    %v4045 = vunpack.c.l.b16 %v3185
    %v4046 = vunpack.c.h.b16 %v3185
    %v4047 = vunpack.c.l.b16 %v3186
    %v4048 = vunpack.c.h.b16 %v3186
    %v4049 = vunpack.c.l.b16 %v3187
    %v4050 = vunpack.c.h.b16 %v3187
    %v4051 = vunpack.c.l.b16 %v3188
    %v4052 = vunpack.c.h.b16 %v3188
    %v4053 = vunpack.c.l.b16 %v3189
    %v4054 = vunpack.c.h.b16 %v3189
    %v4055 = vunpack.c.l.b16 %v3190
    %v4056 = vunpack.c.h.b16 %v3190
    %v4057 = vunpack.c.l.b16 %v3191
    %v4058 = vunpack.c.h.b16 %v3191
    %v4059 = vunpack.c.l.b16 %v3192
    %v4060 = vunpack.c.h.b16 %v3192
    %v4061 = vunpack.c.l.b16 %v3193
    %v4062 = vunpack.c.h.b16 %v3193
    %v4063 = vunpack.c.l.b16 %v3194
    %v4064 = vunpack.c.h.b16 %v3194
    %v4065 = vunpack.c.l.b16 %v3195
    %v4066 = vunpack.c.h.b16 %v3195
    %v4067 = vunpack.c.l.b16 %v3196
    %v4068 = vunpack.c.h.b16 %v3196
    %v4069 = vunpack.c.l.b16 %v3197
    %v4070 = vunpack.c.h.b16 %v3197
    %v4071 = vunpack.c.l.b16 %v3198
    %v4072 = vunpack.c.h.b16 %v3198
    %v4073 = vunpack.c.l.b16 %v3199
    %v4074 = vunpack.c.h.b16 %v3199
    %v4075 = vunpack.c.l.b16 %v3200
    %v4076 = vunpack.c.h.b16 %v3200
    %v4077 = vunpack.c.l.b16 %v3201
    %v4078 = vunpack.c.h.b16 %v3201
    %v4079 = vunpack.c.l.b16 %v3202
    %v4080 = vunpack.c.h.b16 %v3202
    %v4081 = vunpack.c.l.b16 %v3203
    %v4082 = vunpack.c.h.b16 %v3203
    %v4083 = vunpack.c.l.b16 %v3204
    %v4084 = vunpack.c.h.b16 %v3204
    %v4085 = vunpack.c.l.b16 %v3205
    %v4086 = vunpack.c.h.b16 %v3205
    %v4087 = vunpack.c.l.b16 %v3206
    %v4088 = vunpack.c.h.b16 %v3206
    %v4089 = vunpack.c.l.b16 %v3207
    %v4090 = vunpack.c.h.b16 %v3207
    %v4091 = vunpack.c.l.b16 %v3208
    %v4092 = vunpack.c.h.b16 %v3208
    %v4093 = vunpack.c.l.b16 %v3209
    %v4094 = vunpack.c.h.b16 %v3209
    %v4095 = vunpack.c.l.b16 %v3210
    %v4096 = vunpack.c.h.b16 %v3210
    %v4097 = vunpack.c.l.b16 %v3211
    %v4098 = vunpack.c.h.b16 %v3211
    %v4099 = vunpack.c.l.b16 %v3212
    %v4100 = vunpack.c.h.b16 %v3212
    %v4101 = vunpack.c.l.b16 %v3213
    %v4102 = vunpack.c.h.b16 %v3213
    %v4103 = vunpack.c.l.b16 %v3214
    %v4104 = vunpack.c.h.b16 %v3214
    %v4105 = vunpack.c.l.b16 %v3215
    %v4106 = vunpack.c.h.b16 %v3215
    %v4107 = vunpack.c.l.b16 %v3216
    %v4108 = vunpack.c.h.b16 %v3216
    %v4109 = vunpack.c.l.b16 %v3217
    %v4110 = vunpack.c.h.b16 %v3217
    %v4111 = vunpack.c.l.b16 %v3218
    %v4112 = vunpack.c.h.b16 %v3218
    %v4113 = vunpack.c.l.b16 %v3219
    %v4114 = vunpack.c.h.b16 %v3219
    %v4115 = vunpack.c.l.b16 %v3220
    %v4116 = vunpack.c.h.b16 %v3220
    %v4117 = vunpack.c.l.b16 %v3221
    %v4118 = vunpack.c.h.b16 %v3221
    %v4119 = vunpack.c.l.b16 %v3222
    %v4120 = vunpack.c.h.b16 %v3222
    %v4121 = vunpack.c.l.b16 %v3223
    %v4122 = vunpack.c.h.b16 %v3223
    %v4123 = vunpack.c.l.b16 %v3224
    %v4124 = vunpack.c.h.b16 %v3224
    %v4125 = vunpack.c.l.b16 %v3225
    %v4126 = vunpack.c.h.b16 %v3225
    %v4127 = vunpack.c.l.b16 %v3226
    %v4128 = vunpack.c.h.b16 %v3226
    %v4129 = vunpack.c.l.b16 %v3227
    %v4130 = vunpack.c.h.b16 %v3227
    %v4131 = vunpack.c.l.b16 %v3228
    %v4132 = vunpack.c.h.b16 %v3228
    %v4133 = vunpack.c.l.b16 %v3229
    %v4134 = vunpack.c.h.b16 %v3229
    %v4135 = vunpack.c.l.b16 %v3230
    %v4136 = vunpack.c.h.b16 %v3230
    %v4137 = vunpack.c.l.b16 %v3231
    %v4138 = vunpack.c.h.b16 %v3231
    %v4139 = vunpack.c.l.b16 %v3232
    %v4140 = vunpack.c.h.b16 %v3232
    %v4141 = vunpack.c.l.b16 %v3233
    %v4142 = vunpack.c.h.b16 %v3233
    %v4143 = vunpack.c.l.b16 %v3234
    %v4144 = vunpack.c.h.b16 %v3234
    %v4145 = vunpack.c.l.b16 %v3235
    %v4146 = vunpack.c.h.b16 %v3235
    %v4147 = vunpack.c.l.b16 %v3236
    %v4148 = vunpack.c.h.b16 %v3236
    %v4149 = vunpack.c.l.b16 %v3237
    %v4150 = vunpack.c.h.b16 %v3237
    %v4151 = vunpack.c.l.b16 %v3238
    %v4152 = vunpack.c.h.b16 %v3238
    %v4153 = vunpack.c.l.b16 %v3239
    %v4154 = vunpack.c.h.b16 %v3239
    %v4155 = vunpack.c.l.b16 %v3240
    %v4156 = vunpack.c.h.b16 %v3240
    %v4157 = vunpack.c.l.b16 %v3241
    %v4158 = vunpack.c.h.b16 %v3241
    %v4159 = vunpack.c.l.b16 %v3242
    %v4160 = vunpack.c.h.b16 %v3242
    %v4161 = vunpack.c.l.b16 %v3243
    %v4162 = vunpack.c.h.b16 %v3243
    %v4163 = vunpack.c.l.b16 %v3244
    %v4164 = vunpack.c.h.b16 %v3244
    %v4165 = vunpack.c.l.b16 %v3245
    %v4166 = vunpack.c.h.b16 %v3245
    %v4167 = vunpack.c.l.b16 %v3246
    %v4168 = vunpack.c.h.b16 %v3246
    %v4169 = vunpack.c.l.b16 %v3247
    %v4170 = vunpack.c.h.b16 %v3247
    %v4171 = vunpack.c.l.b16 %v3248
    %v4172 = vunpack.c.h.b16 %v3248
    %v4173 = vunpack.c.l.b16 %v3249
    %v4174 = vunpack.c.h.b16 %v3249
    %v4175 = vunpack.c.l.b16 %v3250
    %v4176 = vunpack.c.h.b16 %v3250
    %v4177 = vunpack.c.l.b16 %v3251
    %v4178 = vunpack.c.h.b16 %v3251
    %v4179 = vunpack.c.l.b16 %v3252
    %v4180 = vunpack.c.h.b16 %v3252
    %v4181 = vunpack.c.l.b16 %v3253
    %v4182 = vunpack.c.h.b16 %v3253
    %v4183 = vunpack.c.l.b16 %v3254
    %v4184 = vunpack.c.h.b16 %v3254
    %v4185 = vunpack.c.l.b16 %v3255
    %v4186 = vunpack.c.h.b16 %v3255
    %v4187 = vunpack.c.l.b16 %v3256
    %v4188 = vunpack.c.h.b16 %v3256
    %v4189 = vunpack.c.l.b16 %v3257
    %v4190 = vunpack.c.h.b16 %v3257
    %v4191 = vunpack.c.l.b16 %v3258
    %v4192 = vunpack.c.h.b16 %v3258
    %v4193 = vunpack.c.l.b16 %v3259
    %v4194 = vunpack.c.h.b16 %v3259
    %v4195 = vunpack.c.l.b16 %v3260
    %v4196 = vunpack.c.h.b16 %v3260
    %v4197 = vunpack.c.l.b16 %v3261
    %v4198 = vunpack.c.h.b16 %v3261
    %v4199 = vunpack.c.l.b16 %v3262
    %v4200 = vunpack.c.h.b16 %v3262
    %v4201 = vunpack.c.l.b16 %v3263
    %v4202 = vunpack.c.h.b16 %v3263
    %v4203 = vunpack.c.l.b16 %v3264
    %v4204 = vunpack.c.h.b16 %v3264
    %v4205 = vunpack.c.l.b16 %v3265
    %v4206 = vunpack.c.h.b16 %v3265
    %v4207 = vunpack.c.l.b16 %v3266
    %v4208 = vunpack.c.h.b16 %v3266
    %v4209 = vunpack.c.l.b16 %v3267
    %v4210 = vunpack.c.h.b16 %v3267
    %v4211 = vunpack.c.l.b16 %v3268
    %v4212 = vunpack.c.h.b16 %v3268
    %v4213 = vunpack.c.l.b16 %v3269
    %v4214 = vunpack.c.h.b16 %v3269
    %v4215 = vunpack.c.l.b16 %v3270
    %v4216 = vunpack.c.h.b16 %v3270
    %v4217 = vunpack.c.l.b16 %v3271
    %v4218 = vunpack.c.h.b16 %v3271
    %v4219 = vunpack.c.l.b16 %v3272
    %v4220 = vunpack.c.h.b16 %v3272
    %v4221 = vunpack.c.l.b16 %v3273
    %v4222 = vunpack.c.h.b16 %v3273
    %v4223 = vunpack.c.l.b16 %v3274
    %v4224 = vunpack.c.h.b16 %v3274
    %v4225 = vunpack.c.l.b16 %v3275
    %v4226 = vunpack.c.h.b16 %v3275
    %v4227 = vunpack.c.l.b16 %v3276
    %v4228 = vunpack.c.h.b16 %v3276
    %v4229 = vunpack.c.l.b16 %v3277
    %v4230 = vunpack.c.h.b16 %v3277
    %v4231 = vunpack.c.l.b16 %v3278
    %v4232 = vunpack.c.h.b16 %v3278
    %v4233 = vunpack.c.l.b16 %v3279
    %v4234 = vunpack.c.h.b16 %v3279
    %v4235 = vunpack.c.l.b16 %v3280
    %v4236 = vunpack.c.h.b16 %v3280
    %v4237 = vunpack.c.l.b16 %v3281
    %v4238 = vunpack.c.h.b16 %v3281
    %v4239 = vunpack.c.l.b16 %v3282
    %v4240 = vunpack.c.h.b16 %v3282
    %v4241 = vunpack.c.l.b16 %v3283
    %v4242 = vunpack.c.h.b16 %v3283
    %v4243 = vunpack.c.l.b16 %v3284
    %v4244 = vunpack.c.h.b16 %v3284
    %v4245 = vunpack.c.l.b16 %v3285
    %v4246 = vunpack.c.h.b16 %v3285
    %v4247 = vunpack.c.l.b16 %v3286
    %v4248 = vunpack.c.h.b16 %v3286
    %v4249 = vunpack.c.l.b16 %v3287
    %v4250 = vunpack.c.h.b16 %v3287
    %v4251 = vunpack.c.l.b16 %v3288
    %v4252 = vunpack.c.h.b16 %v3288
    %v4253 = vunpack.c.l.b16 %v3289
    %v4254 = vunpack.c.h.b16 %v3289
    %v4255 = vunpack.c.l.b16 %v3290
    %v4256 = vunpack.c.h.b16 %v3290
    %v4257 = vunpack.c.l.b16 %v3291
    %v4258 = vunpack.c.h.b16 %v3291
    %v4259 = vunpack.c.l.b16 %v3292
    %v4260 = vunpack.c.h.b16 %v3292
    %v4261 = vunpack.c.l.b16 %v3293
    %v4262 = vunpack.c.h.b16 %v3293
    %v4263 = vunpack.c.l.b16 %v3294
    %v4264 = vunpack.c.h.b16 %v3294
    %v4265 = vunpack.c.l.b16 %v3295
    %v4266 = vunpack.c.h.b16 %v3295
    %v4267 = vunpack.c.l.b16 %v3296
    %v4268 = vunpack.c.h.b16 %v3296
    %v4269 = vunpack.c.l.b16 %v3297
    %v4270 = vunpack.c.h.b16 %v3297
    %v4271 = vunpack.c.l.b16 %v3298
    %v4272 = vunpack.c.h.b16 %v3298
    %v4273 = vunpack.c.l.b16 %v3299
    %v4274 = vunpack.c.h.b16 %v3299
    %v4275 = vunpack.c.l.b16 %v3300
    %v4276 = vunpack.c.h.b16 %v3300
    %v4277 = vunpack.c.l.b16 %v3301
    %v4278 = vunpack.c.h.b16 %v3301
    %v4279 = vunpack.c.l.b16 %v3302
    %v4280 = vunpack.c.h.b16 %v3302
    %v4281 = vunpack.c.l.b16 %v3303
    %v4282 = vunpack.c.h.b16 %v3303
    %v4283 = vunpack.c.l.b16 %v3304
    %v4284 = vunpack.c.h.b16 %v3304
    %v4285 = vunpack.c.l.b16 %v3305
    %v4286 = vunpack.c.h.b16 %v3305
    %v4287 = vunpack.c.l.b16 %v3306
    %v4288 = vunpack.c.h.b16 %v3306
    %v4289 = vunpack.c.l.b16 %v3307
    %v4290 = vunpack.c.h.b16 %v3307
    %v4291 = vunpack.c.l.b16 %v3308
    %v4292 = vunpack.c.h.b16 %v3308
    %v4293 = vunpack.c.l.b16 %v3309
    %v4294 = vunpack.c.h.b16 %v3309
    %v4295 = vunpack.c.l.b16 %v3310
    %v4296 = vunpack.c.h.b16 %v3310
    %v4297 = vunpack.c.l.b16 %v3311
    %v4298 = vunpack.c.h.b16 %v3311
    %v4299 = vunpack.c.l.b16 %v3312
    %v4300 = vunpack.c.h.b16 %v3312
    %v4301 = vunpack.c.l.b16 %v3313
    %v4302 = vunpack.c.h.b16 %v3313
    %v4303 = vunpack.c.l.b16 %v3314
    %v4304 = vunpack.c.h.b16 %v3314
    %v4305 = vunpack.c.l.b16 %v3315
    %v4306 = vunpack.c.h.b16 %v3315
    %v4307 = vunpack.c.l.b16 %v3316
    %v4308 = vunpack.c.h.b16 %v3316
    %v4309 = vunpack.c.l.b16 %v3317
    %v4310 = vunpack.c.h.b16 %v3317
    %v4311 = vunpack.c.l.b16 %v3318
    %v4312 = vunpack.c.h.b16 %v3318
    %v4313 = vunpack.c.l.b16 %v3319
    %v4314 = vunpack.c.h.b16 %v3319
    %v4315 = vunpack.c.l.b16 %v3320
    %v4316 = vunpack.c.h.b16 %v3320
    %v4317 = vunpack.c.l.b16 %v3321
    %v4318 = vunpack.c.h.b16 %v3321
    %v4319 = vunpack.c.l.b16 %v3322
    %v4320 = vunpack.c.h.b16 %v3322
    %v4321 = vunpack.c.l.b16 %v3323
    %v4322 = vunpack.c.h.b16 %v3323
    %v4323 = vunpack.c.l.b16 %v3324
    %v4324 = vunpack.c.h.b16 %v3324
    %v4325 = vunpack.c.l.b16 %v3325
    %v4326 = vunpack.c.h.b16 %v3325
    %v4327 = vunpack.c.l.b16 %v3326
    %v4328 = vunpack.c.h.b16 %v3326
    %v4329 = vunpack.c.l.b16 %v3327
    %v4330 = vunpack.c.h.b16 %v3327
    %v4331 = vunpack.c.l.b16 %v3328
    %v4332 = vunpack.c.h.b16 %v3328
    %v4333 = vunpack.c.l.b16 %v3329
    %v4334 = vunpack.c.h.b16 %v3329
    %v4335 = vunpack.c.l.b16 %v3330
    %v4336 = vunpack.c.h.b16 %v3330
    %v4337 = vunpack.c.l.b16 %v3331
    %v4338 = vunpack.c.h.b16 %v3331
    %v4339 = vunpack.c.l.b16 %v3332
    %v4340 = vunpack.c.h.b16 %v3332
    %v4341 = vunpack.c.l.b16 %v3333
    %v4342 = vunpack.c.h.b16 %v3333
    %v4343 = vunpack.c.l.b16 %v3334
    %v4344 = vunpack.c.h.b16 %v3334
    %v4345 = vunpack.c.l.b16 %v3335
    %v4346 = vunpack.c.h.b16 %v3335
    %v4347 = vunpack.c.l.b16 %v3336
    %v4348 = vunpack.c.h.b16 %v3336
    %v4349 = vunpack.c.l.b16 %v3337
    %v4350 = vunpack.c.h.b16 %v3337
    %v4351 = vunpack.c.l.b16 %v3338
    %v4352 = vunpack.c.h.b16 %v3338
    %v4353 = vunpack.c.l.b16 %v3339
    %v4354 = vunpack.c.h.b16 %v3339
    %v4355 = vunpack.c.l.b16 %v3340
    %v4356 = vunpack.c.h.b16 %v3340
    %v4357 = vunpack.c.l.b16 %v3341
    %v4358 = vunpack.c.h.b16 %v3341
    %v4359 = vunpack.c.l.b16 %v3342
    %v4360 = vunpack.c.h.b16 %v3342
    %v4361 = vunpack.c.l.b16 %v3343
    %v4362 = vunpack.c.h.b16 %v3343
    %v4363 = vunpack.c.l.b16 %v3344
    %v4364 = vunpack.c.h.b16 %v3344
    %v4365 = vunpack.c.l.b16 %v3345
    %v4366 = vunpack.c.h.b16 %v3345
    %v4367 = vunpack.c.l.b16 %v3346
    %v4368 = vunpack.c.h.b16 %v3346
    %v4369 = vunpack.c.l.b16 %v3347
    %v4370 = vunpack.c.h.b16 %v3347
    %v4371 = vunpack.c.l.b16 %v3348
    %v4372 = vunpack.c.h.b16 %v3348
    %v4373 = vunpack.c.l.b16 %v3349
    %v4374 = vunpack.c.h.b16 %v3349
    %v4375 = vunpack.c.l.b16 %v3350
    %v4376 = vunpack.c.h.b16 %v3350
    %v4377 = vunpack.c.l.b16 %v3351
    %v4378 = vunpack.c.h.b16 %v3351
    %v4379 = vunpack.c.l.b16 %v3352
    %v4380 = vunpack.c.h.b16 %v3352
    %v4381 = vunpack.c.l.b16 %v3353
    %v4382 = vunpack.c.h.b16 %v3353
    %v4383 = vunpack.c.l.b16 %v3354
    %v4384 = vunpack.c.h.b16 %v3354
    %v4385 = vunpack.c.l.b16 %v3355
    %v4386 = vunpack.c.h.b16 %v3355
    %v4387 = vunpack.c.l.b16 %v3356
    %v4388 = vunpack.c.h.b16 %v3356
    %v4389 = vunpack.c.l.b16 %v3357
    %v4390 = vunpack.c.h.b16 %v3357
    %v4391 = vunpack.c.l.b16 %v3358
    %v4392 = vunpack.c.h.b16 %v3358
    %v4393 = vunpack.c.l.b16 %v3359
    %v4394 = vunpack.c.h.b16 %v3359
    %v4395 = vunpack.c.l.b16 %v3360
    %v4396 = vunpack.c.h.b16 %v3360
    %v4397 = vunpack.c.l.b16 %v3361
    %v4398 = vunpack.c.h.b16 %v3361
    %v4399 = vunpack.c.l.b16 %v3362
    %v4400 = vunpack.c.h.b16 %v3362
    %v4401 = vunpack.c.l.b16 %v3363
    %v4402 = vunpack.c.h.b16 %v3363
    %v4403 = vunpack.c.l.b16 %v3364
    %v4404 = vunpack.c.h.b16 %v3364
    %v4405 = vunpack.c.l.b16 %v3365
    %v4406 = vunpack.c.h.b16 %v3365
    %v4407 = vunpack.c.l.b16 %v3366
    %v4408 = vunpack.c.h.b16 %v3366
    %v4409 = vunpack.c.l.b16 %v3367
    %v4410 = vunpack.c.h.b16 %v3367
    %v4411 = vunpack.c.l.b16 %v3368
    %v4412 = vunpack.c.h.b16 %v3368
    %v4413 = vunpack.c.l.b16 %v3369
    %v4414 = vunpack.c.h.b16 %v3369
    %v4415 = vunpack.c.l.b16 %v3370
    %v4416 = vunpack.c.h.b16 %v3370
    %v4417 = vunpack.c.l.b16 %v3371
    %v4418 = vunpack.c.h.b16 %v3371
    %v4419 = vunpack.c.l.b16 %v3372
    %v4420 = vunpack.c.h.b16 %v3372
    %v4421 = vunpack.c.l.b16 %v3373
    %v4422 = vunpack.c.h.b16 %v3373
    %v4423 = vunpack.c.l.b16 %v3374
    %v4424 = vunpack.c.h.b16 %v3374
    %v4425 = vunpack.c.l.b16 %v3375
    %v4426 = vunpack.c.h.b16 %v3375
    %v4427 = vunpack.c.l.b16 %v3376
    %v4428 = vunpack.c.h.b16 %v3376
    %v4429 = vunpack.c.l.b16 %v3377
    %v4430 = vunpack.c.h.b16 %v3377
    %v4431 = vunpack.c.l.b16 %v3378
    %v4432 = vunpack.c.h.b16 %v3378
    %v4433 = vunpack.c.l.b16 %v3379
    %v4434 = vunpack.c.h.b16 %v3379
    %v4435 = vunpack.c.l.b16 %v3380
    %v4436 = vunpack.c.h.b16 %v3380
    %v4437 = vunpack.c.l.b16 %v3381
    %v4438 = vunpack.c.h.b16 %v3381
    %v4439 = vunpack.c.l.b16 %v3382
    %v4440 = vunpack.c.h.b16 %v3382
    %v4441 = vunpack.c.l.b16 %v3383
    %v4442 = vunpack.c.h.b16 %v3383
    %v4443 = vunpack.c.l.b16 %v3384
    %v4444 = vunpack.c.h.b16 %v3384
    %v4445 = vunpack.c.l.b16 %v3385
    %v4446 = vunpack.c.h.b16 %v3385
    %v4447 = vunpack.c.l.b16 %v3386
    %v4448 = vunpack.c.h.b16 %v3386
    %v4449 = vunpack.c.l.b16 %v3387
    %v4450 = vunpack.c.h.b16 %v3387
    %v4451 = vunpack.c.l.b16 %v3388
    %v4452 = vunpack.c.h.b16 %v3388
    %v4453 = vunpack.c.l.b16 %v3389
    %v4454 = vunpack.c.h.b16 %v3389
    %v4455 = vunpack.c.l.b16 %v3390
    %v4456 = vunpack.c.h.b16 %v3390
    %v4457 = vunpack.c.l.b16 %v3391
    %v4458 = vunpack.c.h.b16 %v3391
    %v4459 = vunpack.c.l.b16 %v3392
    %v4460 = vunpack.c.h.b16 %v3392
    %v4461 = vunpack.c.l.b16 %v3393
    %v4462 = vunpack.c.h.b16 %v3393
    %v4463 = vunpack.c.l.b16 %v3394
    %v4464 = vunpack.c.h.b16 %v3394
    %v4465 = vunpack.c.l.b16 %v3395
    %v4466 = vunpack.c.h.b16 %v3395
    %v4467 = vunpack.c.l.b16 %v3396
    %v4468 = vunpack.c.h.b16 %v3396
    %v4469 = vunpack.c.l.b16 %v3397
    %v4470 = vunpack.c.h.b16 %v3397
    %v4471 = vunpack.c.l.b16 %v3398
    %v4472 = vunpack.c.h.b16 %v3398
    %v4473 = vunpack.c.l.b16 %v3399
    %v4474 = vunpack.c.h.b16 %v3399
    %v4475 = vunpack.c.l.b16 %v3400
    %v4476 = vunpack.c.h.b16 %v3400
    %v4477 = vunpack.c.l.b16 %v3401
    %v4478 = vunpack.c.h.b16 %v3401
    %v4479 = vunpack.c.l.b16 %v3402
    %v4480 = vunpack.c.h.b16 %v3402
    %v4481 = vunpack.c.l.b16 %v3403
    %v4482 = vunpack.c.h.b16 %v3403
    %v4483 = vunpack.c.l.b16 %v3404
    %v4484 = vunpack.c.h.b16 %v3404
    %v4485 = vunpack.c.l.b16 %v3405
    %v4486 = vunpack.c.h.b16 %v3405
    %v4487 = vunpack.c.l.b16 %v3406
    %v4488 = vunpack.c.h.b16 %v3406
    %v4489 = vunpack.c.l.b16 %v3407
    %v4490 = vunpack.c.h.b16 %v3407
    %v4491 = vunpack.c.l.b16 %v3408
    %v4492 = vunpack.c.h.b16 %v3408
    %v4493 = vunpack.c.l.b16 %v3409
    %v4494 = vunpack.c.h.b16 %v3409
    %v4495 = vunpack.c.l.b16 %v3410
    %v4496 = vunpack.c.h.b16 %v3410
    %v4497 = vunpack.c.l.b16 %v3411
    %v4498 = vunpack.c.h.b16 %v3411
    %v4499 = vunpack.c.l.b16 %v3412
    %v4500 = vunpack.c.h.b16 %v3412
    %v4501 = vunpack.c.l.b16 %v3413
    %v4502 = vunpack.c.h.b16 %v3413
    %v4503 = vunpack.c.l.b16 %v3414
    %v4504 = vunpack.c.h.b16 %v3414
    %v4505 = vunpack.c.l.b16 %v3415
    %v4506 = vunpack.c.h.b16 %v3415
    %v4507 = vunpack.c.l.b16 %v3416
    %v4508 = vunpack.c.h.b16 %v3416
    %v4509 = vunpack.c.l.b16 %v3417
    %v4510 = vunpack.c.h.b16 %v3417
    %v4511 = vunpack.c.l.b16 %v3418
    %v4512 = vunpack.c.h.b16 %v3418
    %v4513 = vunpack.c.l.b16 %v3419
    %v4514 = vunpack.c.h.b16 %v3419
    %v4515 = vunpack.c.l.b16 %v3420
    %v4516 = vunpack.c.h.b16 %v3420
    %v4517 = vunpack.c.l.b16 %v3421
    %v4518 = vunpack.c.h.b16 %v3421
    %v4519 = vunpack.c.l.b16 %v3422
    %v4520 = vunpack.c.h.b16 %v3422
    %v4521 = vunpack.c.l.b16 %v3423
    %v4522 = vunpack.c.h.b16 %v3423
    %v4523 = vunpack.c.l.b16 %v3424
    %v4524 = vunpack.c.h.b16 %v3424
    %v4525 = vunpack.c.l.b16 %v3425
    %v4526 = vunpack.c.h.b16 %v3425
    %v4527 = vunpack.c.l.b16 %v3426
    %v4528 = vunpack.c.h.b16 %v3426
    %v4529 = vunpack.c.l.b16 %v3427
    %v4530 = vunpack.c.h.b16 %v3427
    %v4531 = vunpack.c.l.b16 %v3428
    %v4532 = vunpack.c.h.b16 %v3428
    %v4533 = vunpack.c.l.b16 %v3429
    %v4534 = vunpack.c.h.b16 %v3429
    %v4535 = vunpack.c.l.b16 %v3430
    %v4536 = vunpack.c.h.b16 %v3430
    %v4537 = vunpack.c.l.b16 %v3431
    %v4538 = vunpack.c.h.b16 %v3431
    %v4539 = vunpack.c.l.b16 %v3432
    %v4540 = vunpack.c.h.b16 %v3432
    %v4541 = vunpack.c.l.b16 %v3433
    %v4542 = vunpack.c.h.b16 %v3433
    %v4543 = vunpack.c.l.b16 %v3434
    %v4544 = vunpack.c.h.b16 %v3434
    %v4545 = vunpack.c.l.b16 %v3435
    %v4546 = vunpack.c.h.b16 %v3435
    %v4547 = vunpack.c.l.b16 %v3436
    %v4548 = vunpack.c.h.b16 %v3436
    %v4549 = vunpack.c.l.b16 %v3437
    %v4550 = vunpack.c.h.b16 %v3437
    %v4551 = vunpack.c.l.b16 %v3438
    %v4552 = vunpack.c.h.b16 %v3438
    %v4553 = vunpack.c.l.b16 %v3439
    %v4554 = vunpack.c.h.b16 %v3439
    %v4555 = vunpack.c.l.b16 %v3440
    %v4556 = vunpack.c.h.b16 %v3440
    %v4557 = vunpack.c.l.b16 %v3441
    %v4558 = vunpack.c.h.b16 %v3441
    %v4559 = vunpack.c.l.b16 %v3442
    %v4560 = vunpack.c.h.b16 %v3442
    %v4561 = vunpack.c.l.b16 %v3443
    %v4562 = vunpack.c.h.b16 %v3443
    %v4563 = vunpack.c.l.b16 %v3444
    %v4564 = vunpack.c.h.b16 %v3444
    %v4565 = vunpack.c.l.b16 %v3445
    %v4566 = vunpack.c.h.b16 %v3445
    %v4567 = vunpack.c.l.b16 %v3446
    %v4568 = vunpack.c.h.b16 %v3446
    %v4569 = vunpack.c.l.b16 %v3447
    %v4570 = vunpack.c.h.b16 %v3447
    %v4571 = vunpack.c.l.b16 %v3448
    %v4572 = vunpack.c.h.b16 %v3448
    %v4573 = vunpack.c.l.b16 %v3449
    %v4574 = vunpack.c.h.b16 %v3449
    %v4575 = vunpack.c.l.b16 %v3450
    %v4576 = vunpack.c.h.b16 %v3450
    %v4577 = vunpack.c.l.b16 %v3451
    %v4578 = vunpack.c.h.b16 %v3451
    %v4579 = vunpack.c.l.b16 %v3452
    %v4580 = vunpack.c.h.b16 %v3452
    %v4581 = vunpack.c.l.b16 %v3453
    %v4582 = vunpack.c.h.b16 %v3453
    %v4583 = vunpack.c.l.b16 %v3454
    %v4584 = vunpack.c.h.b16 %v3454
    %v4585 = vunpack.c.l.b16 %v3455
    %v4586 = vunpack.c.h.b16 %v3455
    %v4587 = vunpack.c.l.b16 %v3456
    %v4588 = vunpack.c.h.b16 %v3456
    %v4589 = vunpack.c.l.b16 %v3457
    %v4590 = vunpack.c.h.b16 %v3457
    %v4591 = vunpack.c.l.b16 %v3458
    %v4592 = vunpack.c.h.b16 %v3458
    %v4593 = vunpack.c.l.b16 %v3459
    %v4594 = vunpack.c.h.b16 %v3459
    %v4595 = vunpack.c.l.b16 %v3460
    %v4596 = vunpack.c.h.b16 %v3460
    %v4597 = vunpack.c.l.b16 %v3461
    %v4598 = vunpack.c.h.b16 %v3461
    %v4599 = vunpack.c.l.b16 %v3462
    %v4600 = vunpack.c.h.b16 %v3462
    %v4601 = vunpack.c.l.b16 %v3463
    %v4602 = vunpack.c.h.b16 %v3463
    %v4603 = vunpack.c.l.b16 %v3464
    %v4604 = vunpack.c.h.b16 %v3464
    %v4605 = vunpack.c.l.b16 %v3465
    %v4606 = vunpack.c.h.b16 %v3465
    %v4607 = vunpack.c.l.b16 %v3466
    %v4608 = vunpack.c.h.b16 %v3466
    %v4609 = vunpack.c.l.b16 %v3467
    %v4610 = vunpack.c.h.b16 %v3467
    %v4611 = vunpack.c.l.b16 %v3468
    %v4612 = vunpack.c.h.b16 %v3468
    %v4613 = vunpack.c.l.b16 %v3469
    %v4614 = vunpack.c.h.b16 %v3469
    %v4615 = vunpack.c.l.b16 %v3470
    %v4616 = vunpack.c.h.b16 %v3470
    %v4617 = vunpack.c.l.b16 %v3471
    %v4618 = vunpack.c.h.b16 %v3471
    %v4619 = vunpack.c.l.b16 %v3472
    %v4620 = vunpack.c.h.b16 %v3472
    %v4621 = vunpack.c.l.b16 %v3473
    %v4622 = vunpack.c.h.b16 %v3473
    %v4623 = vunpack.c.l.b16 %v3474
    %v4624 = vunpack.c.h.b16 %v3474
    %v4625 = vunpack.c.l.b16 %v3475
    %v4626 = vunpack.c.h.b16 %v3475
    %v4627 = vunpack.c.l.b16 %v3476
    %v4628 = vunpack.c.h.b16 %v3476
    %v4629 = vunpack.c.l.b16 %v3477
    %v4630 = vunpack.c.h.b16 %v3477
    %v4631 = vunpack.c.l.b16 %v3478
    %v4632 = vunpack.c.h.b16 %v3478
    %v4633 = vunpack.c.l.b16 %v3479
    %v4634 = vunpack.c.h.b16 %v3479
    %v4635 = vunpack.c.l.b16 %v3480
    %v4636 = vunpack.c.h.b16 %v3480
    %v4637 = vunpack.c.l.b16 %v3481
    %v4638 = vunpack.c.h.b16 %v3481
    %v4639 = vunpack.c.l.b16 %v3482
    %v4640 = vunpack.c.h.b16 %v3482
    %v4641 = vunpack.c.l.b16 %v3483
    %v4642 = vunpack.c.h.b16 %v3483
    %v4643 = vunpack.c.l.b16 %v3484
    %v4644 = vunpack.c.h.b16 %v3484
    %v4645 = vunpack.c.l.b16 %v3485
    %v4646 = vunpack.c.h.b16 %v3485
    %v4647 = vunpack.c.l.b16 %v3486
    %v4648 = vunpack.c.h.b16 %v3486
    %v4649 = vunpack.c.l.b16 %v3487
    %v4650 = vunpack.c.h.b16 %v3487
    %v4651 = vunpack.c.l.b16 %v3488
    %v4652 = vunpack.c.h.b16 %v3488
    %v4653 = vunpack.c.l.b16 %v3489
    %v4654 = vunpack.c.h.b16 %v3489
    %v4655 = vunpack.c.l.b16 %v3490
    %v4656 = vunpack.c.h.b16 %v3490
    %v4657 = vunpack.c.l.b16 %v3491
    %v4658 = vunpack.c.h.b16 %v3491
    %v4659 = vunpack.c.l.b16 %v3492
    %v4660 = vunpack.c.h.b16 %v3492
    %v4661 = vunpack.c.l.b16 %v3493
    %v4662 = vunpack.c.h.b16 %v3493
    %v4663 = vunpack.c.l.b16 %v3494
    %v4664 = vunpack.c.h.b16 %v3494
    %v4665 = vunpack.c.l.b16 %v3495
    %v4666 = vunpack.c.h.b16 %v3495
    %v4667 = vunpack.c.l.b16 %v3496
    %v4668 = vunpack.c.h.b16 %v3496
    %v4669 = vunpack.c.l.b16 %v3497
    %v4670 = vunpack.c.h.b16 %v3497
    %v4671 = vunpack.c.l.b16 %v3498
    %v4672 = vunpack.c.h.b16 %v3498
    %v4673 = vunpack.c.l.b16 %v3499
    %v4674 = vunpack.c.h.b16 %v3499
    %v4675 = vunpack.c.l.b16 %v3500
    %v4676 = vunpack.c.h.b16 %v3500
    %v4677 = vunpack.c.l.b16 %v3501
    %v4678 = vunpack.c.h.b16 %v3501
    %v4679 = vunpack.c.l.b16 %v3502
    %v4680 = vunpack.c.h.b16 %v3502
    %v4681 = vunpack.c.l.b16 %v3503
    %v4682 = vunpack.c.h.b16 %v3503
    %v4683 = vunpack.c.l.b16 %v3504
    %v4684 = vunpack.c.h.b16 %v3504
    %v4685 = vunpack.c.l.b16 %v3505
    %v4686 = vunpack.c.h.b16 %v3505
    %v4687 = vunpack.c.l.b16 %v3506
    %v4688 = vunpack.c.h.b16 %v3506
    %v4689 = vunpack.c.l.b16 %v3507
    %v4690 = vunpack.c.h.b16 %v3507
    %v4691 = vunpack.c.l.b16 %v3508
    %v4692 = vunpack.c.h.b16 %v3508
    %v4693 = vpack.c.b16 %v3931, %v3925
    %v4694 = vpack.c.b16 %v3932, %v3926
    %v4695 = vpack.c.b16 %v3933, %v3927
    %v4696 = vpack.c.b16 %v3934, %v3928
    %v4697 = vpack.c.b16 %v3935, %v3929
    %v4698 = vpack.c.b16 %v3936, %v3930
    %v4699 = vpack.c.b16 %v3943, %v3937
    %v4700 = vpack.c.b16 %v3944, %v3938
    %v4701 = vpack.c.b16 %v3945, %v3939
    %v4702 = vpack.c.b16 %v3946, %v3940
    %v4703 = vpack.c.b16 %v3947, %v3941
    %v4704 = vpack.c.b16 %v3948, %v3942
    %v4705 = vpack.c.b16 %v3955, %v3949
    %v4706 = vpack.c.b16 %v3956, %v3950
    %v4707 = vpack.c.b16 %v3957, %v3951
    %v4708 = vpack.c.b16 %v3958, %v3952
    %v4709 = vpack.c.b16 %v3959, %v3953
    %v4710 = vpack.c.b16 %v3960, %v3954
    %v4711 = vpack.c.b16 %v3967, %v3961
    %v4712 = vpack.c.b16 %v3968, %v3962
    %v4713 = vpack.c.b16 %v3969, %v3963
    %v4714 = vpack.c.b16 %v3970, %v3964
    %v4715 = vpack.c.b16 %v3971, %v3965
    %v4716 = vpack.c.b16 %v3972, %v3966
    %v4717 = vpack.c.b16 %v3979, %v3973
    %v4718 = vpack.c.b16 %v3980, %v3974
    %v4719 = vpack.c.b16 %v3981, %v3975
    %v4720 = vpack.c.b16 %v3982, %v3976
    %v4721 = vpack.c.b16 %v3983, %v3977
    %v4722 = vpack.c.b16 %v3984, %v3978
    %v4723 = vpack.c.b16 %v3991, %v3985
    %v4724 = vpack.c.b16 %v3992, %v3986
    %v4725 = vpack.c.b16 %v3993, %v3987
    %v4726 = vpack.c.b16 %v3994, %v3988
    %v4727 = vpack.c.b16 %v3995, %v3989
    %v4728 = vpack.c.b16 %v3996, %v3990
    %v4729 = vpack.c.b16 %v4003, %v3997
    %v4730 = vpack.c.b16 %v4004, %v3998
    %v4731 = vpack.c.b16 %v4005, %v3999
    %v4732 = vpack.c.b16 %v4006, %v4000
    %v4733 = vpack.c.b16 %v4007, %v4001
    %v4734 = vpack.c.b16 %v4008, %v4002
    %v4735 = vpack.c.b16 %v4015, %v4009
    %v4736 = vpack.c.b16 %v4016, %v4010
    %v4737 = vpack.c.b16 %v4017, %v4011
    %v4738 = vpack.c.b16 %v4018, %v4012
    %v4739 = vpack.c.b16 %v4019, %v4013
    %v4740 = vpack.c.b16 %v4020, %v4014
    %v4741 = vpack.c.b16 %v4027, %v4021
    %v4742 = vpack.c.b16 %v4028, %v4022
    %v4743 = vpack.c.b16 %v4029, %v4023
    %v4744 = vpack.c.b16 %v4030, %v4024
    %v4745 = vpack.c.b16 %v4031, %v4025
    %v4746 = vpack.c.b16 %v4032, %v4026
    %v4747 = vpack.c.b16 %v4039, %v4033
    %v4748 = vpack.c.b16 %v4040, %v4034
    %v4749 = vpack.c.b16 %v4041, %v4035
    %v4750 = vpack.c.b16 %v4042, %v4036
    %v4751 = vpack.c.b16 %v4043, %v4037
    %v4752 = vpack.c.b16 %v4044, %v4038
    %v4753 = vpack.c.b16 %v4051, %v4045
    %v4754 = vpack.c.b16 %v4052, %v4046
    %v4755 = vpack.c.b16 %v4053, %v4047
    %v4756 = vpack.c.b16 %v4054, %v4048
    %v4757 = vpack.c.b16 %v4055, %v4049
    %v4758 = vpack.c.b16 %v4056, %v4050
    %v4759 = vpack.c.b16 %v4063, %v4057
    %v4760 = vpack.c.b16 %v4064, %v4058
    %v4761 = vpack.c.b16 %v4065, %v4059
    %v4762 = vpack.c.b16 %v4066, %v4060
    %v4763 = vpack.c.b16 %v4067, %v4061
    %v4764 = vpack.c.b16 %v4068, %v4062
    %v4765 = vpack.c.b16 %v4075, %v4069
    %v4766 = vpack.c.b16 %v4076, %v4070
    %v4767 = vpack.c.b16 %v4077, %v4071
    %v4768 = vpack.c.b16 %v4078, %v4072
    %v4769 = vpack.c.b16 %v4079, %v4073
    %v4770 = vpack.c.b16 %v4080, %v4074
    %v4771 = vpack.c.b16 %v4087, %v4081
    %v4772 = vpack.c.b16 %v4088, %v4082
    %v4773 = vpack.c.b16 %v4089, %v4083
    %v4774 = vpack.c.b16 %v4090, %v4084
    %v4775 = vpack.c.b16 %v4091, %v4085
    %v4776 = vpack.c.b16 %v4092, %v4086
    %v4777 = vpack.c.b16 %v4099, %v4093
    %v4778 = vpack.c.b16 %v4100, %v4094
    %v4779 = vpack.c.b16 %v4101, %v4095
    %v4780 = vpack.c.b16 %v4102, %v4096
    %v4781 = vpack.c.b16 %v4103, %v4097
    %v4782 = vpack.c.b16 %v4104, %v4098
    %v4783 = vpack.c.b16 %v4111, %v4105
    %v4784 = vpack.c.b16 %v4112, %v4106
    %v4785 = vpack.c.b16 %v4113, %v4107
    %v4786 = vpack.c.b16 %v4114, %v4108
    %v4787 = vpack.c.b16 %v4115, %v4109
    %v4788 = vpack.c.b16 %v4116, %v4110
    %v4789 = vpack.c.b16 %v4123, %v4117
    %v4790 = vpack.c.b16 %v4124, %v4118
    %v4791 = vpack.c.b16 %v4125, %v4119
    %v4792 = vpack.c.b16 %v4126, %v4120
    %v4793 = vpack.c.b16 %v4127, %v4121
    %v4794 = vpack.c.b16 %v4128, %v4122
    %v4795 = vpack.c.b16 %v4135, %v4129
    %v4796 = vpack.c.b16 %v4136, %v4130
    %v4797 = vpack.c.b16 %v4137, %v4131
    %v4798 = vpack.c.b16 %v4138, %v4132
    %v4799 = vpack.c.b16 %v4139, %v4133
    %v4800 = vpack.c.b16 %v4140, %v4134
    %v4801 = vpack.c.b16 %v4147, %v4141
    %v4802 = vpack.c.b16 %v4148, %v4142
    %v4803 = vpack.c.b16 %v4149, %v4143
    %v4804 = vpack.c.b16 %v4150, %v4144
    %v4805 = vpack.c.b16 %v4151, %v4145
    %v4806 = vpack.c.b16 %v4152, %v4146
    %v4807 = vpack.c.b16 %v4159, %v4153
    %v4808 = vpack.c.b16 %v4160, %v4154
    %v4809 = vpack.c.b16 %v4161, %v4155
    %v4810 = vpack.c.b16 %v4162, %v4156
    %v4811 = vpack.c.b16 %v4163, %v4157
    %v4812 = vpack.c.b16 %v4164, %v4158
    %v4813 = vpack.c.b16 %v4171, %v4165
    %v4814 = vpack.c.b16 %v4172, %v4166
    %v4815 = vpack.c.b16 %v4173, %v4167
    %v4816 = vpack.c.b16 %v4174, %v4168
    %v4817 = vpack.c.b16 %v4175, %v4169
    %v4818 = vpack.c.b16 %v4176, %v4170
    %v4819 = vpack.c.b16 %v4183, %v4177
    %v4820 = vpack.c.b16 %v4184, %v4178
    %v4821 = vpack.c.b16 %v4185, %v4179
    %v4822 = vpack.c.b16 %v4186, %v4180
    %v4823 = vpack.c.b16 %v4187, %v4181
    %v4824 = vpack.c.b16 %v4188, %v4182
    %v4825 = vpack.c.b16 %v4195, %v4189
    %v4826 = vpack.c.b16 %v4196, %v4190
    %v4827 = vpack.c.b16 %v4197, %v4191
    %v4828 = vpack.c.b16 %v4198, %v4192
    %v4829 = vpack.c.b16 %v4199, %v4193
    %v4830 = vpack.c.b16 %v4200, %v4194
    %v4831 = vpack.c.b16 %v4207, %v4201
    %v4832 = vpack.c.b16 %v4208, %v4202
    %v4833 = vpack.c.b16 %v4209, %v4203
    %v4834 = vpack.c.b16 %v4210, %v4204
    %v4835 = vpack.c.b16 %v4211, %v4205
    %v4836 = vpack.c.b16 %v4212, %v4206
    %v4837 = vpack.c.b16 %v4219, %v4213
    %v4838 = vpack.c.b16 %v4220, %v4214
    %v4839 = vpack.c.b16 %v4221, %v4215
    %v4840 = vpack.c.b16 %v4222, %v4216
    %v4841 = vpack.c.b16 %v4223, %v4217
    %v4842 = vpack.c.b16 %v4224, %v4218
    %v4843 = vpack.c.b16 %v4231, %v4225
    %v4844 = vpack.c.b16 %v4232, %v4226
    %v4845 = vpack.c.b16 %v4233, %v4227
    %v4846 = vpack.c.b16 %v4234, %v4228
    %v4847 = vpack.c.b16 %v4235, %v4229
    %v4848 = vpack.c.b16 %v4236, %v4230
    %v4849 = vpack.c.b16 %v4243, %v4237
    %v4850 = vpack.c.b16 %v4244, %v4238
    %v4851 = vpack.c.b16 %v4245, %v4239
    %v4852 = vpack.c.b16 %v4246, %v4240
    %v4853 = vpack.c.b16 %v4247, %v4241
    %v4854 = vpack.c.b16 %v4248, %v4242
    %v4855 = vpack.c.b16 %v4255, %v4249
    %v4856 = vpack.c.b16 %v4256, %v4250
    %v4857 = vpack.c.b16 %v4257, %v4251
    %v4858 = vpack.c.b16 %v4258, %v4252
    %v4859 = vpack.c.b16 %v4259, %v4253
    %v4860 = vpack.c.b16 %v4260, %v4254
    %v4861 = vpack.c.b16 %v4267, %v4261
    %v4862 = vpack.c.b16 %v4268, %v4262
    %v4863 = vpack.c.b16 %v4269, %v4263
    %v4864 = vpack.c.b16 %v4270, %v4264
    %v4865 = vpack.c.b16 %v4271, %v4265
    %v4866 = vpack.c.b16 %v4272, %v4266
    %v4867 = vpack.c.b16 %v4279, %v4273
    %v4868 = vpack.c.b16 %v4280, %v4274
    %v4869 = vpack.c.b16 %v4281, %v4275
    %v4870 = vpack.c.b16 %v4282, %v4276
    %v4871 = vpack.c.b16 %v4283, %v4277
    %v4872 = vpack.c.b16 %v4284, %v4278
    %v4873 = vpack.c.b16 %v4291, %v4285
    %v4874 = vpack.c.b16 %v4292, %v4286
    %v4875 = vpack.c.b16 %v4293, %v4287
    %v4876 = vpack.c.b16 %v4294, %v4288
    %v4877 = vpack.c.b16 %v4295, %v4289
    %v4878 = vpack.c.b16 %v4296, %v4290
    %v4879 = vpack.c.b16 %v4303, %v4297
    %v4880 = vpack.c.b16 %v4304, %v4298
    %v4881 = vpack.c.b16 %v4305, %v4299
    %v4882 = vpack.c.b16 %v4306, %v4300
    %v4883 = vpack.c.b16 %v4307, %v4301
    %v4884 = vpack.c.b16 %v4308, %v4302
    %v4885 = vpack.c.b16 %v4315, %v4309
    %v4886 = vpack.c.b16 %v4316, %v4310
    %v4887 = vpack.c.b16 %v4317, %v4311
    %v4888 = vpack.c.b16 %v4318, %v4312
    %v4889 = vpack.c.b16 %v4319, %v4313
    %v4890 = vpack.c.b16 %v4320, %v4314
    %v4891 = vpack.c.b16 %v4327, %v4321
    %v4892 = vpack.c.b16 %v4328, %v4322
    %v4893 = vpack.c.b16 %v4329, %v4323
    %v4894 = vpack.c.b16 %v4330, %v4324
    %v4895 = vpack.c.b16 %v4331, %v4325
    %v4896 = vpack.c.b16 %v4332, %v4326
    %v4897 = vpack.c.b16 %v4339, %v4333
    %v4898 = vpack.c.b16 %v4340, %v4334
    %v4899 = vpack.c.b16 %v4341, %v4335
    %v4900 = vpack.c.b16 %v4342, %v4336
    %v4901 = vpack.c.b16 %v4343, %v4337
    %v4902 = vpack.c.b16 %v4344, %v4338
    %v4903 = vpack.c.b16 %v4351, %v4345
    %v4904 = vpack.c.b16 %v4352, %v4346
    %v4905 = vpack.c.b16 %v4353, %v4347
    %v4906 = vpack.c.b16 %v4354, %v4348
    %v4907 = vpack.c.b16 %v4355, %v4349
    %v4908 = vpack.c.b16 %v4356, %v4350
    %v4909 = vpack.c.b16 %v4363, %v4357
    %v4910 = vpack.c.b16 %v4364, %v4358
    %v4911 = vpack.c.b16 %v4365, %v4359
    %v4912 = vpack.c.b16 %v4366, %v4360
    %v4913 = vpack.c.b16 %v4367, %v4361
    %v4914 = vpack.c.b16 %v4368, %v4362
    %v4915 = vpack.c.b16 %v4375, %v4369
    %v4916 = vpack.c.b16 %v4376, %v4370
    %v4917 = vpack.c.b16 %v4377, %v4371
    %v4918 = vpack.c.b16 %v4378, %v4372
    %v4919 = vpack.c.b16 %v4379, %v4373
    %v4920 = vpack.c.b16 %v4380, %v4374
    %v4921 = vpack.c.b16 %v4387, %v4381
    %v4922 = vpack.c.b16 %v4388, %v4382
    %v4923 = vpack.c.b16 %v4389, %v4383
    %v4924 = vpack.c.b16 %v4390, %v4384
    %v4925 = vpack.c.b16 %v4391, %v4385
    %v4926 = vpack.c.b16 %v4392, %v4386
    %v4927 = vpack.c.b16 %v4399, %v4393
    %v4928 = vpack.c.b16 %v4400, %v4394
    %v4929 = vpack.c.b16 %v4401, %v4395
    %v4930 = vpack.c.b16 %v4402, %v4396
    %v4931 = vpack.c.b16 %v4403, %v4397
    %v4932 = vpack.c.b16 %v4404, %v4398
    %v4933 = vpack.c.b16 %v4411, %v4405
    %v4934 = vpack.c.b16 %v4412, %v4406
    %v4935 = vpack.c.b16 %v4413, %v4407
    %v4936 = vpack.c.b16 %v4414, %v4408
    %v4937 = vpack.c.b16 %v4415, %v4409
    %v4938 = vpack.c.b16 %v4416, %v4410
    %v4939 = vpack.c.b16 %v4423, %v4417
    %v4940 = vpack.c.b16 %v4424, %v4418
    %v4941 = vpack.c.b16 %v4425, %v4419
    %v4942 = vpack.c.b16 %v4426, %v4420
    %v4943 = vpack.c.b16 %v4427, %v4421
    %v4944 = vpack.c.b16 %v4428, %v4422
    %v4945 = vpack.c.b16 %v4435, %v4429
    %v4946 = vpack.c.b16 %v4436, %v4430
    %v4947 = vpack.c.b16 %v4437, %v4431
    %v4948 = vpack.c.b16 %v4438, %v4432
    %v4949 = vpack.c.b16 %v4439, %v4433
    %v4950 = vpack.c.b16 %v4440, %v4434
    %v4951 = vpack.c.b16 %v4447, %v4441
    %v4952 = vpack.c.b16 %v4448, %v4442
    %v4953 = vpack.c.b16 %v4449, %v4443
    %v4954 = vpack.c.b16 %v4450, %v4444
    %v4955 = vpack.c.b16 %v4451, %v4445
    %v4956 = vpack.c.b16 %v4452, %v4446
    %v4957 = vpack.c.b16 %v4459, %v4453
    %v4958 = vpack.c.b16 %v4460, %v4454
    %v4959 = vpack.c.b16 %v4461, %v4455
    %v4960 = vpack.c.b16 %v4462, %v4456
    %v4961 = vpack.c.b16 %v4463, %v4457
    %v4962 = vpack.c.b16 %v4464, %v4458
    %v4963 = vpack.c.b16 %v4471, %v4465
    %v4964 = vpack.c.b16 %v4472, %v4466
    %v4965 = vpack.c.b16 %v4473, %v4467
    %v4966 = vpack.c.b16 %v4474, %v4468
    %v4967 = vpack.c.b16 %v4475, %v4469
    %v4968 = vpack.c.b16 %v4476, %v4470
    %v4969 = vpack.c.b16 %v4483, %v4477
    %v4970 = vpack.c.b16 %v4484, %v4478
    %v4971 = vpack.c.b16 %v4485, %v4479
    %v4972 = vpack.c.b16 %v4486, %v4480
    %v4973 = vpack.c.b16 %v4487, %v4481
    %v4974 = vpack.c.b16 %v4488, %v4482
    %v4975 = vpack.c.b16 %v4495, %v4489
    %v4976 = vpack.c.b16 %v4496, %v4490
    %v4977 = vpack.c.b16 %v4497, %v4491
    %v4978 = vpack.c.b16 %v4498, %v4492
    %v4979 = vpack.c.b16 %v4499, %v4493
    %v4980 = vpack.c.b16 %v4500, %v4494
    %v4981 = vpack.c.b16 %v4507, %v4501
    %v4982 = vpack.c.b16 %v4508, %v4502
    %v4983 = vpack.c.b16 %v4509, %v4503
    %v4984 = vpack.c.b16 %v4510, %v4504
    %v4985 = vpack.c.b16 %v4511, %v4505
    %v4986 = vpack.c.b16 %v4512, %v4506
    %v4987 = vpack.c.b16 %v4519, %v4513
    %v4988 = vpack.c.b16 %v4520, %v4514
    %v4989 = vpack.c.b16 %v4521, %v4515
    %v4990 = vpack.c.b16 %v4522, %v4516
    %v4991 = vpack.c.b16 %v4523, %v4517
    %v4992 = vpack.c.b16 %v4524, %v4518
    %v4993 = vpack.c.b16 %v4531, %v4525
    %v4994 = vpack.c.b16 %v4532, %v4526
    %v4995 = vpack.c.b16 %v4533, %v4527
    %v4996 = vpack.c.b16 %v4534, %v4528
    %v4997 = vpack.c.b16 %v4535, %v4529
    %v4998 = vpack.c.b16 %v4536, %v4530
    %v4999 = vpack.c.b16 %v4543, %v4537
    %v5000 = vpack.c.b16 %v4544, %v4538
    %v5001 = vpack.c.b16 %v4545, %v4539
    %v5002 = vpack.c.b16 %v4546, %v4540
    %v5003 = vpack.c.b16 %v4547, %v4541
    %v5004 = vpack.c.b16 %v4548, %v4542
    %v5005 = vpack.c.b16 %v4555, %v4549
    %v5006 = vpack.c.b16 %v4556, %v4550
    %v5007 = vpack.c.b16 %v4557, %v4551
    %v5008 = vpack.c.b16 %v4558, %v4552
    %v5009 = vpack.c.b16 %v4559, %v4553
    %v5010 = vpack.c.b16 %v4560, %v4554
    %v5011 = vpack.c.b16 %v4567, %v4561
    %v5012 = vpack.c.b16 %v4568, %v4562
    %v5013 = vpack.c.b16 %v4569, %v4563
    %v5014 = vpack.c.b16 %v4570, %v4564
    %v5015 = vpack.c.b16 %v4571, %v4565
    %v5016 = vpack.c.b16 %v4572, %v4566
    %v5017 = vpack.c.b16 %v4579, %v4573
    %v5018 = vpack.c.b16 %v4580, %v4574
    %v5019 = vpack.c.b16 %v4581, %v4575
    %v5020 = vpack.c.b16 %v4582, %v4576
    %v5021 = vpack.c.b16 %v4583, %v4577
    %v5022 = vpack.c.b16 %v4584, %v4578
    %v5023 = vpack.c.b16 %v4591, %v4585
    %v5024 = vpack.c.b16 %v4592, %v4586
    %v5025 = vpack.c.b16 %v4593, %v4587
    %v5026 = vpack.c.b16 %v4594, %v4588
    %v5027 = vpack.c.b16 %v4595, %v4589
    %v5028 = vpack.c.b16 %v4596, %v4590
    %v5029 = vpack.c.b16 %v4603, %v4597
    %v5030 = vpack.c.b16 %v4604, %v4598
    %v5031 = vpack.c.b16 %v4605, %v4599
    %v5032 = vpack.c.b16 %v4606, %v4600
    %v5033 = vpack.c.b16 %v4607, %v4601
    %v5034 = vpack.c.b16 %v4608, %v4602
    %v5035 = vpack.c.b16 %v4615, %v4609
    %v5036 = vpack.c.b16 %v4616, %v4610
    %v5037 = vpack.c.b16 %v4617, %v4611
    %v5038 = vpack.c.b16 %v4618, %v4612
    %v5039 = vpack.c.b16 %v4619, %v4613
    %v5040 = vpack.c.b16 %v4620, %v4614
    %v5041 = vpack.c.b16 %v4627, %v4621
    %v5042 = vpack.c.b16 %v4628, %v4622
    %v5043 = vpack.c.b16 %v4629, %v4623
    %v5044 = vpack.c.b16 %v4630, %v4624
    %v5045 = vpack.c.b16 %v4631, %v4625
    %v5046 = vpack.c.b16 %v4632, %v4626
    %v5047 = vpack.c.b16 %v4639, %v4633
    %v5048 = vpack.c.b16 %v4640, %v4634
    %v5049 = vpack.c.b16 %v4641, %v4635
    %v5050 = vpack.c.b16 %v4642, %v4636
    %v5051 = vpack.c.b16 %v4643, %v4637
    %v5052 = vpack.c.b16 %v4644, %v4638
    %v5053 = vpack.c.b16 %v4651, %v4645
    %v5054 = vpack.c.b16 %v4652, %v4646
    %v5055 = vpack.c.b16 %v4653, %v4647
    %v5056 = vpack.c.b16 %v4654, %v4648
    %v5057 = vpack.c.b16 %v4655, %v4649
    %v5058 = vpack.c.b16 %v4656, %v4650
    %v5059 = vpack.c.b16 %v4663, %v4657
    %v5060 = vpack.c.b16 %v4664, %v4658
    %v5061 = vpack.c.b16 %v4665, %v4659
    %v5062 = vpack.c.b16 %v4666, %v4660
    %v5063 = vpack.c.b16 %v4667, %v4661
    %v5064 = vpack.c.b16 %v4668, %v4662
    %v5065 = vpack.c.b16 %v4675, %v4669
    %v5066 = vpack.c.b16 %v4676, %v4670
    %v5067 = vpack.c.b16 %v4677, %v4671
    %v5068 = vpack.c.b16 %v4678, %v4672
    %v5069 = vpack.c.b16 %v4679, %v4673
    %v5070 = vpack.c.b16 %v4680, %v4674
    %v5071 = vpack.c.b16 %v4687, %v4681
    %v5072 = vpack.c.b16 %v4688, %v4682
    %v5073 = vpack.c.b16 %v4689, %v4683
    %v5074 = vpack.c.b16 %v4690, %v4684
    %v5075 = vpack.c.b16 %v4691, %v4685
    %v5076 = vpack.c.b16 %v4692, %v4686
    %5461 = vmatprep.subr.bf16.mxu0 %v4694
    %5462 = vmatpush1.bf16.msra.mxu0 %v4693
    %5463 = vmatprep.subr.bf16.mxu0 %v4700
    %5464 = vmatpush1.bf16.msra.mxu0 %v4699
    %5465 = vmatprep.subr.bf16.mxu0 %v4706
    %5466 = vmatpush1.bf16.msra.mxu0 %v4705
    %5467 = vmatprep.subr.bf16.mxu0 %v4712
    %5468 = vmatpush1.bf16.msra.mxu0 %v4711
    %5469 = vmatprep.subr.bf16.mxu0 %v4718
    %5470 = vmatpush1.bf16.msra.mxu0 %v4717
    %5471 = vmatprep.subr.bf16.mxu0 %v4724
    %5472 = vmatpush1.bf16.msra.mxu0 %v4723
    %5473 = vmatprep.subr.bf16.mxu0 %v4730
    %5474 = vmatpush1.bf16.msra.mxu0 %v4729
    %5475 = vmatprep.subr.bf16.mxu0 %v4736
    %5476 = vmatpush1.bf16.msra.mxu0 %v4735
    %5477 = vmatprep.subr.bf16.mxu0 %v4742
    %5478 = vmatpush1.bf16.msra.mxu0 %v4741
    %5479 = vmatprep.subr.bf16.mxu0 %v4748
    %5480 = vmatpush1.bf16.msra.mxu0 %v4747
    %5481 = vmatprep.subr.bf16.mxu0 %v4754
    %5482 = vmatpush1.bf16.msra.mxu0 %v4753
    %5483 = vmatprep.subr.bf16.mxu0 %v4760
    %5484 = vmatpush1.bf16.msra.mxu0 %v4759
    %5485 = vmatprep.subr.bf16.mxu0 %v4766
    %5486 = vmatpush1.bf16.msra.mxu0 %v4765
    %5487 = vmatprep.subr.bf16.mxu0 %v4772
    %5488 = vmatpush1.bf16.msra.mxu0 %v4771
    %5489 = vmatprep.subr.bf16.mxu0 %v4778
    %5490 = vmatpush1.bf16.msra.mxu0 %v4777
    %5491 = vmatprep.subr.bf16.mxu0 %v4784
    %5492 = vmatpush1.bf16.msra.mxu0 %v4783
    %5493 = vmatprep.mubr.bf16.mxu0 %v3118
    %5494 = vmatmul.mubr.bf16.gmra.mrb[0].mxu0 %v3117
    %v5495 = vpop.f32.mrb[0].mxu0
    %v5496 = vadd.f32 %v3514, %v5495
    %v5497 = vpop.f32.mrb[0].mxu0
    %v5498 = vadd.f32 %v3518, %v5497
    %v5499 = vpop.f32.mrb[0].mxu0
    %v5500 = vadd.f32 %v3514, %v5499
    %v5501 = vpop.f32.mrb[0].mxu0
    %v5502 = vadd.f32 %v3518, %v5501
    %5503 = vdwg.mxu0
    %5504 = vmatprep.subr.bf16.mxu0 %v4790
    %5505 = vmatpush1.bf16.msra.mxu0 %v4789
    %5506 = vmatprep.subr.bf16.mxu0 %v4796
    %5507 = vmatpush1.bf16.msra.mxu0 %v4795
    %5508 = vmatprep.subr.bf16.mxu0 %v4802
    %5509 = vmatpush1.bf16.msra.mxu0 %v4801
    %5510 = vmatprep.subr.bf16.mxu0 %v4808
    %5511 = vmatpush1.bf16.msra.mxu0 %v4807
    %5512 = vmatprep.subr.bf16.mxu0 %v4814
    %5513 = vmatpush1.bf16.msra.mxu0 %v4813
    %5514 = vmatprep.subr.bf16.mxu0 %v4820
    %5515 = vmatpush1.bf16.msra.mxu0 %v4819
    %5516 = vmatprep.subr.bf16.mxu0 %v4826
    %5517 = vmatpush1.bf16.msra.mxu0 %v4825
    %5518 = vmatprep.subr.bf16.mxu0 %v4832
    %5519 = vmatpush1.bf16.msra.mxu0 %v4831
    %5520 = vmatprep.subr.bf16.mxu0 %v4838
    %5521 = vmatpush1.bf16.msra.mxu0 %v4837
    %5522 = vmatprep.subr.bf16.mxu0 %v4844
    %5523 = vmatpush1.bf16.msra.mxu0 %v4843
    %5524 = vmatprep.subr.bf16.mxu0 %v4850
    %5525 = vmatpush1.bf16.msra.mxu0 %v4849
    %5526 = vmatprep.subr.bf16.mxu0 %v4856
    %5527 = vmatpush1.bf16.msra.mxu0 %v4855
    %5528 = vmatprep.subr.bf16.mxu0 %v4862
    %5529 = vmatpush1.bf16.msra.mxu0 %v4861
    %5530 = vmatprep.subr.bf16.mxu0 %v4868
    %5531 = vmatpush1.bf16.msra.mxu0 %v4867
    %5532 = vmatprep.subr.bf16.mxu0 %v4874
    %5533 = vmatpush1.bf16.msra.mxu0 %v4873
    %5534 = vmatprep.subr.bf16.mxu0 %v4880
    %5535 = vmatpush1.bf16.msra.mxu0 %v4879
    %5536 = vmatprep.mubr.bf16.mxu0 %v3120
    %5537 = vmatmul.mubr.bf16.gmra.mrb[0].mxu0 %v3119
    %v5538 = vpop.f32.mrb[0].mxu0
    %v5539 = vadd.f32 %v5496, %v5538
    %v5540 = vpop.f32.mrb[0].mxu0
    %v5541 = vadd.f32 %v5498, %v5540
    %v5542 = vpop.f32.mrb[0].mxu0
    %v5543 = vadd.f32 %v5500, %v5542
    %v5544 = vpop.f32.mrb[0].mxu0
    %v5545 = vadd.f32 %v5502, %v5544
    %5546 = vdwg.mxu0
    %5547 = vmatprep.subr.bf16.mxu0 %v4886
    %5548 = vmatpush1.bf16.msra.mxu0 %v4885
    %5549 = vmatprep.subr.bf16.mxu0 %v4892
    %5550 = vmatpush1.bf16.msra.mxu0 %v4891
    %5551 = vmatprep.subr.bf16.mxu0 %v4898
    %5552 = vmatpush1.bf16.msra.mxu0 %v4897
    %5553 = vmatprep.subr.bf16.mxu0 %v4904
    %5554 = vmatpush1.bf16.msra.mxu0 %v4903
    %5555 = vmatprep.subr.bf16.mxu0 %v4910
    %5556 = vmatpush1.bf16.msra.mxu0 %v4909
    %5557 = vmatprep.subr.bf16.mxu0 %v4916
    %5558 = vmatpush1.bf16.msra.mxu0 %v4915
    %5559 = vmatprep.subr.bf16.mxu0 %v4922
    %5560 = vmatpush1.bf16.msra.mxu0 %v4921
    %5561 = vmatprep.subr.bf16.mxu0 %v4928
    %5562 = vmatpush1.bf16.msra.mxu0 %v4927
    %5563 = vmatprep.subr.bf16.mxu0 %v4934
    %5564 = vmatpush1.bf16.msra.mxu0 %v4933
    %5565 = vmatprep.subr.bf16.mxu0 %v4940
    %5566 = vmatpush1.bf16.msra.mxu0 %v4939
    %5567 = vmatprep.subr.bf16.mxu0 %v4946
    %5568 = vmatpush1.bf16.msra.mxu0 %v4945
    %5569 = vmatprep.subr.bf16.mxu0 %v4952
    %5570 = vmatpush1.bf16.msra.mxu0 %v4951
    %5571 = vmatprep.subr.bf16.mxu0 %v4958
    %5572 = vmatpush1.bf16.msra.mxu0 %v4957
    %5573 = vmatprep.subr.bf16.mxu0 %v4964
    %5574 = vmatpush1.bf16.msra.mxu0 %v4963
    %5575 = vmatprep.subr.bf16.mxu0 %v4970
    %5576 = vmatpush1.bf16.msra.mxu0 %v4969
    %5577 = vmatprep.subr.bf16.mxu0 %v4976
    %5578 = vmatpush1.bf16.msra.mxu0 %v4975
    %5579 = vmatprep.mubr.bf16.mxu0 %v3122
    %5580 = vmatmul.mubr.bf16.gmra.mrb[0].mxu0 %v3121
    %v5581 = vpop.f32.mrb[0].mxu0
    %v5582 = vadd.f32 %v5539, %v5581
    %v5583 = vpop.f32.mrb[0].mxu0
    %v5584 = vadd.f32 %v5541, %v5583
    %v5585 = vpop.f32.mrb[0].mxu0
    %v5586 = vadd.f32 %v5543, %v5585
    %v5587 = vpop.f32.mrb[0].mxu0
    %v5588 = vadd.f32 %v5545, %v5587
    %5589 = vdwg.mxu0
    %5590 = vmatprep.subr.bf16.mxu0 %v4982
    %5591 = vmatpush1.bf16.msra.mxu0 %v4981
    %5592 = vmatprep.subr.bf16.mxu0 %v4988
    %5593 = vmatpush1.bf16.msra.mxu0 %v4987
    %5594 = vmatprep.subr.bf16.mxu0 %v4994
    %5595 = vmatpush1.bf16.msra.mxu0 %v4993
    %5596 = vmatprep.subr.bf16.mxu0 %v5000
    %5597 = vmatpush1.bf16.msra.mxu0 %v4999
    %5598 = vmatprep.subr.bf16.mxu0 %v5006
    %5599 = vmatpush1.bf16.msra.mxu0 %v5005
    %5600 = vmatprep.subr.bf16.mxu0 %v5012
    %5601 = vmatpush1.bf16.msra.mxu0 %v5011
    %5602 = vmatprep.subr.bf16.mxu0 %v5018
    %5603 = vmatpush1.bf16.msra.mxu0 %v5017
    %5604 = vmatprep.subr.bf16.mxu0 %v5024
    %5605 = vmatpush1.bf16.msra.mxu0 %v5023
    %5606 = vmatprep.subr.bf16.mxu0 %v5030
    %5607 = vmatpush1.bf16.msra.mxu0 %v5029
    %5608 = vmatprep.subr.bf16.mxu0 %v5036
    %5609 = vmatpush1.bf16.msra.mxu0 %v5035
    %5610 = vmatprep.subr.bf16.mxu0 %v5042
    %5611 = vmatpush1.bf16.msra.mxu0 %v5041
    %5612 = vmatprep.subr.bf16.mxu0 %v5048
    %5613 = vmatpush1.bf16.msra.mxu0 %v5047
    %5614 = vmatprep.subr.bf16.mxu0 %v5054
    %5615 = vmatpush1.bf16.msra.mxu0 %v5053
    %5616 = vmatprep.subr.bf16.mxu0 %v5060
    %5617 = vmatpush1.bf16.msra.mxu0 %v5059
    %5618 = vmatprep.subr.bf16.mxu0 %v5066
    %5619 = vmatpush1.bf16.msra.mxu0 %v5065
    %5620 = vmatprep.subr.bf16.mxu0 %v5072
    %5621 = vmatpush1.bf16.msra.mxu0 %v5071
    %5622 = vmatprep.mubr.bf16.mxu0 %v3124
    %5623 = vmatmul.mubr.bf16.gmra.mrb[0].mxu0 %v3123
    %v5624 = vpop.f32.mrb[0].mxu0
    %v5625 = vadd.f32 %v5582, %v5624
    %v5626 = vpop.f32.mrb[0].mxu0
    %v5627 = vadd.f32 %v5584, %v5626
    %v5628 = vpop.f32.mrb[0].mxu0
    %v5629 = vadd.f32 %v5586, %v5628
    %v5630 = vpop.f32.mrb[0].mxu0
    %v5631 = vadd.f32 %v5588, %v5630
    %5632 = vdwg.mxu0
    %5633 = vmatprep.subr.bf16.mxu0 %v4696
    %5634 = vmatpush1.bf16.msra.mxu0 %v4695
    %5635 = vmatprep.subr.bf16.mxu0 %v4702
    %5636 = vmatpush1.bf16.msra.mxu0 %v4701
    %5637 = vmatprep.subr.bf16.mxu0 %v4708
    %5638 = vmatpush1.bf16.msra.mxu0 %v4707
    %5639 = vmatprep.subr.bf16.mxu0 %v4714
    %5640 = vmatpush1.bf16.msra.mxu0 %v4713
    %5641 = vmatprep.subr.bf16.mxu0 %v4720
    %5642 = vmatpush1.bf16.msra.mxu0 %v4719
    %5643 = vmatprep.subr.bf16.mxu0 %v4726
    %5644 = vmatpush1.bf16.msra.mxu0 %v4725
    %5645 = vmatprep.subr.bf16.mxu0 %v4732
    %5646 = vmatpush1.bf16.msra.mxu0 %v4731
    %5647 = vmatprep.subr.bf16.mxu0 %v4738
    %5648 = vmatpush1.bf16.msra.mxu0 %v4737
    %5649 = vmatprep.subr.bf16.mxu0 %v4744
    %5650 = vmatpush1.bf16.msra.mxu0 %v4743
    %5651 = vmatprep.subr.bf16.mxu0 %v4750
    %5652 = vmatpush1.bf16.msra.mxu0 %v4749
    %5653 = vmatprep.subr.bf16.mxu0 %v4756
    %5654 = vmatpush1.bf16.msra.mxu0 %v4755
    %5655 = vmatprep.subr.bf16.mxu0 %v4762
    %5656 = vmatpush1.bf16.msra.mxu0 %v4761
    %5657 = vmatprep.subr.bf16.mxu0 %v4768
    %5658 = vmatpush1.bf16.msra.mxu0 %v4767
    %5659 = vmatprep.subr.bf16.mxu0 %v4774
    %5660 = vmatpush1.bf16.msra.mxu0 %v4773
    %5661 = vmatprep.subr.bf16.mxu0 %v4780
    %5662 = vmatpush1.bf16.msra.mxu0 %v4779
    %5663 = vmatprep.subr.bf16.mxu0 %v4786
    %5664 = vmatpush1.bf16.msra.mxu0 %v4785
    %5665 = vmatprep.mubr.bf16.mxu0 %v3118
    %5666 = vmatmul.mubr.bf16.gmra.mrb[0].mxu0 %v3117
    %v5667 = vpop.f32.mrb[0].mxu0
    %v5668 = vadd.f32 %v3522, %v5667
    %v5669 = vpop.f32.mrb[0].mxu0
    %v5670 = vadd.f32 %v3526, %v5669
    %v5671 = vpop.f32.mrb[0].mxu0
    %v5672 = vadd.f32 %v3522, %v5671
    %v5673 = vpop.f32.mrb[0].mxu0
    %v5674 = vadd.f32 %v3526, %v5673
    %5675 = vdwg.mxu0
    %5676 = vmatprep.subr.bf16.mxu0 %v4792
    %5677 = vmatpush1.bf16.msra.mxu0 %v4791
    %5678 = vmatprep.subr.bf16.mxu0 %v4798
    %5679 = vmatpush1.bf16.msra.mxu0 %v4797
    %5680 = vmatprep.subr.bf16.mxu0 %v4804
    %5681 = vmatpush1.bf16.msra.mxu0 %v4803
    %5682 = vmatprep.subr.bf16.mxu0 %v4810
    %5683 = vmatpush1.bf16.msra.mxu0 %v4809
    %5684 = vmatprep.subr.bf16.mxu0 %v4816
    %5685 = vmatpush1.bf16.msra.mxu0 %v4815
    %5686 = vmatprep.subr.bf16.mxu0 %v4822
    %5687 = vmatpush1.bf16.msra.mxu0 %v4821
    %5688 = vmatprep.subr.bf16.mxu0 %v4828
    %5689 = vmatpush1.bf16.msra.mxu0 %v4827
    %5690 = vmatprep.subr.bf16.mxu0 %v4834
    %5691 = vmatpush1.bf16.msra.mxu0 %v4833
    %5692 = vmatprep.subr.bf16.mxu0 %v4840
    %5693 = vmatpush1.bf16.msra.mxu0 %v4839
    %5694 = vmatprep.subr.bf16.mxu0 %v4846
    %5695 = vmatpush1.bf16.msra.mxu0 %v4845
    %5696 = vmatprep.subr.bf16.mxu0 %v4852
    %5697 = vmatpush1.bf16.msra.mxu0 %v4851
    %5698 = vmatprep.subr.bf16.mxu0 %v4858
    %5699 = vmatpush1.bf16.msra.mxu0 %v4857
    %5700 = vmatprep.subr.bf16.mxu0 %v4864
    %5701 = vmatpush1.bf16.msra.mxu0 %v4863
    %5702 = vmatprep.subr.bf16.mxu0 %v4870
    %5703 = vmatpush1.bf16.msra.mxu0 %v4869
    %5704 = vmatprep.subr.bf16.mxu0 %v4876
    %5705 = vmatpush1.bf16.msra.mxu0 %v4875
    %5706 = vmatprep.subr.bf16.mxu0 %v4882
    %5707 = vmatpush1.bf16.msra.mxu0 %v4881
    %5708 = vmatprep.mubr.bf16.mxu0 %v3120
    %5709 = vmatmul.mubr.bf16.gmra.mrb[0].mxu0 %v3119
    %v5710 = vpop.f32.mrb[0].mxu0
    %v5711 = vadd.f32 %v5668, %v5710
    %v5712 = vpop.f32.mrb[0].mxu0
    %v5713 = vadd.f32 %v5670, %v5712
    %v5714 = vpop.f32.mrb[0].mxu0
    %v5715 = vadd.f32 %v5672, %v5714
    %v5716 = vpop.f32.mrb[0].mxu0
    %v5717 = vadd.f32 %v5674, %v5716
    %5718 = vdwg.mxu0
    %5719 = vmatprep.subr.bf16.mxu0 %v4888
    %5720 = vmatpush1.bf16.msra.mxu0 %v4887
    %5721 = vmatprep.subr.bf16.mxu0 %v4894
    %5722 = vmatpush1.bf16.msra.mxu0 %v4893
    %5723 = vmatprep.subr.bf16.mxu0 %v4900
    %5724 = vmatpush1.bf16.msra.mxu0 %v4899
    %5725 = vmatprep.subr.bf16.mxu0 %v4906
    %5726 = vmatpush1.bf16.msra.mxu0 %v4905
    %5727 = vmatprep.subr.bf16.mxu0 %v4912
    %5728 = vmatpush1.bf16.msra.mxu0 %v4911
    %5729 = vmatprep.subr.bf16.mxu0 %v4918
    %5730 = vmatpush1.bf16.msra.mxu0 %v4917
    %5731 = vmatprep.subr.bf16.mxu0 %v4924
    %5732 = vmatpush1.bf16.msra.mxu0 %v4923
    %5733 = vmatprep.subr.bf16.mxu0 %v4930
    %5734 = vmatpush1.bf16.msra.mxu0 %v4929
    %5735 = vmatprep.subr.bf16.mxu0 %v4936
    %5736 = vmatpush1.bf16.msra.mxu0 %v4935
    %5737 = vmatprep.subr.bf16.mxu0 %v4942
    %5738 = vmatpush1.bf16.msra.mxu0 %v4941
    %5739 = vmatprep.subr.bf16.mxu0 %v4948
    %5740 = vmatpush1.bf16.msra.mxu0 %v4947
    %5741 = vmatprep.subr.bf16.mxu0 %v4954
    %5742 = vmatpush1.bf16.msra.mxu0 %v4953
    %5743 = vmatprep.subr.bf16.mxu0 %v4960
    %5744 = vmatpush1.bf16.msra.mxu0 %v4959
    %5745 = vmatprep.subr.bf16.mxu0 %v4966
    %5746 = vmatpush1.bf16.msra.mxu0 %v4965
    %5747 = vmatprep.subr.bf16.mxu0 %v4972
    %5748 = vmatpush1.bf16.msra.mxu0 %v4971
    %5749 = vmatprep.subr.bf16.mxu0 %v4978
    %5750 = vmatpush1.bf16.msra.mxu0 %v4977
    %5751 = vmatprep.mubr.bf16.mxu0 %v3122
    %5752 = vmatmul.mubr.bf16.gmra.mrb[0].mxu0 %v3121
    %v5753 = vpop.f32.mrb[0].mxu0
    %v5754 = vadd.f32 %v5711, %v5753
    %v5755 = vpop.f32.mrb[0].mxu0
    %v5756 = vadd.f32 %v5713, %v5755
    %v5757 = vpop.f32.mrb[0].mxu0
    %v5758 = vadd.f32 %v5715, %v5757
    %v5759 = vpop.f32.mrb[0].mxu0
    %v5760 = vadd.f32 %v5717, %v5759
    %5761 = vdwg.mxu0
    %5762 = vmatprep.subr.bf16.mxu0 %v4984
    %5763 = vmatpush1.bf16.msra.mxu0 %v4983
    %5764 = vmatprep.subr.bf16.mxu0 %v4990
    %5765 = vmatpush1.bf16.msra.mxu0 %v4989
    %5766 = vmatprep.subr.bf16.mxu0 %v4996
    %5767 = vmatpush1.bf16.msra.mxu0 %v4995
    %5768 = vmatprep.subr.bf16.mxu0 %v5002
    %5769 = vmatpush1.bf16.msra.mxu0 %v5001
    %5770 = vmatprep.subr.bf16.mxu0 %v5008
    %5771 = vmatpush1.bf16.msra.mxu0 %v5007
    %5772 = vmatprep.subr.bf16.mxu0 %v5014
    %5773 = vmatpush1.bf16.msra.mxu0 %v5013
    %5774 = vmatprep.subr.bf16.mxu0 %v5020
    %5775 = vmatpush1.bf16.msra.mxu0 %v5019
    %5776 = vmatprep.subr.bf16.mxu0 %v5026
    %5777 = vmatpush1.bf16.msra.mxu0 %v5025
    %5778 = vmatprep.subr.bf16.mxu0 %v5032
    %5779 = vmatpush1.bf16.msra.mxu0 %v5031
    %5780 = vmatprep.subr.bf16.mxu0 %v5038
    %5781 = vmatpush1.bf16.msra.mxu0 %v5037
    %5782 = vmatprep.subr.bf16.mxu0 %v5044
    %5783 = vmatpush1.bf16.msra.mxu0 %v5043
    %5784 = vmatprep.subr.bf16.mxu0 %v5050
    %5785 = vmatpush1.bf16.msra.mxu0 %v5049
    %5786 = vmatprep.subr.bf16.mxu0 %v5056
    %5787 = vmatpush1.bf16.msra.mxu0 %v5055
    %5788 = vmatprep.subr.bf16.mxu0 %v5062
    %5789 = vmatpush1.bf16.msra.mxu0 %v5061
    %5790 = vmatprep.subr.bf16.mxu0 %v5068
    %5791 = vmatpush1.bf16.msra.mxu0 %v5067
    %5792 = vmatprep.subr.bf16.mxu0 %v5074
    %5793 = vmatpush1.bf16.msra.mxu0 %v5073
    %5794 = vmatprep.mubr.bf16.mxu0 %v3124
    %5795 = vmatmul.mubr.bf16.gmra.mrb[0].mxu0 %v3123
    %v5796 = vpop.f32.mrb[0].mxu0
    %v5797 = vadd.f32 %v5754, %v5796
    %v5798 = vpop.f32.mrb[0].mxu0
    %v5799 = vadd.f32 %v5756, %v5798
    %v5800 = vpop.f32.mrb[0].mxu0
    %v5801 = vadd.f32 %v5758, %v5800
    %v5802 = vpop.f32.mrb[0].mxu0
    %v5803 = vadd.f32 %v5760, %v5802
    %5804 = vdwg.mxu0
    %5805 = vmatprep.subr.bf16.mxu0 %v4698
    %5806 = vmatpush1.bf16.msra.mxu0 %v4697
    %5807 = vmatprep.subr.bf16.mxu0 %v4704
    %5808 = vmatpush1.bf16.msra.mxu0 %v4703
    %5809 = vmatprep.subr.bf16.mxu0 %v4710
    %5810 = vmatpush1.bf16.msra.mxu0 %v4709
    %5811 = vmatprep.subr.bf16.mxu0 %v4716
    %5812 = vmatpush1.bf16.msra.mxu0 %v4715
    %5813 = vmatprep.subr.bf16.mxu0 %v4722
    %5814 = vmatpush1.bf16.msra.mxu0 %v4721
    %5815 = vmatprep.subr.bf16.mxu0 %v4728
    %5816 = vmatpush1.bf16.msra.mxu0 %v4727
    %5817 = vmatprep.subr.bf16.mxu0 %v4734
    %5818 = vmatpush1.bf16.msra.mxu0 %v4733
    %5819 = vmatprep.subr.bf16.mxu0 %v4740
    %5820 = vmatpush1.bf16.msra.mxu0 %v4739
    %5821 = vmatprep.subr.bf16.mxu0 %v4746
    %5822 = vmatpush1.bf16.msra.mxu0 %v4745
    %5823 = vmatprep.subr.bf16.mxu0 %v4752
    %5824 = vmatpush1.bf16.msra.mxu0 %v4751
    %5825 = vmatprep.subr.bf16.mxu0 %v4758
    %5826 = vmatpush1.bf16.msra.mxu0 %v4757
    %5827 = vmatprep.subr.bf16.mxu0 %v4764
    %5828 = vmatpush1.bf16.msra.mxu0 %v4763
    %5829 = vmatprep.subr.bf16.mxu0 %v4770
    %5830 = vmatpush1.bf16.msra.mxu0 %v4769
    %5831 = vmatprep.subr.bf16.mxu0 %v4776
    %5832 = vmatpush1.bf16.msra.mxu0 %v4775
    %5833 = vmatprep.subr.bf16.mxu0 %v4782
    %5834 = vmatpush1.bf16.msra.mxu0 %v4781
    %5835 = vmatprep.subr.bf16.mxu0 %v4788
    %5836 = vmatpush1.bf16.msra.mxu0 %v4787
    %5837 = vmatprep.mubr.bf16.mxu0 %v3118
    %5838 = vmatmul.mubr.bf16.gmra.mrb[0].mxu0 %v3117
    %v5839 = vpop.f32.mrb[0].mxu0
    %v5840 = vadd.f32 %v3530, %v5839
    %v5841 = vpop.f32.mrb[0].mxu0
    %v5842 = vadd.f32 %v3534, %v5841
    %v5843 = vpop.f32.mrb[0].mxu0
    %v5844 = vadd.f32 %v3530, %v5843
    %v5845 = vpop.f32.mrb[0].mxu0
    %v5846 = vadd.f32 %v3534, %v5845
    %5847 = vdwg.mxu0
    %5848 = vmatprep.subr.bf16.mxu0 %v4794
    %5849 = vmatpush1.bf16.msra.mxu0 %v4793
    %5850 = vmatprep.subr.bf16.mxu0 %v4800
    %5851 = vmatpush1.bf16.msra.mxu0 %v4799
    %5852 = vmatprep.subr.bf16.mxu0 %v4806
    %5853 = vmatpush1.bf16.msra.mxu0 %v4805
    %5854 = vmatprep.subr.bf16.mxu0 %v4812
    %5855 = vmatpush1.bf16.msra.mxu0 %v4811
    %5856 = vmatprep.subr.bf16.mxu0 %v4818
    %5857 = vmatpush1.bf16.msra.mxu0 %v4817
    %5858 = vmatprep.subr.bf16.mxu0 %v4824
    %5859 = vmatpush1.bf16.msra.mxu0 %v4823
    %5860 = vmatprep.subr.bf16.mxu0 %v4830
    %5861 = vmatpush1.bf16.msra.mxu0 %v4829
    %5862 = vmatprep.subr.bf16.mxu0 %v4836
    %5863 = vmatpush1.bf16.msra.mxu0 %v4835
    %5864 = vmatprep.subr.bf16.mxu0 %v4842
    %5865 = vmatpush1.bf16.msra.mxu0 %v4841
    %5866 = vmatprep.subr.bf16.mxu0 %v4848
    %5867 = vmatpush1.bf16.msra.mxu0 %v4847
    %5868 = vmatprep.subr.bf16.mxu0 %v4854
    %5869 = vmatpush1.bf16.msra.mxu0 %v4853
    %5870 = vmatprep.subr.bf16.mxu0 %v4860
    %5871 = vmatpush1.bf16.msra.mxu0 %v4859
    %5872 = vmatprep.subr.bf16.mxu0 %v4866
    %5873 = vmatpush1.bf16.msra.mxu0 %v4865
    %5874 = vmatprep.subr.bf16.mxu0 %v4872
    %5875 = vmatpush1.bf16.msra.mxu0 %v4871
    %5876 = vmatprep.subr.bf16.mxu0 %v4878
    %5877 = vmatpush1.bf16.msra.mxu0 %v4877
    %5878 = vmatprep.subr.bf16.mxu0 %v4884
    %5879 = vmatpush1.bf16.msra.mxu0 %v4883
    %5880 = vmatprep.mubr.bf16.mxu0 %v3120
    %5881 = vmatmul.mubr.bf16.gmra.mrb[0].mxu0 %v3119
    %v5882 = vpop.f32.mrb[0].mxu0
    %v5883 = vadd.f32 %v5840, %v5882
    %v5884 = vpop.f32.mrb[0].mxu0
    %v5885 = vadd.f32 %v5842, %v5884
    %v5886 = vpop.f32.mrb[0].mxu0
    %v5887 = vadd.f32 %v5844, %v5886
    %v5888 = vpop.f32.mrb[0].mxu0
    %v5889 = vadd.f32 %v5846, %v5888
    %5890 = vdwg.mxu0
    %5891 = vmatprep.subr.bf16.mxu0 %v4890
    %5892 = vmatpush1.bf16.msra.mxu0 %v4889
    %5893 = vmatprep.subr.bf16.mxu0 %v4896
    %5894 = vmatpush1.bf16.msra.mxu0 %v4895
    %5895 = vmatprep.subr.bf16.mxu0 %v4902
    %5896 = vmatpush1.bf16.msra.mxu0 %v4901
    %5897 = vmatprep.subr.bf16.mxu0 %v4908
    %5898 = vmatpush1.bf16.msra.mxu0 %v4907
    %5899 = vmatprep.subr.bf16.mxu0 %v4914
    %5900 = vmatpush1.bf16.msra.mxu0 %v4913
    %5901 = vmatprep.subr.bf16.mxu0 %v4920
    %5902 = vmatpush1.bf16.msra.mxu0 %v4919
    %5903 = vmatprep.subr.bf16.mxu0 %v4926
    %5904 = vmatpush1.bf16.msra.mxu0 %v4925
    %5905 = vmatprep.subr.bf16.mxu0 %v4932
    %5906 = vmatpush1.bf16.msra.mxu0 %v4931
    %5907 = vmatprep.subr.bf16.mxu0 %v4938
    %5908 = vmatpush1.bf16.msra.mxu0 %v4937
    %5909 = vmatprep.subr.bf16.mxu0 %v4944
    %5910 = vmatpush1.bf16.msra.mxu0 %v4943
    %5911 = vmatprep.subr.bf16.mxu0 %v4950
    %5912 = vmatpush1.bf16.msra.mxu0 %v4949
    %5913 = vmatprep.subr.bf16.mxu0 %v4956
    %5914 = vmatpush1.bf16.msra.mxu0 %v4955
    %5915 = vmatprep.subr.bf16.mxu0 %v4962
    %5916 = vmatpush1.bf16.msra.mxu0 %v4961
    %5917 = vmatprep.subr.bf16.mxu0 %v4968
    %5918 = vmatpush1.bf16.msra.mxu0 %v4967
    %5919 = vmatprep.subr.bf16.mxu0 %v4974
    %5920 = vmatpush1.bf16.msra.mxu0 %v4973
    %5921 = vmatprep.subr.bf16.mxu0 %v4980
    %5922 = vmatpush1.bf16.msra.mxu0 %v4979
    %5923 = vmatprep.mubr.bf16.mxu0 %v3122
    %5924 = vmatmul.mubr.bf16.gmra.mrb[0].mxu0 %v3121
    %v5925 = vpop.f32.mrb[0].mxu0
    %v5926 = vadd.f32 %v5883, %v5925
    %v5927 = vpop.f32.mrb[0].mxu0
    %v5928 = vadd.f32 %v5885, %v5927
    %v5929 = vpop.f32.mrb[0].mxu0
    %v5930 = vadd.f32 %v5887, %v5929
    %v5931 = vpop.f32.mrb[0].mxu0
    %v5932 = vadd.f32 %v5889, %v5931
    %5933 = vdwg.mxu0
    %5934 = vmatprep.subr.bf16.mxu0 %v4986
    %5935 = vmatpush1.bf16.msra.mxu0 %v4985
    %5936 = vmatprep.subr.bf16.mxu0 %v4992
    %5937 = vmatpush1.bf16.msra.mxu0 %v4991
    %5938 = vmatprep.subr.bf16.mxu0 %v4998
    %5939 = vmatpush1.bf16.msra.mxu0 %v4997
    %5940 = vmatprep.subr.bf16.mxu0 %v5004
    %5941 = vmatpush1.bf16.msra.mxu0 %v5003
    %5942 = vmatprep.subr.bf16.mxu0 %v5010
    %5943 = vmatpush1.bf16.msra.mxu0 %v5009
    %5944 = vmatprep.subr.bf16.mxu0 %v5016
    %5945 = vmatpush1.bf16.msra.mxu0 %v5015
    %5946 = vmatprep.subr.bf16.mxu0 %v5022
    %5947 = vmatpush1.bf16.msra.mxu0 %v5021
    %5948 = vmatprep.subr.bf16.mxu0 %v5028
    %5949 = vmatpush1.bf16.msra.mxu0 %v5027
    %5950 = vmatprep.subr.bf16.mxu0 %v5034
    %5951 = vmatpush1.bf16.msra.mxu0 %v5033
    %5952 = vmatprep.subr.bf16.mxu0 %v5040
    %5953 = vmatpush1.bf16.msra.mxu0 %v5039
    %5954 = vmatprep.subr.bf16.mxu0 %v5046
    %5955 = vmatpush1.bf16.msra.mxu0 %v5045
    %5956 = vmatprep.subr.bf16.mxu0 %v5052
    %5957 = vmatpush1.bf16.msra.mxu0 %v5051
    %5958 = vmatprep.subr.bf16.mxu0 %v5058
    %5959 = vmatpush1.bf16.msra.mxu0 %v5057
    %5960 = vmatprep.subr.bf16.mxu0 %v5064
    %5961 = vmatpush1.bf16.msra.mxu0 %v5063
    %5962 = vmatprep.subr.bf16.mxu0 %v5070
    %5963 = vmatpush1.bf16.msra.mxu0 %v5069
    %5964 = vmatprep.subr.bf16.mxu0 %v5076
    %5965 = vmatpush1.bf16.msra.mxu0 %v5075
    %5966 = vmatprep.mubr.bf16.mxu0 %v3124
    %5967 = vmatmul.mubr.bf16.gmra.mrb[0].mxu0 %v3123
    %v5968 = vpop.f32.mrb[0].mxu0
    %v5969 = vadd.f32 %v5926, %v5968
    %v5970 = vpop.f32.mrb[0].mxu0
    %v5971 = vadd.f32 %v5928, %v5970
    %v5972 = vpop.f32.mrb[0].mxu0
    %v5973 = vadd.f32 %v5930, %v5972
    %v5974 = vpop.f32.mrb[0].mxu0
    %v5975 = vadd.f32 %v5932, %v5974
    %5976 = vdwg.mxu0
    %v5977 = vadd.f32 %v221, %v5625
    %v5978 = vadd.f32 %v222, %v5627
    %v5979 = vadd.f32 %v223, %v5797
    %v5980 = vadd.f32 %v224, %v5799
    %v5981 = vadd.f32 %v225, %v5969
    %v5982 = vadd.f32 %v226, %v5971
    %v5983 = vadd.f32 %v227, %v5629
    %v5984 = vadd.f32 %v228, %v5631
    %v5985 = vadd.f32 %v229, %v5801
    %v5986 = vadd.f32 %v230, %v5803
    %v5987 = vadd.f32 %v231, %v5973
    %v5988 = vadd.f32 %v232, %v5975
    %v5989 = vld [vmem:[%s8] sm:$0x3f]
    %v5990 = vld [vmem:[%s9] sm:$0x3f]
    %v5991 = vadd.f32 %v5977, %v5978
    %v5992 = vadd.f32 %v5991, %v5979
    %v5993 = vadd.f32 %v5992, %v5980
    %v5994 = vadd.f32 %v5993, %v5981
    %v5995 = vadd.f32 %v5994, %v5982
    %5996 = vadd.xlane.f32.xlu0 %v5995
    %v5997 = vpop.xlane.xlu0 %5996
    %v5998 = vadd.f32 %v5983, %v5984
    %v5999 = vadd.f32 %v5998, %v5985
    %v6000 = vadd.f32 %v5999, %v5986
    %v6001 = vadd.f32 %v6000, %v5987
    %v6002 = vadd.f32 %v6001, %v5988
    %6003 = vadd.xlane.f32.xlu0 %v6002
    %v6004 = vpop.xlane.xlu0 %6003
    %v6005 = vmul.f32 %v5997, %v88
    %v6006 = vmul.f32 %v6004, %v88
    %v6007 = vsub.f32 %v5977, %v6005
    %v6008 = vsub.f32 %v5978, %v6005
    %v6009 = vsub.f32 %v5979, %v6005
    %v6010 = vsub.f32 %v5980, %v6005
    %v6011 = vsub.f32 %v5981, %v6005
    %v6012 = vsub.f32 %v5982, %v6005
    %v6013 = vsub.f32 %v5983, %v6006
    %v6014 = vsub.f32 %v5984, %v6006
    %v6015 = vsub.f32 %v5985, %v6006
    %v6016 = vsub.f32 %v5986, %v6006
    %v6017 = vsub.f32 %v5987, %v6006
    %v6018 = vsub.f32 %v5988, %v6006
    %v6019 = vmul.f32 %v6007, %v6007
    %v6020 = vmul.f32 %v6008, %v6008
    %v6021 = vmul.f32 %v6009, %v6009
    %v6022 = vmul.f32 %v6010, %v6010
    %v6023 = vmul.f32 %v6011, %v6011
    %v6024 = vmul.f32 %v6012, %v6012
    %v6025 = vmul.f32 %v6013, %v6013
    %v6026 = vmul.f32 %v6014, %v6014
    %v6027 = vmul.f32 %v6015, %v6015
    %v6028 = vmul.f32 %v6016, %v6016
    %v6029 = vmul.f32 %v6017, %v6017
    %v6030 = vmul.f32 %v6018, %v6018
    %v6031 = vadd.f32 %v6019, %v6020
    %v6032 = vadd.f32 %v6031, %v6021
    %v6033 = vadd.f32 %v6032, %v6022
    %v6034 = vadd.f32 %v6033, %v6023
    %v6035 = vadd.f32 %v6034, %v6024
    %6036 = vadd.xlane.f32.xlu0 %v6035
    %v6037 = vpop.xlane.xlu0 %6036
    %v6038 = vadd.f32 %v6025, %v6026
    %v6039 = vadd.f32 %v6038, %v6027
    %v6040 = vadd.f32 %v6039, %v6028
    %v6041 = vadd.f32 %v6040, %v6029
    %v6042 = vadd.f32 %v6041, %v6030
    %6043 = vadd.xlane.f32.xlu0 %v6042
    %v6044 = vpop.xlane.xlu0 %6043
    %v6045 = vmul.f32 %v6037, %v88
    %v6046 = vmul.f32 %v6044, %v88
    %v6047 = vadd.f32 %v6045, 1e-05
    %v6048 = vadd.f32 %v6046, 1e-05
    %v6049 = vrsqrt.pop %v6047
    %v6050 = vrsqrt.pop %v6048
    %v6051 = vmul.f32 %v6007, %v6049
    %v6052 = vmul.f32 %v6008, %v6049
    %v6053 = vmul.f32 %v6009, %v6049
    %v6054 = vmul.f32 %v6010, %v6049
    %v6055 = vmul.f32 %v6011, %v6049
    %v6056 = vmul.f32 %v6012, %v6049
    %v6057 = vmul.f32 %v6013, %v6050
    %v6058 = vmul.f32 %v6014, %v6050
    %v6059 = vmul.f32 %v6015, %v6050
    %v6060 = vmul.f32 %v6016, %v6050
    %v6061 = vmul.f32 %v6017, %v6050
    %v6062 = vmul.f32 %v6018, %v6050
    %v6064 = vlaneseq
    %v6065 = vshrl.u32 %v6064, 7
    %v6066 = vsub.s32 0, %v6065
    %v6067 = vrot.slane %v5989, %v6066
    %v6068 = vlaneseq
    %v6069 = vshrl.u32 %v6068, 7
    %v6070 = vsub.s32 1, %v6069
    %v6071 = vrot.slane %v5989, %v6070
    %v6072 = vlaneseq
    %v6073 = vshrl.u32 %v6072, 7
    %v6074 = vsub.s32 2, %v6073
    %v6075 = vrot.slane %v5989, %v6074
    %v6076 = vlaneseq
    %v6077 = vshrl.u32 %v6076, 7
    %v6078 = vsub.s32 3, %v6077
    %v6079 = vrot.slane %v5989, %v6078
    %v6080 = vlaneseq
    %v6081 = vshrl.u32 %v6080, 7
    %v6082 = vsub.s32 4, %v6081
    %v6083 = vrot.slane %v5989, %v6082
    %v6084 = vlaneseq
    %v6085 = vshrl.u32 %v6084, 7
    %v6086 = vsub.s32 5, %v6085
    %v6087 = vrot.slane %v5989, %v6086
    %v6094 = vmul.f32 %v6051, %v6067
    %v6095 = vmul.f32 %v6052, %v6071
    %v6096 = vmul.f32 %v6053, %v6075
    %v6097 = vmul.f32 %v6054, %v6079
    %v6098 = vmul.f32 %v6055, %v6083
    %v6099 = vmul.f32 %v6056, %v6087
    %v6100 = vmul.f32 %v6057, %v6067
    %v6101 = vmul.f32 %v6058, %v6071
    %v6102 = vmul.f32 %v6059, %v6075
    %v6103 = vmul.f32 %v6060, %v6079
    %v6104 = vmul.f32 %v6061, %v6083
    %v6105 = vmul.f32 %v6062, %v6087
    %v6107 = vlaneseq
    %v6108 = vshrl.u32 %v6107, 7
    %v6109 = vsub.s32 0, %v6108
    %v6110 = vrot.slane %v5990, %v6109
    %v6111 = vlaneseq
    %v6112 = vshrl.u32 %v6111, 7
    %v6113 = vsub.s32 1, %v6112
    %v6114 = vrot.slane %v5990, %v6113
    %v6115 = vlaneseq
    %v6116 = vshrl.u32 %v6115, 7
    %v6117 = vsub.s32 2, %v6116
    %v6118 = vrot.slane %v5990, %v6117
    %v6119 = vlaneseq
    %v6120 = vshrl.u32 %v6119, 7
    %v6121 = vsub.s32 3, %v6120
    %v6122 = vrot.slane %v5990, %v6121
    %v6123 = vlaneseq
    %v6124 = vshrl.u32 %v6123, 7
    %v6125 = vsub.s32 4, %v6124
    %v6126 = vrot.slane %v5990, %v6125
    %v6127 = vlaneseq
    %v6128 = vshrl.u32 %v6127, 7
    %v6129 = vsub.s32 5, %v6128
    %v6130 = vrot.slane %v5990, %v6129
    %v6137 = vadd.f32 %v6094, %v6110
    %v6138 = vadd.f32 %v6095, %v6114
    %v6139 = vadd.f32 %v6096, %v6118
    %v6140 = vadd.f32 %v6097, %v6122
    %v6141 = vadd.f32 %v6098, %v6126
    %v6142 = vadd.f32 %v6099, %v6130
    %v6143 = vadd.f32 %v6100, %v6110
    %v6144 = vadd.f32 %v6101, %v6114
    %v6145 = vadd.f32 %v6102, %v6118
    %v6146 = vadd.f32 %v6103, %v6122
    %v6147 = vadd.f32 %v6104, %v6126
    %v6148 = vadd.f32 %v6105, %v6130
    %6149 = vst [vmem:[#allocation2] sm:$0xff] %v6137
    %6150 = vst [vmem:[#allocation2 + $0x8] sm:$0xff] %v6138
    %6151 = vst [vmem:[#allocation2 + $0x10] sm:$0xff] %v6139
    %6152 = vst [vmem:[#allocation2 + $0x18] sm:$0xff] %v6140
    %6153 = vst [vmem:[#allocation2 + $0x20] sm:$0xff] %v6141
    %6154 = vst [vmem:[#allocation2 + $0x28] sm:$0xff] %v6142
    %6155 = vst [vmem:[#allocation2 + $0x30] sm:$0xff] %v6143
    %6156 = vst [vmem:[#allocation2 + $0x38] sm:$0xff] %v6144
    %6157 = vst [vmem:[#allocation2 + $0x40] sm:$0xff] %v6145
    %6158 = vst [vmem:[#allocation2 + $0x48] sm:$0xff] %v6146
    %6159 = vst [vmem:[#allocation2 + $0x50] sm:$0xff] %v6147
    %6160 = vst [vmem:[#allocation2 + $0x58] sm:$0xff] %v6148
    // Predicated region
    $region42: #{decoder_forward.11} parent=1 // pred_check
      _
    $region43: #{decoder_forward.11} parent=1 // pred_check_branch
      %6162 = sbr.rel (0) target = $region45
    $region44: #{decoder_forward.11} parent=1 // pred_region
      %s6164 = ssub.s32 1536, 1536
      %6165 = vsyncadd [#allocation3], %s6164
      %s6166 = sshll.u32 [#allocation2], 4
      %s6167 = int_to_ptr.vmem [resolvable:$true] %s6166
      %6172 = dma.vmem_to_hbm [thread:$0]  %s6167, 1536, %s10, [#allocation3], 768, 768, 48
    $region45: #{decoder_forward.11} parent=1 // pred_fallthru
      _
    // Predicated region
    $region46: #{decoder_forward.11} parent=1 // pred_check
      _
    $region47: #{decoder_forward.11} parent=1 // pred_check_branch
      %6174 = sbr.rel (0) target = $region49
    $region48: #{decoder_forward.11} parent=1 // pred_region
      %6175 = dma.done [#allocation3], 1536
    $region49: #{decoder_forward.11} parent=1 // pred_fallthru
      _
    %6176 = vsyncpa [#allocation3], 1

</llo_original>
